<compile_context>
chip_gen: v5e
topology: v5e:2x2
jax: 0.10.0
libtpu: 0.0.40
codegen_flags: <defaults>
</compile_context>

<pallas_src>
import functools

import jax
import jax.numpy as jnp
from jax import lax
from jax.experimental import pallas as pl
from jax.experimental.pallas import tpu as pltpu

LANE = 128  # TPU lane width; channels are zero-padded to a multiple of this.


def _round_up(x, m):
    return ((x + m - 1) // m) * m


def _top_pad(W):
    # Zero rows above/below the image in the flattened (H*W, C) scratch.
    # Must be >= W+1 (largest tap overhang); a multiple of 8 keeps the big
    # per-step image store (offset TOP) sublane-aligned.
    return _round_up(W + 1, 8)


# --------------------------------------------------------------------------- #
# Fused kernel: [optional BN-affine + ReLU on the input] -> 3x3 conv
# (9 accumulating bf16 MXU dots over sublane-shifted windows, f32 accumulate)
# -> per-image channel sum / sumsq of the conv output (for batch-norm stats).
# One batch element per grid step.
# --------------------------------------------------------------------------- #
def _conv_bn_stats_kernel(x_ref, s_ref, b_ref, w_ref,
                          z_ref, sum_ref, sq_ref,
                          pad_ref, *, W, apply_input_act):
    HW, CIN = x_ref.shape[1], x_ref.shape[2]
    TOP = _top_pad(W)
    base = TOP - W - 1  # window start for tap (dy, dx) is base + dy*W + dx

    if apply_input_act:                      # BN1 + ReLU of the previous conv
        xv = x_ref[0].astype(jnp.float32)
        a16 = jnp.maximum(xv * s_ref[...] + b_ref[...], 0.0).astype(jnp.bfloat16)
    else:
        a16 = x_ref[0]                       # already bf16 (cast in wrapper)

    # Zero-framed copy of the image in VMEM (halo handled here, never in HBM).
    # NOTE: frame re-zeroed every step -- see header comment (parallel-axis
    # safety on multi-TensorCore chips); it is ~3 vreg stores per image.
    band = jnp.zeros((TOP, CIN), jnp.bfloat16)
    pad_ref[pl.ds(0, TOP), :] = band
    pad_ref[pl.ds(TOP + HW, TOP), :] = band
    pad_ref[pl.ds(TOP, HW), :] = a16

    # Column-position masks at (HW, 1): the flattened layout wraps rows, so the
    # dx=0 / dx=2 taps must be zeroed at the left / right image edge.  The
    # (HW,1) condition broadcasts along lanes inside jnp.where.
    flat = lax.broadcasted_iota(jnp.int32, (HW, 1), 0)
    if (W & (W - 1)) == 0:
        wpos = jnp.bitwise_and(flat, W - 1)
    else:
        wpos = flat % W
    not_left = wpos != 0
    not_right = wpos != (W - 1)

    # 9 accumulating MXU dots straight from the scratch windows (no col slab).
    # TODO(synk): window starts are not all 8-aligned; a padded row pitch would
    #   make the dx=0 column aligned, at the cost of re-deriving the wrap masks.
    z = None
    for t in range(9):
        dy, dx = t // 3, t % 3
        win = pad_ref[pl.ds(base + dy * W + dx, HW), :]          # (HW, CIN) bf16
        if dx == 0:
            win = jnp.where(not_left, win, jnp.zeros_like(win))
        elif dx == 2:
            win = jnp.where(not_right, win, jnp.zeros_like(win))
        d = jnp.dot(win, w_ref[t], preferred_element_type=jnp.float32)
        z = d if z is None else z + d                            # (HW, COUT) f32

    # Stats from the f32 accumulator; activation stored bf16 (halved HBM traffic).
    z_ref[0] = z.astype(jnp.bfloat16)
    sum_ref[0] = jnp.sum(z, axis=0, keepdims=True)
    sq_ref[0] = jnp.sum(z * z, axis=0, keepdims=True)


def _conv_bn_stats(x_flat, scale, bias, w_packed, *, W, apply_input_act):
    N, HW, CIN = x_flat.shape
    COUT = w_packed.shape[2]
    TOP = _top_pad(W)
    kernel = functools.partial(_conv_bn_stats_kernel, W=W,
                               apply_input_act=apply_input_act)
    return pl.pallas_call(
        kernel,
        out_shape=(
            jax.ShapeDtypeStruct((N, HW, COUT), jnp.bfloat16),   # z (pre-BN), bf16
            jax.ShapeDtypeStruct((N, 1, COUT), jnp.float32),     # per-image sum(z)
            jax.ShapeDtypeStruct((N, 1, COUT), jnp.float32),     # per-image sum(z^2)
        ),
        grid=(N,),
        in_specs=[
            pl.BlockSpec((1, HW, CIN), lambda n: (n, 0, 0)),
            pl.BlockSpec((1, CIN), lambda n: (0, 0)),
            pl.BlockSpec((1, CIN), lambda n: (0, 0)),
            pl.BlockSpec((9, CIN, COUT), lambda n: (0, 0, 0)),   # VMEM-resident
        ],
        out_specs=(
            pl.BlockSpec((1, HW, COUT), lambda n: (n, 0, 0)),
            pl.BlockSpec((1, 1, COUT), lambda n: (n, 0, 0)),
            pl.BlockSpec((1, 1, COUT), lambda n: (n, 0, 0)),
        ),
        scratch_shapes=[
            pltpu.VMEM((HW + 2 * TOP, CIN), jnp.bfloat16),       # zero-framed image
        ],
        # "parallel" lets v7x shard the batch across its 2 TensorCores.
        compiler_params=pltpu.CompilerParams(dimension_semantics=("parallel",)),
    )(x_flat, scale, bias, w_packed)


# --------------------------------------------------------------------------- #
# Final BN2-affine + ReLU (needs full-batch stats of z2 -> one lane-dense pass).
# --------------------------------------------------------------------------- #
def _affine_relu_kernel(z_ref, s_ref, b_ref, o_ref):
    zf = z_ref[0].astype(jnp.float32)
    o_ref[0] = jnp.maximum(zf * s_ref[...] + b_ref[...], 0.0)


def _affine_relu(z_flat, scale, bias):
    N, HW, CP = z_flat.shape
    return pl.pallas_call(
        _affine_relu_kernel,
        out_shape=jax.ShapeDtypeStruct((N, HW, CP), jnp.float32),
        grid=(N,),
        in_specs=[
            pl.BlockSpec((1, HW, CP), lambda n: (n, 0, 0)),
            pl.BlockSpec((1, CP), lambda n: (0, 0)),
            pl.BlockSpec((1, CP), lambda n: (0, 0)),
        ],
        out_specs=pl.BlockSpec((1, HW, CP), lambda n: (n, 0, 0)),
        compiler_params=pltpu.CompilerParams(dimension_semantics=("parallel",)),
    )(z_flat, scale, bias)


# --------------------------------------------------------------------------- #
# Wrapper-side glue (tiny, O(channels) or O(weights) work only).
# --------------------------------------------------------------------------- #
def _pack_weights(w_oihw, cin_p, cout_p):
    """OIHW -> (9, cin_p, cout_p) bf16, zero-padded channels, tap-major."""
    cout, cin, kh, kw = w_oihw.shape
    w = jnp.transpose(w_oihw, (2, 3, 1, 0)).astype(jnp.float32)       # HWIO
    wp = jnp.zeros((kh * kw, cin_p, cout_p), jnp.float32)
    wp = wp.at[:, :cin, :cout].set(w.reshape(kh * kw, cin, cout))
    return wp.astype(jnp.bfloat16)


def _fold_bn(ssum, ssq, gamma, beta, count, cp, eps):
    """Per-image sums -> folded BN (batch-stat) scale/bias, f32, padded to cp."""
    # TODO(synk): E[z^2]-E[z]^2 in f32 can cancel for mean >> std; use a shifted
    #   / Welford formulation at production scale.
    mean = jnp.sum(ssum, axis=(0, 1)) / count                          # (cp,)
    var = jnp.maximum(jnp.sum(ssq, axis=(0, 1)) / count - mean * mean, 0.0)
    g = jnp.zeros((cp,), jnp.float32).at[:gamma.shape[0]].set(gamma.astype(jnp.float32))
    b = jnp.zeros((cp,), jnp.float32).at[:beta.shape[0]].set(beta.astype(jnp.float32))
    scale = g * lax.rsqrt(var + eps)
    bias = b - mean * scale
    return scale.reshape(1, cp), bias.reshape(1, cp)


def double_conv(x_nchw, w1_oihw, w2_oihw, gamma1, beta1, gamma2, beta2, eps=1e-5):
    N, Cin, H, W = x_nchw.shape
    Cmid = w1_oihw.shape[0]
    Cout = w2_oihw.shape[0]
    CIP, CMP, COP = (_round_up(c, LANE) for c in (Cin, Cmid, Cout))
    count = N * H * W

    # NCHW -> flattened lane-dense NHWC, zero-padded channels, bf16 in HBM.
    x = jnp.transpose(x_nchw, (0, 2, 3, 1)).astype(jnp.float32)
    x = jnp.pad(x, ((0, 0), (0, 0), (0, 0), (0, CIP - Cin)))
    x = x.reshape(N, H * W, CIP).astype(jnp.bfloat16)

    w1p = _pack_weights(w1_oihw, CIP, CMP)
    w2p = _pack_weights(w2_oihw, CMP, COP)
    zeros1 = jnp.zeros((1, CIP), jnp.float32)

    # conv1 (+ per-image batch stats of z1).
    z1, s1, q1 = _conv_bn_stats(x, zeros1, zeros1, w1p, W=W, apply_input_act=False)
    scale1, bias1 = _fold_bn(s1, q1, gamma1, beta1, count, CMP, eps)

    # BN1 + ReLU fused into conv2; conv2 also emits batch stats of z2.
    z2, s2, q2 = _conv_bn_stats(z1, scale1, bias1, w2p, W=W, apply_input_act=True)
    scale2, bias2 = _fold_bn(s2, q2, gamma2, beta2, count, COP, eps)

    # BN2 + ReLU (second pass is inherent: its stats span the whole batch).
    y = _affine_relu(z2, scale2, bias2)

    y = y.reshape(N, H, W, COP)[:, :, :, :Cout]
    return jnp.transpose(y, (0, 3, 1, 2))                              # NHWC -> NCHW


# --------------------------------------------------------------------------- #
# Pure-JAX f32 reference (same math) for the correctness check.
# --------------------------------------------------------------------------- #
def double_conv_ref(x_nchw, w1_oihw, w2_oihw, gamma1, beta1, gamma2, beta2, eps=1e-5):
    x = jnp.transpose(x_nchw, (0, 2, 3, 1)).astype(jnp.float32)

    def conv(a, w_oihw):
        w = jnp.transpose(w_oihw, (2, 3, 1, 0)).astype(jnp.float32)
        return lax.conv_general_dilated(
            a, w, window_strides=(1, 1), padding="SAME",
            dimension_numbers=("NHWC", "HWIO", "NHWC"))

    def bn_relu(z, g, b):
        m = jnp.mean(z, axis=(0, 1, 2))
        v = jnp.var(z, axis=(0, 1, 2))
        return jnp.maximum((z - m) / jnp.sqrt(v + eps) * g + b, 0.0)

    a1 = bn_relu(conv(x, w1_oihw), gamma1, beta1)
    a2 = bn_relu(conv(a1, w2_oihw), gamma2, beta2)
    return jnp.transpose(a2, (0, 3, 1, 2))


if __name__ == "__main__":
    # Small shapes consistent with the module: N=2, Cin=4, H=W=16,
    # mid_channels = out_channels = 8 (mid defaults to out).
    N, Cin, H, W = 2, 4, 16, 16
    Cmid = Cout = 8

    key = jax.random.PRNGKey(0)
    k_x, k_w1, k_w2, k_g1, k_b1, k_g2, k_b2 = jax.random.split(key, 7)

    x = jax.random.normal(k_x, (N, Cin, H, W), jnp.float32)
    w1 = 0.2 * jax.random.normal(k_w1, (Cmid, Cin, 3, 3), jnp.float32)
    w2 = 0.2 * jax.random.normal(k_w2, (Cout, Cmid, 3, 3), jnp.float32)
    gamma1 = 1.0 + 0.1 * jax.random.normal(k_g1, (Cmid,), jnp.float32)
    beta1 = 0.1 * jax.random.normal(k_b1, (Cmid,), jnp.float32)
    gamma2 = 1.0 + 0.1 * jax.random.normal(k_g2, (Cout,), jnp.float32)
    beta2 = 0.1 * jax.random.normal(k_b2, (Cout,), jnp.float32)

    out = jax.jit(double_conv)(x, w1, w2, gamma1, beta1, gamma2, beta2)
    out = jax.block_until_ready(out)

    ref = jax.jit(double_conv_ref)(x, w1, w2, gamma1, beta1, gamma2, beta2)
    ref = jax.block_until_ready(ref)

    assert out.shape == (N, Cout, H, W), out.shape
    # bf16 MXU operands + bf16 activation storage -> looser tolerance than f32.
    assert jnp.allclose(out, ref, atol=6e-2, rtol=6e-2), \
        f"max abs err {jnp.max(jnp.abs(out - ref))}"

    print("KERNEL_OK")
</pallas_src>

<mosaic_0001>
module attributes {stable_mosaic.version = 11 : i64} {
  func.func @_conv_bn_stats_kernel(%arg0: i32, %arg1: memref<1x256x128xbf16, #tpu.memory_space<vmem>>, %arg2: memref<1x128xf32, #tpu.memory_space<vmem>>, %arg3: memref<1x128xf32, #tpu.memory_space<vmem>>, %arg4: memref<9x128x128xbf16, #tpu.memory_space<vmem>>, %arg5: memref<1x256x128xbf16, #tpu.memory_space<vmem>>, %arg6: memref<1x1x128xf32, #tpu.memory_space<vmem>>, %arg7: memref<1x1x128xf32, #tpu.memory_space<vmem>>, %arg8: memref<304x128xbf16, #tpu.memory_space<vmem>>) attributes {dimension_semantics = [#tpu.dimension_semantics<parallel>], iteration_bounds = array<i64: 2>, scalar_prefetch = 0 : i64, scratch_operands = 1 : i64, tpu.core_type = #tpu.core_type<tc>, window_params = [{transform_indices = @transform_0, window_bounds = array<i64: 1, 256, 128>}, {pipeline_mode = #tpu.pipeline_mode<synchronous>, transform_indices = @transform_1, window_bounds = array<i64: 1, 128>}, {pipeline_mode = #tpu.pipeline_mode<synchronous>, transform_indices = @transform_2, window_bounds = array<i64: 1, 128>}, {pipeline_mode = #tpu.pipeline_mode<synchronous>, transform_indices = @transform_3, window_bounds = array<i64: 9, 128, 128>}, {transform_indices = @transform_4, window_bounds = array<i64: 1, 256, 128>}, {transform_indices = @transform_5, window_bounds = array<i64: 1, 1, 128>}, {transform_indices = @transform_6, window_bounds = array<i64: 1, 1, 128>}]} {
    %c0 = arith.constant 0 : index
    %c0_0 = arith.constant 0 : index
    %c0_1 = arith.constant 0 : index
    %0 = vector.load %arg1[%c0, %c0_0, %c0_1] : memref<1x256x128xbf16, #tpu.memory_space<vmem>>, vector<1x256x128xbf16>
    %1 = vector.shape_cast %0 : vector<1x256x128xbf16> to vector<256x128xbf16>
    %cst = arith.constant 0.000000e+00 : bf16
    %2 = vector.broadcast %cst : bf16 to vector<24x128xbf16>
    %c0_2 = arith.constant 0 : index
    %c0_3 = arith.constant 0 : index
    %3 = vector.load %arg8[%c0_2, %c0_3] : memref<304x128xbf16, #tpu.memory_space<vmem>>, vector<24x128xbf16>
    tpu.vector_store %arg8[%c0_2, %c0_3], %2 {strides = array<i32>} : memref<304x128xbf16, #tpu.memory_space<vmem>>, vector<24x128xbf16>,
    %c280 = arith.constant 280 : index
    %c0_4 = arith.constant 0 : index
    %4 = vector.load %arg8[%c280, %c0_4] : memref<304x128xbf16, #tpu.memory_space<vmem>>, vector<24x128xbf16>
    tpu.vector_store %arg8[%c280, %c0_4], %2 {strides = array<i32>} : memref<304x128xbf16, #tpu.memory_space<vmem>>, vector<24x128xbf16>,
    %c24 = arith.constant 24 : index
    %c0_5 = arith.constant 0 : index
    %5 = vector.load %arg8[%c24, %c0_5] : memref<304x128xbf16, #tpu.memory_space<vmem>>, vector<256x128xbf16>
    tpu.vector_store %arg8[%c24, %c0_5], %1 {strides = array<i32>} : memref<304x128xbf16, #tpu.memory_space<vmem>>, vector<256x128xbf16>,
    %6 = tpu.iota {dimensions = array<i32: 0>} : vector<256x1xi32>
    %c15_i32 = arith.constant 15 : i32
    %7 = vector.broadcast %c15_i32 : i32 to vector<256x1xi32>
    %8 = arith.andi %6, %7 : vector<256x1xi32>
    %c0_i32 = arith.constant 0 : i32
    %9 = vector.broadcast %c0_i32 : i32 to vector<256x1xi32>
    %10 = arith.cmpi ne, %8, %9 : vector<256x1xi32>
    %c15_i32_6 = arith.constant 15 : i32
    %11 = vector.broadcast %c15_i32_6 : i32 to vector<256x1xi32>
    %12 = arith.cmpi ne, %8, %11 : vector<256x1xi32>
    %c7 = arith.constant 7 : index
    %c0_7 = arith.constant 0 : index
    %13 = vector.load %arg8[%c7, %c0_7] : memref<304x128xbf16, #tpu.memory_space<vmem>>, vector<256x128xbf16>
    %cst_8 = arith.constant 0.000000e+00 : bf16
    %14 = vector.broadcast %cst_8 : bf16 to vector<256x128xbf16>
    %15 = vector.shape_cast %10 : vector<256x1xi1> to vector<256x1xi1>
    %16 = vector.broadcast %15 : vector<256x1xi1> to vector<256x128xi1>
    %17 = arith.select %16, %13, %14 : vector<256x128xi1>, vector<256x128xbf16>
    %c0_9 = arith.constant 0 : index
    %c0_10 = arith.constant 0 : index
    %c0_11 = arith.constant 0 : index
    %18 = vector.load %arg4[%c0_9, %c0_10, %c0_11] : memref<9x128x128xbf16, #tpu.memory_space<vmem>>, vector<1x128x128xbf16>
    %19 = vector.shape_cast %18 : vector<1x128x128xbf16> to vector<128x128xbf16>
    %cst_12 = arith.constant dense<0.000000e+00> : vector<256x128xf32>
    %20 = tpu.matmul %17, %19, %cst_12 {dimension_numbers = #tpu.dot_dimension_numbers<[1], [0], [0], [1], [0, 0, 1, 1], [], []>} : vector<256x128xbf16>, vector<128x128xbf16>, vector<256x128xf32> -> vector<256x128xf32>
    %c8 = arith.constant 8 : index
    %c0_13 = arith.constant 0 : index
    %21 = vector.load %arg8[%c8, %c0_13] : memref<304x128xbf16, #tpu.memory_space<vmem>>, vector<256x128xbf16>
    %c1 = arith.constant 1 : index
    %c0_14 = arith.constant 0 : index
    %c0_15 = arith.constant 0 : index
    %22 = vector.load %arg4[%c1, %c0_14, %c0_15] : memref<9x128x128xbf16, #tpu.memory_space<vmem>>, vector<1x128x128xbf16>
    %23 = vector.shape_cast %22 : vector<1x128x128xbf16> to vector<128x128xbf16>
    %cst_16 = arith.constant dense<0.000000e+00> : vector<256x128xf32>
    %24 = tpu.matmul %21, %23, %cst_16 {dimension_numbers = #tpu.dot_dimension_numbers<[1], [0], [0], [1], [0, 0, 1, 1], [], []>} : vector<256x128xbf16>, vector<128x128xbf16>, vector<256x128xf32> -> vector<256x128xf32>
    %25 = arith.addf %20, %24 : vector<256x128xf32>
    %c9 = arith.constant 9 : index
    %c0_17 = arith.constant 0 : index
    %26 = vector.load %arg8[%c9, %c0_17] : memref<304x128xbf16, #tpu.memory_space<vmem>>, vector<256x128xbf16>
    %cst_18 = arith.constant 0.000000e+00 : bf16
    %27 = vector.broadcast %cst_18 : bf16 to vector<256x128xbf16>
    %28 = vector.shape_cast %12 : vector<256x1xi1> to vector<256x1xi1>
    %29 = vector.broadcast %28 : vector<256x1xi1> to vector<256x128xi1>
    %30 = arith.select %29, %26, %27 : vector<256x128xi1>, vector<256x128xbf16>
    %c2 = arith.constant 2 : index
    %c0_19 = arith.constant 0 : index
    %c0_20 = arith.constant 0 : index
    %31 = vector.load %arg4[%c2, %c0_19, %c0_20] : memref<9x128x128xbf16, #tpu.memory_space<vmem>>, vector<1x128x128xbf16>
    %32 = vector.shape_cast %31 : vector<1x128x128xbf16> to vector<128x128xbf16>
    %cst_21 = arith.constant dense<0.000000e+00> : vector<256x128xf32>
    %33 = tpu.matmul %30, %32, %cst_21 {dimension_numbers = #tpu.dot_dimension_numbers<[1], [0], [0], [1], [0, 0, 1, 1], [], []>} : vector<256x128xbf16>, vector<128x128xbf16>, vector<256x128xf32> -> vector<256x128xf32>
    %34 = arith.addf %25, %33 : vector<256x128xf32>
    %c23 = arith.constant 23 : index
    %c0_22 = arith.constant 0 : index
    %35 = vector.load %arg8[%c23, %c0_22] : memref<304x128xbf16, #tpu.memory_space<vmem>>, vector<256x128xbf16>
    %cst_23 = arith.constant 0.000000e+00 : bf16
    %36 = vector.broadcast %cst_23 : bf16 to vector<256x128xbf16>
    %37 = vector.shape_cast %10 : vector<256x1xi1> to vector<256x1xi1>
    %38 = vector.broadcast %37 : vector<256x1xi1> to vector<256x128xi1>
    %39 = arith.select %38, %35, %36 : vector<256x128xi1>, vector<256x128xbf16>
    %c3 = arith.constant 3 : index
    %c0_24 = arith.constant 0 : index
    %c0_25 = arith.constant 0 : index
    %40 = vector.load %arg4[%c3, %c0_24, %c0_25] : memref<9x128x128xbf16, #tpu.memory_space<vmem>>, vector<1x128x128xbf16>
    %41 = vector.shape_cast %40 : vector<1x128x128xbf16> to vector<128x128xbf16>
    %cst_26 = arith.constant dense<0.000000e+00> : vector<256x128xf32>
    %42 = tpu.matmul %39, %41, %cst_26 {dimension_numbers = #tpu.dot_dimension_numbers<[1], [0], [0], [1], [0, 0, 1, 1], [], []>} : vector<256x128xbf16>, vector<128x128xbf16>, vector<256x128xf32> -> vector<256x128xf32>
    %43 = arith.addf %34, %42 : vector<256x128xf32>
    %c24_27 = arith.constant 24 : index
    %c0_28 = arith.constant 0 : index
    %44 = vector.load %arg8[%c24_27, %c0_28] : memref<304x128xbf16, #tpu.memory_space<vmem>>, vector<256x128xbf16>
    %c4 = arith.constant 4 : index
    %c0_29 = arith.constant 0 : index
    %c0_30 = arith.constant 0 : index
    %45 = vector.load %arg4[%c4, %c0_29, %c0_30] : memref<9x128x128xbf16, #tpu.memory_space<vmem>>, vector<1x128x128xbf16>
    %46 = vector.shape_cast %45 : vector<1x128x128xbf16> to vector<128x128xbf16>
    %cst_31 = arith.constant dense<0.000000e+00> : vector<256x128xf32>
    %47 = tpu.matmul %44, %46, %cst_31 {dimension_numbers = #tpu.dot_dimension_numbers<[1], [0], [0], [1], [0, 0, 1, 1], [], []>} : vector<256x128xbf16>, vector<128x128xbf16>, vector<256x128xf32> -> vector<256x128xf32>
    %48 = arith.addf %43, %47 : vector<256x128xf32>
    %c25 = arith.constant 25 : index
    %c0_32 = arith.constant 0 : index
    %49 = vector.load %arg8[%c25, %c0_32] : memref<304x128xbf16, #tpu.memory_space<vmem>>, vector<256x128xbf16>
    %cst_33 = arith.constant 0.000000e+00 : bf16
    %50 = vector.broadcast %cst_33 : bf16 to vector<256x128xbf16>
    %51 = vector.shape_cast %12 : vector<256x1xi1> to vector<256x1xi1>
    %52 = vector.broadcast %51 : vector<256x1xi1> to vector<256x128xi1>
    %53 = arith.select %52, %49, %50 : vector<256x128xi1>, vector<256x128xbf16>
    %c5 = arith.constant 5 : index
    %c0_34 = arith.constant 0 : index
    %c0_35 = arith.constant 0 : index
    %54 = vector.load %arg4[%c5, %c0_34, %c0_35] : memref<9x128x128xbf16, #tpu.memory_space<vmem>>, vector<1x128x128xbf16>
    %55 = vector.shape_cast %54 : vector<1x128x128xbf16> to vector<128x128xbf16>
    %cst_36 = arith.constant dense<0.000000e+00> : vector<256x128xf32>
    %56 = tpu.matmul %53, %55, %cst_36 {dimension_numbers = #tpu.dot_dimension_numbers<[1], [0], [0], [1], [0, 0, 1, 1], [], []>} : vector<256x128xbf16>, vector<128x128xbf16>, vector<256x128xf32> -> vector<256x128xf32>
    %57 = arith.addf %48, %56 : vector<256x128xf32>
    %c39 = arith.constant 39 : index
    %c0_37 = arith.constant 0 : index
    %58 = vector.load %arg8[%c39, %c0_37] : memref<304x128xbf16, #tpu.memory_space<vmem>>, vector<256x128xbf16>
    %cst_38 = arith.constant 0.000000e+00 : bf16
    %59 = vector.broadcast %cst_38 : bf16 to vector<256x128xbf16>
    %60 = vector.shape_cast %10 : vector<256x1xi1> to vector<256x1xi1>
    %61 = vector.broadcast %60 : vector<256x1xi1> to vector<256x128xi1>
    %62 = arith.select %61, %58, %59 : vector<256x128xi1>, vector<256x128xbf16>
    %c6 = arith.constant 6 : index
    %c0_39 = arith.constant 0 : index
    %c0_40 = arith.constant 0 : index
    %63 = vector.load %arg4[%c6, %c0_39, %c0_40] : memref<9x128x128xbf16, #tpu.memory_space<vmem>>, vector<1x128x128xbf16>
    %64 = vector.shape_cast %63 : vector<1x128x128xbf16> to vector<128x128xbf16>
    %cst_41 = arith.constant dense<0.000000e+00> : vector<256x128xf32>
    %65 = tpu.matmul %62, %64, %cst_41 {dimension_numbers = #tpu.dot_dimension_numbers<[1], [0], [0], [1], [0, 0, 1, 1], [], []>} : vector<256x128xbf16>, vector<128x128xbf16>, vector<256x128xf32> -> vector<256x128xf32>
    %66 = arith.addf %57, %65 : vector<256x128xf32>
    %c40 = arith.constant 40 : index
    %c0_42 = arith.constant 0 : index
    %67 = vector.load %arg8[%c40, %c0_42] : memref<304x128xbf16, #tpu.memory_space<vmem>>, vector<256x128xbf16>
    %c7_43 = arith.constant 7 : index
    %c0_44 = arith.constant 0 : index
    %c0_45 = arith.constant 0 : index
    %68 = vector.load %arg4[%c7_43, %c0_44, %c0_45] : memref<9x128x128xbf16, #tpu.memory_space<vmem>>, vector<1x128x128xbf16>
    %69 = vector.shape_cast %68 : vector<1x128x128xbf16> to vector<128x128xbf16>
    %cst_46 = arith.constant dense<0.000000e+00> : vector<256x128xf32>
    %70 = tpu.matmul %67, %69, %cst_46 {dimension_numbers = #tpu.dot_dimension_numbers<[1], [0], [0], [1], [0, 0, 1, 1], [], []>} : vector<256x128xbf16>, vector<128x128xbf16>, vector<256x128xf32> -> vector<256x128xf32>
    %71 = arith.addf %66, %70 : vector<256x128xf32>
    %c41 = arith.constant 41 : index
    %c0_47 = arith.constant 0 : index
    %72 = vector.load %arg8[%c41, %c0_47] : memref<304x128xbf16, #tpu.memory_space<vmem>>, vector<256x128xbf16>
    %cst_48 = arith.constant 0.000000e+00 : bf16
    %73 = vector.broadcast %cst_48 : bf16 to vector<256x128xbf16>
    %74 = vector.shape_cast %12 : vector<256x1xi1> to vector<256x1xi1>
    %75 = vector.broadcast %74 : vector<256x1xi1> to vector<256x128xi1>
    %76 = arith.select %75, %72, %73 : vector<256x128xi1>, vector<256x128xbf16>
    %c8_49 = arith.constant 8 : index
    %c0_50 = arith.constant 0 : index
    %c0_51 = arith.constant 0 : index
    %77 = vector.load %arg4[%c8_49, %c0_50, %c0_51] : memref<9x128x128xbf16, #tpu.memory_space<vmem>>, vector<1x128x128xbf16>
    %78 = vector.shape_cast %77 : vector<1x128x128xbf16> to vector<128x128xbf16>
    %cst_52 = arith.constant dense<0.000000e+00> : vector<256x128xf32>
    %79 = tpu.matmul %76, %78, %cst_52 {dimension_numbers = #tpu.dot_dimension_numbers<[1], [0], [0], [1], [0, 0, 1, 1], [], []>} : vector<256x128xbf16>, vector<128x128xbf16>, vector<256x128xf32> -> vector<256x128xf32>
    %80 = arith.addf %71, %79 : vector<256x128xf32>
    %81 = arith.truncf %80 : vector<256x128xf32> to vector<256x128xbf16>
    %c0_53 = arith.constant 0 : index
    %c0_54 = arith.constant 0 : index
    %c0_55 = arith.constant 0 : index
    %82 = vector.load %arg5[%c0_53, %c0_54, %c0_55] : memref<1x256x128xbf16, #tpu.memory_space<vmem>>, vector<1x256x128xbf16>
    %83 = vector.shape_cast %82 : vector<1x256x128xbf16> to vector<256x128xbf16>
    %84 = vector.shape_cast %81 : vector<256x128xbf16> to vector<1x256x128xbf16>
    tpu.vector_store %arg5[%c0_53, %c0_54, %c0_55], %84 {strides = array<i32>} : memref<1x256x128xbf16, #tpu.memory_space<vmem>>, vector<1x256x128xbf16>,
    %cst_56 = arith.constant dense<0.000000e+00> : vector<128xf32>
    %85 = vector.multi_reduction <add>, %80, %cst_56 [0] : vector<256x128xf32> to vector<128xf32>
    %86 = vector.shape_cast %85 : vector<128xf32> to vector<1x128xf32>
    %c0_57 = arith.constant 0 : index
    %c0_58 = arith.constant 0 : index
    %c0_59 = arith.constant 0 : index
    %87 = vector.load %arg6[%c0_57, %c0_58, %c0_59] : memref<1x1x128xf32, #tpu.memory_space<vmem>>, vector<1x1x128xf32>
    %88 = vector.shape_cast %87 : vector<1x1x128xf32> to vector<1x128xf32>
    %89 = vector.shape_cast %86 : vector<1x128xf32> to vector<1x1x128xf32>
    tpu.vector_store %arg6[%c0_57, %c0_58, %c0_59], %89 {strides = array<i32>} : memref<1x1x128xf32, #tpu.memory_space<vmem>>, vector<1x1x128xf32>,
    %90 = arith.mulf %80, %80 : vector<256x128xf32>
    %cst_60 = arith.constant dense<0.000000e+00> : vector<128xf32>
    %91 = vector.multi_reduction <add>, %90, %cst_60 [0] : vector<256x128xf32> to vector<128xf32>
    %92 = vector.shape_cast %91 : vector<128xf32> to vector<1x128xf32>
    %c0_61 = arith.constant 0 : index
    %c0_62 = arith.constant 0 : index
    %c0_63 = arith.constant 0 : index
    %93 = vector.load %arg7[%c0_61, %c0_62, %c0_63] : memref<1x1x128xf32, #tpu.memory_space<vmem>>, vector<1x1x128xf32>
    %94 = vector.shape_cast %93 : vector<1x1x128xf32> to vector<1x128xf32>
    %95 = vector.shape_cast %92 : vector<1x128xf32> to vector<1x1x128xf32>
    tpu.vector_store %arg7[%c0_61, %c0_62, %c0_63], %95 {strides = array<i32>} : memref<1x1x128xf32, #tpu.memory_space<vmem>>, vector<1x1x128xf32>,
    return
  }
  func.func @transform_0(%arg0: i32) -> (i32, i32, i32) {
    %c0_i32 = arith.constant 0 : i32
    %c0_i32_0 = arith.constant 0 : i32
    %c0_i32_1 = arith.constant 0 : i32
    return %arg0, %c0_i32, %c0_i32_0 : i32, i32, i32
  }
  func.func @transform_1(%arg0: i32) -> (i32, i32) {
    %c0_i32 = arith.constant 0 : i32
    %c0_i32_0 = arith.constant 0 : i32
    %c0_i32_1 = arith.constant 0 : i32
    return %c0_i32, %c0_i32_0 : i32, i32
  }
  func.func @transform_2(%arg0: i32) -> (i32, i32) {
    %c0_i32 = arith.constant 0 : i32
    %c0_i32_0 = arith.constant 0 : i32
    %c0_i32_1 = arith.constant 0 : i32
    return %c0_i32, %c0_i32_0 : i32, i32
  }
  func.func @transform_3(%arg0: i32) -> (i32, i32, i32) {
    %c0_i32 = arith.constant 0 : i32
    %c0_i32_0 = arith.constant 0 : i32
    %c0_i32_1 = arith.constant 0 : i32
    %c0_i32_2 = arith.constant 0 : i32
    return %c0_i32, %c0_i32_0, %c0_i32_1 : i32, i32, i32
  }
  func.func @transform_4(%arg0: i32) -> (i32, i32, i32) {
    %c0_i32 = arith.constant 0 : i32
    %c0_i32_0 = arith.constant 0 : i32
    %c0_i32_1 = arith.constant 0 : i32
    return %arg0, %c0_i32, %c0_i32_0 : i32, i32, i32
  }
  func.func @transform_5(%arg0: i32) -> (i32, i32, i32) {
    %c0_i32 = arith.constant 0 : i32
    %c0_i32_0 = arith.constant 0 : i32
    %c0_i32_1 = arith.constant 0 : i32
    return %arg0, %c0_i32, %c0_i32_0 : i32, i32, i32
  }
  func.func @transform_6(%arg0: i32) -> (i32, i32, i32) {
    %c0_i32 = arith.constant 0 : i32
    %c0_i32_0 = arith.constant 0 : i32
    %c0_i32_1 = arith.constant 0 : i32
    return %arg0, %c0_i32, %c0_i32_0 : i32, i32, i32
  }
}

module attributes {stable_mosaic.version = 11 : i64} {
  func.func @_conv_bn_stats_kernel(%arg0: i32, %arg1: memref<1x256x128xbf16, #tpu.memory_space<vmem>>, %arg2: memref<1x128xf32, #tpu.memory_space<vmem>>, %arg3: memref<1x128xf32, #tpu.memory_space<vmem>>, %arg4: memref<9x128x128xbf16, #tpu.memory_space<vmem>>, %arg5: memref<1x256x128xbf16, #tpu.memory_space<vmem>>, %arg6: memref<1x1x128xf32, #tpu.memory_space<vmem>>, %arg7: memref<1x1x128xf32, #tpu.memory_space<vmem>>, %arg8: memref<304x128xbf16, #tpu.memory_space<vmem>>) attributes {dimension_semantics = [#tpu.dimension_semantics<parallel>], iteration_bounds = array<i64: 2>, scalar_prefetch = 0 : i64, scratch_operands = 1 : i64, tpu.core_type = #tpu.core_type<tc>, window_params = [{transform_indices = @transform_0, window_bounds = array<i64: 1, 256, 128>}, {pipeline_mode = #tpu.pipeline_mode<synchronous>, transform_indices = @transform_1, window_bounds = array<i64: 1, 128>}, {pipeline_mode = #tpu.pipeline_mode<synchronous>, transform_indices = @transform_2, window_bounds = array<i64: 1, 128>}, {pipeline_mode = #tpu.pipeline_mode<synchronous>, transform_indices = @transform_3, window_bounds = array<i64: 9, 128, 128>}, {transform_indices = @transform_4, window_bounds = array<i64: 1, 256, 128>}, {transform_indices = @transform_5, window_bounds = array<i64: 1, 1, 128>}, {transform_indices = @transform_6, window_bounds = array<i64: 1, 1, 128>}]} {
    %c0 = arith.constant 0 : index
    %c0_0 = arith.constant 0 : index
    %c0_1 = arith.constant 0 : index
    %0 = vector.load %arg1[%c0, %c0_0, %c0_1] : memref<1x256x128xbf16, #tpu.memory_space<vmem>>, vector<1x256x128xbf16>
    %1 = vector.shape_cast %0 : vector<1x256x128xbf16> to vector<256x128xbf16>
    %2 = arith.extf %1 : vector<256x128xbf16> to vector<256x128xf32>
    %c0_2 = arith.constant 0 : index
    %c0_3 = arith.constant 0 : index
    %3 = vector.load %arg2[%c0_2, %c0_3] : memref<1x128xf32, #tpu.memory_space<vmem>>, vector<1x128xf32>
    %4 = vector.broadcast %3 : vector<1x128xf32> to vector<256x128xf32>
    %5 = arith.mulf %2, %4 : vector<256x128xf32>
    %c0_4 = arith.constant 0 : index
    %c0_5 = arith.constant 0 : index
    %6 = vector.load %arg3[%c0_4, %c0_5] : memref<1x128xf32, #tpu.memory_space<vmem>>, vector<1x128xf32>
    %7 = vector.broadcast %6 : vector<1x128xf32> to vector<256x128xf32>
    %8 = arith.addf %5, %7 : vector<256x128xf32>
    %cst = arith.constant 0.000000e+00 : f32
    %9 = vector.broadcast %cst : f32 to vector<256x128xf32>
    %10 = arith.maximumf %8, %9 : vector<256x128xf32>
    %11 = arith.truncf %10 : vector<256x128xf32> to vector<256x128xbf16>
    %cst_6 = arith.constant 0.000000e+00 : bf16
    %12 = vector.broadcast %cst_6 : bf16 to vector<24x128xbf16>
    %c0_7 = arith.constant 0 : index
    %c0_8 = arith.constant 0 : index
    %13 = vector.load %arg8[%c0_7, %c0_8] : memref<304x128xbf16, #tpu.memory_space<vmem>>, vector<24x128xbf16>
    tpu.vector_store %arg8[%c0_7, %c0_8], %12 {strides = array<i32>} : memref<304x128xbf16, #tpu.memory_space<vmem>>, vector<24x128xbf16>,
    %c280 = arith.constant 280 : index
    %c0_9 = arith.constant 0 : index
    %14 = vector.load %arg8[%c280, %c0_9] : memref<304x128xbf16, #tpu.memory_space<vmem>>, vector<24x128xbf16>
    tpu.vector_store %arg8[%c280, %c0_9], %12 {strides = array<i32>} : memref<304x128xbf16, #tpu.memory_space<vmem>>, vector<24x128xbf16>,
    %c24 = arith.constant 24 : index
    %c0_10 = arith.constant 0 : index
    %15 = vector.load %arg8[%c24, %c0_10] : memref<304x128xbf16, #tpu.memory_space<vmem>>, vector<256x128xbf16>
    tpu.vector_store %arg8[%c24, %c0_10], %11 {strides = array<i32>} : memref<304x128xbf16, #tpu.memory_space<vmem>>, vector<256x128xbf16>,
    %16 = tpu.iota {dimensions = array<i32: 0>} : vector<256x1xi32>
    %c15_i32 = arith.constant 15 : i32
    %17 = vector.broadcast %c15_i32 : i32 to vector<256x1xi32>
    %18 = arith.andi %16, %17 : vector<256x1xi32>
    %c0_i32 = arith.constant 0 : i32
    %19 = vector.broadcast %c0_i32 : i32 to vector<256x1xi32>
    %20 = arith.cmpi ne, %18, %19 : vector<256x1xi32>
    %c15_i32_11 = arith.constant 15 : i32
    %21 = vector.broadcast %c15_i32_11 : i32 to vector<256x1xi32>
    %22 = arith.cmpi ne, %18, %21 : vector<256x1xi32>
    %c7 = arith.constant 7 : index
    %c0_12 = arith.constant 0 : index
    %23 = vector.load %arg8[%c7, %c0_12] : memref<304x128xbf16, #tpu.memory_space<vmem>>, vector<256x128xbf16>
    %cst_13 = arith.constant 0.000000e+00 : bf16
    %24 = vector.broadcast %cst_13 : bf16 to vector<256x128xbf16>
    %25 = vector.shape_cast %20 : vector<256x1xi1> to vector<256x1xi1>
    %26 = vector.broadcast %25 : vector<256x1xi1> to vector<256x128xi1>
    %27 = arith.select %26, %23, %24 : vector<256x128xi1>, vector<256x128xbf16>
    %c0_14 = arith.constant 0 : index
    %c0_15 = arith.constant 0 : index
    %c0_16 = arith.constant 0 : index
    %28 = vector.load %arg4[%c0_14, %c0_15, %c0_16] : memref<9x128x128xbf16, #tpu.memory_space<vmem>>, vector<1x128x128xbf16>
    %29 = vector.shape_cast %28 : vector<1x128x128xbf16> to vector<128x128xbf16>
    %cst_17 = arith.constant dense<0.000000e+00> : vector<256x128xf32>
    %30 = tpu.matmul %27, %29, %cst_17 {dimension_numbers = #tpu.dot_dimension_numbers<[1], [0], [0], [1], [0, 0, 1, 1], [], []>} : vector<256x128xbf16>, vector<128x128xbf16>, vector<256x128xf32> -> vector<256x128xf32>
    %c8 = arith.constant 8 : index
    %c0_18 = arith.constant 0 : index
    %31 = vector.load %arg8[%c8, %c0_18] : memref<304x128xbf16, #tpu.memory_space<vmem>>, vector<256x128xbf16>
    %c1 = arith.constant 1 : index
    %c0_19 = arith.constant 0 : index
    %c0_20 = arith.constant 0 : index
    %32 = vector.load %arg4[%c1, %c0_19, %c0_20] : memref<9x128x128xbf16, #tpu.memory_space<vmem>>, vector<1x128x128xbf16>
    %33 = vector.shape_cast %32 : vector<1x128x128xbf16> to vector<128x128xbf16>
    %cst_21 = arith.constant dense<0.000000e+00> : vector<256x128xf32>
    %34 = tpu.matmul %31, %33, %cst_21 {dimension_numbers = #tpu.dot_dimension_numbers<[1], [0], [0], [1], [0, 0, 1, 1], [], []>} : vector<256x128xbf16>, vector<128x128xbf16>, vector<256x128xf32> -> vector<256x128xf32>
    %35 = arith.addf %30, %34 : vector<256x128xf32>
    %c9 = arith.constant 9 : index
    %c0_22 = arith.constant 0 : index
    %36 = vector.load %arg8[%c9, %c0_22] : memref<304x128xbf16, #tpu.memory_space<vmem>>, vector<256x128xbf16>
    %cst_23 = arith.constant 0.000000e+00 : bf16
    %37 = vector.broadcast %cst_23 : bf16 to vector<256x128xbf16>
    %38 = vector.shape_cast %22 : vector<256x1xi1> to vector<256x1xi1>
    %39 = vector.broadcast %38 : vector<256x1xi1> to vector<256x128xi1>
    %40 = arith.select %39, %36, %37 : vector<256x128xi1>, vector<256x128xbf16>
    %c2 = arith.constant 2 : index
    %c0_24 = arith.constant 0 : index
    %c0_25 = arith.constant 0 : index
    %41 = vector.load %arg4[%c2, %c0_24, %c0_25] : memref<9x128x128xbf16, #tpu.memory_space<vmem>>, vector<1x128x128xbf16>
    %42 = vector.shape_cast %41 : vector<1x128x128xbf16> to vector<128x128xbf16>
    %cst_26 = arith.constant dense<0.000000e+00> : vector<256x128xf32>
    %43 = tpu.matmul %40, %42, %cst_26 {dimension_numbers = #tpu.dot_dimension_numbers<[1], [0], [0], [1], [0, 0, 1, 1], [], []>} : vector<256x128xbf16>, vector<128x128xbf16>, vector<256x128xf32> -> vector<256x128xf32>
    %44 = arith.addf %35, %43 : vector<256x128xf32>
    %c23 = arith.constant 23 : index
    %c0_27 = arith.constant 0 : index
    %45 = vector.load %arg8[%c23, %c0_27] : memref<304x128xbf16, #tpu.memory_space<vmem>>, vector<256x128xbf16>
    %cst_28 = arith.constant 0.000000e+00 : bf16
    %46 = vector.broadcast %cst_28 : bf16 to vector<256x128xbf16>
    %47 = vector.shape_cast %20 : vector<256x1xi1> to vector<256x1xi1>
    %48 = vector.broadcast %47 : vector<256x1xi1> to vector<256x128xi1>
    %49 = arith.select %48, %45, %46 : vector<256x128xi1>, vector<256x128xbf16>
    %c3 = arith.constant 3 : index
    %c0_29 = arith.constant 0 : index
    %c0_30 = arith.constant 0 : index
    %50 = vector.load %arg4[%c3, %c0_29, %c0_30] : memref<9x128x128xbf16, #tpu.memory_space<vmem>>, vector<1x128x128xbf16>
    %51 = vector.shape_cast %50 : vector<1x128x128xbf16> to vector<128x128xbf16>
    %cst_31 = arith.constant dense<0.000000e+00> : vector<256x128xf32>
    %52 = tpu.matmul %49, %51, %cst_31 {dimension_numbers = #tpu.dot_dimension_numbers<[1], [0], [0], [1], [0, 0, 1, 1], [], []>} : vector<256x128xbf16>, vector<128x128xbf16>, vector<256x128xf32> -> vector<256x128xf32>
    %53 = arith.addf %44, %52 : vector<256x128xf32>
    %c24_32 = arith.constant 24 : index
    %c0_33 = arith.constant 0 : index
    %54 = vector.load %arg8[%c24_32, %c0_33] : memref<304x128xbf16, #tpu.memory_space<vmem>>, vector<256x128xbf16>
    %c4 = arith.constant 4 : index
    %c0_34 = arith.constant 0 : index
    %c0_35 = arith.constant 0 : index
    %55 = vector.load %arg4[%c4, %c0_34, %c0_35] : memref<9x128x128xbf16, #tpu.memory_space<vmem>>, vector<1x128x128xbf16>
    %56 = vector.shape_cast %55 : vector<1x128x128xbf16> to vector<128x128xbf16>
    %cst_36 = arith.constant dense<0.000000e+00> : vector<256x128xf32>
    %57 = tpu.matmul %54, %56, %cst_36 {dimension_numbers = #tpu.dot_dimension_numbers<[1], [0], [0], [1], [0, 0, 1, 1], [], []>} : vector<256x128xbf16>, vector<128x128xbf16>, vector<256x128xf32> -> vector<256x128xf32>
    %58 = arith.addf %53, %57 : vector<256x128xf32>
    %c25 = arith.constant 25 : index
    %c0_37 = arith.constant 0 : index
    %59 = vector.load %arg8[%c25, %c0_37] : memref<304x128xbf16, #tpu.memory_space<vmem>>, vector<256x128xbf16>
    %cst_38 = arith.constant 0.000000e+00 : bf16
    %60 = vector.broadcast %cst_38 : bf16 to vector<256x128xbf16>
    %61 = vector.shape_cast %22 : vector<256x1xi1> to vector<256x1xi1>
    %62 = vector.broadcast %61 : vector<256x1xi1> to vector<256x128xi1>
    %63 = arith.select %62, %59, %60 : vector<256x128xi1>, vector<256x128xbf16>
    %c5 = arith.constant 5 : index
    %c0_39 = arith.constant 0 : index
    %c0_40 = arith.constant 0 : index
    %64 = vector.load %arg4[%c5, %c0_39, %c0_40] : memref<9x128x128xbf16, #tpu.memory_space<vmem>>, vector<1x128x128xbf16>
    %65 = vector.shape_cast %64 : vector<1x128x128xbf16> to vector<128x128xbf16>
    %cst_41 = arith.constant dense<0.000000e+00> : vector<256x128xf32>
    %66 = tpu.matmul %63, %65, %cst_41 {dimension_numbers = #tpu.dot_dimension_numbers<[1], [0], [0], [1], [0, 0, 1, 1], [], []>} : vector<256x128xbf16>, vector<128x128xbf16>, vector<256x128xf32> -> vector<256x128xf32>
    %67 = arith.addf %58, %66 : vector<256x128xf32>
    %c39 = arith.constant 39 : index
    %c0_42 = arith.constant 0 : index
    %68 = vector.load %arg8[%c39, %c0_42] : memref<304x128xbf16, #tpu.memory_space<vmem>>, vector<256x128xbf16>
    %cst_43 = arith.constant 0.000000e+00 : bf16
    %69 = vector.broadcast %cst_43 : bf16 to vector<256x128xbf16>
    %70 = vector.shape_cast %20 : vector<256x1xi1> to vector<256x1xi1>
    %71 = vector.broadcast %70 : vector<256x1xi1> to vector<256x128xi1>
    %72 = arith.select %71, %68, %69 : vector<256x128xi1>, vector<256x128xbf16>
    %c6 = arith.constant 6 : index
    %c0_44 = arith.constant 0 : index
    %c0_45 = arith.constant 0 : index
    %73 = vector.load %arg4[%c6, %c0_44, %c0_45] : memref<9x128x128xbf16, #tpu.memory_space<vmem>>, vector<1x128x128xbf16>
    %74 = vector.shape_cast %73 : vector<1x128x128xbf16> to vector<128x128xbf16>
    %cst_46 = arith.constant dense<0.000000e+00> : vector<256x128xf32>
    %75 = tpu.matmul %72, %74, %cst_46 {dimension_numbers = #tpu.dot_dimension_numbers<[1], [0], [0], [1], [0, 0, 1, 1], [], []>} : vector<256x128xbf16>, vector<128x128xbf16>, vector<256x128xf32> -> vector<256x128xf32>
    %76 = arith.addf %67, %75 : vector<256x128xf32>
    %c40 = arith.constant 40 : index
    %c0_47 = arith.constant 0 : index
    %77 = vector.load %arg8[%c40, %c0_47] : memref<304x128xbf16, #tpu.memory_space<vmem>>, vector<256x128xbf16>
    %c7_48 = arith.constant 7 : index
    %c0_49 = arith.constant 0 : index
    %c0_50 = arith.constant 0 : index
    %78 = vector.load %arg4[%c7_48, %c0_49, %c0_50] : memref<9x128x128xbf16, #tpu.memory_space<vmem>>, vector<1x128x128xbf16>
    %79 = vector.shape_cast %78 : vector<1x128x128xbf16> to vector<128x128xbf16>
    %cst_51 = arith.constant dense<0.000000e+00> : vector<256x128xf32>
    %80 = tpu.matmul %77, %79, %cst_51 {dimension_numbers = #tpu.dot_dimension_numbers<[1], [0], [0], [1], [0, 0, 1, 1], [], []>} : vector<256x128xbf16>, vector<128x128xbf16>, vector<256x128xf32> -> vector<256x128xf32>
    %81 = arith.addf %76, %80 : vector<256x128xf32>
    %c41 = arith.constant 41 : index
    %c0_52 = arith.constant 0 : index
    %82 = vector.load %arg8[%c41, %c0_52] : memref<304x128xbf16, #tpu.memory_space<vmem>>, vector<256x128xbf16>
    %cst_53 = arith.constant 0.000000e+00 : bf16
    %83 = vector.broadcast %cst_53 : bf16 to vector<256x128xbf16>
    %84 = vector.shape_cast %22 : vector<256x1xi1> to vector<256x1xi1>
    %85 = vector.broadcast %84 : vector<256x1xi1> to vector<256x128xi1>
    %86 = arith.select %85, %82, %83 : vector<256x128xi1>, vector<256x128xbf16>
    %c8_54 = arith.constant 8 : index
    %c0_55 = arith.constant 0 : index
    %c0_56 = arith.constant 0 : index
    %87 = vector.load %arg4[%c8_54, %c0_55, %c0_56] : memref<9x128x128xbf16, #tpu.memory_space<vmem>>, vector<1x128x128xbf16>
    %88 = vector.shape_cast %87 : vector<1x128x128xbf16> to vector<128x128xbf16>
    %cst_57 = arith.constant dense<0.000000e+00> : vector<256x128xf32>
    %89 = tpu.matmul %86, %88, %cst_57 {dimension_numbers = #tpu.dot_dimension_numbers<[1], [0], [0], [1], [0, 0, 1, 1], [], []>} : vector<256x128xbf16>, vector<128x128xbf16>, vector<256x128xf32> -> vector<256x128xf32>
    %90 = arith.addf %81, %89 : vector<256x128xf32>
    %91 = arith.truncf %90 : vector<256x128xf32> to vector<256x128xbf16>
    %c0_58 = arith.constant 0 : index
    %c0_59 = arith.constant 0 : index
    %c0_60 = arith.constant 0 : index
    %92 = vector.load %arg5[%c0_58, %c0_59, %c0_60] : memref<1x256x128xbf16, #tpu.memory_space<vmem>>, vector<1x256x128xbf16>
    %93 = vector.shape_cast %92 : vector<1x256x128xbf16> to vector<256x128xbf16>
    %94 = vector.shape_cast %91 : vector<256x128xbf16> to vector<1x256x128xbf16>
    tpu.vector_store %arg5[%c0_58, %c0_59, %c0_60], %94 {strides = array<i32>} : memref<1x256x128xbf16, #tpu.memory_space<vmem>>, vector<1x256x128xbf16>,
    %cst_61 = arith.constant dense<0.000000e+00> : vector<128xf32>
    %95 = vector.multi_reduction <add>, %90, %cst_61 [0] : vector<256x128xf32> to vector<128xf32>
    %96 = vector.shape_cast %95 : vector<128xf32> to vector<1x128xf32>
    %c0_62 = arith.constant 0 : index
    %c0_63 = arith.constant 0 : index
    %c0_64 = arith.constant 0 : index
    %97 = vector.load %arg6[%c0_62, %c0_63, %c0_64] : memref<1x1x128xf32, #tpu.memory_space<vmem>>, vector<1x1x128xf32>
    %98 = vector.shape_cast %97 : vector<1x1x128xf32> to vector<1x128xf32>
    %99 = vector.shape_cast %96 : vector<1x128xf32> to vector<1x1x128xf32>
    tpu.vector_store %arg6[%c0_62, %c0_63, %c0_64], %99 {strides = array<i32>} : memref<1x1x128xf32, #tpu.memory_space<vmem>>, vector<1x1x128xf32>,
    %100 = arith.mulf %90, %90 : vector<256x128xf32>
    %cst_65 = arith.constant dense<0.000000e+00> : vector<128xf32>
    %101 = vector.multi_reduction <add>, %100, %cst_65 [0] : vector<256x128xf32> to vector<128xf32>
    %102 = vector.shape_cast %101 : vector<128xf32> to vector<1x128xf32>
    %c0_66 = arith.constant 0 : index
    %c0_67 = arith.constant 0 : index
    %c0_68 = arith.constant 0 : index
    %103 = vector.load %arg7[%c0_66, %c0_67, %c0_68] : memref<1x1x128xf32, #tpu.memory_space<vmem>>, vector<1x1x128xf32>
    %104 = vector.shape_cast %103 : vector<1x1x128xf32> to vector<1x128xf32>
    %105 = vector.shape_cast %102 : vector<1x128xf32> to vector<1x1x128xf32>
    tpu.vector_store %arg7[%c0_66, %c0_67, %c0_68], %105 {strides = array<i32>} : memref<1x1x128xf32, #tpu.memory_space<vmem>>, vector<1x1x128xf32>,
    return
  }
  func.func @transform_0(%arg0: i32) -> (i32, i32, i32) {
    %c0_i32 = arith.constant 0 : i32
    %c0_i32_0 = arith.constant 0 : i32
    %c0_i32_1 = arith.constant 0 : i32
    return %arg0, %c0_i32, %c0_i32_0 : i32, i32, i32
  }
  func.func @transform_1(%arg0: i32) -> (i32, i32) {
    %c0_i32 = arith.constant 0 : i32
    %c0_i32_0 = arith.constant 0 : i32
    %c0_i32_1 = arith.constant 0 : i32
    return %c0_i32, %c0_i32_0 : i32, i32
  }
  func.func @transform_2(%arg0: i32) -> (i32, i32) {
    %c0_i32 = arith.constant 0 : i32
    %c0_i32_0 = arith.constant 0 : i32
    %c0_i32_1 = arith.constant 0 : i32
    return %c0_i32, %c0_i32_0 : i32, i32
  }
  func.func @transform_3(%arg0: i32) -> (i32, i32, i32) {
    %c0_i32 = arith.constant 0 : i32
    %c0_i32_0 = arith.constant 0 : i32
    %c0_i32_1 = arith.constant 0 : i32
    %c0_i32_2 = arith.constant 0 : i32
    return %c0_i32, %c0_i32_0, %c0_i32_1 : i32, i32, i32
  }
  func.func @transform_4(%arg0: i32) -> (i32, i32, i32) {
    %c0_i32 = arith.constant 0 : i32
    %c0_i32_0 = arith.constant 0 : i32
    %c0_i32_1 = arith.constant 0 : i32
    return %arg0, %c0_i32, %c0_i32_0 : i32, i32, i32
  }
  func.func @transform_5(%arg0: i32) -> (i32, i32, i32) {
    %c0_i32 = arith.constant 0 : i32
    %c0_i32_0 = arith.constant 0 : i32
    %c0_i32_1 = arith.constant 0 : i32
    return %arg0, %c0_i32, %c0_i32_0 : i32, i32, i32
  }
  func.func @transform_6(%arg0: i32) -> (i32, i32, i32) {
    %c0_i32 = arith.constant 0 : i32
    %c0_i32_0 = arith.constant 0 : i32
    %c0_i32_1 = arith.constant 0 : i32
    return %arg0, %c0_i32, %c0_i32_0 : i32, i32, i32
  }
}

module attributes {stable_mosaic.version = 11 : i64} {
  func.func @_affine_relu_kernel(%arg0: i32, %arg1: memref<1x256x128xbf16, #tpu.memory_space<vmem>>, %arg2: memref<1x128xf32, #tpu.memory_space<vmem>>, %arg3: memref<1x128xf32, #tpu.memory_space<vmem>>, %arg4: memref<1x256x128xf32, #tpu.memory_space<vmem>>) attributes {dimension_semantics = [#tpu.dimension_semantics<parallel>], iteration_bounds = array<i64: 2>, scalar_prefetch = 0 : i64, scratch_operands = 0 : i64, tpu.core_type = #tpu.core_type<tc>, window_params = [{transform_indices = @transform_0, window_bounds = array<i64: 1, 256, 128>}, {pipeline_mode = #tpu.pipeline_mode<synchronous>, transform_indices = @transform_1, window_bounds = array<i64: 1, 128>}, {pipeline_mode = #tpu.pipeline_mode<synchronous>, transform_indices = @transform_2, window_bounds = array<i64: 1, 128>}, {transform_indices = @transform_3, window_bounds = array<i64: 1, 256, 128>}]} {
    %c0 = arith.constant 0 : index
    %c0_0 = arith.constant 0 : index
    %c0_1 = arith.constant 0 : index
    %0 = vector.load %arg1[%c0, %c0_0, %c0_1] : memref<1x256x128xbf16, #tpu.memory_space<vmem>>, vector<1x256x128xbf16>
    %1 = vector.shape_cast %0 : vector<1x256x128xbf16> to vector<256x128xbf16>
    %2 = arith.extf %1 : vector<256x128xbf16> to vector<256x128xf32>
    %c0_2 = arith.constant 0 : index
    %c0_3 = arith.constant 0 : index
    %3 = vector.load %arg2[%c0_2, %c0_3] : memref<1x128xf32, #tpu.memory_space<vmem>>, vector<1x128xf32>
    %4 = vector.broadcast %3 : vector<1x128xf32> to vector<256x128xf32>
    %5 = arith.mulf %2, %4 : vector<256x128xf32>
    %c0_4 = arith.constant 0 : index
    %c0_5 = arith.constant 0 : index
    %6 = vector.load %arg3[%c0_4, %c0_5] : memref<1x128xf32, #tpu.memory_space<vmem>>, vector<1x128xf32>
    %7 = vector.broadcast %6 : vector<1x128xf32> to vector<256x128xf32>
    %8 = arith.addf %5, %7 : vector<256x128xf32>
    %cst = arith.constant 0.000000e+00 : f32
    %9 = vector.broadcast %cst : f32 to vector<256x128xf32>
    %10 = arith.maximumf %8, %9 : vector<256x128xf32>
    %c0_6 = arith.constant 0 : index
    %c0_7 = arith.constant 0 : index
    %c0_8 = arith.constant 0 : index
    %11 = vector.load %arg4[%c0_6, %c0_7, %c0_8] : memref<1x256x128xf32, #tpu.memory_space<vmem>>, vector<1x256x128xf32>
    %12 = vector.shape_cast %11 : vector<1x256x128xf32> to vector<256x128xf32>
    %13 = vector.shape_cast %10 : vector<256x128xf32> to vector<1x256x128xf32>
    tpu.vector_store %arg4[%c0_6, %c0_7, %c0_8], %13 {strides = array<i32>} : memref<1x256x128xf32, #tpu.memory_space<vmem>>, vector<1x256x128xf32>,
    return
  }
  func.func @transform_0(%arg0: i32) -> (i32, i32, i32) {
    %c0_i32 = arith.constant 0 : i32
    %c0_i32_0 = arith.constant 0 : i32
    %c0_i32_1 = arith.constant 0 : i32
    return %arg0, %c0_i32, %c0_i32_0 : i32, i32, i32
  }
  func.func @transform_1(%arg0: i32) -> (i32, i32) {
    %c0_i32 = arith.constant 0 : i32
    %c0_i32_0 = arith.constant 0 : i32
    %c0_i32_1 = arith.constant 0 : i32
    return %c0_i32, %c0_i32_0 : i32, i32
  }
  func.func @transform_2(%arg0: i32) -> (i32, i32) {
    %c0_i32 = arith.constant 0 : i32
    %c0_i32_0 = arith.constant 0 : i32
    %c0_i32_1 = arith.constant 0 : i32
    return %c0_i32, %c0_i32_0 : i32, i32
  }
  func.func @transform_3(%arg0: i32) -> (i32, i32, i32) {
    %c0_i32 = arith.constant 0 : i32
    %c0_i32_0 = arith.constant 0 : i32
    %c0_i32_1 = arith.constant 0 : i32
    return %arg0, %c0_i32, %c0_i32_0 : i32, i32, i32
  }
}

</mosaic_0001>

<llo_original>
// kernel: double_conv.5
$region0: #{double_conv.5}
  #allocation0 [shape = 'u32[]', space=smem, size = 0x4, offset = 0x4, fixed_abs, tag = 'smem constant byte address 0x4 - core index']
  #allocation1 [shape = 'u32[72,128]{1,0:T(1,128)}', space=vmem, size = 0x9000, scoped, tag = 'internal scratch']
  %s0 = inlined_call_operand.vmem [shape: bf16[2,256,128], index: 0, kind: input, shape index: {}]
  %s1 = inlined_call_operand.vmem [shape: f32[1,128], index: 1, kind: input, shape index: {}]
  %s2 = inlined_call_operand.vmem [shape: f32[1,128], index: 2, kind: input, shape index: {}]
  %s3 = inlined_call_operand.vmem [shape: f32[2,256,128], index: 3, kind: output, shape index: {}]
  %s4 = sld [smem:[#allocation0]]
  $region45: #{double_conv.5} parent=0
    _
  %s6 = ssub.s32 1, %s4
  %s7 = scalar_select 0, %s6, %s4
  loop: start=0, step=1, limit=4
  $region2: #{double_conv.5} parent=0 // loop_pre_header
    _
  $region3: #{double_conv.5} parent=0 // loop_header
    %s9 = sphi 0, %s13
    %p10 = scmp.ge.s32.totalorder %s9, 4
    %s19 = sphi 0, %s21
    %s22 = sphi 0, %s19
    %s23 = sphi 0, %s22
    %s39 = sphi 0, %s23
    %s43 = sphi 0, %s43
    %s45 = sphi 0, %s43
    %s46 = sphi 0, %s45
    %s60 = sphi 0, %s46
    %s64 = sphi 0, %s64
    %s66 = sphi 0, %s64
    %s67 = sphi 0, %s66
    %s81 = sphi 0, %s67
    %s87 = sphi 0, %s89
    %s90 = sphi 0, %s87
    %s91 = sphi 0, %s90
    %s107 = sphi 0, %s91
  $region4: #{double_conv.5} parent=0 // loop_header_branch
    %12 = sbr.rel (%p10) target = $region8
  $region5: #{double_conv.5} parent=0 // loop_body
    %s14 = ssub.s32 %s9, 1
    %s15 = ssub.s32 %s9, 2
    %s16 = sadd.s32 %s9, 1
    %s17 = ssub.s32 %s9, %s16
    %p18 = scmp.eq.s32.totalorder %s17, 0
    %s20 = sadd.s32 %s19, 1
    %s21 = scalar_select %p18, %s19, %s20
    %p24 = pneg %p18
    %p25 = scmp.eq.s32.totalorder %s9, 1
    %p26 = por %p24, %p25
    %p27 = scmp.ne.s32.totalorder %s19, %s22
    %p28 = scmp.eq.s32.totalorder %s9, 0
    %p29 = por %p27, %p28
    %p30 = scmp.ne.s32.totalorder %s19, %s22
    %p31 = scmp.eq.s32.totalorder %s14, 1
    %p32 = por %p30, %p31
    %p33 = scmp.ne.s32.totalorder %s22, %s23
    %p34 = scmp.eq.s32.totalorder %s14, 0
    %p35 = por %p33, %p34
    %p36 = scmp.ne.s32.totalorder %s22, %s23
    %p37 = scmp.eq.s32.totalorder %s15, 1
    %p38 = por %p36, %p37
    %p40 = scmp.ne.s32.totalorder %s23, %s39
    %p41 = scmp.eq.s32.totalorder %s15, 0
    %p42 = por %p40, %p41
    %s44 = sadd.s32 %s43, 1
    %p47 = scmp.eq.s32.totalorder %s9, 1
    %p48 = scmp.ne.s32.totalorder %s43, %s45
    %p49 = scmp.eq.s32.totalorder %s9, 0
    %p50 = por %p48, %p49
    %p51 = scmp.ne.s32.totalorder %s43, %s45
    %p52 = scmp.eq.s32.totalorder %s14, 1
    %p53 = por %p51, %p52
    %p54 = scmp.ne.s32.totalorder %s45, %s46
    %p55 = scmp.eq.s32.totalorder %s14, 0
    %p56 = por %p54, %p55
    %p57 = scmp.ne.s32.totalorder %s45, %s46
    %p58 = scmp.eq.s32.totalorder %s15, 1
    %p59 = por %p57, %p58
    %p61 = scmp.ne.s32.totalorder %s46, %s60
    %p62 = scmp.eq.s32.totalorder %s15, 0
    %p63 = por %p61, %p62
    %s65 = sadd.s32 %s64, 1
    %p68 = scmp.eq.s32.totalorder %s9, 1
    %p69 = scmp.ne.s32.totalorder %s64, %s66
    %p70 = scmp.eq.s32.totalorder %s9, 0
    %p71 = por %p69, %p70
    %p72 = scmp.ne.s32.totalorder %s64, %s66
    %p73 = scmp.eq.s32.totalorder %s14, 1
    %p74 = por %p72, %p73
    %p75 = scmp.ne.s32.totalorder %s66, %s67
    %p76 = scmp.eq.s32.totalorder %s14, 0
    %p77 = por %p75, %p76
    %p78 = scmp.ne.s32.totalorder %s66, %s67
    %p79 = scmp.eq.s32.totalorder %s15, 1
    %p80 = por %p78, %p79
    %p82 = scmp.ne.s32.totalorder %s67, %s81
    %p83 = scmp.eq.s32.totalorder %s15, 0
    %p84 = por %p82, %p83
    %s85 = ssub.s32 %s9, %s16
    %p86 = scmp.eq.s32.totalorder %s85, 0
    %s88 = sadd.s32 %s87, 1
    %s89 = scalar_select %p86, %s87, %s88
    %p92 = pneg %p86
    %p93 = scmp.eq.s32.totalorder %s9, 1
    %p94 = por %p92, %p93
    %p95 = scmp.ne.s32.totalorder %s87, %s90
    %p96 = scmp.eq.s32.totalorder %s9, 0
    %p97 = por %p95, %p96
    %p98 = scmp.ne.s32.totalorder %s87, %s90
    %p99 = scmp.eq.s32.totalorder %s14, 1
    %p100 = por %p98, %p99
    %p101 = scmp.ne.s32.totalorder %s90, %s91
    %p102 = scmp.eq.s32.totalorder %s14, 0
    %p103 = por %p101, %p102
    %p104 = scmp.ne.s32.totalorder %s90, %s91
    %p105 = scmp.eq.s32.totalorder %s15, 1
    %p106 = por %p104, %p105
    %p108 = scmp.ne.s32.totalorder %s91, %s107
    %p109 = scmp.eq.s32.totalorder %s15, 0
    %p110 = por %p108, %p109
    %p111 = scmp.le.s32.totalorder 1, %s9
    %p112 = scmp.lt.s32.totalorder %s9, 3
    %p113 = pnand %p111, %p112
    %p114 = pneg %p113
    // Predicated region
    $region9: #{double_conv.5} parent=5 // pred_check
      _
    $region10: #{double_conv.5} parent=5 // pred_check_branch
      %116 = sbr.rel (%p113) target = $region12
    $region11: #{double_conv.5} parent=5 // pred_region
      %s117 = ssub.s32 %s9, 1
      // Predicated region
      $region13: #{double_conv.5} parent=11 // pred_check
        %p118 = pneg %p56
      $region14: #{double_conv.5} parent=11 // pred_check_branch
        %120 = sbr.rel (%p118) target = $region16
      $region15: #{double_conv.5} parent=11 // pred_region
        _
      $region16: #{double_conv.5} parent=11 // pred_fallthru
        _
      // Predicated region
      $region17: #{double_conv.5} parent=11 // pred_check
        %p121 = pneg %p77
      $region18: #{double_conv.5} parent=11 // pred_check_branch
        %123 = sbr.rel (%p121) target = $region20
      $region19: #{double_conv.5} parent=11 // pred_region
        _
      $region20: #{double_conv.5} parent=11 // pred_fallthru
        _
    $region12: #{double_conv.5} parent=5 // pred_fallthru
      _
    %p124 = scmp.lt.s32.totalorder %s9, 2
    // Predicated region
    $region21: #{double_conv.5} parent=5 // pred_check
      %p125 = pneg %p124
    $region22: #{double_conv.5} parent=5 // pred_check_branch
      %127 = sbr.rel (%p125) target = $region24
    $region23: #{double_conv.5} parent=5 // pred_region
      // Predicated region
      $region25: #{double_conv.5} parent=23 // pred_check
        %p128 = pneg %p29
      $region26: #{double_conv.5} parent=23 // pred_check_branch
        %130 = sbr.rel (%p128) target = $region28
      $region27: #{double_conv.5} parent=23 // pred_region
        %p131 = scmp.lt.s32.totalorder %s9, 1
        %s132 = scalar_select %p131, %s9, 1
        %s133 = smul.addr %s132, 32
        %s134 = smul.addr %s133, 4
        %s135 = scalar_lea.vmem %s0, %s134
      $region28: #{double_conv.5} parent=23 // pred_fallthru
        _
    $region24: #{double_conv.5} parent=5 // pred_fallthru
      _
    %p136 = scmp.le.s32.totalorder 1, %s9
    %p137 = scmp.lt.s32.totalorder %s9, 3
    %p138 = pnand %p136, %p137
    %p139 = pneg %p138
    // Predicated region
    $region29: #{double_conv.5} parent=5 // pred_check
      _
    $region30: #{double_conv.5} parent=5 // pred_check_branch
      %141 = sbr.rel (%p138) target = $region32
    $region31: #{double_conv.5} parent=5 // pred_region
      %s142 = ssub.s32 %s9, 1
      %p143 = scmp.lt.s32.totalorder %s14, 1
      %s144 = scalar_select %p143, %s14, 1
      %s145 = smul.addr %s144, 32
      %s146 = smul.addr %s145, 4
      %s147 = scalar_lea.vmem %s0, %s146
      %p148 = pneg %p35
      %p149 = pneg %p32
      %p150 = pneg %p56
      %p151 = pneg %p53
      %p152 = pneg %p77
      %p153 = pneg %p74
      %p154 = pneg %p103
      %p155 = pneg %p100
      %p156 = scmp.lt.s32.totalorder %s14, 1
      %s157 = scalar_select %p156, %s14, 1
      %s158 = smul.addr %s157, 32
      %s159 = smul.addr %s158, 8
      %s160 = scalar_lea.vmem %s3, %s159
      %p161 = scmp.lt.s32.totalorder %s14, 1
      %s162 = scalar_select %p161, %s14, 1
      %s163 = smul.addr %s162, 32
      %s164 = smul.addr %s163, 4
      %s165 = scalar_lea.vmem %s0, %s164
      %p166 = scmp.lt.s32.totalorder %s14, 1
      %s167 = scalar_select %p166, %s14, 1
      %s168 = smul.addr %s167, 32
      %s169 = smul.addr %s168, 8
      %s170 = scalar_lea.vmem %s3, %s169
      %v171 = vld [vmem:[%s165] sm:$0xf]
      %v172 = vld [vmem:[%s165 + $0x4] sm:$0xf]
      %v173 = vld [vmem:[%s165 + $0x8] sm:$0xf]
      %v174 = vld [vmem:[%s165 + $0xc] sm:$0xf]
      %v175 = vld [vmem:[%s165 + $0x10] sm:$0xf]
      %v176 = vld [vmem:[%s165 + $0x14] sm:$0xf]
      %v177 = vld [vmem:[%s165 + $0x18] sm:$0xf]
      %v178 = vld [vmem:[%s165 + $0x1c] sm:$0xf]
      %v179 = vld [vmem:[%s165 + $0x20] sm:$0xf]
      %v180 = vld [vmem:[%s165 + $0x24] sm:$0xf]
      %v181 = vld [vmem:[%s165 + $0x28] sm:$0xf]
      %v182 = vld [vmem:[%s165 + $0x2c] sm:$0xf]
      %v183 = vld [vmem:[%s165 + $0x30] sm:$0xf]
      %v184 = vld [vmem:[%s165 + $0x34] sm:$0xf]
      %v185 = vld [vmem:[%s165 + $0x38] sm:$0xf]
      %v186 = vld [vmem:[%s165 + $0x3c] sm:$0xf]
      %v187 = vld [vmem:[%s165 + $0x40] sm:$0xf]
      %v188 = vld [vmem:[%s165 + $0x44] sm:$0xf]
      %v189 = vld [vmem:[%s165 + $0x48] sm:$0xf]
      %v190 = vld [vmem:[%s165 + $0x4c] sm:$0xf]
      %v191 = vld [vmem:[%s165 + $0x50] sm:$0xf]
      %v192 = vld [vmem:[%s165 + $0x54] sm:$0xf]
      %v193 = vld [vmem:[%s165 + $0x58] sm:$0xf]
      %v194 = vld [vmem:[%s165 + $0x5c] sm:$0xf]
      %v195 = vld [vmem:[%s165 + $0x60] sm:$0xf]
      %v196 = vld [vmem:[%s165 + $0x64] sm:$0xf]
      %v197 = vld [vmem:[%s165 + $0x68] sm:$0xf]
      %v198 = vld [vmem:[%s165 + $0x6c] sm:$0xf]
      %v199 = vld [vmem:[%s165 + $0x70] sm:$0xf]
      %v200 = vld [vmem:[%s165 + $0x74] sm:$0xf]
      %v201 = vld [vmem:[%s165 + $0x78] sm:$0xf]
      %v202 = vld [vmem:[%s165 + $0x7c] sm:$0xf]
      %v203 = vunpack.c.l.bf16 %v171
      %v204 = vunpack.c.l.bf16 %v172
      %v205 = vunpack.c.l.bf16 %v173
      %v206 = vunpack.c.l.bf16 %v174
      %v207 = vunpack.c.l.bf16 %v175
      %v208 = vunpack.c.l.bf16 %v176
      %v209 = vunpack.c.l.bf16 %v177
      %v210 = vunpack.c.l.bf16 %v178
      %v211 = vunpack.c.l.bf16 %v179
      %v212 = vunpack.c.l.bf16 %v180
      %v213 = vunpack.c.l.bf16 %v181
      %v214 = vunpack.c.l.bf16 %v182
      %v215 = vunpack.c.l.bf16 %v183
      %v216 = vunpack.c.l.bf16 %v184
      %v217 = vunpack.c.l.bf16 %v185
      %v218 = vunpack.c.l.bf16 %v186
      %v219 = vunpack.c.l.bf16 %v187
      %v220 = vunpack.c.l.bf16 %v188
      %v221 = vunpack.c.l.bf16 %v189
      %v222 = vunpack.c.l.bf16 %v190
      %v223 = vunpack.c.l.bf16 %v191
      %v224 = vunpack.c.l.bf16 %v192
      %v225 = vunpack.c.l.bf16 %v193
      %v226 = vunpack.c.l.bf16 %v194
      %v227 = vunpack.c.l.bf16 %v195
      %v228 = vunpack.c.l.bf16 %v196
      %v229 = vunpack.c.l.bf16 %v197
      %v230 = vunpack.c.l.bf16 %v198
      %v231 = vunpack.c.l.bf16 %v199
      %v232 = vunpack.c.l.bf16 %v200
      %v233 = vunpack.c.l.bf16 %v201
      %v234 = vunpack.c.l.bf16 %v202
      %v235 = vld [vmem:[%s1] sm:$0x1]
      %v237 = vperm.slane %v235, 0
      %v239 = vmul.f32 %v203, %v237
      %v240 = vmul.f32 %v204, %v237
      %v241 = vmul.f32 %v205, %v237
      %v242 = vmul.f32 %v206, %v237
      %v243 = vmul.f32 %v207, %v237
      %v244 = vmul.f32 %v208, %v237
      %v245 = vmul.f32 %v209, %v237
      %v246 = vmul.f32 %v210, %v237
      %v247 = vmul.f32 %v211, %v237
      %v248 = vmul.f32 %v212, %v237
      %v249 = vmul.f32 %v213, %v237
      %v250 = vmul.f32 %v214, %v237
      %v251 = vmul.f32 %v215, %v237
      %v252 = vmul.f32 %v216, %v237
      %v253 = vmul.f32 %v217, %v237
      %v254 = vmul.f32 %v218, %v237
      %v255 = vmul.f32 %v219, %v237
      %v256 = vmul.f32 %v220, %v237
      %v257 = vmul.f32 %v221, %v237
      %v258 = vmul.f32 %v222, %v237
      %v259 = vmul.f32 %v223, %v237
      %v260 = vmul.f32 %v224, %v237
      %v261 = vmul.f32 %v225, %v237
      %v262 = vmul.f32 %v226, %v237
      %v263 = vmul.f32 %v227, %v237
      %v264 = vmul.f32 %v228, %v237
      %v265 = vmul.f32 %v229, %v237
      %v266 = vmul.f32 %v230, %v237
      %v267 = vmul.f32 %v231, %v237
      %v268 = vmul.f32 %v232, %v237
      %v269 = vmul.f32 %v233, %v237
      %v270 = vmul.f32 %v234, %v237
      %v271 = vld [vmem:[%s2] sm:$0x1]
      %v273 = vperm.slane %v271, 0
      %v275 = vadd.f32 %v239, %v273
      %v276 = vadd.f32 %v240, %v273
      %v277 = vadd.f32 %v241, %v273
      %v278 = vadd.f32 %v242, %v273
      %v279 = vadd.f32 %v243, %v273
      %v280 = vadd.f32 %v244, %v273
      %v281 = vadd.f32 %v245, %v273
      %v282 = vadd.f32 %v246, %v273
      %v283 = vadd.f32 %v247, %v273
      %v284 = vadd.f32 %v248, %v273
      %v285 = vadd.f32 %v249, %v273
      %v286 = vadd.f32 %v250, %v273
      %v287 = vadd.f32 %v251, %v273
      %v288 = vadd.f32 %v252, %v273
      %v289 = vadd.f32 %v253, %v273
      %v290 = vadd.f32 %v254, %v273
      %v291 = vadd.f32 %v255, %v273
      %v292 = vadd.f32 %v256, %v273
      %v293 = vadd.f32 %v257, %v273
      %v294 = vadd.f32 %v258, %v273
      %v295 = vadd.f32 %v259, %v273
      %v296 = vadd.f32 %v260, %v273
      %v297 = vadd.f32 %v261, %v273
      %v298 = vadd.f32 %v262, %v273
      %v299 = vadd.f32 %v263, %v273
      %v300 = vadd.f32 %v264, %v273
      %v301 = vadd.f32 %v265, %v273
      %v302 = vadd.f32 %v266, %v273
      %v303 = vadd.f32 %v267, %v273
      %v304 = vadd.f32 %v268, %v273
      %v305 = vadd.f32 %v269, %v273
      %v306 = vadd.f32 %v270, %v273
      %v307 = vmax.f32 %v275, 0.0
      %v308 = vmax.f32 %v276, 0.0
      %v309 = vmax.f32 %v277, 0.0
      %v310 = vmax.f32 %v278, 0.0
      %v311 = vmax.f32 %v279, 0.0
      %v312 = vmax.f32 %v280, 0.0
      %v313 = vmax.f32 %v281, 0.0
      %v314 = vmax.f32 %v282, 0.0
      %v315 = vmax.f32 %v283, 0.0
      %v316 = vmax.f32 %v284, 0.0
      %v317 = vmax.f32 %v285, 0.0
      %v318 = vmax.f32 %v286, 0.0
      %v319 = vmax.f32 %v287, 0.0
      %v320 = vmax.f32 %v288, 0.0
      %v321 = vmax.f32 %v289, 0.0
      %v322 = vmax.f32 %v290, 0.0
      %v323 = vmax.f32 %v291, 0.0
      %v324 = vmax.f32 %v292, 0.0
      %v325 = vmax.f32 %v293, 0.0
      %v326 = vmax.f32 %v294, 0.0
      %v327 = vmax.f32 %v295, 0.0
      %v328 = vmax.f32 %v296, 0.0
      %v329 = vmax.f32 %v297, 0.0
      %v330 = vmax.f32 %v298, 0.0
      %v331 = vmax.f32 %v299, 0.0
      %v332 = vmax.f32 %v300, 0.0
      %v333 = vmax.f32 %v301, 0.0
      %v334 = vmax.f32 %v302, 0.0
      %v335 = vmax.f32 %v303, 0.0
      %v336 = vmax.f32 %v304, 0.0
      %v337 = vmax.f32 %v305, 0.0
      %v338 = vmax.f32 %v306, 0.0
      %339 = vst [vmem:[%s170] sm:$0xff] %v307
      %340 = vst [vmem:[%s170 + $0x8] sm:$0xff] %v308
      %341 = vst [vmem:[%s170 + $0x10] sm:$0xff] %v309
      %342 = vst [vmem:[%s170 + $0x18] sm:$0xff] %v310
      %343 = vst [vmem:[%s170 + $0x20] sm:$0xff] %v311
      %344 = vst [vmem:[%s170 + $0x28] sm:$0xff] %v312
      %345 = vst [vmem:[%s170 + $0x30] sm:$0xff] %v313
      %346 = vst [vmem:[%s170 + $0x38] sm:$0xff] %v314
      %347 = vst [vmem:[%s170 + $0x40] sm:$0xff] %v315
      %348 = vst [vmem:[%s170 + $0x48] sm:$0xff] %v316
      %349 = vst [vmem:[%s170 + $0x50] sm:$0xff] %v317
      %350 = vst [vmem:[%s170 + $0x58] sm:$0xff] %v318
      %351 = vst [vmem:[%s170 + $0x60] sm:$0xff] %v319
      %352 = vst [vmem:[%s170 + $0x68] sm:$0xff] %v320
      %353 = vst [vmem:[%s170 + $0x70] sm:$0xff] %v321
      %354 = vst [vmem:[%s170 + $0x78] sm:$0xff] %v322
      %355 = vst [vmem:[%s170 + $0x80] sm:$0xff] %v323
      %356 = vst [vmem:[%s170 + $0x88] sm:$0xff] %v324
      %357 = vst [vmem:[%s170 + $0x90] sm:$0xff] %v325
      %358 = vst [vmem:[%s170 + $0x98] sm:$0xff] %v326
      %359 = vst [vmem:[%s170 + $0xa0] sm:$0xff] %v327
      %360 = vst [vmem:[%s170 + $0xa8] sm:$0xff] %v328
      %361 = vst [vmem:[%s170 + $0xb0] sm:$0xff] %v329
      %362 = vst [vmem:[%s170 + $0xb8] sm:$0xff] %v330
      %363 = vst [vmem:[%s170 + $0xc0] sm:$0xff] %v331
      %364 = vst [vmem:[%s170 + $0xc8] sm:$0xff] %v332
      %365 = vst [vmem:[%s170 + $0xd0] sm:$0xff] %v333
      %366 = vst [vmem:[%s170 + $0xd8] sm:$0xff] %v334
      %367 = vst [vmem:[%s170 + $0xe0] sm:$0xff] %v335
      %368 = vst [vmem:[%s170 + $0xe8] sm:$0xff] %v336
      %369 = vst [vmem:[%s170 + $0xf0] sm:$0xff] %v337
      %370 = vst [vmem:[%s170 + $0xf8] sm:$0xff] %v338
      %p371 = scmp.lt.s32.totalorder %s14, 1
      %s372 = scalar_select %p371, %s14, 1
      %s373 = smul.addr %s372, 32
      %s374 = smul.addr %s373, 8
      %s375 = scalar_lea.vmem %s3, %s374
      // Predicated region
      $region33: #{double_conv.5} parent=31 // pred_check
        %p376 = pneg %p100
      $region34: #{double_conv.5} parent=31 // pred_check_branch
        %378 = sbr.rel (%p376) target = $region36
      $region35: #{double_conv.5} parent=31 // pred_region
        _
      $region36: #{double_conv.5} parent=31 // pred_fallthru
        _
    $region32: #{double_conv.5} parent=5 // pred_fallthru
      _
    %p379 = scmp.le.s32.totalorder 2, %s9
    // Predicated region
    $region37: #{double_conv.5} parent=5 // pred_check
      %p380 = pneg %p379
    $region38: #{double_conv.5} parent=5 // pred_check_branch
      %382 = sbr.rel (%p380) target = $region40
    $region39: #{double_conv.5} parent=5 // pred_region
      %s383 = ssub.s32 %s9, 2
      // Predicated region
      $region41: #{double_conv.5} parent=39 // pred_check
        %p384 = pneg %p106
      $region42: #{double_conv.5} parent=39 // pred_check_branch
        %386 = sbr.rel (%p384) target = $region44
      $region43: #{double_conv.5} parent=39 // pred_region
        %p387 = scmp.lt.s32.totalorder %s15, 1
        %s388 = scalar_select %p387, %s15, 1
        %s389 = smul.addr %s388, 32
        %s390 = smul.addr %s389, 8
        %s391 = scalar_lea.vmem %s3, %s390
      $region44: #{double_conv.5} parent=39 // pred_fallthru
        _
    $region40: #{double_conv.5} parent=5 // pred_fallthru
      _
  $region6: #{double_conv.5} parent=0 // loop_footer
    %s13 = sadd.s32 1, %s9
  $region7: #{double_conv.5} parent=0 // loop_footer_branch
    %8 = sbr.rel target = $region3
  $region8: #{double_conv.5} parent=0 // loop_exit
    _

// kernel: double_conv.3
$region0: #{double_conv.3}
  #allocation0 [shape = 'u32[]', space=smem, size = 0x4, offset = 0x4, fixed_abs, tag = 'smem constant byte address 0x4 - core index']
  #allocation1 [shape = 'u32[72,128]{1,0:T(1,128)}', space=vmem, size = 0x9000, scoped, tag = 'internal scratch']
  #allocation2 [shape = 'bf16[304,128]{1,0:T(8,128)(2,1)}', space=vmem, size = 0x13000, scoped, tag = 'scratch operand']
  %s0 = inlined_call_operand.vmem [shape: bf16[2,256,128], index: 0, kind: input, shape index: {}]
  %s1 = inlined_call_operand.vmem [shape: f32[1,128], index: 1, kind: input, shape index: {}, may-alias: {1,2}]
  %s2 = inlined_call_operand.vmem [shape: f32[1,128], index: 2, kind: input, shape index: {}, may-alias: {1,2}]
  %s3 = inlined_call_operand.vmem [shape: bf16[9,128,128], index: 3, kind: input, shape index: {}]
  %s4 = inlined_call_operand.vmem [shape: bf16[2,256,128], index: 4, kind: output, shape index: {0}]
  %s5 = inlined_call_operand.vmem [shape: f32[2,1,128], index: 5, kind: output, shape index: {1}]
  %s6 = inlined_call_operand.vmem [shape: f32[2,1,128], index: 6, kind: output, shape index: {2}]
  %7 = xla_tuple %s4, %s5, %s6
  %s8 = sld [smem:[#allocation0]]
  $region65: #{double_conv.3} parent=0
    _
  %s10 = ssub.s32 1, %s8
  %s11 = scalar_select 0, %s10, %s8
  loop: start=0, step=1, limit=4
  $region2: #{double_conv.3} parent=0 // loop_pre_header
    _
  $region3: #{double_conv.3} parent=0 // loop_header
    %s13 = sphi 0, %s17
    %p14 = scmp.ge.s32.totalorder %s13, 4
    %s23 = sphi 0, %s25
    %s26 = sphi 0, %s23
    %s27 = sphi 0, %s26
    %s43 = sphi 0, %s27
    %s47 = sphi 0, %s47
    %s49 = sphi 0, %s47
    %s50 = sphi 0, %s49
    %s64 = sphi 0, %s50
    %s68 = sphi 0, %s68
    %s70 = sphi 0, %s68
    %s71 = sphi 0, %s70
    %s85 = sphi 0, %s71
    %s89 = sphi 0, %s89
    %s91 = sphi 0, %s89
    %s92 = sphi 0, %s91
    %s106 = sphi 0, %s92
    %s112 = sphi 0, %s114
    %s115 = sphi 0, %s112
    %s116 = sphi 0, %s115
    %s132 = sphi 0, %s116
    %s138 = sphi 0, %s140
    %s141 = sphi 0, %s138
    %s142 = sphi 0, %s141
    %s158 = sphi 0, %s142
    %s164 = sphi 0, %s166
    %s167 = sphi 0, %s164
    %s168 = sphi 0, %s167
    %s184 = sphi 0, %s168
  $region4: #{double_conv.3} parent=0 // loop_header_branch
    %16 = sbr.rel (%p14) target = $region8
  $region5: #{double_conv.3} parent=0 // loop_body
    %s18 = ssub.s32 %s13, 1
    %s19 = ssub.s32 %s13, 2
    %s20 = sadd.s32 %s13, 1
    %s21 = ssub.s32 %s13, %s20
    %p22 = scmp.eq.s32.totalorder %s21, 0
    %s24 = sadd.s32 %s23, 1
    %s25 = scalar_select %p22, %s23, %s24
    %p28 = pneg %p22
    %p29 = scmp.eq.s32.totalorder %s13, 1
    %p30 = por %p28, %p29
    %p31 = scmp.ne.s32.totalorder %s23, %s26
    %p32 = scmp.eq.s32.totalorder %s13, 0
    %p33 = por %p31, %p32
    %p34 = scmp.ne.s32.totalorder %s23, %s26
    %p35 = scmp.eq.s32.totalorder %s18, 1
    %p36 = por %p34, %p35
    %p37 = scmp.ne.s32.totalorder %s26, %s27
    %p38 = scmp.eq.s32.totalorder %s18, 0
    %p39 = por %p37, %p38
    %p40 = scmp.ne.s32.totalorder %s26, %s27
    %p41 = scmp.eq.s32.totalorder %s19, 1
    %p42 = por %p40, %p41
    %p44 = scmp.ne.s32.totalorder %s27, %s43
    %p45 = scmp.eq.s32.totalorder %s19, 0
    %p46 = por %p44, %p45
    %s48 = sadd.s32 %s47, 1
    %p51 = scmp.eq.s32.totalorder %s13, 1
    %p52 = scmp.ne.s32.totalorder %s47, %s49
    %p53 = scmp.eq.s32.totalorder %s13, 0
    %p54 = por %p52, %p53
    %p55 = scmp.ne.s32.totalorder %s47, %s49
    %p56 = scmp.eq.s32.totalorder %s18, 1
    %p57 = por %p55, %p56
    %p58 = scmp.ne.s32.totalorder %s49, %s50
    %p59 = scmp.eq.s32.totalorder %s18, 0
    %p60 = por %p58, %p59
    %p61 = scmp.ne.s32.totalorder %s49, %s50
    %p62 = scmp.eq.s32.totalorder %s19, 1
    %p63 = por %p61, %p62
    %p65 = scmp.ne.s32.totalorder %s50, %s64
    %p66 = scmp.eq.s32.totalorder %s19, 0
    %p67 = por %p65, %p66
    %s69 = sadd.s32 %s68, 1
    %p72 = scmp.eq.s32.totalorder %s13, 1
    %p73 = scmp.ne.s32.totalorder %s68, %s70
    %p74 = scmp.eq.s32.totalorder %s13, 0
    %p75 = por %p73, %p74
    %p76 = scmp.ne.s32.totalorder %s68, %s70
    %p77 = scmp.eq.s32.totalorder %s18, 1
    %p78 = por %p76, %p77
    %p79 = scmp.ne.s32.totalorder %s70, %s71
    %p80 = scmp.eq.s32.totalorder %s18, 0
    %p81 = por %p79, %p80
    %p82 = scmp.ne.s32.totalorder %s70, %s71
    %p83 = scmp.eq.s32.totalorder %s19, 1
    %p84 = por %p82, %p83
    %p86 = scmp.ne.s32.totalorder %s71, %s85
    %p87 = scmp.eq.s32.totalorder %s19, 0
    %p88 = por %p86, %p87
    %s90 = sadd.s32 %s89, 1
    %p93 = scmp.eq.s32.totalorder %s13, 1
    %p94 = scmp.ne.s32.totalorder %s89, %s91
    %p95 = scmp.eq.s32.totalorder %s13, 0
    %p96 = por %p94, %p95
    %p97 = scmp.ne.s32.totalorder %s89, %s91
    %p98 = scmp.eq.s32.totalorder %s18, 1
    %p99 = por %p97, %p98
    %p100 = scmp.ne.s32.totalorder %s91, %s92
    %p101 = scmp.eq.s32.totalorder %s18, 0
    %p102 = por %p100, %p101
    %p103 = scmp.ne.s32.totalorder %s91, %s92
    %p104 = scmp.eq.s32.totalorder %s19, 1
    %p105 = por %p103, %p104
    %p107 = scmp.ne.s32.totalorder %s92, %s106
    %p108 = scmp.eq.s32.totalorder %s19, 0
    %p109 = por %p107, %p108
    %s110 = ssub.s32 %s13, %s20
    %p111 = scmp.eq.s32.totalorder %s110, 0
    %s113 = sadd.s32 %s112, 1
    %s114 = scalar_select %p111, %s112, %s113
    %p117 = pneg %p111
    %p118 = scmp.eq.s32.totalorder %s13, 1
    %p119 = por %p117, %p118
    %p120 = scmp.ne.s32.totalorder %s112, %s115
    %p121 = scmp.eq.s32.totalorder %s13, 0
    %p122 = por %p120, %p121
    %p123 = scmp.ne.s32.totalorder %s112, %s115
    %p124 = scmp.eq.s32.totalorder %s18, 1
    %p125 = por %p123, %p124
    %p126 = scmp.ne.s32.totalorder %s115, %s116
    %p127 = scmp.eq.s32.totalorder %s18, 0
    %p128 = por %p126, %p127
    %p129 = scmp.ne.s32.totalorder %s115, %s116
    %p130 = scmp.eq.s32.totalorder %s19, 1
    %p131 = por %p129, %p130
    %p133 = scmp.ne.s32.totalorder %s116, %s132
    %p134 = scmp.eq.s32.totalorder %s19, 0
    %p135 = por %p133, %p134
    %s136 = ssub.s32 %s13, %s20
    %p137 = scmp.eq.s32.totalorder %s136, 0
    %s139 = sadd.s32 %s138, 1
    %s140 = scalar_select %p137, %s138, %s139
    %p143 = pneg %p137
    %p144 = scmp.eq.s32.totalorder %s13, 1
    %p145 = por %p143, %p144
    %p146 = scmp.ne.s32.totalorder %s138, %s141
    %p147 = scmp.eq.s32.totalorder %s13, 0
    %p148 = por %p146, %p147
    %p149 = scmp.ne.s32.totalorder %s138, %s141
    %p150 = scmp.eq.s32.totalorder %s18, 1
    %p151 = por %p149, %p150
    %p152 = scmp.ne.s32.totalorder %s141, %s142
    %p153 = scmp.eq.s32.totalorder %s18, 0
    %p154 = por %p152, %p153
    %p155 = scmp.ne.s32.totalorder %s141, %s142
    %p156 = scmp.eq.s32.totalorder %s19, 1
    %p157 = por %p155, %p156
    %p159 = scmp.ne.s32.totalorder %s142, %s158
    %p160 = scmp.eq.s32.totalorder %s19, 0
    %p161 = por %p159, %p160
    %s162 = ssub.s32 %s13, %s20
    %p163 = scmp.eq.s32.totalorder %s162, 0
    %s165 = sadd.s32 %s164, 1
    %s166 = scalar_select %p163, %s164, %s165
    %p169 = pneg %p163
    %p170 = scmp.eq.s32.totalorder %s13, 1
    %p171 = por %p169, %p170
    %p172 = scmp.ne.s32.totalorder %s164, %s167
    %p173 = scmp.eq.s32.totalorder %s13, 0
    %p174 = por %p172, %p173
    %p175 = scmp.ne.s32.totalorder %s164, %s167
    %p176 = scmp.eq.s32.totalorder %s18, 1
    %p177 = por %p175, %p176
    %p178 = scmp.ne.s32.totalorder %s167, %s168
    %p179 = scmp.eq.s32.totalorder %s18, 0
    %p180 = por %p178, %p179
    %p181 = scmp.ne.s32.totalorder %s167, %s168
    %p182 = scmp.eq.s32.totalorder %s19, 1
    %p183 = por %p181, %p182
    %p185 = scmp.ne.s32.totalorder %s168, %s184
    %p186 = scmp.eq.s32.totalorder %s19, 0
    %p187 = por %p185, %p186
    %p188 = scmp.le.s32.totalorder 1, %s13
    %p189 = scmp.lt.s32.totalorder %s13, 3
    %p190 = pnand %p188, %p189
    %p191 = pneg %p190
    // Predicated region
    $region9: #{double_conv.3} parent=5 // pred_check
      _
    $region10: #{double_conv.3} parent=5 // pred_check_branch
      %193 = sbr.rel (%p190) target = $region12
    $region11: #{double_conv.3} parent=5 // pred_region
      %s194 = ssub.s32 %s13, 1
      // Predicated region
      $region13: #{double_conv.3} parent=11 // pred_check
        %p195 = pneg %p60
      $region14: #{double_conv.3} parent=11 // pred_check_branch
        %197 = sbr.rel (%p195) target = $region16
      $region15: #{double_conv.3} parent=11 // pred_region
        _
      $region16: #{double_conv.3} parent=11 // pred_fallthru
        _
      // Predicated region
      $region17: #{double_conv.3} parent=11 // pred_check
        %p198 = pneg %p81
      $region18: #{double_conv.3} parent=11 // pred_check_branch
        %200 = sbr.rel (%p198) target = $region20
      $region19: #{double_conv.3} parent=11 // pred_region
        _
      $region20: #{double_conv.3} parent=11 // pred_fallthru
        _
      // Predicated region
      $region21: #{double_conv.3} parent=11 // pred_check
        %p201 = pneg %p102
      $region22: #{double_conv.3} parent=11 // pred_check_branch
        %203 = sbr.rel (%p201) target = $region24
      $region23: #{double_conv.3} parent=11 // pred_region
        _
      $region24: #{double_conv.3} parent=11 // pred_fallthru
        _
    $region12: #{double_conv.3} parent=5 // pred_fallthru
      _
    %p204 = scmp.lt.s32.totalorder %s13, 2
    // Predicated region
    $region25: #{double_conv.3} parent=5 // pred_check
      %p205 = pneg %p204
    $region26: #{double_conv.3} parent=5 // pred_check_branch
      %207 = sbr.rel (%p205) target = $region28
    $region27: #{double_conv.3} parent=5 // pred_region
      // Predicated region
      $region29: #{double_conv.3} parent=27 // pred_check
        %p208 = pneg %p33
      $region30: #{double_conv.3} parent=27 // pred_check_branch
        %210 = sbr.rel (%p208) target = $region32
      $region31: #{double_conv.3} parent=27 // pred_region
        %p211 = scmp.lt.s32.totalorder %s13, 1
        %s212 = scalar_select %p211, %s13, 1
        %s213 = smul.addr %s212, 32
        %s214 = smul.addr %s213, 4
        %s215 = scalar_lea.vmem %s0, %s214
      $region32: #{double_conv.3} parent=27 // pred_fallthru
        _
    $region28: #{double_conv.3} parent=5 // pred_fallthru
      _
    %p216 = scmp.le.s32.totalorder 1, %s13
    %p217 = scmp.lt.s32.totalorder %s13, 3
    %p218 = pnand %p216, %p217
    %p219 = pneg %p218
    // Predicated region
    $region33: #{double_conv.3} parent=5 // pred_check
      _
    $region34: #{double_conv.3} parent=5 // pred_check_branch
      %221 = sbr.rel (%p218) target = $region36
    $region35: #{double_conv.3} parent=5 // pred_region
      %s222 = ssub.s32 %s13, 1
      %p223 = scmp.lt.s32.totalorder %s18, 1
      %s224 = scalar_select %p223, %s18, 1
      %s225 = smul.addr %s224, 32
      %s226 = smul.addr %s225, 4
      %s227 = scalar_lea.vmem %s0, %s226
      %p228 = pneg %p39
      %p229 = pneg %p36
      %p230 = pneg %p60
      %p231 = pneg %p57
      %p232 = pneg %p81
      %p233 = pneg %p78
      %p234 = pneg %p102
      %p235 = pneg %p99
      %p236 = pneg %p128
      %p237 = pneg %p125
      %p238 = scmp.lt.s32.totalorder %s18, 1
      %s239 = scalar_select %p238, %s18, 1
      %s240 = smul.addr %s239, 32
      %s241 = smul.addr %s240, 4
      %s242 = scalar_lea.vmem %s4, %s241
      %p243 = pneg %p154
      %p244 = pneg %p151
      %p245 = scmp.lt.s32.totalorder %s18, 1
      %s246 = scalar_select %p245, %s18, 1
      %s247 = scalar_lea.vmem %s5, %s246
      %p248 = pneg %p180
      %p249 = pneg %p177
      %p250 = scmp.lt.s32.totalorder %s18, 1
      %s251 = scalar_select %p250, %s18, 1
      %s252 = scalar_lea.vmem %s6, %s251
      %p253 = scmp.lt.s32.totalorder %s18, 1
      %s254 = scalar_select %p253, %s18, 1
      %s255 = smul.addr %s254, 32
      %s256 = smul.addr %s255, 4
      %s257 = scalar_lea.vmem %s0, %s256
      %p258 = scmp.lt.s32.totalorder %s18, 1
      %s259 = scalar_select %p258, %s18, 1
      %s260 = smul.addr %s259, 32
      %s261 = smul.addr %s260, 4
      %s262 = scalar_lea.vmem %s4, %s261
      %p263 = scmp.lt.s32.totalorder %s18, 1
      %s264 = scalar_select %p263, %s18, 1
      %s265 = scalar_lea.vmem %s5, %s264
      %p266 = scmp.lt.s32.totalorder %s18, 1
      %s267 = scalar_select %p266, %s18, 1
      %s268 = scalar_lea.vmem %s6, %s267
      %v272 = vld [vmem:[%s257] sm:$0xf]
      %v273 = vld [vmem:[%s257 + $0x4] sm:$0xf]
      %v274 = vld [vmem:[%s257 + $0x8] sm:$0xf]
      %v275 = vld [vmem:[%s257 + $0xc] sm:$0xf]
      %v276 = vld [vmem:[%s257 + $0x10] sm:$0xf]
      %v277 = vld [vmem:[%s257 + $0x14] sm:$0xf]
      %v278 = vld [vmem:[%s257 + $0x18] sm:$0xf]
      %v279 = vld [vmem:[%s257 + $0x1c] sm:$0xf]
      %v280 = vld [vmem:[%s257 + $0x20] sm:$0xf]
      %v281 = vld [vmem:[%s257 + $0x24] sm:$0xf]
      %v282 = vld [vmem:[%s257 + $0x28] sm:$0xf]
      %v283 = vld [vmem:[%s257 + $0x2c] sm:$0xf]
      %v284 = vld [vmem:[%s257 + $0x30] sm:$0xf]
      %v285 = vld [vmem:[%s257 + $0x34] sm:$0xf]
      %v286 = vld [vmem:[%s257 + $0x38] sm:$0xf]
      %v287 = vld [vmem:[%s257 + $0x3c] sm:$0xf]
      %v288 = vld [vmem:[%s257 + $0x40] sm:$0xf]
      %v289 = vld [vmem:[%s257 + $0x44] sm:$0xf]
      %v290 = vld [vmem:[%s257 + $0x48] sm:$0xf]
      %v291 = vld [vmem:[%s257 + $0x4c] sm:$0xf]
      %v292 = vld [vmem:[%s257 + $0x50] sm:$0xf]
      %v293 = vld [vmem:[%s257 + $0x54] sm:$0xf]
      %v294 = vld [vmem:[%s257 + $0x58] sm:$0xf]
      %v295 = vld [vmem:[%s257 + $0x5c] sm:$0xf]
      %v296 = vld [vmem:[%s257 + $0x60] sm:$0xf]
      %v297 = vld [vmem:[%s257 + $0x64] sm:$0xf]
      %v298 = vld [vmem:[%s257 + $0x68] sm:$0xf]
      %v299 = vld [vmem:[%s257 + $0x6c] sm:$0xf]
      %v300 = vld [vmem:[%s257 + $0x70] sm:$0xf]
      %v301 = vld [vmem:[%s257 + $0x74] sm:$0xf]
      %v302 = vld [vmem:[%s257 + $0x78] sm:$0xf]
      %v303 = vld [vmem:[%s257 + $0x7c] sm:$0xf]
      %304 = vst [vmem:[#allocation2] sm:$0xf] 0
      %305 = vst [vmem:[#allocation2 + $0x4] sm:$0xf] 0
      %306 = vst [vmem:[#allocation2 + $0x8] sm:$0xf] 0
      %307 = vst [vmem:[#allocation2 + $0x8c] sm:$0xf] 0
      %308 = vst [vmem:[#allocation2 + $0x90] sm:$0xf] 0
      %309 = vst [vmem:[#allocation2 + $0x94] sm:$0xf] 0
      %310 = vst [vmem:[#allocation2 + $0xc] sm:$0xf] %v272
      %311 = vst [vmem:[#allocation2 + $0x10] sm:$0xf] %v273
      %312 = vst [vmem:[#allocation2 + $0x14] sm:$0xf] %v274
      %313 = vst [vmem:[#allocation2 + $0x18] sm:$0xf] %v275
      %314 = vst [vmem:[#allocation2 + $0x1c] sm:$0xf] %v276
      %315 = vst [vmem:[#allocation2 + $0x20] sm:$0xf] %v277
      %316 = vst [vmem:[#allocation2 + $0x24] sm:$0xf] %v278
      %317 = vst [vmem:[#allocation2 + $0x28] sm:$0xf] %v279
      %318 = vst [vmem:[#allocation2 + $0x2c] sm:$0xf] %v280
      %319 = vst [vmem:[#allocation2 + $0x30] sm:$0xf] %v281
      %320 = vst [vmem:[#allocation2 + $0x34] sm:$0xf] %v282
      %321 = vst [vmem:[#allocation2 + $0x38] sm:$0xf] %v283
      %322 = vst [vmem:[#allocation2 + $0x3c] sm:$0xf] %v284
      %323 = vst [vmem:[#allocation2 + $0x40] sm:$0xf] %v285
      %324 = vst [vmem:[#allocation2 + $0x44] sm:$0xf] %v286
      %325 = vst [vmem:[#allocation2 + $0x48] sm:$0xf] %v287
      %326 = vst [vmem:[#allocation2 + $0x4c] sm:$0xf] %v288
      %327 = vst [vmem:[#allocation2 + $0x50] sm:$0xf] %v289
      %328 = vst [vmem:[#allocation2 + $0x54] sm:$0xf] %v290
      %329 = vst [vmem:[#allocation2 + $0x58] sm:$0xf] %v291
      %330 = vst [vmem:[#allocation2 + $0x5c] sm:$0xf] %v292
      %331 = vst [vmem:[#allocation2 + $0x60] sm:$0xf] %v293
      %332 = vst [vmem:[#allocation2 + $0x64] sm:$0xf] %v294
      %333 = vst [vmem:[#allocation2 + $0x68] sm:$0xf] %v295
      %334 = vst [vmem:[#allocation2 + $0x6c] sm:$0xf] %v296
      %335 = vst [vmem:[#allocation2 + $0x70] sm:$0xf] %v297
      %336 = vst [vmem:[#allocation2 + $0x74] sm:$0xf] %v298
      %337 = vst [vmem:[#allocation2 + $0x78] sm:$0xf] %v299
      %338 = vst [vmem:[#allocation2 + $0x7c] sm:$0xf] %v300
      %339 = vst [vmem:[#allocation2 + $0x80] sm:$0xf] %v301
      %340 = vst [vmem:[#allocation2 + $0x84] sm:$0xf] %v302
      %341 = vst [vmem:[#allocation2 + $0x88] sm:$0xf] %v303
      %v342 = vlaneseq
      %v343 = vshrl.u32 %v342, 7
      %v344 = vadd.s32 %v343, 8
      %v345 = vadd.s32 %v343, 16
      %v346 = vadd.s32 %v343, 24
      %v347 = vadd.s32 %v343, 32
      %v348 = vadd.s32 %v343, 40
      %v349 = vadd.s32 %v343, 48
      %v350 = vadd.s32 %v343, 56
      %v351 = vadd.s32 %v343, 64
      %v352 = vadd.s32 %v343, 72
      %v353 = vadd.s32 %v343, 80
      %v354 = vadd.s32 %v343, 88
      %v355 = vadd.s32 %v343, 96
      %v356 = vadd.s32 %v343, 104
      %v357 = vadd.s32 %v343, 112
      %v358 = vadd.s32 %v343, 120
      %v359 = vadd.s32 %v343, 128
      %v360 = vadd.s32 %v343, 136
      %v361 = vadd.s32 %v343, 144
      %v362 = vadd.s32 %v343, 152
      %v363 = vadd.s32 %v343, 160
      %v364 = vadd.s32 %v343, 168
      %v365 = vadd.s32 %v343, 176
      %v366 = vadd.s32 %v343, 184
      %v367 = vadd.s32 %v343, 192
      %v368 = vadd.s32 %v343, 200
      %v369 = vadd.s32 %v343, 208
      %v370 = vadd.s32 %v343, 216
      %v371 = vadd.s32 %v343, 224
      %v372 = vadd.s32 %v343, 232
      %v373 = vadd.s32 %v343, 240
      %v374 = vadd.s32 %v343, 248
      %v375 = vand.u32 %v343, 15
      %v376 = vand.u32 %v344, 15
      %v377 = vand.u32 %v345, 15
      %v378 = vand.u32 %v346, 15
      %v379 = vand.u32 %v347, 15
      %v380 = vand.u32 %v348, 15
      %v381 = vand.u32 %v349, 15
      %v382 = vand.u32 %v350, 15
      %v383 = vand.u32 %v351, 15
      %v384 = vand.u32 %v352, 15
      %v385 = vand.u32 %v353, 15
      %v386 = vand.u32 %v354, 15
      %v387 = vand.u32 %v355, 15
      %v388 = vand.u32 %v356, 15
      %v389 = vand.u32 %v357, 15
      %v390 = vand.u32 %v358, 15
      %v391 = vand.u32 %v359, 15
      %v392 = vand.u32 %v360, 15
      %v393 = vand.u32 %v361, 15
      %v394 = vand.u32 %v362, 15
      %v395 = vand.u32 %v363, 15
      %v396 = vand.u32 %v364, 15
      %v397 = vand.u32 %v365, 15
      %v398 = vand.u32 %v366, 15
      %v399 = vand.u32 %v367, 15
      %v400 = vand.u32 %v368, 15
      %v401 = vand.u32 %v369, 15
      %v402 = vand.u32 %v370, 15
      %v403 = vand.u32 %v371, 15
      %v404 = vand.u32 %v372, 15
      %v405 = vand.u32 %v373, 15
      %v406 = vand.u32 %v374, 15
      %vm407 = vcmp.ne.s32.totalorder %v375, 0
      %vm408 = vcmp.ne.s32.totalorder %v376, 0
      %vm409 = vcmp.ne.s32.totalorder %v377, 0
      %vm410 = vcmp.ne.s32.totalorder %v378, 0
      %vm411 = vcmp.ne.s32.totalorder %v379, 0
      %vm412 = vcmp.ne.s32.totalorder %v380, 0
      %vm413 = vcmp.ne.s32.totalorder %v381, 0
      %vm414 = vcmp.ne.s32.totalorder %v382, 0
      %vm415 = vcmp.ne.s32.totalorder %v383, 0
      %vm416 = vcmp.ne.s32.totalorder %v384, 0
      %vm417 = vcmp.ne.s32.totalorder %v385, 0
      %vm418 = vcmp.ne.s32.totalorder %v386, 0
      %vm419 = vcmp.ne.s32.totalorder %v387, 0
      %vm420 = vcmp.ne.s32.totalorder %v388, 0
      %vm421 = vcmp.ne.s32.totalorder %v389, 0
      %vm422 = vcmp.ne.s32.totalorder %v390, 0
      %vm423 = vcmp.ne.s32.totalorder %v391, 0
      %vm424 = vcmp.ne.s32.totalorder %v392, 0
      %vm425 = vcmp.ne.s32.totalorder %v393, 0
      %vm426 = vcmp.ne.s32.totalorder %v394, 0
      %vm427 = vcmp.ne.s32.totalorder %v395, 0
      %vm428 = vcmp.ne.s32.totalorder %v396, 0
      %vm429 = vcmp.ne.s32.totalorder %v397, 0
      %vm430 = vcmp.ne.s32.totalorder %v398, 0
      %vm431 = vcmp.ne.s32.totalorder %v399, 0
      %vm432 = vcmp.ne.s32.totalorder %v400, 0
      %vm433 = vcmp.ne.s32.totalorder %v401, 0
      %vm434 = vcmp.ne.s32.totalorder %v402, 0
      %vm435 = vcmp.ne.s32.totalorder %v403, 0
      %vm436 = vcmp.ne.s32.totalorder %v404, 0
      %vm437 = vcmp.ne.s32.totalorder %v405, 0
      %vm438 = vcmp.ne.s32.totalorder %v406, 0
      %vm439 = vcmp.ne.s32.totalorder %v375, 15
      %vm440 = vcmp.ne.s32.totalorder %v376, 15
      %vm441 = vcmp.ne.s32.totalorder %v377, 15
      %vm442 = vcmp.ne.s32.totalorder %v378, 15
      %vm443 = vcmp.ne.s32.totalorder %v379, 15
      %vm444 = vcmp.ne.s32.totalorder %v380, 15
      %vm445 = vcmp.ne.s32.totalorder %v381, 15
      %vm446 = vcmp.ne.s32.totalorder %v382, 15
      %vm447 = vcmp.ne.s32.totalorder %v383, 15
      %vm448 = vcmp.ne.s32.totalorder %v384, 15
      %vm449 = vcmp.ne.s32.totalorder %v385, 15
      %vm450 = vcmp.ne.s32.totalorder %v386, 15
      %vm451 = vcmp.ne.s32.totalorder %v387, 15
      %vm452 = vcmp.ne.s32.totalorder %v388, 15
      %vm453 = vcmp.ne.s32.totalorder %v389, 15
      %vm454 = vcmp.ne.s32.totalorder %v390, 15
      %vm455 = vcmp.ne.s32.totalorder %v391, 15
      %vm456 = vcmp.ne.s32.totalorder %v392, 15
      %vm457 = vcmp.ne.s32.totalorder %v393, 15
      %vm458 = vcmp.ne.s32.totalorder %v394, 15
      %vm459 = vcmp.ne.s32.totalorder %v395, 15
      %vm460 = vcmp.ne.s32.totalorder %v396, 15
      %vm461 = vcmp.ne.s32.totalorder %v397, 15
      %vm462 = vcmp.ne.s32.totalorder %v398, 15
      %vm463 = vcmp.ne.s32.totalorder %v399, 15
      %vm464 = vcmp.ne.s32.totalorder %v400, 15
      %vm465 = vcmp.ne.s32.totalorder %v401, 15
      %vm466 = vcmp.ne.s32.totalorder %v402, 15
      %vm467 = vcmp.ne.s32.totalorder %v403, 15
      %vm468 = vcmp.ne.s32.totalorder %v404, 15
      %vm469 = vcmp.ne.s32.totalorder %v405, 15
      %vm470 = vcmp.ne.s32.totalorder %v406, 15
      %v471 = vld [vmem:[#allocation2] sm:$0x8]
      %v472 = vld [vmem:[#allocation2 + $0x4] sm:$0xf]
      %v473 = vld [vmem:[#allocation2 + $0x8] sm:$0xf]
      %v474 = vld [vmem:[#allocation2 + $0xc] sm:$0xf]
      %v475 = vld [vmem:[#allocation2 + $0x10] sm:$0xf]
      %v476 = vld [vmem:[#allocation2 + $0x14] sm:$0xf]
      %v477 = vld [vmem:[#allocation2 + $0x18] sm:$0xf]
      %v478 = vld [vmem:[#allocation2 + $0x1c] sm:$0xf]
      %v479 = vld [vmem:[#allocation2 + $0x20] sm:$0xf]
      %v480 = vld [vmem:[#allocation2 + $0x24] sm:$0xf]
      %v481 = vld [vmem:[#allocation2 + $0x28] sm:$0xf]
      %v482 = vld [vmem:[#allocation2 + $0x2c] sm:$0xf]
      %v483 = vld [vmem:[#allocation2 + $0x30] sm:$0xf]
      %v484 = vld [vmem:[#allocation2 + $0x34] sm:$0xf]
      %v485 = vld [vmem:[#allocation2 + $0x38] sm:$0xf]
      %v486 = vld [vmem:[#allocation2 + $0x3c] sm:$0xf]
      %v487 = vld [vmem:[#allocation2 + $0x40] sm:$0xf]
      %v488 = vld [vmem:[#allocation2 + $0x44] sm:$0xf]
      %v489 = vld [vmem:[#allocation2 + $0x48] sm:$0xf]
      %v490 = vld [vmem:[#allocation2 + $0x4c] sm:$0xf]
      %v491 = vld [vmem:[#allocation2 + $0x50] sm:$0xf]
      %v492 = vld [vmem:[#allocation2 + $0x54] sm:$0xf]
      %v493 = vld [vmem:[#allocation2 + $0x58] sm:$0xf]
      %v494 = vld [vmem:[#allocation2 + $0x5c] sm:$0xf]
      %v495 = vld [vmem:[#allocation2 + $0x60] sm:$0xf]
      %v496 = vld [vmem:[#allocation2 + $0x64] sm:$0xf]
      %v497 = vld [vmem:[#allocation2 + $0x68] sm:$0xf]
      %v498 = vld [vmem:[#allocation2 + $0x6c] sm:$0xf]
      %v499 = vld [vmem:[#allocation2 + $0x70] sm:$0xf]
      %v500 = vld [vmem:[#allocation2 + $0x74] sm:$0xf]
      %v501 = vld [vmem:[#allocation2 + $0x78] sm:$0xf]
      %v502 = vld [vmem:[#allocation2 + $0x7c] sm:$0xf]
      %v503 = vld [vmem:[#allocation2 + $0x80] sm:$0xf]
      %v504 = vsel %vm407, 1, 0
      %v505 = vsel %vm408, 1, 0
      %v506 = vsel %vm409, 1, 0
      %v507 = vsel %vm410, 1, 0
      %v508 = vsel %vm411, 1, 0
      %v509 = vsel %vm412, 1, 0
      %v510 = vsel %vm413, 1, 0
      %v511 = vsel %vm414, 1, 0
      %v512 = vsel %vm415, 1, 0
      %v513 = vsel %vm416, 1, 0
      %v514 = vsel %vm417, 1, 0
      %v515 = vsel %vm418, 1, 0
      %v516 = vsel %vm419, 1, 0
      %v517 = vsel %vm420, 1, 0
      %v518 = vsel %vm421, 1, 0
      %v519 = vsel %vm422, 1, 0
      %v520 = vsel %vm423, 1, 0
      %v521 = vsel %vm424, 1, 0
      %v522 = vsel %vm425, 1, 0
      %v523 = vsel %vm426, 1, 0
      %v524 = vsel %vm427, 1, 0
      %v525 = vsel %vm428, 1, 0
      %v526 = vsel %vm429, 1, 0
      %v527 = vsel %vm430, 1, 0
      %v528 = vsel %vm431, 1, 0
      %v529 = vsel %vm432, 1, 0
      %v530 = vsel %vm433, 1, 0
      %v531 = vsel %vm434, 1, 0
      %v532 = vsel %vm435, 1, 0
      %v533 = vsel %vm436, 1, 0
      %v534 = vsel %vm437, 1, 0
      %v535 = vsel %vm438, 1, 0
      %vm536 = vcmp.eq.s32.totalorder %v504, 1
      %vm537 = vcmp.eq.s32.totalorder %v505, 1
      %vm538 = vcmp.eq.s32.totalorder %v506, 1
      %vm539 = vcmp.eq.s32.totalorder %v507, 1
      %vm540 = vcmp.eq.s32.totalorder %v508, 1
      %vm541 = vcmp.eq.s32.totalorder %v509, 1
      %vm542 = vcmp.eq.s32.totalorder %v510, 1
      %vm543 = vcmp.eq.s32.totalorder %v511, 1
      %vm544 = vcmp.eq.s32.totalorder %v512, 1
      %vm545 = vcmp.eq.s32.totalorder %v513, 1
      %vm546 = vcmp.eq.s32.totalorder %v514, 1
      %vm547 = vcmp.eq.s32.totalorder %v515, 1
      %vm548 = vcmp.eq.s32.totalorder %v516, 1
      %vm549 = vcmp.eq.s32.totalorder %v517, 1
      %vm550 = vcmp.eq.s32.totalorder %v518, 1
      %vm551 = vcmp.eq.s32.totalorder %v519, 1
      %vm552 = vcmp.eq.s32.totalorder %v520, 1
      %vm553 = vcmp.eq.s32.totalorder %v521, 1
      %vm554 = vcmp.eq.s32.totalorder %v522, 1
      %vm555 = vcmp.eq.s32.totalorder %v523, 1
      %vm556 = vcmp.eq.s32.totalorder %v524, 1
      %vm557 = vcmp.eq.s32.totalorder %v525, 1
      %vm558 = vcmp.eq.s32.totalorder %v526, 1
      %vm559 = vcmp.eq.s32.totalorder %v527, 1
      %vm560 = vcmp.eq.s32.totalorder %v528, 1
      %vm561 = vcmp.eq.s32.totalorder %v529, 1
      %vm562 = vcmp.eq.s32.totalorder %v530, 1
      %vm563 = vcmp.eq.s32.totalorder %v531, 1
      %vm564 = vcmp.eq.s32.totalorder %v532, 1
      %vm565 = vcmp.eq.s32.totalorder %v533, 1
      %vm566 = vcmp.eq.s32.totalorder %v534, 1
      %vm567 = vcmp.eq.s32.totalorder %v535, 1
      %vm568 = vmpackc.low %vm536, %vm536
      %vm569 = vmpackc.low %vm537, %vm537
      %vm570 = vmpackc.low %vm538, %vm538
      %vm571 = vmpackc.low %vm539, %vm539
      %vm572 = vmpackc.low %vm540, %vm540
      %vm573 = vmpackc.low %vm541, %vm541
      %vm574 = vmpackc.low %vm542, %vm542
      %vm575 = vmpackc.low %vm543, %vm543
      %vm576 = vmpackc.low %vm544, %vm544
      %vm577 = vmpackc.low %vm545, %vm545
      %vm578 = vmpackc.low %vm546, %vm546
      %vm579 = vmpackc.low %vm547, %vm547
      %vm580 = vmpackc.low %vm548, %vm548
      %vm581 = vmpackc.low %vm549, %vm549
      %vm582 = vmpackc.low %vm550, %vm550
      %vm583 = vmpackc.low %vm551, %vm551
      %vm584 = vmpackc.low %vm552, %vm552
      %vm585 = vmpackc.low %vm553, %vm553
      %vm586 = vmpackc.low %vm554, %vm554
      %vm587 = vmpackc.low %vm555, %vm555
      %vm588 = vmpackc.low %vm556, %vm556
      %vm589 = vmpackc.low %vm557, %vm557
      %vm590 = vmpackc.low %vm558, %vm558
      %vm591 = vmpackc.low %vm559, %vm559
      %vm592 = vmpackc.low %vm560, %vm560
      %vm593 = vmpackc.low %vm561, %vm561
      %vm594 = vmpackc.low %vm562, %vm562
      %vm595 = vmpackc.low %vm563, %vm563
      %vm596 = vmpackc.low %vm564, %vm564
      %vm597 = vmpackc.low %vm565, %vm565
      %vm598 = vmpackc.low %vm566, %vm566
      %vm599 = vmpackc.low %vm567, %vm567
      %v600 = vsel %vm568, 65537, 0
      %v601 = vsel %vm569, 65537, 0
      %v602 = vsel %vm570, 65537, 0
      %v603 = vsel %vm571, 65537, 0
      %v604 = vsel %vm572, 65537, 0
      %v605 = vsel %vm573, 65537, 0
      %v606 = vsel %vm574, 65537, 0
      %v607 = vsel %vm575, 65537, 0
      %v608 = vsel %vm576, 65537, 0
      %v609 = vsel %vm577, 65537, 0
      %v610 = vsel %vm578, 65537, 0
      %v611 = vsel %vm579, 65537, 0
      %v612 = vsel %vm580, 65537, 0
      %v613 = vsel %vm581, 65537, 0
      %v614 = vsel %vm582, 65537, 0
      %v615 = vsel %vm583, 65537, 0
      %v616 = vsel %vm584, 65537, 0
      %v617 = vsel %vm585, 65537, 0
      %v618 = vsel %vm586, 65537, 0
      %v619 = vsel %vm587, 65537, 0
      %v620 = vsel %vm588, 65537, 0
      %v621 = vsel %vm589, 65537, 0
      %v622 = vsel %vm590, 65537, 0
      %v623 = vsel %vm591, 65537, 0
      %v624 = vsel %vm592, 65537, 0
      %v625 = vsel %vm593, 65537, 0
      %v626 = vsel %vm594, 65537, 0
      %v627 = vsel %vm595, 65537, 0
      %v628 = vsel %vm596, 65537, 0
      %v629 = vsel %vm597, 65537, 0
      %v630 = vsel %vm598, 65537, 0
      %v631 = vsel %vm599, 65537, 0
      %vm632 = vsmask.f32 3328
      %vm633 = vsmask.f32 7440
      %vm634 = vmor %vm632, %vm633
      %v636 = vshll.u32 %v600, 16
      %v638 = vrot.slane %v636, 5
      %v639 = vshrl.u32 %v600, 16
      %v641 = vrot.slane %v639, 4
      %v642 = vor.u32 %v641, %v638
      %v643 = vrot.slane %v642, 4
      %v645 = vshll.u32 %v601, 16
      %v647 = vrot.slane %v645, 5
      %v648 = vsel %vm634, %v643, %v647
      %v649 = vshrl.u32 %v601, 16
      %v651 = vrot.slane %v649, 4
      %v652 = vor.u32 %v651, %v647
      %v653 = vrot.slane %v652, 4
      %v655 = vshll.u32 %v602, 16
      %v657 = vrot.slane %v655, 5
      %v658 = vsel %vm634, %v653, %v657
      %v659 = vshrl.u32 %v602, 16
      %v661 = vrot.slane %v659, 4
      %v662 = vor.u32 %v661, %v657
      %v663 = vrot.slane %v662, 4
      %v665 = vshll.u32 %v603, 16
      %v667 = vrot.slane %v665, 5
      %v668 = vsel %vm634, %v663, %v667
      %v669 = vshrl.u32 %v603, 16
      %v671 = vrot.slane %v669, 4
      %v672 = vor.u32 %v671, %v667
      %v673 = vrot.slane %v672, 4
      %v675 = vshll.u32 %v604, 16
      %v677 = vrot.slane %v675, 5
      %v678 = vsel %vm634, %v673, %v677
      %v679 = vshrl.u32 %v604, 16
      %v681 = vrot.slane %v679, 4
      %v682 = vor.u32 %v681, %v677
      %v683 = vrot.slane %v682, 4
      %v685 = vshll.u32 %v605, 16
      %v687 = vrot.slane %v685, 5
      %v688 = vsel %vm634, %v683, %v687
      %v689 = vshrl.u32 %v605, 16
      %v691 = vrot.slane %v689, 4
      %v692 = vor.u32 %v691, %v687
      %v693 = vrot.slane %v692, 4
      %v695 = vshll.u32 %v606, 16
      %v697 = vrot.slane %v695, 5
      %v698 = vsel %vm634, %v693, %v697
      %v699 = vshrl.u32 %v606, 16
      %v701 = vrot.slane %v699, 4
      %v702 = vor.u32 %v701, %v697
      %v703 = vrot.slane %v702, 4
      %v705 = vshll.u32 %v607, 16
      %v707 = vrot.slane %v705, 5
      %v708 = vsel %vm634, %v703, %v707
      %v709 = vshrl.u32 %v607, 16
      %v711 = vrot.slane %v709, 4
      %v712 = vor.u32 %v711, %v707
      %v713 = vrot.slane %v712, 4
      %v715 = vshll.u32 %v608, 16
      %v717 = vrot.slane %v715, 5
      %v718 = vsel %vm634, %v713, %v717
      %v719 = vshrl.u32 %v608, 16
      %v721 = vrot.slane %v719, 4
      %v722 = vor.u32 %v721, %v717
      %v723 = vrot.slane %v722, 4
      %v725 = vshll.u32 %v609, 16
      %v727 = vrot.slane %v725, 5
      %v728 = vsel %vm634, %v723, %v727
      %v729 = vshrl.u32 %v609, 16
      %v731 = vrot.slane %v729, 4
      %v732 = vor.u32 %v731, %v727
      %v733 = vrot.slane %v732, 4
      %v735 = vshll.u32 %v610, 16
      %v737 = vrot.slane %v735, 5
      %v738 = vsel %vm634, %v733, %v737
      %v739 = vshrl.u32 %v610, 16
      %v741 = vrot.slane %v739, 4
      %v742 = vor.u32 %v741, %v737
      %v743 = vrot.slane %v742, 4
      %v745 = vshll.u32 %v611, 16
      %v747 = vrot.slane %v745, 5
      %v748 = vsel %vm634, %v743, %v747
      %v749 = vshrl.u32 %v611, 16
      %v751 = vrot.slane %v749, 4
      %v752 = vor.u32 %v751, %v747
      %v753 = vrot.slane %v752, 4
      %v755 = vshll.u32 %v612, 16
      %v757 = vrot.slane %v755, 5
      %v758 = vsel %vm634, %v753, %v757
      %v759 = vshrl.u32 %v612, 16
      %v761 = vrot.slane %v759, 4
      %v762 = vor.u32 %v761, %v757
      %v763 = vrot.slane %v762, 4
      %v765 = vshll.u32 %v613, 16
      %v767 = vrot.slane %v765, 5
      %v768 = vsel %vm634, %v763, %v767
      %v769 = vshrl.u32 %v613, 16
      %v771 = vrot.slane %v769, 4
      %v772 = vor.u32 %v771, %v767
      %v773 = vrot.slane %v772, 4
      %v775 = vshll.u32 %v614, 16
      %v777 = vrot.slane %v775, 5
      %v778 = vsel %vm634, %v773, %v777
      %v779 = vshrl.u32 %v614, 16
      %v781 = vrot.slane %v779, 4
      %v782 = vor.u32 %v781, %v777
      %v783 = vrot.slane %v782, 4
      %v785 = vshll.u32 %v615, 16
      %v787 = vrot.slane %v785, 5
      %v788 = vsel %vm634, %v783, %v787
      %v789 = vshrl.u32 %v615, 16
      %v791 = vrot.slane %v789, 4
      %v792 = vor.u32 %v791, %v787
      %v793 = vrot.slane %v792, 4
      %v795 = vshll.u32 %v616, 16
      %v797 = vrot.slane %v795, 5
      %v798 = vsel %vm634, %v793, %v797
      %v799 = vshrl.u32 %v616, 16
      %v801 = vrot.slane %v799, 4
      %v802 = vor.u32 %v801, %v797
      %v803 = vrot.slane %v802, 4
      %v805 = vshll.u32 %v617, 16
      %v807 = vrot.slane %v805, 5
      %v808 = vsel %vm634, %v803, %v807
      %v809 = vshrl.u32 %v617, 16
      %v811 = vrot.slane %v809, 4
      %v812 = vor.u32 %v811, %v807
      %v813 = vrot.slane %v812, 4
      %v815 = vshll.u32 %v618, 16
      %v817 = vrot.slane %v815, 5
      %v818 = vsel %vm634, %v813, %v817
      %v819 = vshrl.u32 %v618, 16
      %v821 = vrot.slane %v819, 4
      %v822 = vor.u32 %v821, %v817
      %v823 = vrot.slane %v822, 4
      %v825 = vshll.u32 %v619, 16
      %v827 = vrot.slane %v825, 5
      %v828 = vsel %vm634, %v823, %v827
      %v829 = vshrl.u32 %v619, 16
      %v831 = vrot.slane %v829, 4
      %v832 = vor.u32 %v831, %v827
      %v833 = vrot.slane %v832, 4
      %v835 = vshll.u32 %v620, 16
      %v837 = vrot.slane %v835, 5
      %v838 = vsel %vm634, %v833, %v837
      %v839 = vshrl.u32 %v620, 16
      %v841 = vrot.slane %v839, 4
      %v842 = vor.u32 %v841, %v837
      %v843 = vrot.slane %v842, 4
      %v845 = vshll.u32 %v621, 16
      %v847 = vrot.slane %v845, 5
      %v848 = vsel %vm634, %v843, %v847
      %v849 = vshrl.u32 %v621, 16
      %v851 = vrot.slane %v849, 4
      %v852 = vor.u32 %v851, %v847
      %v853 = vrot.slane %v852, 4
      %v855 = vshll.u32 %v622, 16
      %v857 = vrot.slane %v855, 5
      %v858 = vsel %vm634, %v853, %v857
      %v859 = vshrl.u32 %v622, 16
      %v861 = vrot.slane %v859, 4
      %v862 = vor.u32 %v861, %v857
      %v863 = vrot.slane %v862, 4
      %v865 = vshll.u32 %v623, 16
      %v867 = vrot.slane %v865, 5
      %v868 = vsel %vm634, %v863, %v867
      %v869 = vshrl.u32 %v623, 16
      %v871 = vrot.slane %v869, 4
      %v872 = vor.u32 %v871, %v867
      %v873 = vrot.slane %v872, 4
      %v875 = vshll.u32 %v624, 16
      %v877 = vrot.slane %v875, 5
      %v878 = vsel %vm634, %v873, %v877
      %v879 = vshrl.u32 %v624, 16
      %v881 = vrot.slane %v879, 4
      %v882 = vor.u32 %v881, %v877
      %v883 = vrot.slane %v882, 4
      %v885 = vshll.u32 %v625, 16
      %v887 = vrot.slane %v885, 5
      %v888 = vsel %vm634, %v883, %v887
      %v889 = vshrl.u32 %v625, 16
      %v891 = vrot.slane %v889, 4
      %v892 = vor.u32 %v891, %v887
      %v893 = vrot.slane %v892, 4
      %v895 = vshll.u32 %v626, 16
      %v897 = vrot.slane %v895, 5
      %v898 = vsel %vm634, %v893, %v897
      %v899 = vshrl.u32 %v626, 16
      %v901 = vrot.slane %v899, 4
      %v902 = vor.u32 %v901, %v897
      %v903 = vrot.slane %v902, 4
      %v905 = vshll.u32 %v627, 16
      %v907 = vrot.slane %v905, 5
      %v908 = vsel %vm634, %v903, %v907
      %v909 = vshrl.u32 %v627, 16
      %v911 = vrot.slane %v909, 4
      %v912 = vor.u32 %v911, %v907
      %v913 = vrot.slane %v912, 4
      %v915 = vshll.u32 %v628, 16
      %v917 = vrot.slane %v915, 5
      %v918 = vsel %vm634, %v913, %v917
      %v919 = vshrl.u32 %v628, 16
      %v921 = vrot.slane %v919, 4
      %v922 = vor.u32 %v921, %v917
      %v923 = vrot.slane %v922, 4
      %v925 = vshll.u32 %v629, 16
      %v927 = vrot.slane %v925, 5
      %v928 = vsel %vm634, %v923, %v927
      %v929 = vshrl.u32 %v629, 16
      %v931 = vrot.slane %v929, 4
      %v932 = vor.u32 %v931, %v927
      %v933 = vrot.slane %v932, 4
      %v935 = vshll.u32 %v630, 16
      %v937 = vrot.slane %v935, 5
      %v938 = vsel %vm634, %v933, %v937
      %v939 = vshrl.u32 %v630, 16
      %v941 = vrot.slane %v939, 4
      %v942 = vor.u32 %v941, %v937
      %v943 = vrot.slane %v942, 4
      %v945 = vshll.u32 %v631, 16
      %v947 = vrot.slane %v945, 5
      %v948 = vsel %vm634, %v943, %v947
      %v949 = vshrl.u32 %v631, 16
      %v951 = vrot.slane %v949, 4
      %v952 = vor.u32 %v951, %v947
      %v953 = vrot.slane %v952, 4
      %v954 = vunpack.c.l.b16 %v638
      %v955 = vunpack.c.h.b16 %v638
      %v956 = vunpack.c.l.b16 0
      %v957 = vunpack.c.h.b16 0
      %vm958 = vcmp.ne.s32.totalorder %v954, %v956
      %vm959 = vcmp.ne.s32.totalorder %v955, %v957
      %vm960 = vmpackc.low %vm959, %vm958
      %v961 = vunpack.c.l.b16 %v648
      %v962 = vunpack.c.h.b16 %v648
      %v963 = vunpack.c.l.b16 0
      %v964 = vunpack.c.h.b16 0
      %vm965 = vcmp.ne.s32.totalorder %v961, %v963
      %vm966 = vcmp.ne.s32.totalorder %v962, %v964
      %vm967 = vmpackc.low %vm966, %vm965
      %v968 = vunpack.c.l.b16 %v658
      %v969 = vunpack.c.h.b16 %v658
      %v970 = vunpack.c.l.b16 0
      %v971 = vunpack.c.h.b16 0
      %vm972 = vcmp.ne.s32.totalorder %v968, %v970
      %vm973 = vcmp.ne.s32.totalorder %v969, %v971
      %vm974 = vmpackc.low %vm973, %vm972
      %v975 = vunpack.c.l.b16 %v668
      %v976 = vunpack.c.h.b16 %v668
      %v977 = vunpack.c.l.b16 0
      %v978 = vunpack.c.h.b16 0
      %vm979 = vcmp.ne.s32.totalorder %v975, %v977
      %vm980 = vcmp.ne.s32.totalorder %v976, %v978
      %vm981 = vmpackc.low %vm980, %vm979
      %v982 = vunpack.c.l.b16 %v678
      %v983 = vunpack.c.h.b16 %v678
      %v984 = vunpack.c.l.b16 0
      %v985 = vunpack.c.h.b16 0
      %vm986 = vcmp.ne.s32.totalorder %v982, %v984
      %vm987 = vcmp.ne.s32.totalorder %v983, %v985
      %vm988 = vmpackc.low %vm987, %vm986
      %v989 = vunpack.c.l.b16 %v688
      %v990 = vunpack.c.h.b16 %v688
      %v991 = vunpack.c.l.b16 0
      %v992 = vunpack.c.h.b16 0
      %vm993 = vcmp.ne.s32.totalorder %v989, %v991
      %vm994 = vcmp.ne.s32.totalorder %v990, %v992
      %vm995 = vmpackc.low %vm994, %vm993
      %v996 = vunpack.c.l.b16 %v698
      %v997 = vunpack.c.h.b16 %v698
      %v998 = vunpack.c.l.b16 0
      %v999 = vunpack.c.h.b16 0
      %vm1000 = vcmp.ne.s32.totalorder %v996, %v998
      %vm1001 = vcmp.ne.s32.totalorder %v997, %v999
      %vm1002 = vmpackc.low %vm1001, %vm1000
      %v1003 = vunpack.c.l.b16 %v708
      %v1004 = vunpack.c.h.b16 %v708
      %v1005 = vunpack.c.l.b16 0
      %v1006 = vunpack.c.h.b16 0
      %vm1007 = vcmp.ne.s32.totalorder %v1003, %v1005
      %vm1008 = vcmp.ne.s32.totalorder %v1004, %v1006
      %vm1009 = vmpackc.low %vm1008, %vm1007
      %v1010 = vunpack.c.l.b16 %v718
      %v1011 = vunpack.c.h.b16 %v718
      %v1012 = vunpack.c.l.b16 0
      %v1013 = vunpack.c.h.b16 0
      %vm1014 = vcmp.ne.s32.totalorder %v1010, %v1012
      %vm1015 = vcmp.ne.s32.totalorder %v1011, %v1013
      %vm1016 = vmpackc.low %vm1015, %vm1014
      %v1017 = vunpack.c.l.b16 %v728
      %v1018 = vunpack.c.h.b16 %v728
      %v1019 = vunpack.c.l.b16 0
      %v1020 = vunpack.c.h.b16 0
      %vm1021 = vcmp.ne.s32.totalorder %v1017, %v1019
      %vm1022 = vcmp.ne.s32.totalorder %v1018, %v1020
      %vm1023 = vmpackc.low %vm1022, %vm1021
      %v1024 = vunpack.c.l.b16 %v738
      %v1025 = vunpack.c.h.b16 %v738
      %v1026 = vunpack.c.l.b16 0
      %v1027 = vunpack.c.h.b16 0
      %vm1028 = vcmp.ne.s32.totalorder %v1024, %v1026
      %vm1029 = vcmp.ne.s32.totalorder %v1025, %v1027
      %vm1030 = vmpackc.low %vm1029, %vm1028
      %v1031 = vunpack.c.l.b16 %v748
      %v1032 = vunpack.c.h.b16 %v748
      %v1033 = vunpack.c.l.b16 0
      %v1034 = vunpack.c.h.b16 0
      %vm1035 = vcmp.ne.s32.totalorder %v1031, %v1033
      %vm1036 = vcmp.ne.s32.totalorder %v1032, %v1034
      %vm1037 = vmpackc.low %vm1036, %vm1035
      %v1038 = vunpack.c.l.b16 %v758
      %v1039 = vunpack.c.h.b16 %v758
      %v1040 = vunpack.c.l.b16 0
      %v1041 = vunpack.c.h.b16 0
      %vm1042 = vcmp.ne.s32.totalorder %v1038, %v1040
      %vm1043 = vcmp.ne.s32.totalorder %v1039, %v1041
      %vm1044 = vmpackc.low %vm1043, %vm1042
      %v1045 = vunpack.c.l.b16 %v768
      %v1046 = vunpack.c.h.b16 %v768
      %v1047 = vunpack.c.l.b16 0
      %v1048 = vunpack.c.h.b16 0
      %vm1049 = vcmp.ne.s32.totalorder %v1045, %v1047
      %vm1050 = vcmp.ne.s32.totalorder %v1046, %v1048
      %vm1051 = vmpackc.low %vm1050, %vm1049
      %v1052 = vunpack.c.l.b16 %v778
      %v1053 = vunpack.c.h.b16 %v778
      %v1054 = vunpack.c.l.b16 0
      %v1055 = vunpack.c.h.b16 0
      %vm1056 = vcmp.ne.s32.totalorder %v1052, %v1054
      %vm1057 = vcmp.ne.s32.totalorder %v1053, %v1055
      %vm1058 = vmpackc.low %vm1057, %vm1056
      %v1059 = vunpack.c.l.b16 %v788
      %v1060 = vunpack.c.h.b16 %v788
      %v1061 = vunpack.c.l.b16 0
      %v1062 = vunpack.c.h.b16 0
      %vm1063 = vcmp.ne.s32.totalorder %v1059, %v1061
      %vm1064 = vcmp.ne.s32.totalorder %v1060, %v1062
      %vm1065 = vmpackc.low %vm1064, %vm1063
      %v1066 = vunpack.c.l.b16 %v798
      %v1067 = vunpack.c.h.b16 %v798
      %v1068 = vunpack.c.l.b16 0
      %v1069 = vunpack.c.h.b16 0
      %vm1070 = vcmp.ne.s32.totalorder %v1066, %v1068
      %vm1071 = vcmp.ne.s32.totalorder %v1067, %v1069
      %vm1072 = vmpackc.low %vm1071, %vm1070
      %v1073 = vunpack.c.l.b16 %v808
      %v1074 = vunpack.c.h.b16 %v808
      %v1075 = vunpack.c.l.b16 0
      %v1076 = vunpack.c.h.b16 0
      %vm1077 = vcmp.ne.s32.totalorder %v1073, %v1075
      %vm1078 = vcmp.ne.s32.totalorder %v1074, %v1076
      %vm1079 = vmpackc.low %vm1078, %vm1077
      %v1080 = vunpack.c.l.b16 %v818
      %v1081 = vunpack.c.h.b16 %v818
      %v1082 = vunpack.c.l.b16 0
      %v1083 = vunpack.c.h.b16 0
      %vm1084 = vcmp.ne.s32.totalorder %v1080, %v1082
      %vm1085 = vcmp.ne.s32.totalorder %v1081, %v1083
      %vm1086 = vmpackc.low %vm1085, %vm1084
      %v1087 = vunpack.c.l.b16 %v828
      %v1088 = vunpack.c.h.b16 %v828
      %v1089 = vunpack.c.l.b16 0
      %v1090 = vunpack.c.h.b16 0
      %vm1091 = vcmp.ne.s32.totalorder %v1087, %v1089
      %vm1092 = vcmp.ne.s32.totalorder %v1088, %v1090
      %vm1093 = vmpackc.low %vm1092, %vm1091
      %v1094 = vunpack.c.l.b16 %v838
      %v1095 = vunpack.c.h.b16 %v838
      %v1096 = vunpack.c.l.b16 0
      %v1097 = vunpack.c.h.b16 0
      %vm1098 = vcmp.ne.s32.totalorder %v1094, %v1096
      %vm1099 = vcmp.ne.s32.totalorder %v1095, %v1097
      %vm1100 = vmpackc.low %vm1099, %vm1098
      %v1101 = vunpack.c.l.b16 %v848
      %v1102 = vunpack.c.h.b16 %v848
      %v1103 = vunpack.c.l.b16 0
      %v1104 = vunpack.c.h.b16 0
      %vm1105 = vcmp.ne.s32.totalorder %v1101, %v1103
      %vm1106 = vcmp.ne.s32.totalorder %v1102, %v1104
      %vm1107 = vmpackc.low %vm1106, %vm1105
      %v1108 = vunpack.c.l.b16 %v858
      %v1109 = vunpack.c.h.b16 %v858
      %v1110 = vunpack.c.l.b16 0
      %v1111 = vunpack.c.h.b16 0
      %vm1112 = vcmp.ne.s32.totalorder %v1108, %v1110
      %vm1113 = vcmp.ne.s32.totalorder %v1109, %v1111
      %vm1114 = vmpackc.low %vm1113, %vm1112
      %v1115 = vunpack.c.l.b16 %v868
      %v1116 = vunpack.c.h.b16 %v868
      %v1117 = vunpack.c.l.b16 0
      %v1118 = vunpack.c.h.b16 0
      %vm1119 = vcmp.ne.s32.totalorder %v1115, %v1117
      %vm1120 = vcmp.ne.s32.totalorder %v1116, %v1118
      %vm1121 = vmpackc.low %vm1120, %vm1119
      %v1122 = vunpack.c.l.b16 %v878
      %v1123 = vunpack.c.h.b16 %v878
      %v1124 = vunpack.c.l.b16 0
      %v1125 = vunpack.c.h.b16 0
      %vm1126 = vcmp.ne.s32.totalorder %v1122, %v1124
      %vm1127 = vcmp.ne.s32.totalorder %v1123, %v1125
      %vm1128 = vmpackc.low %vm1127, %vm1126
      %v1129 = vunpack.c.l.b16 %v888
      %v1130 = vunpack.c.h.b16 %v888
      %v1131 = vunpack.c.l.b16 0
      %v1132 = vunpack.c.h.b16 0
      %vm1133 = vcmp.ne.s32.totalorder %v1129, %v1131
      %vm1134 = vcmp.ne.s32.totalorder %v1130, %v1132
      %vm1135 = vmpackc.low %vm1134, %vm1133
      %v1136 = vunpack.c.l.b16 %v898
      %v1137 = vunpack.c.h.b16 %v898
      %v1138 = vunpack.c.l.b16 0
      %v1139 = vunpack.c.h.b16 0
      %vm1140 = vcmp.ne.s32.totalorder %v1136, %v1138
      %vm1141 = vcmp.ne.s32.totalorder %v1137, %v1139
      %vm1142 = vmpackc.low %vm1141, %vm1140
      %v1143 = vunpack.c.l.b16 %v908
      %v1144 = vunpack.c.h.b16 %v908
      %v1145 = vunpack.c.l.b16 0
      %v1146 = vunpack.c.h.b16 0
      %vm1147 = vcmp.ne.s32.totalorder %v1143, %v1145
      %vm1148 = vcmp.ne.s32.totalorder %v1144, %v1146
      %vm1149 = vmpackc.low %vm1148, %vm1147
      %v1150 = vunpack.c.l.b16 %v918
      %v1151 = vunpack.c.h.b16 %v918
      %v1152 = vunpack.c.l.b16 0
      %v1153 = vunpack.c.h.b16 0
      %vm1154 = vcmp.ne.s32.totalorder %v1150, %v1152
      %vm1155 = vcmp.ne.s32.totalorder %v1151, %v1153
      %vm1156 = vmpackc.low %vm1155, %vm1154
      %v1157 = vunpack.c.l.b16 %v928
      %v1158 = vunpack.c.h.b16 %v928
      %v1159 = vunpack.c.l.b16 0
      %v1160 = vunpack.c.h.b16 0
      %vm1161 = vcmp.ne.s32.totalorder %v1157, %v1159
      %vm1162 = vcmp.ne.s32.totalorder %v1158, %v1160
      %vm1163 = vmpackc.low %vm1162, %vm1161
      %v1164 = vunpack.c.l.b16 %v938
      %v1165 = vunpack.c.h.b16 %v938
      %v1166 = vunpack.c.l.b16 0
      %v1167 = vunpack.c.h.b16 0
      %vm1168 = vcmp.ne.s32.totalorder %v1164, %v1166
      %vm1169 = vcmp.ne.s32.totalorder %v1165, %v1167
      %vm1170 = vmpackc.low %vm1169, %vm1168
      %v1171 = vunpack.c.l.b16 %v948
      %v1172 = vunpack.c.h.b16 %v948
      %v1173 = vunpack.c.l.b16 0
      %v1174 = vunpack.c.h.b16 0
      %vm1175 = vcmp.ne.s32.totalorder %v1171, %v1173
      %vm1176 = vcmp.ne.s32.totalorder %v1172, %v1174
      %vm1177 = vmpackc.low %vm1176, %vm1175
      %v1178 = vunpack.c.l.b16 %v953
      %v1179 = vunpack.c.h.b16 %v953
      %v1180 = vunpack.c.l.b16 0
      %v1181 = vunpack.c.h.b16 0
      %vm1182 = vcmp.ne.s32.totalorder %v1178, %v1180
      %vm1183 = vcmp.ne.s32.totalorder %v1179, %v1181
      %vm1184 = vmpackc.low %vm1183, %vm1182
      %v1185 = vsel %vm960, %v471, 0
      %v1186 = vsel %vm967, %v472, 0
      %v1187 = vsel %vm974, %v473, 0
      %v1188 = vsel %vm981, %v474, 0
      %v1189 = vsel %vm988, %v475, 0
      %v1190 = vsel %vm995, %v476, 0
      %v1191 = vsel %vm1002, %v477, 0
      %v1192 = vsel %vm1009, %v478, 0
      %v1193 = vsel %vm1016, %v479, 0
      %v1194 = vsel %vm1023, %v480, 0
      %v1195 = vsel %vm1030, %v481, 0
      %v1196 = vsel %vm1037, %v482, 0
      %v1197 = vsel %vm1044, %v483, 0
      %v1198 = vsel %vm1051, %v484, 0
      %v1199 = vsel %vm1058, %v485, 0
      %v1200 = vsel %vm1065, %v486, 0
      %v1201 = vsel %vm1072, %v487, 0
      %v1202 = vsel %vm1079, %v488, 0
      %v1203 = vsel %vm1086, %v489, 0
      %v1204 = vsel %vm1093, %v490, 0
      %v1205 = vsel %vm1100, %v491, 0
      %v1206 = vsel %vm1107, %v492, 0
      %v1207 = vsel %vm1114, %v493, 0
      %v1208 = vsel %vm1121, %v494, 0
      %v1209 = vsel %vm1128, %v495, 0
      %v1210 = vsel %vm1135, %v496, 0
      %v1211 = vsel %vm1142, %v497, 0
      %v1212 = vsel %vm1149, %v498, 0
      %v1213 = vsel %vm1156, %v499, 0
      %v1214 = vsel %vm1163, %v500, 0
      %v1215 = vsel %vm1170, %v501, 0
      %v1216 = vsel %vm1177, %v502, 0
      %v1217 = vsel %vm1184, %v503, 0
      %v1218 = vld [vmem:[%s3] sm:$0xf]
      %v1219 = vld [vmem:[%s3 + $0x4] sm:$0xf]
      %v1220 = vld [vmem:[%s3 + $0x8] sm:$0xf]
      %v1221 = vld [vmem:[%s3 + $0xc] sm:$0xf]
      %v1222 = vld [vmem:[%s3 + $0x10] sm:$0xf]
      %v1223 = vld [vmem:[%s3 + $0x14] sm:$0xf]
      %v1224 = vld [vmem:[%s3 + $0x18] sm:$0xf]
      %v1225 = vld [vmem:[%s3 + $0x1c] sm:$0xf]
      %v1226 = vld [vmem:[%s3 + $0x20] sm:$0xf]
      %v1227 = vld [vmem:[%s3 + $0x24] sm:$0xf]
      %v1228 = vld [vmem:[%s3 + $0x28] sm:$0xf]
      %v1229 = vld [vmem:[%s3 + $0x2c] sm:$0xf]
      %v1230 = vld [vmem:[%s3 + $0x30] sm:$0xf]
      %v1231 = vld [vmem:[%s3 + $0x34] sm:$0xf]
      %v1232 = vld [vmem:[%s3 + $0x38] sm:$0xf]
      %v1233 = vld [vmem:[%s3 + $0x3c] sm:$0xf]
      %s1234 = scalar_lea.vmem %s3, 64
      %v1235 = vld [vmem:[%s1234] sm:$0xf]
      %v1236 = vld [vmem:[%s1234 + $0x4] sm:$0xf]
      %v1237 = vld [vmem:[%s1234 + $0x8] sm:$0xf]
      %v1238 = vld [vmem:[%s1234 + $0xc] sm:$0xf]
      %v1239 = vld [vmem:[%s1234 + $0x10] sm:$0xf]
      %v1240 = vld [vmem:[%s1234 + $0x14] sm:$0xf]
      %v1241 = vld [vmem:[%s1234 + $0x18] sm:$0xf]
      %v1242 = vld [vmem:[%s1234 + $0x1c] sm:$0xf]
      %v1243 = vld [vmem:[%s1234 + $0x20] sm:$0xf]
      %v1244 = vld [vmem:[%s1234 + $0x24] sm:$0xf]
      %v1245 = vld [vmem:[%s1234 + $0x28] sm:$0xf]
      %v1246 = vld [vmem:[%s1234 + $0x2c] sm:$0xf]
      %v1247 = vld [vmem:[%s1234 + $0x30] sm:$0xf]
      %v1248 = vld [vmem:[%s1234 + $0x34] sm:$0xf]
      %v1249 = vld [vmem:[%s1234 + $0x38] sm:$0xf]
      %v1250 = vld [vmem:[%s1234 + $0x3c] sm:$0xf]
      %v1283 = vunpack.c.l.b16 %v472
      %v1284 = vunpack.c.l.b16 %v473
      %v1285 = vunpack.c.l.b16 %v474
      %v1286 = vunpack.c.l.b16 %v475
      %v1287 = vunpack.c.l.b16 %v476
      %v1288 = vunpack.c.l.b16 %v477
      %v1289 = vunpack.c.l.b16 %v478
      %v1290 = vunpack.c.l.b16 %v479
      %v1291 = vunpack.c.l.b16 %v480
      %v1292 = vunpack.c.l.b16 %v481
      %v1293 = vunpack.c.l.b16 %v482
      %v1294 = vunpack.c.l.b16 %v483
      %v1295 = vunpack.c.l.b16 %v484
      %v1296 = vunpack.c.l.b16 %v485
      %v1297 = vunpack.c.l.b16 %v486
      %v1298 = vunpack.c.l.b16 %v487
      %v1299 = vunpack.c.l.b16 %v488
      %v1300 = vunpack.c.l.b16 %v489
      %v1301 = vunpack.c.l.b16 %v490
      %v1302 = vunpack.c.l.b16 %v491
      %v1303 = vunpack.c.l.b16 %v492
      %v1304 = vunpack.c.l.b16 %v493
      %v1305 = vunpack.c.l.b16 %v494
      %v1306 = vunpack.c.l.b16 %v495
      %v1307 = vunpack.c.l.b16 %v496
      %v1308 = vunpack.c.l.b16 %v497
      %v1309 = vunpack.c.l.b16 %v498
      %v1310 = vunpack.c.l.b16 %v499
      %v1311 = vunpack.c.l.b16 %v500
      %v1312 = vunpack.c.l.b16 %v501
      %v1313 = vunpack.c.l.b16 %v502
      %v1314 = vunpack.c.l.b16 %v503
      %v1315 = vpack.c.b16 %v1284, %v1283
      %v1316 = vpack.c.b16 %v1286, %v1285
      %v1317 = vpack.c.b16 %v1288, %v1287
      %v1318 = vpack.c.b16 %v1290, %v1289
      %v1319 = vpack.c.b16 %v1292, %v1291
      %v1320 = vpack.c.b16 %v1294, %v1293
      %v1321 = vpack.c.b16 %v1296, %v1295
      %v1322 = vpack.c.b16 %v1298, %v1297
      %v1323 = vpack.c.b16 %v1300, %v1299
      %v1324 = vpack.c.b16 %v1302, %v1301
      %v1325 = vpack.c.b16 %v1304, %v1303
      %v1326 = vpack.c.b16 %v1306, %v1305
      %v1327 = vpack.c.b16 %v1308, %v1307
      %v1328 = vpack.c.b16 %v1310, %v1309
      %v1329 = vpack.c.b16 %v1312, %v1311
      %v1330 = vpack.c.b16 %v1314, %v1313
      %v1363 = vunpack.c.l.b16 %v1235
      %v1364 = vunpack.c.l.b16 %v1236
      %v1365 = vunpack.c.l.b16 %v1237
      %v1366 = vunpack.c.l.b16 %v1238
      %v1367 = vunpack.c.l.b16 %v1239
      %v1368 = vunpack.c.l.b16 %v1240
      %v1369 = vunpack.c.l.b16 %v1241
      %v1370 = vunpack.c.l.b16 %v1242
      %v1371 = vunpack.c.l.b16 %v1243
      %v1372 = vunpack.c.l.b16 %v1244
      %v1373 = vunpack.c.l.b16 %v1245
      %v1374 = vunpack.c.l.b16 %v1246
      %v1375 = vunpack.c.l.b16 %v1247
      %v1376 = vunpack.c.l.b16 %v1248
      %v1377 = vunpack.c.l.b16 %v1249
      %v1378 = vunpack.c.l.b16 %v1250
      %v1379 = vpack.c.b16 %v1364, %v1363
      %v1380 = vpack.c.b16 %v1366, %v1365
      %v1381 = vpack.c.b16 %v1368, %v1367
      %v1382 = vpack.c.b16 %v1370, %v1369
      %v1383 = vpack.c.b16 %v1372, %v1371
      %v1384 = vpack.c.b16 %v1374, %v1373
      %v1385 = vpack.c.b16 %v1376, %v1375
      %v1386 = vpack.c.b16 %v1378, %v1377
      %1395 = vmatpush.bf16.msra.mxu0 %v1386
      %1396 = vmatpush.bf16.msra.mxu0 %v1385
      %1397 = vmatpush.bf16.msra.mxu0 %v1384
      %1398 = vmatpush.bf16.msra.mxu0 %v1383
      %1399 = vmatpush.bf16.msra.mxu0 %v1382
      %1400 = vmatpush.bf16.msra.mxu0 %v1381
      %1401 = vmatpush.bf16.msra.mxu0 %v1380
      %1402 = vmatpush.bf16.msra.mxu0 %v1379
      %1403 = vmatmul.bf16.gmra.mxu0 %v1315
      %v1404 = vpop.f32.mrf.mxu0
      %v1405 = vadd.f32 0.0, %v1404
      %v1406 = vpop.f32.mrf.mxu0
      %v1407 = vadd.f32 0.0, %v1406
      %1408 = vmatmul.bf16.gmra.mxu0 %v1316
      %v1409 = vpop.f32.mrf.mxu0
      %v1410 = vadd.f32 0.0, %v1409
      %v1411 = vpop.f32.mrf.mxu0
      %v1412 = vadd.f32 0.0, %v1411
      %1413 = vmatmul.bf16.gmra.mxu0 %v1317
      %v1414 = vpop.f32.mrf.mxu0
      %v1415 = vadd.f32 0.0, %v1414
      %v1416 = vpop.f32.mrf.mxu0
      %v1417 = vadd.f32 0.0, %v1416
      %1418 = vmatmul.bf16.gmra.mxu0 %v1318
      %v1419 = vpop.f32.mrf.mxu0
      %v1420 = vadd.f32 0.0, %v1419
      %v1421 = vpop.f32.mrf.mxu0
      %v1422 = vadd.f32 0.0, %v1421
      %1423 = vmatmul.bf16.gmra.mxu0 %v1319
      %v1424 = vpop.f32.mrf.mxu0
      %v1425 = vadd.f32 0.0, %v1424
      %v1426 = vpop.f32.mrf.mxu0
      %v1427 = vadd.f32 0.0, %v1426
      %1428 = vmatmul.bf16.gmra.mxu0 %v1320
      %v1429 = vpop.f32.mrf.mxu0
      %v1430 = vadd.f32 0.0, %v1429
      %v1431 = vpop.f32.mrf.mxu0
      %v1432 = vadd.f32 0.0, %v1431
      %1433 = vmatmul.bf16.gmra.mxu0 %v1321
      %v1434 = vpop.f32.mrf.mxu0
      %v1435 = vadd.f32 0.0, %v1434
      %v1436 = vpop.f32.mrf.mxu0
      %v1437 = vadd.f32 0.0, %v1436
      %1438 = vmatmul.bf16.gmra.mxu0 %v1322
      %v1439 = vpop.f32.mrf.mxu0
      %v1440 = vadd.f32 0.0, %v1439
      %v1441 = vpop.f32.mrf.mxu0
      %v1442 = vadd.f32 0.0, %v1441
      %1443 = vmatmul.bf16.gmra.mxu0 %v1323
      %v1444 = vpop.f32.mrf.mxu0
      %v1445 = vadd.f32 0.0, %v1444
      %v1446 = vpop.f32.mrf.mxu0
      %v1447 = vadd.f32 0.0, %v1446
      %1448 = vmatmul.bf16.gmra.mxu0 %v1324
      %v1449 = vpop.f32.mrf.mxu0
      %v1450 = vadd.f32 0.0, %v1449
      %v1451 = vpop.f32.mrf.mxu0
      %v1452 = vadd.f32 0.0, %v1451
      %1453 = vmatmul.bf16.gmra.mxu0 %v1325
      %v1454 = vpop.f32.mrf.mxu0
      %v1455 = vadd.f32 0.0, %v1454
      %v1456 = vpop.f32.mrf.mxu0
      %v1457 = vadd.f32 0.0, %v1456
      %1458 = vmatmul.bf16.gmra.mxu0 %v1326
      %v1459 = vpop.f32.mrf.mxu0
      %v1460 = vadd.f32 0.0, %v1459
      %v1461 = vpop.f32.mrf.mxu0
      %v1462 = vadd.f32 0.0, %v1461
      %1463 = vmatmul.bf16.gmra.mxu0 %v1327
      %v1464 = vpop.f32.mrf.mxu0
      %v1465 = vadd.f32 0.0, %v1464
      %v1466 = vpop.f32.mrf.mxu0
      %v1467 = vadd.f32 0.0, %v1466
      %1468 = vmatmul.bf16.gmra.mxu0 %v1328
      %v1469 = vpop.f32.mrf.mxu0
      %v1470 = vadd.f32 0.0, %v1469
      %v1471 = vpop.f32.mrf.mxu0
      %v1472 = vadd.f32 0.0, %v1471
      %1473 = vmatmul.bf16.gmra.mxu0 %v1329
      %v1474 = vpop.f32.mrf.mxu0
      %v1475 = vadd.f32 0.0, %v1474
      %v1476 = vpop.f32.mrf.mxu0
      %v1477 = vadd.f32 0.0, %v1476
      %1478 = vmatmul.bf16.gmra.mxu0 %v1330
      %v1479 = vpop.f32.mrf.mxu0
      %v1480 = vadd.f32 0.0, %v1479
      %v1481 = vpop.f32.mrf.mxu0
      %v1482 = vadd.f32 0.0, %v1481
      %1483 = vdwg.mxu0
      %v1517 = vunpack.c.l.b16 %v1185
      %v1518 = vunpack.c.l.b16 %v1186
      %v1519 = vunpack.c.l.b16 %v1187
      %v1520 = vunpack.c.l.b16 %v1188
      %v1521 = vunpack.c.l.b16 %v1189
      %v1522 = vunpack.c.l.b16 %v1190
      %v1523 = vunpack.c.l.b16 %v1191
      %v1524 = vunpack.c.l.b16 %v1192
      %v1525 = vunpack.c.l.b16 %v1193
      %v1526 = vunpack.c.l.b16 %v1194
      %v1527 = vunpack.c.l.b16 %v1195
      %v1528 = vunpack.c.l.b16 %v1196
      %v1529 = vunpack.c.l.b16 %v1197
      %v1530 = vunpack.c.l.b16 %v1198
      %v1531 = vunpack.c.l.b16 %v1199
      %v1532 = vunpack.c.l.b16 %v1200
      %v1533 = vunpack.c.l.b16 %v1201
      %v1534 = vunpack.c.l.b16 %v1202
      %v1535 = vunpack.c.l.b16 %v1203
      %v1536 = vunpack.c.l.b16 %v1204
      %v1537 = vunpack.c.l.b16 %v1205
      %v1538 = vunpack.c.l.b16 %v1206
      %v1539 = vunpack.c.l.b16 %v1207
      %v1540 = vunpack.c.l.b16 %v1208
      %v1541 = vunpack.c.l.b16 %v1209
      %v1542 = vunpack.c.l.b16 %v1210
      %v1543 = vunpack.c.l.b16 %v1211
      %v1544 = vunpack.c.l.b16 %v1212
      %v1545 = vunpack.c.l.b16 %v1213
      %v1546 = vunpack.c.l.b16 %v1214
      %v1547 = vunpack.c.l.b16 %v1215
      %v1548 = vunpack.c.l.b16 %v1216
      %v1549 = vunpack.c.l.b16 %v1217
      %v1550 = vpack.c.b16 %v1518, %v1517
      %v1551 = vpack.c.b16 %v1520, %v1519
      %v1552 = vpack.c.b16 %v1522, %v1521
      %v1553 = vpack.c.b16 %v1524, %v1523
      %v1554 = vpack.c.b16 %v1526, %v1525
      %v1555 = vpack.c.b16 %v1528, %v1527
      %v1556 = vpack.c.b16 %v1530, %v1529
      %v1557 = vpack.c.b16 %v1532, %v1531
      %v1558 = vpack.c.b16 %v1534, %v1533
      %v1559 = vpack.c.b16 %v1536, %v1535
      %v1560 = vpack.c.b16 %v1538, %v1537
      %v1561 = vpack.c.b16 %v1540, %v1539
      %v1562 = vpack.c.b16 %v1542, %v1541
      %v1563 = vpack.c.b16 %v1544, %v1543
      %v1564 = vpack.c.b16 %v1546, %v1545
      %v1565 = vpack.c.b16 %v1548, %v1547
      %v1566 = vpack.c.b16 %v1549, %v1549
      %vm1567 = vsmask.f32 4352
      %v1569 = vshrl.u32 %v1550, 16
      %v1571 = vrot.slane %v1569, 3
      %v1572 = vshll.u32 %v1550, 16
      %v1574 = vrot.slane %v1572, 4
      %v1575 = vor.u32 %v1571, %v1574
      %v1577 = vshrl.u32 %v1551, 16
      %v1579 = vrot.slane %v1577, 3
      %v1580 = vshll.u32 %v1551, 16
      %v1582 = vrot.slane %v1580, 4
      %v1583 = vor.u32 %v1579, %v1582
      %v1584 = vsel %vm1567, %v1575, %v1583
      %v1586 = vshrl.u32 %v1552, 16
      %v1588 = vrot.slane %v1586, 3
      %v1589 = vshll.u32 %v1552, 16
      %v1591 = vrot.slane %v1589, 4
      %v1592 = vor.u32 %v1588, %v1591
      %v1593 = vsel %vm1567, %v1583, %v1592
      %v1595 = vshrl.u32 %v1553, 16
      %v1597 = vrot.slane %v1595, 3
      %v1598 = vshll.u32 %v1553, 16
      %v1600 = vrot.slane %v1598, 4
      %v1601 = vor.u32 %v1597, %v1600
      %v1602 = vsel %vm1567, %v1592, %v1601
      %v1604 = vshrl.u32 %v1554, 16
      %v1606 = vrot.slane %v1604, 3
      %v1607 = vshll.u32 %v1554, 16
      %v1609 = vrot.slane %v1607, 4
      %v1610 = vor.u32 %v1606, %v1609
      %v1611 = vsel %vm1567, %v1601, %v1610
      %v1613 = vshrl.u32 %v1555, 16
      %v1615 = vrot.slane %v1613, 3
      %v1616 = vshll.u32 %v1555, 16
      %v1618 = vrot.slane %v1616, 4
      %v1619 = vor.u32 %v1615, %v1618
      %v1620 = vsel %vm1567, %v1610, %v1619
      %v1622 = vshrl.u32 %v1556, 16
      %v1624 = vrot.slane %v1622, 3
      %v1625 = vshll.u32 %v1556, 16
      %v1627 = vrot.slane %v1625, 4
      %v1628 = vor.u32 %v1624, %v1627
      %v1629 = vsel %vm1567, %v1619, %v1628
      %v1631 = vshrl.u32 %v1557, 16
      %v1633 = vrot.slane %v1631, 3
      %v1634 = vshll.u32 %v1557, 16
      %v1636 = vrot.slane %v1634, 4
      %v1637 = vor.u32 %v1633, %v1636
      %v1638 = vsel %vm1567, %v1628, %v1637
      %v1640 = vshrl.u32 %v1558, 16
      %v1642 = vrot.slane %v1640, 3
      %v1643 = vshll.u32 %v1558, 16
      %v1645 = vrot.slane %v1643, 4
      %v1646 = vor.u32 %v1642, %v1645
      %v1647 = vsel %vm1567, %v1637, %v1646
      %v1649 = vshrl.u32 %v1559, 16
      %v1651 = vrot.slane %v1649, 3
      %v1652 = vshll.u32 %v1559, 16
      %v1654 = vrot.slane %v1652, 4
      %v1655 = vor.u32 %v1651, %v1654
      %v1656 = vsel %vm1567, %v1646, %v1655
      %v1658 = vshrl.u32 %v1560, 16
      %v1660 = vrot.slane %v1658, 3
      %v1661 = vshll.u32 %v1560, 16
      %v1663 = vrot.slane %v1661, 4
      %v1664 = vor.u32 %v1660, %v1663
      %v1665 = vsel %vm1567, %v1655, %v1664
      %v1667 = vshrl.u32 %v1561, 16
      %v1669 = vrot.slane %v1667, 3
      %v1670 = vshll.u32 %v1561, 16
      %v1672 = vrot.slane %v1670, 4
      %v1673 = vor.u32 %v1669, %v1672
      %v1674 = vsel %vm1567, %v1664, %v1673
      %v1676 = vshrl.u32 %v1562, 16
      %v1678 = vrot.slane %v1676, 3
      %v1679 = vshll.u32 %v1562, 16
      %v1681 = vrot.slane %v1679, 4
      %v1682 = vor.u32 %v1678, %v1681
      %v1683 = vsel %vm1567, %v1673, %v1682
      %v1685 = vshrl.u32 %v1563, 16
      %v1687 = vrot.slane %v1685, 3
      %v1688 = vshll.u32 %v1563, 16
      %v1690 = vrot.slane %v1688, 4
      %v1691 = vor.u32 %v1687, %v1690
      %v1692 = vsel %vm1567, %v1682, %v1691
      %v1694 = vshrl.u32 %v1564, 16
      %v1696 = vrot.slane %v1694, 3
      %v1697 = vshll.u32 %v1564, 16
      %v1699 = vrot.slane %v1697, 4
      %v1700 = vor.u32 %v1696, %v1699
      %v1701 = vsel %vm1567, %v1691, %v1700
      %v1703 = vshrl.u32 %v1565, 16
      %v1705 = vrot.slane %v1703, 3
      %v1706 = vshll.u32 %v1565, 16
      %v1708 = vrot.slane %v1706, 4
      %v1709 = vor.u32 %v1705, %v1708
      %v1710 = vsel %vm1567, %v1700, %v1709
      %v1712 = vshrl.u32 %v1566, 16
      %v1714 = vrot.slane %v1712, 3
      %v1715 = vshll.u32 %v1566, 16
      %v1717 = vrot.slane %v1715, 4
      %v1718 = vor.u32 %v1714, %v1717
      %v1719 = vsel %vm1567, %v1709, %v1718
      %v1752 = vunpack.c.l.b16 %v1218
      %v1753 = vunpack.c.l.b16 %v1219
      %v1754 = vunpack.c.l.b16 %v1220
      %v1755 = vunpack.c.l.b16 %v1221
      %v1756 = vunpack.c.l.b16 %v1222
      %v1757 = vunpack.c.l.b16 %v1223
      %v1758 = vunpack.c.l.b16 %v1224
      %v1759 = vunpack.c.l.b16 %v1225
      %v1760 = vunpack.c.l.b16 %v1226
      %v1761 = vunpack.c.l.b16 %v1227
      %v1762 = vunpack.c.l.b16 %v1228
      %v1763 = vunpack.c.l.b16 %v1229
      %v1764 = vunpack.c.l.b16 %v1230
      %v1765 = vunpack.c.l.b16 %v1231
      %v1766 = vunpack.c.l.b16 %v1232
      %v1767 = vunpack.c.l.b16 %v1233
      %v1768 = vpack.c.b16 %v1753, %v1752
      %v1769 = vpack.c.b16 %v1755, %v1754
      %v1770 = vpack.c.b16 %v1757, %v1756
      %v1771 = vpack.c.b16 %v1759, %v1758
      %v1772 = vpack.c.b16 %v1761, %v1760
      %v1773 = vpack.c.b16 %v1763, %v1762
      %v1774 = vpack.c.b16 %v1765, %v1764
      %v1775 = vpack.c.b16 %v1767, %v1766
      %1784 = vmatpush.bf16.msra.mxu0 %v1775
      %1785 = vmatpush.bf16.msra.mxu0 %v1774
      %1786 = vmatpush.bf16.msra.mxu0 %v1773
      %1787 = vmatpush.bf16.msra.mxu0 %v1772
      %1788 = vmatpush.bf16.msra.mxu0 %v1771
      %1789 = vmatpush.bf16.msra.mxu0 %v1770
      %1790 = vmatpush.bf16.msra.mxu0 %v1769
      %1791 = vmatpush.bf16.msra.mxu0 %v1768
      %1792 = vmatmul.bf16.gmra.mxu0 %v1584
      %v1793 = vpop.f32.mrf.mxu0
      %v1794 = vadd.f32 %v1405, %v1793
      %v1795 = vpop.f32.mrf.mxu0
      %v1796 = vadd.f32 %v1407, %v1795
      %1797 = vmatmul.bf16.gmra.mxu0 %v1593
      %v1798 = vpop.f32.mrf.mxu0
      %v1799 = vadd.f32 %v1410, %v1798
      %v1800 = vpop.f32.mrf.mxu0
      %v1801 = vadd.f32 %v1412, %v1800
      %1802 = vmatmul.bf16.gmra.mxu0 %v1602
      %v1803 = vpop.f32.mrf.mxu0
      %v1804 = vadd.f32 %v1415, %v1803
      %v1805 = vpop.f32.mrf.mxu0
      %v1806 = vadd.f32 %v1417, %v1805
      %1807 = vmatmul.bf16.gmra.mxu0 %v1611
      %v1808 = vpop.f32.mrf.mxu0
      %v1809 = vadd.f32 %v1420, %v1808
      %v1810 = vpop.f32.mrf.mxu0
      %v1811 = vadd.f32 %v1422, %v1810
      %1812 = vmatmul.bf16.gmra.mxu0 %v1620
      %v1813 = vpop.f32.mrf.mxu0
      %v1814 = vadd.f32 %v1425, %v1813
      %v1815 = vpop.f32.mrf.mxu0
      %v1816 = vadd.f32 %v1427, %v1815
      %1817 = vmatmul.bf16.gmra.mxu0 %v1629
      %v1818 = vpop.f32.mrf.mxu0
      %v1819 = vadd.f32 %v1430, %v1818
      %v1820 = vpop.f32.mrf.mxu0
      %v1821 = vadd.f32 %v1432, %v1820
      %1822 = vmatmul.bf16.gmra.mxu0 %v1638
      %v1823 = vpop.f32.mrf.mxu0
      %v1824 = vadd.f32 %v1435, %v1823
      %v1825 = vpop.f32.mrf.mxu0
      %v1826 = vadd.f32 %v1437, %v1825
      %1827 = vmatmul.bf16.gmra.mxu0 %v1647
      %v1828 = vpop.f32.mrf.mxu0
      %v1829 = vadd.f32 %v1440, %v1828
      %v1830 = vpop.f32.mrf.mxu0
      %v1831 = vadd.f32 %v1442, %v1830
      %1832 = vmatmul.bf16.gmra.mxu0 %v1656
      %v1833 = vpop.f32.mrf.mxu0
      %v1834 = vadd.f32 %v1445, %v1833
      %v1835 = vpop.f32.mrf.mxu0
      %v1836 = vadd.f32 %v1447, %v1835
      %1837 = vmatmul.bf16.gmra.mxu0 %v1665
      %v1838 = vpop.f32.mrf.mxu0
      %v1839 = vadd.f32 %v1450, %v1838
      %v1840 = vpop.f32.mrf.mxu0
      %v1841 = vadd.f32 %v1452, %v1840
      %1842 = vmatmul.bf16.gmra.mxu0 %v1674
      %v1843 = vpop.f32.mrf.mxu0
      %v1844 = vadd.f32 %v1455, %v1843
      %v1845 = vpop.f32.mrf.mxu0
      %v1846 = vadd.f32 %v1457, %v1845
      %1847 = vmatmul.bf16.gmra.mxu0 %v1683
      %v1848 = vpop.f32.mrf.mxu0
      %v1849 = vadd.f32 %v1460, %v1848
      %v1850 = vpop.f32.mrf.mxu0
      %v1851 = vadd.f32 %v1462, %v1850
      %1852 = vmatmul.bf16.gmra.mxu0 %v1692
      %v1853 = vpop.f32.mrf.mxu0
      %v1854 = vadd.f32 %v1465, %v1853
      %v1855 = vpop.f32.mrf.mxu0
      %v1856 = vadd.f32 %v1467, %v1855
      %1857 = vmatmul.bf16.gmra.mxu0 %v1701
      %v1858 = vpop.f32.mrf.mxu0
      %v1859 = vadd.f32 %v1470, %v1858
      %v1860 = vpop.f32.mrf.mxu0
      %v1861 = vadd.f32 %v1472, %v1860
      %1862 = vmatmul.bf16.gmra.mxu0 %v1710
      %v1863 = vpop.f32.mrf.mxu0
      %v1864 = vadd.f32 %v1475, %v1863
      %v1865 = vpop.f32.mrf.mxu0
      %v1866 = vadd.f32 %v1477, %v1865
      %1867 = vmatmul.bf16.gmra.mxu0 %v1719
      %v1868 = vpop.f32.mrf.mxu0
      %v1869 = vadd.f32 %v1480, %v1868
      %v1870 = vpop.f32.mrf.mxu0
      %v1871 = vadd.f32 %v1482, %v1870
      %1872 = vdwg.mxu0
      %v1873 = vld [vmem:[#allocation2 + $0x4] sm:$0xf]
      %v1874 = vld [vmem:[#allocation2 + $0x8] sm:$0xf]
      %v1875 = vld [vmem:[#allocation2 + $0xc] sm:$0xf]
      %v1876 = vld [vmem:[#allocation2 + $0x10] sm:$0xf]
      %v1877 = vld [vmem:[#allocation2 + $0x14] sm:$0xf]
      %v1878 = vld [vmem:[#allocation2 + $0x18] sm:$0xf]
      %v1879 = vld [vmem:[#allocation2 + $0x1c] sm:$0xf]
      %v1880 = vld [vmem:[#allocation2 + $0x20] sm:$0xf]
      %v1881 = vld [vmem:[#allocation2 + $0x24] sm:$0xf]
      %v1882 = vld [vmem:[#allocation2 + $0x28] sm:$0xf]
      %v1883 = vld [vmem:[#allocation2 + $0x2c] sm:$0xf]
      %v1884 = vld [vmem:[#allocation2 + $0x30] sm:$0xf]
      %v1885 = vld [vmem:[#allocation2 + $0x34] sm:$0xf]
      %v1886 = vld [vmem:[#allocation2 + $0x38] sm:$0xf]
      %v1887 = vld [vmem:[#allocation2 + $0x3c] sm:$0xf]
      %v1888 = vld [vmem:[#allocation2 + $0x40] sm:$0xf]
      %v1889 = vld [vmem:[#allocation2 + $0x44] sm:$0xf]
      %v1890 = vld [vmem:[#allocation2 + $0x48] sm:$0xf]
      %v1891 = vld [vmem:[#allocation2 + $0x4c] sm:$0xf]
      %v1892 = vld [vmem:[#allocation2 + $0x50] sm:$0xf]
      %v1893 = vld [vmem:[#allocation2 + $0x54] sm:$0xf]
      %v1894 = vld [vmem:[#allocation2 + $0x58] sm:$0xf]
      %v1895 = vld [vmem:[#allocation2 + $0x5c] sm:$0xf]
      %v1896 = vld [vmem:[#allocation2 + $0x60] sm:$0xf]
      %v1897 = vld [vmem:[#allocation2 + $0x64] sm:$0xf]
      %v1898 = vld [vmem:[#allocation2 + $0x68] sm:$0xf]
      %v1899 = vld [vmem:[#allocation2 + $0x6c] sm:$0xf]
      %v1900 = vld [vmem:[#allocation2 + $0x70] sm:$0xf]
      %v1901 = vld [vmem:[#allocation2 + $0x74] sm:$0xf]
      %v1902 = vld [vmem:[#allocation2 + $0x78] sm:$0xf]
      %v1903 = vld [vmem:[#allocation2 + $0x7c] sm:$0xf]
      %v1904 = vld [vmem:[#allocation2 + $0x80] sm:$0xf]
      %v1905 = vld [vmem:[#allocation2 + $0x84] sm:$0x1]
      %v1906 = vsel %vm439, 1, 0
      %v1907 = vsel %vm440, 1, 0
      %v1908 = vsel %vm441, 1, 0
      %v1909 = vsel %vm442, 1, 0
      %v1910 = vsel %vm443, 1, 0
      %v1911 = vsel %vm444, 1, 0
      %v1912 = vsel %vm445, 1, 0
      %v1913 = vsel %vm446, 1, 0
      %v1914 = vsel %vm447, 1, 0
      %v1915 = vsel %vm448, 1, 0
      %v1916 = vsel %vm449, 1, 0
      %v1917 = vsel %vm450, 1, 0
      %v1918 = vsel %vm451, 1, 0
      %v1919 = vsel %vm452, 1, 0
      %v1920 = vsel %vm453, 1, 0
      %v1921 = vsel %vm454, 1, 0
      %v1922 = vsel %vm455, 1, 0
      %v1923 = vsel %vm456, 1, 0
      %v1924 = vsel %vm457, 1, 0
      %v1925 = vsel %vm458, 1, 0
      %v1926 = vsel %vm459, 1, 0
      %v1927 = vsel %vm460, 1, 0
      %v1928 = vsel %vm461, 1, 0
      %v1929 = vsel %vm462, 1, 0
      %v1930 = vsel %vm463, 1, 0
      %v1931 = vsel %vm464, 1, 0
      %v1932 = vsel %vm465, 1, 0
      %v1933 = vsel %vm466, 1, 0
      %v1934 = vsel %vm467, 1, 0
      %v1935 = vsel %vm468, 1, 0
      %v1936 = vsel %vm469, 1, 0
      %v1937 = vsel %vm470, 1, 0
      %vm1938 = vcmp.eq.s32.totalorder %v1906, 1
      %vm1939 = vcmp.eq.s32.totalorder %v1907, 1
      %vm1940 = vcmp.eq.s32.totalorder %v1908, 1
      %vm1941 = vcmp.eq.s32.totalorder %v1909, 1
      %vm1942 = vcmp.eq.s32.totalorder %v1910, 1
      %vm1943 = vcmp.eq.s32.totalorder %v1911, 1
      %vm1944 = vcmp.eq.s32.totalorder %v1912, 1
      %vm1945 = vcmp.eq.s32.totalorder %v1913, 1
      %vm1946 = vcmp.eq.s32.totalorder %v1914, 1
      %vm1947 = vcmp.eq.s32.totalorder %v1915, 1
      %vm1948 = vcmp.eq.s32.totalorder %v1916, 1
      %vm1949 = vcmp.eq.s32.totalorder %v1917, 1
      %vm1950 = vcmp.eq.s32.totalorder %v1918, 1
      %vm1951 = vcmp.eq.s32.totalorder %v1919, 1
      %vm1952 = vcmp.eq.s32.totalorder %v1920, 1
      %vm1953 = vcmp.eq.s32.totalorder %v1921, 1
      %vm1954 = vcmp.eq.s32.totalorder %v1922, 1
      %vm1955 = vcmp.eq.s32.totalorder %v1923, 1
      %vm1956 = vcmp.eq.s32.totalorder %v1924, 1
      %vm1957 = vcmp.eq.s32.totalorder %v1925, 1
      %vm1958 = vcmp.eq.s32.totalorder %v1926, 1
      %vm1959 = vcmp.eq.s32.totalorder %v1927, 1
      %vm1960 = vcmp.eq.s32.totalorder %v1928, 1
      %vm1961 = vcmp.eq.s32.totalorder %v1929, 1
      %vm1962 = vcmp.eq.s32.totalorder %v1930, 1
      %vm1963 = vcmp.eq.s32.totalorder %v1931, 1
      %vm1964 = vcmp.eq.s32.totalorder %v1932, 1
      %vm1965 = vcmp.eq.s32.totalorder %v1933, 1
      %vm1966 = vcmp.eq.s32.totalorder %v1934, 1
      %vm1967 = vcmp.eq.s32.totalorder %v1935, 1
      %vm1968 = vcmp.eq.s32.totalorder %v1936, 1
      %vm1969 = vcmp.eq.s32.totalorder %v1937, 1
      %vm1970 = vmpackc.low %vm1938, %vm1938
      %vm1971 = vmpackc.low %vm1939, %vm1939
      %vm1972 = vmpackc.low %vm1940, %vm1940
      %vm1973 = vmpackc.low %vm1941, %vm1941
      %vm1974 = vmpackc.low %vm1942, %vm1942
      %vm1975 = vmpackc.low %vm1943, %vm1943
      %vm1976 = vmpackc.low %vm1944, %vm1944
      %vm1977 = vmpackc.low %vm1945, %vm1945
      %vm1978 = vmpackc.low %vm1946, %vm1946
      %vm1979 = vmpackc.low %vm1947, %vm1947
      %vm1980 = vmpackc.low %vm1948, %vm1948
      %vm1981 = vmpackc.low %vm1949, %vm1949
      %vm1982 = vmpackc.low %vm1950, %vm1950
      %vm1983 = vmpackc.low %vm1951, %vm1951
      %vm1984 = vmpackc.low %vm1952, %vm1952
      %vm1985 = vmpackc.low %vm1953, %vm1953
      %vm1986 = vmpackc.low %vm1954, %vm1954
      %vm1987 = vmpackc.low %vm1955, %vm1955
      %vm1988 = vmpackc.low %vm1956, %vm1956
      %vm1989 = vmpackc.low %vm1957, %vm1957
      %vm1990 = vmpackc.low %vm1958, %vm1958
      %vm1991 = vmpackc.low %vm1959, %vm1959
      %vm1992 = vmpackc.low %vm1960, %vm1960
      %vm1993 = vmpackc.low %vm1961, %vm1961
      %vm1994 = vmpackc.low %vm1962, %vm1962
      %vm1995 = vmpackc.low %vm1963, %vm1963
      %vm1996 = vmpackc.low %vm1964, %vm1964
      %vm1997 = vmpackc.low %vm1965, %vm1965
      %vm1998 = vmpackc.low %vm1966, %vm1966
      %vm1999 = vmpackc.low %vm1967, %vm1967
      %vm2000 = vmpackc.low %vm1968, %vm1968
      %vm2001 = vmpackc.low %vm1969, %vm1969
      %v2002 = vsel %vm1970, 65537, 0
      %v2003 = vsel %vm1971, 65537, 0
      %v2004 = vsel %vm1972, 65537, 0
      %v2005 = vsel %vm1973, 65537, 0
      %v2006 = vsel %vm1974, 65537, 0
      %v2007 = vsel %vm1975, 65537, 0
      %v2008 = vsel %vm1976, 65537, 0
      %v2009 = vsel %vm1977, 65537, 0
      %v2010 = vsel %vm1978, 65537, 0
      %v2011 = vsel %vm1979, 65537, 0
      %v2012 = vsel %vm1980, 65537, 0
      %v2013 = vsel %vm1981, 65537, 0
      %v2014 = vsel %vm1982, 65537, 0
      %v2015 = vsel %vm1983, 65537, 0
      %v2016 = vsel %vm1984, 65537, 0
      %v2017 = vsel %vm1985, 65537, 0
      %v2018 = vsel %vm1986, 65537, 0
      %v2019 = vsel %vm1987, 65537, 0
      %v2020 = vsel %vm1988, 65537, 0
      %v2021 = vsel %vm1989, 65537, 0
      %v2022 = vsel %vm1990, 65537, 0
      %v2023 = vsel %vm1991, 65537, 0
      %v2024 = vsel %vm1992, 65537, 0
      %v2025 = vsel %vm1993, 65537, 0
      %v2026 = vsel %vm1994, 65537, 0
      %v2027 = vsel %vm1995, 65537, 0
      %v2028 = vsel %vm1996, 65537, 0
      %v2029 = vsel %vm1997, 65537, 0
      %v2030 = vsel %vm1998, 65537, 0
      %v2031 = vsel %vm1999, 65537, 0
      %v2032 = vsel %vm2000, 65537, 0
      %v2033 = vsel %vm2001, 65537, 0
      %vm2034 = vsmask.f32 256
      %vm2035 = vsmask.f32 4368
      %vm2036 = vmor %vm2034, %vm2035
      %v2038 = vshrl.u32 %v2002, 16
      %v2040 = vrot.slane %v2038, 7
      %v2041 = vshll.u32 %v2002, 16
      %v2043 = vor.u32 %v2040, %v2041
      %v2044 = vrot.slane %v2040, 4
      %v2046 = vshrl.u32 %v2003, 16
      %v2048 = vrot.slane %v2046, 7
      %v2049 = vshll.u32 %v2003, 16
      %v2051 = vor.u32 %v2048, %v2049
      %v2052 = vsel %vm2036, %v2044, %v2051
      %v2053 = vrot.slane %v2048, 4
      %v2055 = vshrl.u32 %v2004, 16
      %v2057 = vrot.slane %v2055, 7
      %v2058 = vshll.u32 %v2004, 16
      %v2060 = vor.u32 %v2057, %v2058
      %v2061 = vsel %vm2036, %v2053, %v2060
      %v2062 = vrot.slane %v2057, 4
      %v2064 = vshrl.u32 %v2005, 16
      %v2066 = vrot.slane %v2064, 7
      %v2067 = vshll.u32 %v2005, 16
      %v2069 = vor.u32 %v2066, %v2067
      %v2070 = vsel %vm2036, %v2062, %v2069
      %v2071 = vrot.slane %v2066, 4
      %v2073 = vshrl.u32 %v2006, 16
      %v2075 = vrot.slane %v2073, 7
      %v2076 = vshll.u32 %v2006, 16
      %v2078 = vor.u32 %v2075, %v2076
      %v2079 = vsel %vm2036, %v2071, %v2078
      %v2080 = vrot.slane %v2075, 4
      %v2082 = vshrl.u32 %v2007, 16
      %v2084 = vrot.slane %v2082, 7
      %v2085 = vshll.u32 %v2007, 16
      %v2087 = vor.u32 %v2084, %v2085
      %v2088 = vsel %vm2036, %v2080, %v2087
      %v2089 = vrot.slane %v2084, 4
      %v2091 = vshrl.u32 %v2008, 16
      %v2093 = vrot.slane %v2091, 7
      %v2094 = vshll.u32 %v2008, 16
      %v2096 = vor.u32 %v2093, %v2094
      %v2097 = vsel %vm2036, %v2089, %v2096
      %v2098 = vrot.slane %v2093, 4
      %v2100 = vshrl.u32 %v2009, 16
      %v2102 = vrot.slane %v2100, 7
      %v2103 = vshll.u32 %v2009, 16
      %v2105 = vor.u32 %v2102, %v2103
      %v2106 = vsel %vm2036, %v2098, %v2105
      %v2107 = vrot.slane %v2102, 4
      %v2109 = vshrl.u32 %v2010, 16
      %v2111 = vrot.slane %v2109, 7
      %v2112 = vshll.u32 %v2010, 16
      %v2114 = vor.u32 %v2111, %v2112
      %v2115 = vsel %vm2036, %v2107, %v2114
      %v2116 = vrot.slane %v2111, 4
      %v2118 = vshrl.u32 %v2011, 16
      %v2120 = vrot.slane %v2118, 7
      %v2121 = vshll.u32 %v2011, 16
      %v2123 = vor.u32 %v2120, %v2121
      %v2124 = vsel %vm2036, %v2116, %v2123
      %v2125 = vrot.slane %v2120, 4
      %v2127 = vshrl.u32 %v2012, 16
      %v2129 = vrot.slane %v2127, 7
      %v2130 = vshll.u32 %v2012, 16
      %v2132 = vor.u32 %v2129, %v2130
      %v2133 = vsel %vm2036, %v2125, %v2132
      %v2134 = vrot.slane %v2129, 4
      %v2136 = vshrl.u32 %v2013, 16
      %v2138 = vrot.slane %v2136, 7
      %v2139 = vshll.u32 %v2013, 16
      %v2141 = vor.u32 %v2138, %v2139
      %v2142 = vsel %vm2036, %v2134, %v2141
      %v2143 = vrot.slane %v2138, 4
      %v2145 = vshrl.u32 %v2014, 16
      %v2147 = vrot.slane %v2145, 7
      %v2148 = vshll.u32 %v2014, 16
      %v2150 = vor.u32 %v2147, %v2148
      %v2151 = vsel %vm2036, %v2143, %v2150
      %v2152 = vrot.slane %v2147, 4
      %v2154 = vshrl.u32 %v2015, 16
      %v2156 = vrot.slane %v2154, 7
      %v2157 = vshll.u32 %v2015, 16
      %v2159 = vor.u32 %v2156, %v2157
      %v2160 = vsel %vm2036, %v2152, %v2159
      %v2161 = vrot.slane %v2156, 4
      %v2163 = vshrl.u32 %v2016, 16
      %v2165 = vrot.slane %v2163, 7
      %v2166 = vshll.u32 %v2016, 16
      %v2168 = vor.u32 %v2165, %v2166
      %v2169 = vsel %vm2036, %v2161, %v2168
      %v2170 = vrot.slane %v2165, 4
      %v2172 = vshrl.u32 %v2017, 16
      %v2174 = vrot.slane %v2172, 7
      %v2175 = vshll.u32 %v2017, 16
      %v2177 = vor.u32 %v2174, %v2175
      %v2178 = vsel %vm2036, %v2170, %v2177
      %v2179 = vrot.slane %v2174, 4
      %v2181 = vshrl.u32 %v2018, 16
      %v2183 = vrot.slane %v2181, 7
      %v2184 = vshll.u32 %v2018, 16
      %v2186 = vor.u32 %v2183, %v2184
      %v2187 = vsel %vm2036, %v2179, %v2186
      %v2188 = vrot.slane %v2183, 4
      %v2190 = vshrl.u32 %v2019, 16
      %v2192 = vrot.slane %v2190, 7
      %v2193 = vshll.u32 %v2019, 16
      %v2195 = vor.u32 %v2192, %v2193
      %v2196 = vsel %vm2036, %v2188, %v2195
      %v2197 = vrot.slane %v2192, 4
      %v2199 = vshrl.u32 %v2020, 16
      %v2201 = vrot.slane %v2199, 7
      %v2202 = vshll.u32 %v2020, 16
      %v2204 = vor.u32 %v2201, %v2202
      %v2205 = vsel %vm2036, %v2197, %v2204
      %v2206 = vrot.slane %v2201, 4
      %v2208 = vshrl.u32 %v2021, 16
      %v2210 = vrot.slane %v2208, 7
      %v2211 = vshll.u32 %v2021, 16
      %v2213 = vor.u32 %v2210, %v2211
      %v2214 = vsel %vm2036, %v2206, %v2213
      %v2215 = vrot.slane %v2210, 4
      %v2217 = vshrl.u32 %v2022, 16
      %v2219 = vrot.slane %v2217, 7
      %v2220 = vshll.u32 %v2022, 16
      %v2222 = vor.u32 %v2219, %v2220
      %v2223 = vsel %vm2036, %v2215, %v2222
      %v2224 = vrot.slane %v2219, 4
      %v2226 = vshrl.u32 %v2023, 16
      %v2228 = vrot.slane %v2226, 7
      %v2229 = vshll.u32 %v2023, 16
      %v2231 = vor.u32 %v2228, %v2229
      %v2232 = vsel %vm2036, %v2224, %v2231
      %v2233 = vrot.slane %v2228, 4
      %v2235 = vshrl.u32 %v2024, 16
      %v2237 = vrot.slane %v2235, 7
      %v2238 = vshll.u32 %v2024, 16
      %v2240 = vor.u32 %v2237, %v2238
      %v2241 = vsel %vm2036, %v2233, %v2240
      %v2242 = vrot.slane %v2237, 4
      %v2244 = vshrl.u32 %v2025, 16
      %v2246 = vrot.slane %v2244, 7
      %v2247 = vshll.u32 %v2025, 16
      %v2249 = vor.u32 %v2246, %v2247
      %v2250 = vsel %vm2036, %v2242, %v2249
      %v2251 = vrot.slane %v2246, 4
      %v2253 = vshrl.u32 %v2026, 16
      %v2255 = vrot.slane %v2253, 7
      %v2256 = vshll.u32 %v2026, 16
      %v2258 = vor.u32 %v2255, %v2256
      %v2259 = vsel %vm2036, %v2251, %v2258
      %v2260 = vrot.slane %v2255, 4
      %v2262 = vshrl.u32 %v2027, 16
      %v2264 = vrot.slane %v2262, 7
      %v2265 = vshll.u32 %v2027, 16
      %v2267 = vor.u32 %v2264, %v2265
      %v2268 = vsel %vm2036, %v2260, %v2267
      %v2269 = vrot.slane %v2264, 4
      %v2271 = vshrl.u32 %v2028, 16
      %v2273 = vrot.slane %v2271, 7
      %v2274 = vshll.u32 %v2028, 16
      %v2276 = vor.u32 %v2273, %v2274
      %v2277 = vsel %vm2036, %v2269, %v2276
      %v2278 = vrot.slane %v2273, 4
      %v2280 = vshrl.u32 %v2029, 16
      %v2282 = vrot.slane %v2280, 7
      %v2283 = vshll.u32 %v2029, 16
      %v2285 = vor.u32 %v2282, %v2283
      %v2286 = vsel %vm2036, %v2278, %v2285
      %v2287 = vrot.slane %v2282, 4
      %v2289 = vshrl.u32 %v2030, 16
      %v2291 = vrot.slane %v2289, 7
      %v2292 = vshll.u32 %v2030, 16
      %v2294 = vor.u32 %v2291, %v2292
      %v2295 = vsel %vm2036, %v2287, %v2294
      %v2296 = vrot.slane %v2291, 4
      %v2298 = vshrl.u32 %v2031, 16
      %v2300 = vrot.slane %v2298, 7
      %v2301 = vshll.u32 %v2031, 16
      %v2303 = vor.u32 %v2300, %v2301
      %v2304 = vsel %vm2036, %v2296, %v2303
      %v2305 = vrot.slane %v2300, 4
      %v2307 = vshrl.u32 %v2032, 16
      %v2309 = vrot.slane %v2307, 7
      %v2310 = vshll.u32 %v2032, 16
      %v2312 = vor.u32 %v2309, %v2310
      %v2313 = vsel %vm2036, %v2305, %v2312
      %v2314 = vrot.slane %v2309, 4
      %v2316 = vshrl.u32 %v2033, 16
      %v2318 = vrot.slane %v2316, 7
      %v2319 = vshll.u32 %v2033, 16
      %v2321 = vor.u32 %v2318, %v2319
      %v2322 = vsel %vm2036, %v2314, %v2321
      %v2323 = vrot.slane %v2318, 4
      %v2324 = vunpack.c.l.b16 %v2043
      %v2325 = vunpack.c.h.b16 %v2043
      %v2326 = vunpack.c.l.b16 0
      %v2327 = vunpack.c.h.b16 0
      %vm2328 = vcmp.ne.s32.totalorder %v2324, %v2326
      %vm2329 = vcmp.ne.s32.totalorder %v2325, %v2327
      %vm2330 = vmpackc.low %vm2329, %vm2328
      %v2331 = vunpack.c.l.b16 %v2052
      %v2332 = vunpack.c.h.b16 %v2052
      %v2333 = vunpack.c.l.b16 0
      %v2334 = vunpack.c.h.b16 0
      %vm2335 = vcmp.ne.s32.totalorder %v2331, %v2333
      %vm2336 = vcmp.ne.s32.totalorder %v2332, %v2334
      %vm2337 = vmpackc.low %vm2336, %vm2335
      %v2338 = vunpack.c.l.b16 %v2061
      %v2339 = vunpack.c.h.b16 %v2061
      %v2340 = vunpack.c.l.b16 0
      %v2341 = vunpack.c.h.b16 0
      %vm2342 = vcmp.ne.s32.totalorder %v2338, %v2340
      %vm2343 = vcmp.ne.s32.totalorder %v2339, %v2341
      %vm2344 = vmpackc.low %vm2343, %vm2342
      %v2345 = vunpack.c.l.b16 %v2070
      %v2346 = vunpack.c.h.b16 %v2070
      %v2347 = vunpack.c.l.b16 0
      %v2348 = vunpack.c.h.b16 0
      %vm2349 = vcmp.ne.s32.totalorder %v2345, %v2347
      %vm2350 = vcmp.ne.s32.totalorder %v2346, %v2348
      %vm2351 = vmpackc.low %vm2350, %vm2349
      %v2352 = vunpack.c.l.b16 %v2079
      %v2353 = vunpack.c.h.b16 %v2079
      %v2354 = vunpack.c.l.b16 0
      %v2355 = vunpack.c.h.b16 0
      %vm2356 = vcmp.ne.s32.totalorder %v2352, %v2354
      %vm2357 = vcmp.ne.s32.totalorder %v2353, %v2355
      %vm2358 = vmpackc.low %vm2357, %vm2356
      %v2359 = vunpack.c.l.b16 %v2088
      %v2360 = vunpack.c.h.b16 %v2088
      %v2361 = vunpack.c.l.b16 0
      %v2362 = vunpack.c.h.b16 0
      %vm2363 = vcmp.ne.s32.totalorder %v2359, %v2361
      %vm2364 = vcmp.ne.s32.totalorder %v2360, %v2362
      %vm2365 = vmpackc.low %vm2364, %vm2363
      %v2366 = vunpack.c.l.b16 %v2097
      %v2367 = vunpack.c.h.b16 %v2097
      %v2368 = vunpack.c.l.b16 0
      %v2369 = vunpack.c.h.b16 0
      %vm2370 = vcmp.ne.s32.totalorder %v2366, %v2368
      %vm2371 = vcmp.ne.s32.totalorder %v2367, %v2369
      %vm2372 = vmpackc.low %vm2371, %vm2370
      %v2373 = vunpack.c.l.b16 %v2106
      %v2374 = vunpack.c.h.b16 %v2106
      %v2375 = vunpack.c.l.b16 0
      %v2376 = vunpack.c.h.b16 0
      %vm2377 = vcmp.ne.s32.totalorder %v2373, %v2375
      %vm2378 = vcmp.ne.s32.totalorder %v2374, %v2376
      %vm2379 = vmpackc.low %vm2378, %vm2377
      %v2380 = vunpack.c.l.b16 %v2115
      %v2381 = vunpack.c.h.b16 %v2115
      %v2382 = vunpack.c.l.b16 0
      %v2383 = vunpack.c.h.b16 0
      %vm2384 = vcmp.ne.s32.totalorder %v2380, %v2382
      %vm2385 = vcmp.ne.s32.totalorder %v2381, %v2383
      %vm2386 = vmpackc.low %vm2385, %vm2384
      %v2387 = vunpack.c.l.b16 %v2124
      %v2388 = vunpack.c.h.b16 %v2124
      %v2389 = vunpack.c.l.b16 0
      %v2390 = vunpack.c.h.b16 0
      %vm2391 = vcmp.ne.s32.totalorder %v2387, %v2389
      %vm2392 = vcmp.ne.s32.totalorder %v2388, %v2390
      %vm2393 = vmpackc.low %vm2392, %vm2391
      %v2394 = vunpack.c.l.b16 %v2133
      %v2395 = vunpack.c.h.b16 %v2133
      %v2396 = vunpack.c.l.b16 0
      %v2397 = vunpack.c.h.b16 0
      %vm2398 = vcmp.ne.s32.totalorder %v2394, %v2396
      %vm2399 = vcmp.ne.s32.totalorder %v2395, %v2397
      %vm2400 = vmpackc.low %vm2399, %vm2398
      %v2401 = vunpack.c.l.b16 %v2142
      %v2402 = vunpack.c.h.b16 %v2142
      %v2403 = vunpack.c.l.b16 0
      %v2404 = vunpack.c.h.b16 0
      %vm2405 = vcmp.ne.s32.totalorder %v2401, %v2403
      %vm2406 = vcmp.ne.s32.totalorder %v2402, %v2404
      %vm2407 = vmpackc.low %vm2406, %vm2405
      %v2408 = vunpack.c.l.b16 %v2151
      %v2409 = vunpack.c.h.b16 %v2151
      %v2410 = vunpack.c.l.b16 0
      %v2411 = vunpack.c.h.b16 0
      %vm2412 = vcmp.ne.s32.totalorder %v2408, %v2410
      %vm2413 = vcmp.ne.s32.totalorder %v2409, %v2411
      %vm2414 = vmpackc.low %vm2413, %vm2412
      %v2415 = vunpack.c.l.b16 %v2160
      %v2416 = vunpack.c.h.b16 %v2160
      %v2417 = vunpack.c.l.b16 0
      %v2418 = vunpack.c.h.b16 0
      %vm2419 = vcmp.ne.s32.totalorder %v2415, %v2417
      %vm2420 = vcmp.ne.s32.totalorder %v2416, %v2418
      %vm2421 = vmpackc.low %vm2420, %vm2419
      %v2422 = vunpack.c.l.b16 %v2169
      %v2423 = vunpack.c.h.b16 %v2169
      %v2424 = vunpack.c.l.b16 0
      %v2425 = vunpack.c.h.b16 0
      %vm2426 = vcmp.ne.s32.totalorder %v2422, %v2424
      %vm2427 = vcmp.ne.s32.totalorder %v2423, %v2425
      %vm2428 = vmpackc.low %vm2427, %vm2426
      %v2429 = vunpack.c.l.b16 %v2178
      %v2430 = vunpack.c.h.b16 %v2178
      %v2431 = vunpack.c.l.b16 0
      %v2432 = vunpack.c.h.b16 0
      %vm2433 = vcmp.ne.s32.totalorder %v2429, %v2431
      %vm2434 = vcmp.ne.s32.totalorder %v2430, %v2432
      %vm2435 = vmpackc.low %vm2434, %vm2433
      %v2436 = vunpack.c.l.b16 %v2187
      %v2437 = vunpack.c.h.b16 %v2187
      %v2438 = vunpack.c.l.b16 0
      %v2439 = vunpack.c.h.b16 0
      %vm2440 = vcmp.ne.s32.totalorder %v2436, %v2438
      %vm2441 = vcmp.ne.s32.totalorder %v2437, %v2439
      %vm2442 = vmpackc.low %vm2441, %vm2440
      %v2443 = vunpack.c.l.b16 %v2196
      %v2444 = vunpack.c.h.b16 %v2196
      %v2445 = vunpack.c.l.b16 0
      %v2446 = vunpack.c.h.b16 0
      %vm2447 = vcmp.ne.s32.totalorder %v2443, %v2445
      %vm2448 = vcmp.ne.s32.totalorder %v2444, %v2446
      %vm2449 = vmpackc.low %vm2448, %vm2447
      %v2450 = vunpack.c.l.b16 %v2205
      %v2451 = vunpack.c.h.b16 %v2205
      %v2452 = vunpack.c.l.b16 0
      %v2453 = vunpack.c.h.b16 0
      %vm2454 = vcmp.ne.s32.totalorder %v2450, %v2452
      %vm2455 = vcmp.ne.s32.totalorder %v2451, %v2453
      %vm2456 = vmpackc.low %vm2455, %vm2454
      %v2457 = vunpack.c.l.b16 %v2214
      %v2458 = vunpack.c.h.b16 %v2214
      %v2459 = vunpack.c.l.b16 0
      %v2460 = vunpack.c.h.b16 0
      %vm2461 = vcmp.ne.s32.totalorder %v2457, %v2459
      %vm2462 = vcmp.ne.s32.totalorder %v2458, %v2460
      %vm2463 = vmpackc.low %vm2462, %vm2461
      %v2464 = vunpack.c.l.b16 %v2223
      %v2465 = vunpack.c.h.b16 %v2223
      %v2466 = vunpack.c.l.b16 0
      %v2467 = vunpack.c.h.b16 0
      %vm2468 = vcmp.ne.s32.totalorder %v2464, %v2466
      %vm2469 = vcmp.ne.s32.totalorder %v2465, %v2467
      %vm2470 = vmpackc.low %vm2469, %vm2468
      %v2471 = vunpack.c.l.b16 %v2232
      %v2472 = vunpack.c.h.b16 %v2232
      %v2473 = vunpack.c.l.b16 0
      %v2474 = vunpack.c.h.b16 0
      %vm2475 = vcmp.ne.s32.totalorder %v2471, %v2473
      %vm2476 = vcmp.ne.s32.totalorder %v2472, %v2474
      %vm2477 = vmpackc.low %vm2476, %vm2475
      %v2478 = vunpack.c.l.b16 %v2241
      %v2479 = vunpack.c.h.b16 %v2241
      %v2480 = vunpack.c.l.b16 0
      %v2481 = vunpack.c.h.b16 0
      %vm2482 = vcmp.ne.s32.totalorder %v2478, %v2480
      %vm2483 = vcmp.ne.s32.totalorder %v2479, %v2481
      %vm2484 = vmpackc.low %vm2483, %vm2482
      %v2485 = vunpack.c.l.b16 %v2250
      %v2486 = vunpack.c.h.b16 %v2250
      %v2487 = vunpack.c.l.b16 0
      %v2488 = vunpack.c.h.b16 0
      %vm2489 = vcmp.ne.s32.totalorder %v2485, %v2487
      %vm2490 = vcmp.ne.s32.totalorder %v2486, %v2488
      %vm2491 = vmpackc.low %vm2490, %vm2489
      %v2492 = vunpack.c.l.b16 %v2259
      %v2493 = vunpack.c.h.b16 %v2259
      %v2494 = vunpack.c.l.b16 0
      %v2495 = vunpack.c.h.b16 0
      %vm2496 = vcmp.ne.s32.totalorder %v2492, %v2494
      %vm2497 = vcmp.ne.s32.totalorder %v2493, %v2495
      %vm2498 = vmpackc.low %vm2497, %vm2496
      %v2499 = vunpack.c.l.b16 %v2268
      %v2500 = vunpack.c.h.b16 %v2268
      %v2501 = vunpack.c.l.b16 0
      %v2502 = vunpack.c.h.b16 0
      %vm2503 = vcmp.ne.s32.totalorder %v2499, %v2501
      %vm2504 = vcmp.ne.s32.totalorder %v2500, %v2502
      %vm2505 = vmpackc.low %vm2504, %vm2503
      %v2506 = vunpack.c.l.b16 %v2277
      %v2507 = vunpack.c.h.b16 %v2277
      %v2508 = vunpack.c.l.b16 0
      %v2509 = vunpack.c.h.b16 0
      %vm2510 = vcmp.ne.s32.totalorder %v2506, %v2508
      %vm2511 = vcmp.ne.s32.totalorder %v2507, %v2509
      %vm2512 = vmpackc.low %vm2511, %vm2510
      %v2513 = vunpack.c.l.b16 %v2286
      %v2514 = vunpack.c.h.b16 %v2286
      %v2515 = vunpack.c.l.b16 0
      %v2516 = vunpack.c.h.b16 0
      %vm2517 = vcmp.ne.s32.totalorder %v2513, %v2515
      %vm2518 = vcmp.ne.s32.totalorder %v2514, %v2516
      %vm2519 = vmpackc.low %vm2518, %vm2517
      %v2520 = vunpack.c.l.b16 %v2295
      %v2521 = vunpack.c.h.b16 %v2295
      %v2522 = vunpack.c.l.b16 0
      %v2523 = vunpack.c.h.b16 0
      %vm2524 = vcmp.ne.s32.totalorder %v2520, %v2522
      %vm2525 = vcmp.ne.s32.totalorder %v2521, %v2523
      %vm2526 = vmpackc.low %vm2525, %vm2524
      %v2527 = vunpack.c.l.b16 %v2304
      %v2528 = vunpack.c.h.b16 %v2304
      %v2529 = vunpack.c.l.b16 0
      %v2530 = vunpack.c.h.b16 0
      %vm2531 = vcmp.ne.s32.totalorder %v2527, %v2529
      %vm2532 = vcmp.ne.s32.totalorder %v2528, %v2530
      %vm2533 = vmpackc.low %vm2532, %vm2531
      %v2534 = vunpack.c.l.b16 %v2313
      %v2535 = vunpack.c.h.b16 %v2313
      %v2536 = vunpack.c.l.b16 0
      %v2537 = vunpack.c.h.b16 0
      %vm2538 = vcmp.ne.s32.totalorder %v2534, %v2536
      %vm2539 = vcmp.ne.s32.totalorder %v2535, %v2537
      %vm2540 = vmpackc.low %vm2539, %vm2538
      %v2541 = vunpack.c.l.b16 %v2322
      %v2542 = vunpack.c.h.b16 %v2322
      %v2543 = vunpack.c.l.b16 0
      %v2544 = vunpack.c.h.b16 0
      %vm2545 = vcmp.ne.s32.totalorder %v2541, %v2543
      %vm2546 = vcmp.ne.s32.totalorder %v2542, %v2544
      %vm2547 = vmpackc.low %vm2546, %vm2545
      %v2548 = vunpack.c.l.b16 %v2323
      %v2549 = vunpack.c.h.b16 %v2323
      %v2550 = vunpack.c.l.b16 0
      %v2551 = vunpack.c.h.b16 0
      %vm2552 = vcmp.ne.s32.totalorder %v2548, %v2550
      %vm2553 = vcmp.ne.s32.totalorder %v2549, %v2551
      %vm2554 = vmpackc.low %vm2553, %vm2552
      %v2555 = vsel %vm2330, %v1873, 0
      %v2556 = vsel %vm2337, %v1874, 0
      %v2557 = vsel %vm2344, %v1875, 0
      %v2558 = vsel %vm2351, %v1876, 0
      %v2559 = vsel %vm2358, %v1877, 0
      %v2560 = vsel %vm2365, %v1878, 0
      %v2561 = vsel %vm2372, %v1879, 0
      %v2562 = vsel %vm2379, %v1880, 0
      %v2563 = vsel %vm2386, %v1881, 0
      %v2564 = vsel %vm2393, %v1882, 0
      %v2565 = vsel %vm2400, %v1883, 0
      %v2566 = vsel %vm2407, %v1884, 0
      %v2567 = vsel %vm2414, %v1885, 0
      %v2568 = vsel %vm2421, %v1886, 0
      %v2569 = vsel %vm2428, %v1887, 0
      %v2570 = vsel %vm2435, %v1888, 0
      %v2571 = vsel %vm2442, %v1889, 0
      %v2572 = vsel %vm2449, %v1890, 0
      %v2573 = vsel %vm2456, %v1891, 0
      %v2574 = vsel %vm2463, %v1892, 0
      %v2575 = vsel %vm2470, %v1893, 0
      %v2576 = vsel %vm2477, %v1894, 0
      %v2577 = vsel %vm2484, %v1895, 0
      %v2578 = vsel %vm2491, %v1896, 0
      %v2579 = vsel %vm2498, %v1897, 0
      %v2580 = vsel %vm2505, %v1898, 0
      %v2581 = vsel %vm2512, %v1899, 0
      %v2582 = vsel %vm2519, %v1900, 0
      %v2583 = vsel %vm2526, %v1901, 0
      %v2584 = vsel %vm2533, %v1902, 0
      %v2585 = vsel %vm2540, %v1903, 0
      %v2586 = vsel %vm2547, %v1904, 0
      %v2587 = vsel %vm2554, %v1905, 0
      %s2588 = scalar_lea.vmem %s3, 128
      %v2589 = vld [vmem:[%s2588] sm:$0xf]
      %v2590 = vld [vmem:[%s2588 + $0x4] sm:$0xf]
      %v2591 = vld [vmem:[%s2588 + $0x8] sm:$0xf]
      %v2592 = vld [vmem:[%s2588 + $0xc] sm:$0xf]
      %v2593 = vld [vmem:[%s2588 + $0x10] sm:$0xf]
      %v2594 = vld [vmem:[%s2588 + $0x14] sm:$0xf]
      %v2595 = vld [vmem:[%s2588 + $0x18] sm:$0xf]
      %v2596 = vld [vmem:[%s2588 + $0x1c] sm:$0xf]
      %v2597 = vld [vmem:[%s2588 + $0x20] sm:$0xf]
      %v2598 = vld [vmem:[%s2588 + $0x24] sm:$0xf]
      %v2599 = vld [vmem:[%s2588 + $0x28] sm:$0xf]
      %v2600 = vld [vmem:[%s2588 + $0x2c] sm:$0xf]
      %v2601 = vld [vmem:[%s2588 + $0x30] sm:$0xf]
      %v2602 = vld [vmem:[%s2588 + $0x34] sm:$0xf]
      %v2603 = vld [vmem:[%s2588 + $0x38] sm:$0xf]
      %v2604 = vld [vmem:[%s2588 + $0x3c] sm:$0xf]
      %v2638 = vunpack.c.l.b16 %v2555
      %v2639 = vunpack.c.l.b16 %v2556
      %v2640 = vunpack.c.l.b16 %v2557
      %v2641 = vunpack.c.l.b16 %v2558
      %v2642 = vunpack.c.l.b16 %v2559
      %v2643 = vunpack.c.l.b16 %v2560
      %v2644 = vunpack.c.l.b16 %v2561
      %v2645 = vunpack.c.l.b16 %v2562
      %v2646 = vunpack.c.l.b16 %v2563
      %v2647 = vunpack.c.l.b16 %v2564
      %v2648 = vunpack.c.l.b16 %v2565
      %v2649 = vunpack.c.l.b16 %v2566
      %v2650 = vunpack.c.l.b16 %v2567
      %v2651 = vunpack.c.l.b16 %v2568
      %v2652 = vunpack.c.l.b16 %v2569
      %v2653 = vunpack.c.l.b16 %v2570
      %v2654 = vunpack.c.l.b16 %v2571
      %v2655 = vunpack.c.l.b16 %v2572
      %v2656 = vunpack.c.l.b16 %v2573
      %v2657 = vunpack.c.l.b16 %v2574
      %v2658 = vunpack.c.l.b16 %v2575
      %v2659 = vunpack.c.l.b16 %v2576
      %v2660 = vunpack.c.l.b16 %v2577
      %v2661 = vunpack.c.l.b16 %v2578
      %v2662 = vunpack.c.l.b16 %v2579
      %v2663 = vunpack.c.l.b16 %v2580
      %v2664 = vunpack.c.l.b16 %v2581
      %v2665 = vunpack.c.l.b16 %v2582
      %v2666 = vunpack.c.l.b16 %v2583
      %v2667 = vunpack.c.l.b16 %v2584
      %v2668 = vunpack.c.l.b16 %v2585
      %v2669 = vunpack.c.l.b16 %v2586
      %v2670 = vunpack.c.l.b16 %v2587
      %v2671 = vpack.c.b16 %v2639, %v2638
      %v2672 = vpack.c.b16 %v2641, %v2640
      %v2673 = vpack.c.b16 %v2643, %v2642
      %v2674 = vpack.c.b16 %v2645, %v2644
      %v2675 = vpack.c.b16 %v2647, %v2646
      %v2676 = vpack.c.b16 %v2649, %v2648
      %v2677 = vpack.c.b16 %v2651, %v2650
      %v2678 = vpack.c.b16 %v2653, %v2652
      %v2679 = vpack.c.b16 %v2655, %v2654
      %v2680 = vpack.c.b16 %v2657, %v2656
      %v2681 = vpack.c.b16 %v2659, %v2658
      %v2682 = vpack.c.b16 %v2661, %v2660
      %v2683 = vpack.c.b16 %v2663, %v2662
      %v2684 = vpack.c.b16 %v2665, %v2664
      %v2685 = vpack.c.b16 %v2667, %v2666
      %v2686 = vpack.c.b16 %v2669, %v2668
      %v2687 = vpack.c.b16 %v2670, %v2670
      %vm2688 = vsmask.f32 7424
      %v2690 = vshrl.u32 %v2671, 16
      %v2692 = vshll.u32 %v2671, 16
      %v2694 = vrot.slane %v2692, 1
      %v2695 = vor.u32 %v2690, %v2694
      %v2697 = vshll.u32 %v2672, 16
      %v2699 = vrot.slane %v2697, 1
      %v2700 = vsel %vm2688, %v2695, %v2699
      %v2701 = vshrl.u32 %v2672, 16
      %v2703 = vor.u32 %v2701, %v2699
      %v2705 = vshll.u32 %v2673, 16
      %v2707 = vrot.slane %v2705, 1
      %v2708 = vsel %vm2688, %v2703, %v2707
      %v2709 = vshrl.u32 %v2673, 16
      %v2711 = vor.u32 %v2709, %v2707
      %v2713 = vshll.u32 %v2674, 16
      %v2715 = vrot.slane %v2713, 1
      %v2716 = vsel %vm2688, %v2711, %v2715
      %v2717 = vshrl.u32 %v2674, 16
      %v2719 = vor.u32 %v2717, %v2715
      %v2721 = vshll.u32 %v2675, 16
      %v2723 = vrot.slane %v2721, 1
      %v2724 = vsel %vm2688, %v2719, %v2723
      %v2725 = vshrl.u32 %v2675, 16
      %v2727 = vor.u32 %v2725, %v2723
      %v2729 = vshll.u32 %v2676, 16
      %v2731 = vrot.slane %v2729, 1
      %v2732 = vsel %vm2688, %v2727, %v2731
      %v2733 = vshrl.u32 %v2676, 16
      %v2735 = vor.u32 %v2733, %v2731
      %v2737 = vshll.u32 %v2677, 16
      %v2739 = vrot.slane %v2737, 1
      %v2740 = vsel %vm2688, %v2735, %v2739
      %v2741 = vshrl.u32 %v2677, 16
      %v2743 = vor.u32 %v2741, %v2739
      %v2745 = vshll.u32 %v2678, 16
      %v2747 = vrot.slane %v2745, 1
      %v2748 = vsel %vm2688, %v2743, %v2747
      %v2749 = vshrl.u32 %v2678, 16
      %v2751 = vor.u32 %v2749, %v2747
      %v2753 = vshll.u32 %v2679, 16
      %v2755 = vrot.slane %v2753, 1
      %v2756 = vsel %vm2688, %v2751, %v2755
      %v2757 = vshrl.u32 %v2679, 16
      %v2759 = vor.u32 %v2757, %v2755
      %v2761 = vshll.u32 %v2680, 16
      %v2763 = vrot.slane %v2761, 1
      %v2764 = vsel %vm2688, %v2759, %v2763
      %v2765 = vshrl.u32 %v2680, 16
      %v2767 = vor.u32 %v2765, %v2763
      %v2769 = vshll.u32 %v2681, 16
      %v2771 = vrot.slane %v2769, 1
      %v2772 = vsel %vm2688, %v2767, %v2771
      %v2773 = vshrl.u32 %v2681, 16
      %v2775 = vor.u32 %v2773, %v2771
      %v2777 = vshll.u32 %v2682, 16
      %v2779 = vrot.slane %v2777, 1
      %v2780 = vsel %vm2688, %v2775, %v2779
      %v2781 = vshrl.u32 %v2682, 16
      %v2783 = vor.u32 %v2781, %v2779
      %v2785 = vshll.u32 %v2683, 16
      %v2787 = vrot.slane %v2785, 1
      %v2788 = vsel %vm2688, %v2783, %v2787
      %v2789 = vshrl.u32 %v2683, 16
      %v2791 = vor.u32 %v2789, %v2787
      %v2793 = vshll.u32 %v2684, 16
      %v2795 = vrot.slane %v2793, 1
      %v2796 = vsel %vm2688, %v2791, %v2795
      %v2797 = vshrl.u32 %v2684, 16
      %v2799 = vor.u32 %v2797, %v2795
      %v2801 = vshll.u32 %v2685, 16
      %v2803 = vrot.slane %v2801, 1
      %v2804 = vsel %vm2688, %v2799, %v2803
      %v2805 = vshrl.u32 %v2685, 16
      %v2807 = vor.u32 %v2805, %v2803
      %v2809 = vshll.u32 %v2686, 16
      %v2811 = vrot.slane %v2809, 1
      %v2812 = vsel %vm2688, %v2807, %v2811
      %v2813 = vshrl.u32 %v2686, 16
      %v2815 = vor.u32 %v2813, %v2811
      %v2817 = vshll.u32 %v2687, 16
      %v2819 = vrot.slane %v2817, 1
      %v2820 = vsel %vm2688, %v2815, %v2819
      %v2853 = vunpack.c.l.b16 %v2589
      %v2854 = vunpack.c.l.b16 %v2590
      %v2855 = vunpack.c.l.b16 %v2591
      %v2856 = vunpack.c.l.b16 %v2592
      %v2857 = vunpack.c.l.b16 %v2593
      %v2858 = vunpack.c.l.b16 %v2594
      %v2859 = vunpack.c.l.b16 %v2595
      %v2860 = vunpack.c.l.b16 %v2596
      %v2861 = vunpack.c.l.b16 %v2597
      %v2862 = vunpack.c.l.b16 %v2598
      %v2863 = vunpack.c.l.b16 %v2599
      %v2864 = vunpack.c.l.b16 %v2600
      %v2865 = vunpack.c.l.b16 %v2601
      %v2866 = vunpack.c.l.b16 %v2602
      %v2867 = vunpack.c.l.b16 %v2603
      %v2868 = vunpack.c.l.b16 %v2604
      %v2869 = vpack.c.b16 %v2854, %v2853
      %v2870 = vpack.c.b16 %v2856, %v2855
      %v2871 = vpack.c.b16 %v2858, %v2857
      %v2872 = vpack.c.b16 %v2860, %v2859
      %v2873 = vpack.c.b16 %v2862, %v2861
      %v2874 = vpack.c.b16 %v2864, %v2863
      %v2875 = vpack.c.b16 %v2866, %v2865
      %v2876 = vpack.c.b16 %v2868, %v2867
      %2885 = vmatpush.bf16.msra.mxu0 %v2876
      %2886 = vmatpush.bf16.msra.mxu0 %v2875
      %2887 = vmatpush.bf16.msra.mxu0 %v2874
      %2888 = vmatpush.bf16.msra.mxu0 %v2873
      %2889 = vmatpush.bf16.msra.mxu0 %v2872
      %2890 = vmatpush.bf16.msra.mxu0 %v2871
      %2891 = vmatpush.bf16.msra.mxu0 %v2870
      %2892 = vmatpush.bf16.msra.mxu0 %v2869
      %2893 = vmatmul.bf16.gmra.mxu0 %v2700
      %v2894 = vpop.f32.mrf.mxu0
      %v2895 = vadd.f32 0.0, %v2894
      %v2896 = vpop.f32.mrf.mxu0
      %v2897 = vadd.f32 0.0, %v2896
      %2898 = vmatmul.bf16.gmra.mxu0 %v2708
      %v2899 = vpop.f32.mrf.mxu0
      %v2900 = vadd.f32 0.0, %v2899
      %v2901 = vpop.f32.mrf.mxu0
      %v2902 = vadd.f32 0.0, %v2901
      %2903 = vmatmul.bf16.gmra.mxu0 %v2716
      %v2904 = vpop.f32.mrf.mxu0
      %v2905 = vadd.f32 0.0, %v2904
      %v2906 = vpop.f32.mrf.mxu0
      %v2907 = vadd.f32 0.0, %v2906
      %2908 = vmatmul.bf16.gmra.mxu0 %v2724
      %v2909 = vpop.f32.mrf.mxu0
      %v2910 = vadd.f32 0.0, %v2909
      %v2911 = vpop.f32.mrf.mxu0
      %v2912 = vadd.f32 0.0, %v2911
      %2913 = vmatmul.bf16.gmra.mxu0 %v2732
      %v2914 = vpop.f32.mrf.mxu0
      %v2915 = vadd.f32 0.0, %v2914
      %v2916 = vpop.f32.mrf.mxu0
      %v2917 = vadd.f32 0.0, %v2916
      %2918 = vmatmul.bf16.gmra.mxu0 %v2740
      %v2919 = vpop.f32.mrf.mxu0
      %v2920 = vadd.f32 0.0, %v2919
      %v2921 = vpop.f32.mrf.mxu0
      %v2922 = vadd.f32 0.0, %v2921
      %2923 = vmatmul.bf16.gmra.mxu0 %v2748
      %v2924 = vpop.f32.mrf.mxu0
      %v2925 = vadd.f32 0.0, %v2924
      %v2926 = vpop.f32.mrf.mxu0
      %v2927 = vadd.f32 0.0, %v2926
      %2928 = vmatmul.bf16.gmra.mxu0 %v2756
      %v2929 = vpop.f32.mrf.mxu0
      %v2930 = vadd.f32 0.0, %v2929
      %v2931 = vpop.f32.mrf.mxu0
      %v2932 = vadd.f32 0.0, %v2931
      %2933 = vmatmul.bf16.gmra.mxu0 %v2764
      %v2934 = vpop.f32.mrf.mxu0
      %v2935 = vadd.f32 0.0, %v2934
      %v2936 = vpop.f32.mrf.mxu0
      %v2937 = vadd.f32 0.0, %v2936
      %2938 = vmatmul.bf16.gmra.mxu0 %v2772
      %v2939 = vpop.f32.mrf.mxu0
      %v2940 = vadd.f32 0.0, %v2939
      %v2941 = vpop.f32.mrf.mxu0
      %v2942 = vadd.f32 0.0, %v2941
      %2943 = vmatmul.bf16.gmra.mxu0 %v2780
      %v2944 = vpop.f32.mrf.mxu0
      %v2945 = vadd.f32 0.0, %v2944
      %v2946 = vpop.f32.mrf.mxu0
      %v2947 = vadd.f32 0.0, %v2946
      %2948 = vmatmul.bf16.gmra.mxu0 %v2788
      %v2949 = vpop.f32.mrf.mxu0
      %v2950 = vadd.f32 0.0, %v2949
      %v2951 = vpop.f32.mrf.mxu0
      %v2952 = vadd.f32 0.0, %v2951
      %2953 = vmatmul.bf16.gmra.mxu0 %v2796
      %v2954 = vpop.f32.mrf.mxu0
      %v2955 = vadd.f32 0.0, %v2954
      %v2956 = vpop.f32.mrf.mxu0
      %v2957 = vadd.f32 0.0, %v2956
      %2958 = vmatmul.bf16.gmra.mxu0 %v2804
      %v2959 = vpop.f32.mrf.mxu0
      %v2960 = vadd.f32 0.0, %v2959
      %v2961 = vpop.f32.mrf.mxu0
      %v2962 = vadd.f32 0.0, %v2961
      %2963 = vmatmul.bf16.gmra.mxu0 %v2812
      %v2964 = vpop.f32.mrf.mxu0
      %v2965 = vadd.f32 0.0, %v2964
      %v2966 = vpop.f32.mrf.mxu0
      %v2967 = vadd.f32 0.0, %v2966
      %2968 = vmatmul.bf16.gmra.mxu0 %v2820
      %v2969 = vpop.f32.mrf.mxu0
      %v2970 = vadd.f32 0.0, %v2969
      %v2971 = vpop.f32.mrf.mxu0
      %v2972 = vadd.f32 0.0, %v2971
      %2973 = vdwg.mxu0
      %v2974 = vadd.f32 %v1794, %v2895
      %v2975 = vadd.f32 %v1796, %v2897
      %v2976 = vadd.f32 %v1799, %v2900
      %v2977 = vadd.f32 %v1801, %v2902
      %v2978 = vadd.f32 %v1804, %v2905
      %v2979 = vadd.f32 %v1806, %v2907
      %v2980 = vadd.f32 %v1809, %v2910
      %v2981 = vadd.f32 %v1811, %v2912
      %v2982 = vadd.f32 %v1814, %v2915
      %v2983 = vadd.f32 %v1816, %v2917
      %v2984 = vadd.f32 %v1819, %v2920
      %v2985 = vadd.f32 %v1821, %v2922
      %v2986 = vadd.f32 %v1824, %v2925
      %v2987 = vadd.f32 %v1826, %v2927
      %v2988 = vadd.f32 %v1829, %v2930
      %v2989 = vadd.f32 %v1831, %v2932
      %v2990 = vadd.f32 %v1834, %v2935
      %v2991 = vadd.f32 %v1836, %v2937
      %v2992 = vadd.f32 %v1839, %v2940
      %v2993 = vadd.f32 %v1841, %v2942
      %v2994 = vadd.f32 %v1844, %v2945
      %v2995 = vadd.f32 %v1846, %v2947
      %v2996 = vadd.f32 %v1849, %v2950
      %v2997 = vadd.f32 %v1851, %v2952
      %v2998 = vadd.f32 %v1854, %v2955
      %v2999 = vadd.f32 %v1856, %v2957
      %v3000 = vadd.f32 %v1859, %v2960
      %v3001 = vadd.f32 %v1861, %v2962
      %v3002 = vadd.f32 %v1864, %v2965
      %v3003 = vadd.f32 %v1866, %v2967
      %v3004 = vadd.f32 %v1869, %v2970
      %v3005 = vadd.f32 %v1871, %v2972
      %v3006 = vld [vmem:[#allocation2 + $0x8] sm:$0x8]
      %v3007 = vld [vmem:[#allocation2 + $0xc] sm:$0xf]
      %v3008 = vld [vmem:[#allocation2 + $0x10] sm:$0xf]
      %v3009 = vld [vmem:[#allocation2 + $0x14] sm:$0xf]
      %v3010 = vld [vmem:[#allocation2 + $0x18] sm:$0xf]
      %v3011 = vld [vmem:[#allocation2 + $0x1c] sm:$0xf]
      %v3012 = vld [vmem:[#allocation2 + $0x20] sm:$0xf]
      %v3013 = vld [vmem:[#allocation2 + $0x24] sm:$0xf]
      %v3014 = vld [vmem:[#allocation2 + $0x28] sm:$0xf]
      %v3015 = vld [vmem:[#allocation2 + $0x2c] sm:$0xf]
      %v3016 = vld [vmem:[#allocation2 + $0x30] sm:$0xf]
      %v3017 = vld [vmem:[#allocation2 + $0x34] sm:$0xf]
      %v3018 = vld [vmem:[#allocation2 + $0x38] sm:$0xf]
      %v3019 = vld [vmem:[#allocation2 + $0x3c] sm:$0xf]
      %v3020 = vld [vmem:[#allocation2 + $0x40] sm:$0xf]
      %v3021 = vld [vmem:[#allocation2 + $0x44] sm:$0xf]
      %v3022 = vld [vmem:[#allocation2 + $0x48] sm:$0xf]
      %v3023 = vld [vmem:[#allocation2 + $0x4c] sm:$0xf]
      %v3024 = vld [vmem:[#allocation2 + $0x50] sm:$0xf]
      %v3025 = vld [vmem:[#allocation2 + $0x54] sm:$0xf]
      %v3026 = vld [vmem:[#allocation2 + $0x58] sm:$0xf]
      %v3027 = vld [vmem:[#allocation2 + $0x5c] sm:$0xf]
      %v3028 = vld [vmem:[#allocation2 + $0x60] sm:$0xf]
      %v3029 = vld [vmem:[#allocation2 + $0x64] sm:$0xf]
      %v3030 = vld [vmem:[#allocation2 + $0x68] sm:$0xf]
      %v3031 = vld [vmem:[#allocation2 + $0x6c] sm:$0xf]
      %v3032 = vld [vmem:[#allocation2 + $0x70] sm:$0xf]
      %v3033 = vld [vmem:[#allocation2 + $0x74] sm:$0xf]
      %v3034 = vld [vmem:[#allocation2 + $0x78] sm:$0xf]
      %v3035 = vld [vmem:[#allocation2 + $0x7c] sm:$0xf]
      %v3036 = vld [vmem:[#allocation2 + $0x80] sm:$0xf]
      %v3037 = vld [vmem:[#allocation2 + $0x84] sm:$0xf]
      %v3038 = vld [vmem:[#allocation2 + $0x88] sm:$0xf]
      %v3039 = vsel %vm960, %v3006, 0
      %v3040 = vsel %vm967, %v3007, 0
      %v3041 = vsel %vm974, %v3008, 0
      %v3042 = vsel %vm981, %v3009, 0
      %v3043 = vsel %vm988, %v3010, 0
      %v3044 = vsel %vm995, %v3011, 0
      %v3045 = vsel %vm1002, %v3012, 0
      %v3046 = vsel %vm1009, %v3013, 0
      %v3047 = vsel %vm1016, %v3014, 0
      %v3048 = vsel %vm1023, %v3015, 0
      %v3049 = vsel %vm1030, %v3016, 0
      %v3050 = vsel %vm1037, %v3017, 0
      %v3051 = vsel %vm1044, %v3018, 0
      %v3052 = vsel %vm1051, %v3019, 0
      %v3053 = vsel %vm1058, %v3020, 0
      %v3054 = vsel %vm1065, %v3021, 0
      %v3055 = vsel %vm1072, %v3022, 0
      %v3056 = vsel %vm1079, %v3023, 0
      %v3057 = vsel %vm1086, %v3024, 0
      %v3058 = vsel %vm1093, %v3025, 0
      %v3059 = vsel %vm1100, %v3026, 0
      %v3060 = vsel %vm1107, %v3027, 0
      %v3061 = vsel %vm1114, %v3028, 0
      %v3062 = vsel %vm1121, %v3029, 0
      %v3063 = vsel %vm1128, %v3030, 0
      %v3064 = vsel %vm1135, %v3031, 0
      %v3065 = vsel %vm1142, %v3032, 0
      %v3066 = vsel %vm1149, %v3033, 0
      %v3067 = vsel %vm1156, %v3034, 0
      %v3068 = vsel %vm1163, %v3035, 0
      %v3069 = vsel %vm1170, %v3036, 0
      %v3070 = vsel %vm1177, %v3037, 0
      %v3071 = vsel %vm1184, %v3038, 0
      %s3072 = scalar_lea.vmem %s3, 192
      %v3073 = vld [vmem:[%s3072] sm:$0xf]
      %v3074 = vld [vmem:[%s3072 + $0x4] sm:$0xf]
      %v3075 = vld [vmem:[%s3072 + $0x8] sm:$0xf]
      %v3076 = vld [vmem:[%s3072 + $0xc] sm:$0xf]
      %v3077 = vld [vmem:[%s3072 + $0x10] sm:$0xf]
      %v3078 = vld [vmem:[%s3072 + $0x14] sm:$0xf]
      %v3079 = vld [vmem:[%s3072 + $0x18] sm:$0xf]
      %v3080 = vld [vmem:[%s3072 + $0x1c] sm:$0xf]
      %v3081 = vld [vmem:[%s3072 + $0x20] sm:$0xf]
      %v3082 = vld [vmem:[%s3072 + $0x24] sm:$0xf]
      %v3083 = vld [vmem:[%s3072 + $0x28] sm:$0xf]
      %v3084 = vld [vmem:[%s3072 + $0x2c] sm:$0xf]
      %v3085 = vld [vmem:[%s3072 + $0x30] sm:$0xf]
      %v3086 = vld [vmem:[%s3072 + $0x34] sm:$0xf]
      %v3087 = vld [vmem:[%s3072 + $0x38] sm:$0xf]
      %v3088 = vld [vmem:[%s3072 + $0x3c] sm:$0xf]
      %v3122 = vunpack.c.l.b16 %v3039
      %v3123 = vunpack.c.l.b16 %v3040
      %v3124 = vunpack.c.l.b16 %v3041
      %v3125 = vunpack.c.l.b16 %v3042
      %v3126 = vunpack.c.l.b16 %v3043
      %v3127 = vunpack.c.l.b16 %v3044
      %v3128 = vunpack.c.l.b16 %v3045
      %v3129 = vunpack.c.l.b16 %v3046
      %v3130 = vunpack.c.l.b16 %v3047
      %v3131 = vunpack.c.l.b16 %v3048
      %v3132 = vunpack.c.l.b16 %v3049
      %v3133 = vunpack.c.l.b16 %v3050
      %v3134 = vunpack.c.l.b16 %v3051
      %v3135 = vunpack.c.l.b16 %v3052
      %v3136 = vunpack.c.l.b16 %v3053
      %v3137 = vunpack.c.l.b16 %v3054
      %v3138 = vunpack.c.l.b16 %v3055
      %v3139 = vunpack.c.l.b16 %v3056
      %v3140 = vunpack.c.l.b16 %v3057
      %v3141 = vunpack.c.l.b16 %v3058
      %v3142 = vunpack.c.l.b16 %v3059
      %v3143 = vunpack.c.l.b16 %v3060
      %v3144 = vunpack.c.l.b16 %v3061
      %v3145 = vunpack.c.l.b16 %v3062
      %v3146 = vunpack.c.l.b16 %v3063
      %v3147 = vunpack.c.l.b16 %v3064
      %v3148 = vunpack.c.l.b16 %v3065
      %v3149 = vunpack.c.l.b16 %v3066
      %v3150 = vunpack.c.l.b16 %v3067
      %v3151 = vunpack.c.l.b16 %v3068
      %v3152 = vunpack.c.l.b16 %v3069
      %v3153 = vunpack.c.l.b16 %v3070
      %v3154 = vunpack.c.l.b16 %v3071
      %v3155 = vpack.c.b16 %v3123, %v3122
      %v3156 = vpack.c.b16 %v3125, %v3124
      %v3157 = vpack.c.b16 %v3127, %v3126
      %v3158 = vpack.c.b16 %v3129, %v3128
      %v3159 = vpack.c.b16 %v3131, %v3130
      %v3160 = vpack.c.b16 %v3133, %v3132
      %v3161 = vpack.c.b16 %v3135, %v3134
      %v3162 = vpack.c.b16 %v3137, %v3136
      %v3163 = vpack.c.b16 %v3139, %v3138
      %v3164 = vpack.c.b16 %v3141, %v3140
      %v3165 = vpack.c.b16 %v3143, %v3142
      %v3166 = vpack.c.b16 %v3145, %v3144
      %v3167 = vpack.c.b16 %v3147, %v3146
      %v3168 = vpack.c.b16 %v3149, %v3148
      %v3169 = vpack.c.b16 %v3151, %v3150
      %v3170 = vpack.c.b16 %v3153, %v3152
      %v3171 = vpack.c.b16 %v3154, %v3154
      %v3173 = vshrl.u32 %v3155, 16
      %v3175 = vrot.slane %v3173, 3
      %v3176 = vshll.u32 %v3155, 16
      %v3178 = vrot.slane %v3176, 4
      %v3179 = vor.u32 %v3175, %v3178
      %v3181 = vshrl.u32 %v3156, 16
      %v3183 = vrot.slane %v3181, 3
      %v3184 = vshll.u32 %v3156, 16
      %v3186 = vrot.slane %v3184, 4
      %v3187 = vor.u32 %v3183, %v3186
      %v3188 = vsel %vm1567, %v3179, %v3187
      %v3190 = vshrl.u32 %v3157, 16
      %v3192 = vrot.slane %v3190, 3
      %v3193 = vshll.u32 %v3157, 16
      %v3195 = vrot.slane %v3193, 4
      %v3196 = vor.u32 %v3192, %v3195
      %v3197 = vsel %vm1567, %v3187, %v3196
      %v3199 = vshrl.u32 %v3158, 16
      %v3201 = vrot.slane %v3199, 3
      %v3202 = vshll.u32 %v3158, 16
      %v3204 = vrot.slane %v3202, 4
      %v3205 = vor.u32 %v3201, %v3204
      %v3206 = vsel %vm1567, %v3196, %v3205
      %v3208 = vshrl.u32 %v3159, 16
      %v3210 = vrot.slane %v3208, 3
      %v3211 = vshll.u32 %v3159, 16
      %v3213 = vrot.slane %v3211, 4
      %v3214 = vor.u32 %v3210, %v3213
      %v3215 = vsel %vm1567, %v3205, %v3214
      %v3217 = vshrl.u32 %v3160, 16
      %v3219 = vrot.slane %v3217, 3
      %v3220 = vshll.u32 %v3160, 16
      %v3222 = vrot.slane %v3220, 4
      %v3223 = vor.u32 %v3219, %v3222
      %v3224 = vsel %vm1567, %v3214, %v3223
      %v3226 = vshrl.u32 %v3161, 16
      %v3228 = vrot.slane %v3226, 3
      %v3229 = vshll.u32 %v3161, 16
      %v3231 = vrot.slane %v3229, 4
      %v3232 = vor.u32 %v3228, %v3231
      %v3233 = vsel %vm1567, %v3223, %v3232
      %v3235 = vshrl.u32 %v3162, 16
      %v3237 = vrot.slane %v3235, 3
      %v3238 = vshll.u32 %v3162, 16
      %v3240 = vrot.slane %v3238, 4
      %v3241 = vor.u32 %v3237, %v3240
      %v3242 = vsel %vm1567, %v3232, %v3241
      %v3244 = vshrl.u32 %v3163, 16
      %v3246 = vrot.slane %v3244, 3
      %v3247 = vshll.u32 %v3163, 16
      %v3249 = vrot.slane %v3247, 4
      %v3250 = vor.u32 %v3246, %v3249
      %v3251 = vsel %vm1567, %v3241, %v3250
      %v3253 = vshrl.u32 %v3164, 16
      %v3255 = vrot.slane %v3253, 3
      %v3256 = vshll.u32 %v3164, 16
      %v3258 = vrot.slane %v3256, 4
      %v3259 = vor.u32 %v3255, %v3258
      %v3260 = vsel %vm1567, %v3250, %v3259
      %v3262 = vshrl.u32 %v3165, 16
      %v3264 = vrot.slane %v3262, 3
      %v3265 = vshll.u32 %v3165, 16
      %v3267 = vrot.slane %v3265, 4
      %v3268 = vor.u32 %v3264, %v3267
      %v3269 = vsel %vm1567, %v3259, %v3268
      %v3271 = vshrl.u32 %v3166, 16
      %v3273 = vrot.slane %v3271, 3
      %v3274 = vshll.u32 %v3166, 16
      %v3276 = vrot.slane %v3274, 4
      %v3277 = vor.u32 %v3273, %v3276
      %v3278 = vsel %vm1567, %v3268, %v3277
      %v3280 = vshrl.u32 %v3167, 16
      %v3282 = vrot.slane %v3280, 3
      %v3283 = vshll.u32 %v3167, 16
      %v3285 = vrot.slane %v3283, 4
      %v3286 = vor.u32 %v3282, %v3285
      %v3287 = vsel %vm1567, %v3277, %v3286
      %v3289 = vshrl.u32 %v3168, 16
      %v3291 = vrot.slane %v3289, 3
      %v3292 = vshll.u32 %v3168, 16
      %v3294 = vrot.slane %v3292, 4
      %v3295 = vor.u32 %v3291, %v3294
      %v3296 = vsel %vm1567, %v3286, %v3295
      %v3298 = vshrl.u32 %v3169, 16
      %v3300 = vrot.slane %v3298, 3
      %v3301 = vshll.u32 %v3169, 16
      %v3303 = vrot.slane %v3301, 4
      %v3304 = vor.u32 %v3300, %v3303
      %v3305 = vsel %vm1567, %v3295, %v3304
      %v3307 = vshrl.u32 %v3170, 16
      %v3309 = vrot.slane %v3307, 3
      %v3310 = vshll.u32 %v3170, 16
      %v3312 = vrot.slane %v3310, 4
      %v3313 = vor.u32 %v3309, %v3312
      %v3314 = vsel %vm1567, %v3304, %v3313
      %v3316 = vshrl.u32 %v3171, 16
      %v3318 = vrot.slane %v3316, 3
      %v3319 = vshll.u32 %v3171, 16
      %v3321 = vrot.slane %v3319, 4
      %v3322 = vor.u32 %v3318, %v3321
      %v3323 = vsel %vm1567, %v3313, %v3322
      %v3356 = vunpack.c.l.b16 %v3073
      %v3357 = vunpack.c.l.b16 %v3074
      %v3358 = vunpack.c.l.b16 %v3075
      %v3359 = vunpack.c.l.b16 %v3076
      %v3360 = vunpack.c.l.b16 %v3077
      %v3361 = vunpack.c.l.b16 %v3078
      %v3362 = vunpack.c.l.b16 %v3079
      %v3363 = vunpack.c.l.b16 %v3080
      %v3364 = vunpack.c.l.b16 %v3081
      %v3365 = vunpack.c.l.b16 %v3082
      %v3366 = vunpack.c.l.b16 %v3083
      %v3367 = vunpack.c.l.b16 %v3084
      %v3368 = vunpack.c.l.b16 %v3085
      %v3369 = vunpack.c.l.b16 %v3086
      %v3370 = vunpack.c.l.b16 %v3087
      %v3371 = vunpack.c.l.b16 %v3088
      %v3372 = vpack.c.b16 %v3357, %v3356
      %v3373 = vpack.c.b16 %v3359, %v3358
      %v3374 = vpack.c.b16 %v3361, %v3360
      %v3375 = vpack.c.b16 %v3363, %v3362
      %v3376 = vpack.c.b16 %v3365, %v3364
      %v3377 = vpack.c.b16 %v3367, %v3366
      %v3378 = vpack.c.b16 %v3369, %v3368
      %v3379 = vpack.c.b16 %v3371, %v3370
      %3388 = vmatpush.bf16.msra.mxu0 %v3379
      %3389 = vmatpush.bf16.msra.mxu0 %v3378
      %3390 = vmatpush.bf16.msra.mxu0 %v3377
      %3391 = vmatpush.bf16.msra.mxu0 %v3376
      %3392 = vmatpush.bf16.msra.mxu0 %v3375
      %3393 = vmatpush.bf16.msra.mxu0 %v3374
      %3394 = vmatpush.bf16.msra.mxu0 %v3373
      %3395 = vmatpush.bf16.msra.mxu0 %v3372
      %3396 = vmatmul.bf16.gmra.mxu0 %v3188
      %v3397 = vpop.f32.mrf.mxu0
      %v3398 = vadd.f32 0.0, %v3397
      %v3399 = vpop.f32.mrf.mxu0
      %v3400 = vadd.f32 0.0, %v3399
      %3401 = vmatmul.bf16.gmra.mxu0 %v3197
      %v3402 = vpop.f32.mrf.mxu0
      %v3403 = vadd.f32 0.0, %v3402
      %v3404 = vpop.f32.mrf.mxu0
      %v3405 = vadd.f32 0.0, %v3404
      %3406 = vmatmul.bf16.gmra.mxu0 %v3206
      %v3407 = vpop.f32.mrf.mxu0
      %v3408 = vadd.f32 0.0, %v3407
      %v3409 = vpop.f32.mrf.mxu0
      %v3410 = vadd.f32 0.0, %v3409
      %3411 = vmatmul.bf16.gmra.mxu0 %v3215
      %v3412 = vpop.f32.mrf.mxu0
      %v3413 = vadd.f32 0.0, %v3412
      %v3414 = vpop.f32.mrf.mxu0
      %v3415 = vadd.f32 0.0, %v3414
      %3416 = vmatmul.bf16.gmra.mxu0 %v3224
      %v3417 = vpop.f32.mrf.mxu0
      %v3418 = vadd.f32 0.0, %v3417
      %v3419 = vpop.f32.mrf.mxu0
      %v3420 = vadd.f32 0.0, %v3419
      %3421 = vmatmul.bf16.gmra.mxu0 %v3233
      %v3422 = vpop.f32.mrf.mxu0
      %v3423 = vadd.f32 0.0, %v3422
      %v3424 = vpop.f32.mrf.mxu0
      %v3425 = vadd.f32 0.0, %v3424
      %3426 = vmatmul.bf16.gmra.mxu0 %v3242
      %v3427 = vpop.f32.mrf.mxu0
      %v3428 = vadd.f32 0.0, %v3427
      %v3429 = vpop.f32.mrf.mxu0
      %v3430 = vadd.f32 0.0, %v3429
      %3431 = vmatmul.bf16.gmra.mxu0 %v3251
      %v3432 = vpop.f32.mrf.mxu0
      %v3433 = vadd.f32 0.0, %v3432
      %v3434 = vpop.f32.mrf.mxu0
      %v3435 = vadd.f32 0.0, %v3434
      %3436 = vmatmul.bf16.gmra.mxu0 %v3260
      %v3437 = vpop.f32.mrf.mxu0
      %v3438 = vadd.f32 0.0, %v3437
      %v3439 = vpop.f32.mrf.mxu0
      %v3440 = vadd.f32 0.0, %v3439
      %3441 = vmatmul.bf16.gmra.mxu0 %v3269
      %v3442 = vpop.f32.mrf.mxu0
      %v3443 = vadd.f32 0.0, %v3442
      %v3444 = vpop.f32.mrf.mxu0
      %v3445 = vadd.f32 0.0, %v3444
      %3446 = vmatmul.bf16.gmra.mxu0 %v3278
      %v3447 = vpop.f32.mrf.mxu0
      %v3448 = vadd.f32 0.0, %v3447
      %v3449 = vpop.f32.mrf.mxu0
      %v3450 = vadd.f32 0.0, %v3449
      %3451 = vmatmul.bf16.gmra.mxu0 %v3287
      %v3452 = vpop.f32.mrf.mxu0
      %v3453 = vadd.f32 0.0, %v3452
      %v3454 = vpop.f32.mrf.mxu0
      %v3455 = vadd.f32 0.0, %v3454
      %3456 = vmatmul.bf16.gmra.mxu0 %v3296
      %v3457 = vpop.f32.mrf.mxu0
      %v3458 = vadd.f32 0.0, %v3457
      %v3459 = vpop.f32.mrf.mxu0
      %v3460 = vadd.f32 0.0, %v3459
      %3461 = vmatmul.bf16.gmra.mxu0 %v3305
      %v3462 = vpop.f32.mrf.mxu0
      %v3463 = vadd.f32 0.0, %v3462
      %v3464 = vpop.f32.mrf.mxu0
      %v3465 = vadd.f32 0.0, %v3464
      %3466 = vmatmul.bf16.gmra.mxu0 %v3314
      %v3467 = vpop.f32.mrf.mxu0
      %v3468 = vadd.f32 0.0, %v3467
      %v3469 = vpop.f32.mrf.mxu0
      %v3470 = vadd.f32 0.0, %v3469
      %3471 = vmatmul.bf16.gmra.mxu0 %v3323
      %v3472 = vpop.f32.mrf.mxu0
      %v3473 = vadd.f32 0.0, %v3472
      %v3474 = vpop.f32.mrf.mxu0
      %v3475 = vadd.f32 0.0, %v3474
      %3476 = vdwg.mxu0
      %v3477 = vadd.f32 %v2974, %v3398
      %v3478 = vadd.f32 %v2975, %v3400
      %v3479 = vadd.f32 %v2976, %v3403
      %v3480 = vadd.f32 %v2977, %v3405
      %v3481 = vadd.f32 %v2978, %v3408
      %v3482 = vadd.f32 %v2979, %v3410
      %v3483 = vadd.f32 %v2980, %v3413
      %v3484 = vadd.f32 %v2981, %v3415
      %v3485 = vadd.f32 %v2982, %v3418
      %v3486 = vadd.f32 %v2983, %v3420
      %v3487 = vadd.f32 %v2984, %v3423
      %v3488 = vadd.f32 %v2985, %v3425
      %v3489 = vadd.f32 %v2986, %v3428
      %v3490 = vadd.f32 %v2987, %v3430
      %v3491 = vadd.f32 %v2988, %v3433
      %v3492 = vadd.f32 %v2989, %v3435
      %v3493 = vadd.f32 %v2990, %v3438
      %v3494 = vadd.f32 %v2991, %v3440
      %v3495 = vadd.f32 %v2992, %v3443
      %v3496 = vadd.f32 %v2993, %v3445
      %v3497 = vadd.f32 %v2994, %v3448
      %v3498 = vadd.f32 %v2995, %v3450
      %v3499 = vadd.f32 %v2996, %v3453
      %v3500 = vadd.f32 %v2997, %v3455
      %v3501 = vadd.f32 %v2998, %v3458
      %v3502 = vadd.f32 %v2999, %v3460
      %v3503 = vadd.f32 %v3000, %v3463
      %v3504 = vadd.f32 %v3001, %v3465
      %v3505 = vadd.f32 %v3002, %v3468
      %v3506 = vadd.f32 %v3003, %v3470
      %v3507 = vadd.f32 %v3004, %v3473
      %v3508 = vadd.f32 %v3005, %v3475
      %s3509 = scalar_lea.vmem %s3, 256
      %v3510 = vld [vmem:[%s3509] sm:$0xf]
      %v3511 = vld [vmem:[%s3509 + $0x4] sm:$0xf]
      %v3512 = vld [vmem:[%s3509 + $0x8] sm:$0xf]
      %v3513 = vld [vmem:[%s3509 + $0xc] sm:$0xf]
      %v3514 = vld [vmem:[%s3509 + $0x10] sm:$0xf]
      %v3515 = vld [vmem:[%s3509 + $0x14] sm:$0xf]
      %v3516 = vld [vmem:[%s3509 + $0x18] sm:$0xf]
      %v3517 = vld [vmem:[%s3509 + $0x1c] sm:$0xf]
      %v3518 = vld [vmem:[%s3509 + $0x20] sm:$0xf]
      %v3519 = vld [vmem:[%s3509 + $0x24] sm:$0xf]
      %v3520 = vld [vmem:[%s3509 + $0x28] sm:$0xf]
      %v3521 = vld [vmem:[%s3509 + $0x2c] sm:$0xf]
      %v3522 = vld [vmem:[%s3509 + $0x30] sm:$0xf]
      %v3523 = vld [vmem:[%s3509 + $0x34] sm:$0xf]
      %v3524 = vld [vmem:[%s3509 + $0x38] sm:$0xf]
      %v3525 = vld [vmem:[%s3509 + $0x3c] sm:$0xf]
      %v3558 = vunpack.c.l.b16 %v3007
      %v3559 = vunpack.c.l.b16 %v3008
      %v3560 = vunpack.c.l.b16 %v3009
      %v3561 = vunpack.c.l.b16 %v3010
      %v3562 = vunpack.c.l.b16 %v3011
      %v3563 = vunpack.c.l.b16 %v3012
      %v3564 = vunpack.c.l.b16 %v3013
      %v3565 = vunpack.c.l.b16 %v3014
      %v3566 = vunpack.c.l.b16 %v3015
      %v3567 = vunpack.c.l.b16 %v3016
      %v3568 = vunpack.c.l.b16 %v3017
      %v3569 = vunpack.c.l.b16 %v3018
      %v3570 = vunpack.c.l.b16 %v3019
      %v3571 = vunpack.c.l.b16 %v3020
      %v3572 = vunpack.c.l.b16 %v3021
      %v3573 = vunpack.c.l.b16 %v3022
      %v3574 = vunpack.c.l.b16 %v3023
      %v3575 = vunpack.c.l.b16 %v3024
      %v3576 = vunpack.c.l.b16 %v3025
      %v3577 = vunpack.c.l.b16 %v3026
      %v3578 = vunpack.c.l.b16 %v3027
      %v3579 = vunpack.c.l.b16 %v3028
      %v3580 = vunpack.c.l.b16 %v3029
      %v3581 = vunpack.c.l.b16 %v3030
      %v3582 = vunpack.c.l.b16 %v3031
      %v3583 = vunpack.c.l.b16 %v3032
      %v3584 = vunpack.c.l.b16 %v3033
      %v3585 = vunpack.c.l.b16 %v3034
      %v3586 = vunpack.c.l.b16 %v3035
      %v3587 = vunpack.c.l.b16 %v3036
      %v3588 = vunpack.c.l.b16 %v3037
      %v3589 = vunpack.c.l.b16 %v3038
      %v3590 = vpack.c.b16 %v3559, %v3558
      %v3591 = vpack.c.b16 %v3561, %v3560
      %v3592 = vpack.c.b16 %v3563, %v3562
      %v3593 = vpack.c.b16 %v3565, %v3564
      %v3594 = vpack.c.b16 %v3567, %v3566
      %v3595 = vpack.c.b16 %v3569, %v3568
      %v3596 = vpack.c.b16 %v3571, %v3570
      %v3597 = vpack.c.b16 %v3573, %v3572
      %v3598 = vpack.c.b16 %v3575, %v3574
      %v3599 = vpack.c.b16 %v3577, %v3576
      %v3600 = vpack.c.b16 %v3579, %v3578
      %v3601 = vpack.c.b16 %v3581, %v3580
      %v3602 = vpack.c.b16 %v3583, %v3582
      %v3603 = vpack.c.b16 %v3585, %v3584
      %v3604 = vpack.c.b16 %v3587, %v3586
      %v3605 = vpack.c.b16 %v3589, %v3588
      %v3638 = vunpack.c.l.b16 %v3510
      %v3639 = vunpack.c.l.b16 %v3511
      %v3640 = vunpack.c.l.b16 %v3512
      %v3641 = vunpack.c.l.b16 %v3513
      %v3642 = vunpack.c.l.b16 %v3514
      %v3643 = vunpack.c.l.b16 %v3515
      %v3644 = vunpack.c.l.b16 %v3516
      %v3645 = vunpack.c.l.b16 %v3517
      %v3646 = vunpack.c.l.b16 %v3518
      %v3647 = vunpack.c.l.b16 %v3519
      %v3648 = vunpack.c.l.b16 %v3520
      %v3649 = vunpack.c.l.b16 %v3521
      %v3650 = vunpack.c.l.b16 %v3522
      %v3651 = vunpack.c.l.b16 %v3523
      %v3652 = vunpack.c.l.b16 %v3524
      %v3653 = vunpack.c.l.b16 %v3525
      %v3654 = vpack.c.b16 %v3639, %v3638
      %v3655 = vpack.c.b16 %v3641, %v3640
      %v3656 = vpack.c.b16 %v3643, %v3642
      %v3657 = vpack.c.b16 %v3645, %v3644
      %v3658 = vpack.c.b16 %v3647, %v3646
      %v3659 = vpack.c.b16 %v3649, %v3648
      %v3660 = vpack.c.b16 %v3651, %v3650
      %v3661 = vpack.c.b16 %v3653, %v3652
      %3670 = vmatpush.bf16.msra.mxu0 %v3661
      %3671 = vmatpush.bf16.msra.mxu0 %v3660
      %3672 = vmatpush.bf16.msra.mxu0 %v3659
      %3673 = vmatpush.bf16.msra.mxu0 %v3658
      %3674 = vmatpush.bf16.msra.mxu0 %v3657
      %3675 = vmatpush.bf16.msra.mxu0 %v3656
      %3676 = vmatpush.bf16.msra.mxu0 %v3655
      %3677 = vmatpush.bf16.msra.mxu0 %v3654
      %3678 = vmatmul.bf16.gmra.mxu0 %v3590
      %v3679 = vpop.f32.mrf.mxu0
      %v3680 = vadd.f32 0.0, %v3679
      %v3681 = vpop.f32.mrf.mxu0
      %v3682 = vadd.f32 0.0, %v3681
      %3683 = vmatmul.bf16.gmra.mxu0 %v3591
      %v3684 = vpop.f32.mrf.mxu0
      %v3685 = vadd.f32 0.0, %v3684
      %v3686 = vpop.f32.mrf.mxu0
      %v3687 = vadd.f32 0.0, %v3686
      %3688 = vmatmul.bf16.gmra.mxu0 %v3592
      %v3689 = vpop.f32.mrf.mxu0
      %v3690 = vadd.f32 0.0, %v3689
      %v3691 = vpop.f32.mrf.mxu0
      %v3692 = vadd.f32 0.0, %v3691
      %3693 = vmatmul.bf16.gmra.mxu0 %v3593
      %v3694 = vpop.f32.mrf.mxu0
      %v3695 = vadd.f32 0.0, %v3694
      %v3696 = vpop.f32.mrf.mxu0
      %v3697 = vadd.f32 0.0, %v3696
      %3698 = vmatmul.bf16.gmra.mxu0 %v3594
      %v3699 = vpop.f32.mrf.mxu0
      %v3700 = vadd.f32 0.0, %v3699
      %v3701 = vpop.f32.mrf.mxu0
      %v3702 = vadd.f32 0.0, %v3701
      %3703 = vmatmul.bf16.gmra.mxu0 %v3595
      %v3704 = vpop.f32.mrf.mxu0
      %v3705 = vadd.f32 0.0, %v3704
      %v3706 = vpop.f32.mrf.mxu0
      %v3707 = vadd.f32 0.0, %v3706
      %3708 = vmatmul.bf16.gmra.mxu0 %v3596
      %v3709 = vpop.f32.mrf.mxu0
      %v3710 = vadd.f32 0.0, %v3709
      %v3711 = vpop.f32.mrf.mxu0
      %v3712 = vadd.f32 0.0, %v3711
      %3713 = vmatmul.bf16.gmra.mxu0 %v3597
      %v3714 = vpop.f32.mrf.mxu0
      %v3715 = vadd.f32 0.0, %v3714
      %v3716 = vpop.f32.mrf.mxu0
      %v3717 = vadd.f32 0.0, %v3716
      %3718 = vmatmul.bf16.gmra.mxu0 %v3598
      %v3719 = vpop.f32.mrf.mxu0
      %v3720 = vadd.f32 0.0, %v3719
      %v3721 = vpop.f32.mrf.mxu0
      %v3722 = vadd.f32 0.0, %v3721
      %3723 = vmatmul.bf16.gmra.mxu0 %v3599
      %v3724 = vpop.f32.mrf.mxu0
      %v3725 = vadd.f32 0.0, %v3724
      %v3726 = vpop.f32.mrf.mxu0
      %v3727 = vadd.f32 0.0, %v3726
      %3728 = vmatmul.bf16.gmra.mxu0 %v3600
      %v3729 = vpop.f32.mrf.mxu0
      %v3730 = vadd.f32 0.0, %v3729
      %v3731 = vpop.f32.mrf.mxu0
      %v3732 = vadd.f32 0.0, %v3731
      %3733 = vmatmul.bf16.gmra.mxu0 %v3601
      %v3734 = vpop.f32.mrf.mxu0
      %v3735 = vadd.f32 0.0, %v3734
      %v3736 = vpop.f32.mrf.mxu0
      %v3737 = vadd.f32 0.0, %v3736
      %3738 = vmatmul.bf16.gmra.mxu0 %v3602
      %v3739 = vpop.f32.mrf.mxu0
      %v3740 = vadd.f32 0.0, %v3739
      %v3741 = vpop.f32.mrf.mxu0
      %v3742 = vadd.f32 0.0, %v3741
      %3743 = vmatmul.bf16.gmra.mxu0 %v3603
      %v3744 = vpop.f32.mrf.mxu0
      %v3745 = vadd.f32 0.0, %v3744
      %v3746 = vpop.f32.mrf.mxu0
      %v3747 = vadd.f32 0.0, %v3746
      %3748 = vmatmul.bf16.gmra.mxu0 %v3604
      %v3749 = vpop.f32.mrf.mxu0
      %v3750 = vadd.f32 0.0, %v3749
      %v3751 = vpop.f32.mrf.mxu0
      %v3752 = vadd.f32 0.0, %v3751
      %3753 = vmatmul.bf16.gmra.mxu0 %v3605
      %v3754 = vpop.f32.mrf.mxu0
      %v3755 = vadd.f32 0.0, %v3754
      %v3756 = vpop.f32.mrf.mxu0
      %v3757 = vadd.f32 0.0, %v3756
      %3758 = vdwg.mxu0
      %v3759 = vadd.f32 %v3477, %v3680
      %v3760 = vadd.f32 %v3478, %v3682
      %v3761 = vadd.f32 %v3479, %v3685
      %v3762 = vadd.f32 %v3480, %v3687
      %v3763 = vadd.f32 %v3481, %v3690
      %v3764 = vadd.f32 %v3482, %v3692
      %v3765 = vadd.f32 %v3483, %v3695
      %v3766 = vadd.f32 %v3484, %v3697
      %v3767 = vadd.f32 %v3485, %v3700
      %v3768 = vadd.f32 %v3486, %v3702
      %v3769 = vadd.f32 %v3487, %v3705
      %v3770 = vadd.f32 %v3488, %v3707
      %v3771 = vadd.f32 %v3489, %v3710
      %v3772 = vadd.f32 %v3490, %v3712
      %v3773 = vadd.f32 %v3491, %v3715
      %v3774 = vadd.f32 %v3492, %v3717
      %v3775 = vadd.f32 %v3493, %v3720
      %v3776 = vadd.f32 %v3494, %v3722
      %v3777 = vadd.f32 %v3495, %v3725
      %v3778 = vadd.f32 %v3496, %v3727
      %v3779 = vadd.f32 %v3497, %v3730
      %v3780 = vadd.f32 %v3498, %v3732
      %v3781 = vadd.f32 %v3499, %v3735
      %v3782 = vadd.f32 %v3500, %v3737
      %v3783 = vadd.f32 %v3501, %v3740
      %v3784 = vadd.f32 %v3502, %v3742
      %v3785 = vadd.f32 %v3503, %v3745
      %v3786 = vadd.f32 %v3504, %v3747
      %v3787 = vadd.f32 %v3505, %v3750
      %v3788 = vadd.f32 %v3506, %v3752
      %v3789 = vadd.f32 %v3507, %v3755
      %v3790 = vadd.f32 %v3508, %v3757
      %v3791 = vld [vmem:[#allocation2 + $0xc] sm:$0xf]
      %v3792 = vld [vmem:[#allocation2 + $0x10] sm:$0xf]
      %v3793 = vld [vmem:[#allocation2 + $0x14] sm:$0xf]
      %v3794 = vld [vmem:[#allocation2 + $0x18] sm:$0xf]
      %v3795 = vld [vmem:[#allocation2 + $0x1c] sm:$0xf]
      %v3796 = vld [vmem:[#allocation2 + $0x20] sm:$0xf]
      %v3797 = vld [vmem:[#allocation2 + $0x24] sm:$0xf]
      %v3798 = vld [vmem:[#allocation2 + $0x28] sm:$0xf]
      %v3799 = vld [vmem:[#allocation2 + $0x2c] sm:$0xf]
      %v3800 = vld [vmem:[#allocation2 + $0x30] sm:$0xf]
      %v3801 = vld [vmem:[#allocation2 + $0x34] sm:$0xf]
      %v3802 = vld [vmem:[#allocation2 + $0x38] sm:$0xf]
      %v3803 = vld [vmem:[#allocation2 + $0x3c] sm:$0xf]
      %v3804 = vld [vmem:[#allocation2 + $0x40] sm:$0xf]
      %v3805 = vld [vmem:[#allocation2 + $0x44] sm:$0xf]
      %v3806 = vld [vmem:[#allocation2 + $0x48] sm:$0xf]
      %v3807 = vld [vmem:[#allocation2 + $0x4c] sm:$0xf]
      %v3808 = vld [vmem:[#allocation2 + $0x50] sm:$0xf]
      %v3809 = vld [vmem:[#allocation2 + $0x54] sm:$0xf]
      %v3810 = vld [vmem:[#allocation2 + $0x58] sm:$0xf]
      %v3811 = vld [vmem:[#allocation2 + $0x5c] sm:$0xf]
      %v3812 = vld [vmem:[#allocation2 + $0x60] sm:$0xf]
      %v3813 = vld [vmem:[#allocation2 + $0x64] sm:$0xf]
      %v3814 = vld [vmem:[#allocation2 + $0x68] sm:$0xf]
      %v3815 = vld [vmem:[#allocation2 + $0x6c] sm:$0xf]
      %v3816 = vld [vmem:[#allocation2 + $0x70] sm:$0xf]
      %v3817 = vld [vmem:[#allocation2 + $0x74] sm:$0xf]
      %v3818 = vld [vmem:[#allocation2 + $0x78] sm:$0xf]
      %v3819 = vld [vmem:[#allocation2 + $0x7c] sm:$0xf]
      %v3820 = vld [vmem:[#allocation2 + $0x80] sm:$0xf]
      %v3821 = vld [vmem:[#allocation2 + $0x84] sm:$0xf]
      %v3822 = vld [vmem:[#allocation2 + $0x88] sm:$0xf]
      %v3823 = vld [vmem:[#allocation2 + $0x8c] sm:$0x1]
      %v3824 = vsel %vm2330, %v3791, 0
      %v3825 = vsel %vm2337, %v3792, 0
      %v3826 = vsel %vm2344, %v3793, 0
      %v3827 = vsel %vm2351, %v3794, 0
      %v3828 = vsel %vm2358, %v3795, 0
      %v3829 = vsel %vm2365, %v3796, 0
      %v3830 = vsel %vm2372, %v3797, 0
      %v3831 = vsel %vm2379, %v3798, 0
      %v3832 = vsel %vm2386, %v3799, 0
      %v3833 = vsel %vm2393, %v3800, 0
      %v3834 = vsel %vm2400, %v3801, 0
      %v3835 = vsel %vm2407, %v3802, 0
      %v3836 = vsel %vm2414, %v3803, 0
      %v3837 = vsel %vm2421, %v3804, 0
      %v3838 = vsel %vm2428, %v3805, 0
      %v3839 = vsel %vm2435, %v3806, 0
      %v3840 = vsel %vm2442, %v3807, 0
      %v3841 = vsel %vm2449, %v3808, 0
      %v3842 = vsel %vm2456, %v3809, 0
      %v3843 = vsel %vm2463, %v3810, 0
      %v3844 = vsel %vm2470, %v3811, 0
      %v3845 = vsel %vm2477, %v3812, 0
      %v3846 = vsel %vm2484, %v3813, 0
      %v3847 = vsel %vm2491, %v3814, 0
      %v3848 = vsel %vm2498, %v3815, 0
      %v3849 = vsel %vm2505, %v3816, 0
      %v3850 = vsel %vm2512, %v3817, 0
      %v3851 = vsel %vm2519, %v3818, 0
      %v3852 = vsel %vm2526, %v3819, 0
      %v3853 = vsel %vm2533, %v3820, 0
      %v3854 = vsel %vm2540, %v3821, 0
      %v3855 = vsel %vm2547, %v3822, 0
      %v3856 = vsel %vm2554, %v3823, 0
      %s3857 = scalar_lea.vmem %s3, 320
      %v3858 = vld [vmem:[%s3857] sm:$0xf]
      %v3859 = vld [vmem:[%s3857 + $0x4] sm:$0xf]
      %v3860 = vld [vmem:[%s3857 + $0x8] sm:$0xf]
      %v3861 = vld [vmem:[%s3857 + $0xc] sm:$0xf]
      %v3862 = vld [vmem:[%s3857 + $0x10] sm:$0xf]
      %v3863 = vld [vmem:[%s3857 + $0x14] sm:$0xf]
      %v3864 = vld [vmem:[%s3857 + $0x18] sm:$0xf]
      %v3865 = vld [vmem:[%s3857 + $0x1c] sm:$0xf]
      %v3866 = vld [vmem:[%s3857 + $0x20] sm:$0xf]
      %v3867 = vld [vmem:[%s3857 + $0x24] sm:$0xf]
      %v3868 = vld [vmem:[%s3857 + $0x28] sm:$0xf]
      %v3869 = vld [vmem:[%s3857 + $0x2c] sm:$0xf]
      %v3870 = vld [vmem:[%s3857 + $0x30] sm:$0xf]
      %v3871 = vld [vmem:[%s3857 + $0x34] sm:$0xf]
      %v3872 = vld [vmem:[%s3857 + $0x38] sm:$0xf]
      %v3873 = vld [vmem:[%s3857 + $0x3c] sm:$0xf]
      %v3907 = vunpack.c.l.b16 %v3824
      %v3908 = vunpack.c.l.b16 %v3825
      %v3909 = vunpack.c.l.b16 %v3826
      %v3910 = vunpack.c.l.b16 %v3827
      %v3911 = vunpack.c.l.b16 %v3828
      %v3912 = vunpack.c.l.b16 %v3829
      %v3913 = vunpack.c.l.b16 %v3830
      %v3914 = vunpack.c.l.b16 %v3831
      %v3915 = vunpack.c.l.b16 %v3832
      %v3916 = vunpack.c.l.b16 %v3833
      %v3917 = vunpack.c.l.b16 %v3834
      %v3918 = vunpack.c.l.b16 %v3835
      %v3919 = vunpack.c.l.b16 %v3836
      %v3920 = vunpack.c.l.b16 %v3837
      %v3921 = vunpack.c.l.b16 %v3838
      %v3922 = vunpack.c.l.b16 %v3839
      %v3923 = vunpack.c.l.b16 %v3840
      %v3924 = vunpack.c.l.b16 %v3841
      %v3925 = vunpack.c.l.b16 %v3842
      %v3926 = vunpack.c.l.b16 %v3843
      %v3927 = vunpack.c.l.b16 %v3844
      %v3928 = vunpack.c.l.b16 %v3845
      %v3929 = vunpack.c.l.b16 %v3846
      %v3930 = vunpack.c.l.b16 %v3847
      %v3931 = vunpack.c.l.b16 %v3848
      %v3932 = vunpack.c.l.b16 %v3849
      %v3933 = vunpack.c.l.b16 %v3850
      %v3934 = vunpack.c.l.b16 %v3851
      %v3935 = vunpack.c.l.b16 %v3852
      %v3936 = vunpack.c.l.b16 %v3853
      %v3937 = vunpack.c.l.b16 %v3854
      %v3938 = vunpack.c.l.b16 %v3855
      %v3939 = vunpack.c.l.b16 %v3856
      %v3940 = vpack.c.b16 %v3908, %v3907
      %v3941 = vpack.c.b16 %v3910, %v3909
      %v3942 = vpack.c.b16 %v3912, %v3911
      %v3943 = vpack.c.b16 %v3914, %v3913
      %v3944 = vpack.c.b16 %v3916, %v3915
      %v3945 = vpack.c.b16 %v3918, %v3917
      %v3946 = vpack.c.b16 %v3920, %v3919
      %v3947 = vpack.c.b16 %v3922, %v3921
      %v3948 = vpack.c.b16 %v3924, %v3923
      %v3949 = vpack.c.b16 %v3926, %v3925
      %v3950 = vpack.c.b16 %v3928, %v3927
      %v3951 = vpack.c.b16 %v3930, %v3929
      %v3952 = vpack.c.b16 %v3932, %v3931
      %v3953 = vpack.c.b16 %v3934, %v3933
      %v3954 = vpack.c.b16 %v3936, %v3935
      %v3955 = vpack.c.b16 %v3938, %v3937
      %v3956 = vpack.c.b16 %v3939, %v3939
      %v3958 = vshrl.u32 %v3940, 16
      %v3960 = vshll.u32 %v3940, 16
      %v3962 = vrot.slane %v3960, 1
      %v3963 = vor.u32 %v3958, %v3962
      %v3965 = vshll.u32 %v3941, 16
      %v3967 = vrot.slane %v3965, 1
      %v3968 = vsel %vm2688, %v3963, %v3967
      %v3969 = vshrl.u32 %v3941, 16
      %v3971 = vor.u32 %v3969, %v3967
      %v3973 = vshll.u32 %v3942, 16
      %v3975 = vrot.slane %v3973, 1
      %v3976 = vsel %vm2688, %v3971, %v3975
      %v3977 = vshrl.u32 %v3942, 16
      %v3979 = vor.u32 %v3977, %v3975
      %v3981 = vshll.u32 %v3943, 16
      %v3983 = vrot.slane %v3981, 1
      %v3984 = vsel %vm2688, %v3979, %v3983
      %v3985 = vshrl.u32 %v3943, 16
      %v3987 = vor.u32 %v3985, %v3983
      %v3989 = vshll.u32 %v3944, 16
      %v3991 = vrot.slane %v3989, 1
      %v3992 = vsel %vm2688, %v3987, %v3991
      %v3993 = vshrl.u32 %v3944, 16
      %v3995 = vor.u32 %v3993, %v3991
      %v3997 = vshll.u32 %v3945, 16
      %v3999 = vrot.slane %v3997, 1
      %v4000 = vsel %vm2688, %v3995, %v3999
      %v4001 = vshrl.u32 %v3945, 16
      %v4003 = vor.u32 %v4001, %v3999
      %v4005 = vshll.u32 %v3946, 16
      %v4007 = vrot.slane %v4005, 1
      %v4008 = vsel %vm2688, %v4003, %v4007
      %v4009 = vshrl.u32 %v3946, 16
      %v4011 = vor.u32 %v4009, %v4007
      %v4013 = vshll.u32 %v3947, 16
      %v4015 = vrot.slane %v4013, 1
      %v4016 = vsel %vm2688, %v4011, %v4015
      %v4017 = vshrl.u32 %v3947, 16
      %v4019 = vor.u32 %v4017, %v4015
      %v4021 = vshll.u32 %v3948, 16
      %v4023 = vrot.slane %v4021, 1
      %v4024 = vsel %vm2688, %v4019, %v4023
      %v4025 = vshrl.u32 %v3948, 16
      %v4027 = vor.u32 %v4025, %v4023
      %v4029 = vshll.u32 %v3949, 16
      %v4031 = vrot.slane %v4029, 1
      %v4032 = vsel %vm2688, %v4027, %v4031
      %v4033 = vshrl.u32 %v3949, 16
      %v4035 = vor.u32 %v4033, %v4031
      %v4037 = vshll.u32 %v3950, 16
      %v4039 = vrot.slane %v4037, 1
      %v4040 = vsel %vm2688, %v4035, %v4039
      %v4041 = vshrl.u32 %v3950, 16
      %v4043 = vor.u32 %v4041, %v4039
      %v4045 = vshll.u32 %v3951, 16
      %v4047 = vrot.slane %v4045, 1
      %v4048 = vsel %vm2688, %v4043, %v4047
      %v4049 = vshrl.u32 %v3951, 16
      %v4051 = vor.u32 %v4049, %v4047
      %v4053 = vshll.u32 %v3952, 16
      %v4055 = vrot.slane %v4053, 1
      %v4056 = vsel %vm2688, %v4051, %v4055
      %v4057 = vshrl.u32 %v3952, 16
      %v4059 = vor.u32 %v4057, %v4055
      %v4061 = vshll.u32 %v3953, 16
      %v4063 = vrot.slane %v4061, 1
      %v4064 = vsel %vm2688, %v4059, %v4063
      %v4065 = vshrl.u32 %v3953, 16
      %v4067 = vor.u32 %v4065, %v4063
      %v4069 = vshll.u32 %v3954, 16
      %v4071 = vrot.slane %v4069, 1
      %v4072 = vsel %vm2688, %v4067, %v4071
      %v4073 = vshrl.u32 %v3954, 16
      %v4075 = vor.u32 %v4073, %v4071
      %v4077 = vshll.u32 %v3955, 16
      %v4079 = vrot.slane %v4077, 1
      %v4080 = vsel %vm2688, %v4075, %v4079
      %v4081 = vshrl.u32 %v3955, 16
      %v4083 = vor.u32 %v4081, %v4079
      %v4085 = vshll.u32 %v3956, 16
      %v4087 = vrot.slane %v4085, 1
      %v4088 = vsel %vm2688, %v4083, %v4087
      %v4121 = vunpack.c.l.b16 %v3858
      %v4122 = vunpack.c.l.b16 %v3859
      %v4123 = vunpack.c.l.b16 %v3860
      %v4124 = vunpack.c.l.b16 %v3861
      %v4125 = vunpack.c.l.b16 %v3862
      %v4126 = vunpack.c.l.b16 %v3863
      %v4127 = vunpack.c.l.b16 %v3864
      %v4128 = vunpack.c.l.b16 %v3865
      %v4129 = vunpack.c.l.b16 %v3866
      %v4130 = vunpack.c.l.b16 %v3867
      %v4131 = vunpack.c.l.b16 %v3868
      %v4132 = vunpack.c.l.b16 %v3869
      %v4133 = vunpack.c.l.b16 %v3870
      %v4134 = vunpack.c.l.b16 %v3871
      %v4135 = vunpack.c.l.b16 %v3872
      %v4136 = vunpack.c.l.b16 %v3873
      %v4137 = vpack.c.b16 %v4122, %v4121
      %v4138 = vpack.c.b16 %v4124, %v4123
      %v4139 = vpack.c.b16 %v4126, %v4125
      %v4140 = vpack.c.b16 %v4128, %v4127
      %v4141 = vpack.c.b16 %v4130, %v4129
      %v4142 = vpack.c.b16 %v4132, %v4131
      %v4143 = vpack.c.b16 %v4134, %v4133
      %v4144 = vpack.c.b16 %v4136, %v4135
      %4153 = vmatpush.bf16.msra.mxu0 %v4144
      %4154 = vmatpush.bf16.msra.mxu0 %v4143
      %4155 = vmatpush.bf16.msra.mxu0 %v4142
      %4156 = vmatpush.bf16.msra.mxu0 %v4141
      %4157 = vmatpush.bf16.msra.mxu0 %v4140
      %4158 = vmatpush.bf16.msra.mxu0 %v4139
      %4159 = vmatpush.bf16.msra.mxu0 %v4138
      %4160 = vmatpush.bf16.msra.mxu0 %v4137
      %4161 = vmatmul.bf16.gmra.mxu0 %v3968
      %v4162 = vpop.f32.mrf.mxu0
      %v4163 = vadd.f32 0.0, %v4162
      %v4164 = vpop.f32.mrf.mxu0
      %v4165 = vadd.f32 0.0, %v4164
      %4166 = vmatmul.bf16.gmra.mxu0 %v3976
      %v4167 = vpop.f32.mrf.mxu0
      %v4168 = vadd.f32 0.0, %v4167
      %v4169 = vpop.f32.mrf.mxu0
      %v4170 = vadd.f32 0.0, %v4169
      %4171 = vmatmul.bf16.gmra.mxu0 %v3984
      %v4172 = vpop.f32.mrf.mxu0
      %v4173 = vadd.f32 0.0, %v4172
      %v4174 = vpop.f32.mrf.mxu0
      %v4175 = vadd.f32 0.0, %v4174
      %4176 = vmatmul.bf16.gmra.mxu0 %v3992
      %v4177 = vpop.f32.mrf.mxu0
      %v4178 = vadd.f32 0.0, %v4177
      %v4179 = vpop.f32.mrf.mxu0
      %v4180 = vadd.f32 0.0, %v4179
      %4181 = vmatmul.bf16.gmra.mxu0 %v4000
      %v4182 = vpop.f32.mrf.mxu0
      %v4183 = vadd.f32 0.0, %v4182
      %v4184 = vpop.f32.mrf.mxu0
      %v4185 = vadd.f32 0.0, %v4184
      %4186 = vmatmul.bf16.gmra.mxu0 %v4008
      %v4187 = vpop.f32.mrf.mxu0
      %v4188 = vadd.f32 0.0, %v4187
      %v4189 = vpop.f32.mrf.mxu0
      %v4190 = vadd.f32 0.0, %v4189
      %4191 = vmatmul.bf16.gmra.mxu0 %v4016
      %v4192 = vpop.f32.mrf.mxu0
      %v4193 = vadd.f32 0.0, %v4192
      %v4194 = vpop.f32.mrf.mxu0
      %v4195 = vadd.f32 0.0, %v4194
      %4196 = vmatmul.bf16.gmra.mxu0 %v4024
      %v4197 = vpop.f32.mrf.mxu0
      %v4198 = vadd.f32 0.0, %v4197
      %v4199 = vpop.f32.mrf.mxu0
      %v4200 = vadd.f32 0.0, %v4199
      %4201 = vmatmul.bf16.gmra.mxu0 %v4032
      %v4202 = vpop.f32.mrf.mxu0
      %v4203 = vadd.f32 0.0, %v4202
      %v4204 = vpop.f32.mrf.mxu0
      %v4205 = vadd.f32 0.0, %v4204
      %4206 = vmatmul.bf16.gmra.mxu0 %v4040
      %v4207 = vpop.f32.mrf.mxu0
      %v4208 = vadd.f32 0.0, %v4207
      %v4209 = vpop.f32.mrf.mxu0
      %v4210 = vadd.f32 0.0, %v4209
      %4211 = vmatmul.bf16.gmra.mxu0 %v4048
      %v4212 = vpop.f32.mrf.mxu0
      %v4213 = vadd.f32 0.0, %v4212
      %v4214 = vpop.f32.mrf.mxu0
      %v4215 = vadd.f32 0.0, %v4214
      %4216 = vmatmul.bf16.gmra.mxu0 %v4056
      %v4217 = vpop.f32.mrf.mxu0
      %v4218 = vadd.f32 0.0, %v4217
      %v4219 = vpop.f32.mrf.mxu0
      %v4220 = vadd.f32 0.0, %v4219
      %4221 = vmatmul.bf16.gmra.mxu0 %v4064
      %v4222 = vpop.f32.mrf.mxu0
      %v4223 = vadd.f32 0.0, %v4222
      %v4224 = vpop.f32.mrf.mxu0
      %v4225 = vadd.f32 0.0, %v4224
      %4226 = vmatmul.bf16.gmra.mxu0 %v4072
      %v4227 = vpop.f32.mrf.mxu0
      %v4228 = vadd.f32 0.0, %v4227
      %v4229 = vpop.f32.mrf.mxu0
      %v4230 = vadd.f32 0.0, %v4229
      %4231 = vmatmul.bf16.gmra.mxu0 %v4080
      %v4232 = vpop.f32.mrf.mxu0
      %v4233 = vadd.f32 0.0, %v4232
      %v4234 = vpop.f32.mrf.mxu0
      %v4235 = vadd.f32 0.0, %v4234
      %4236 = vmatmul.bf16.gmra.mxu0 %v4088
      %v4237 = vpop.f32.mrf.mxu0
      %v4238 = vadd.f32 0.0, %v4237
      %v4239 = vpop.f32.mrf.mxu0
      %v4240 = vadd.f32 0.0, %v4239
      %4241 = vdwg.mxu0
      %v4242 = vadd.f32 %v3759, %v4163
      %v4243 = vadd.f32 %v3760, %v4165
      %v4244 = vadd.f32 %v3761, %v4168
      %v4245 = vadd.f32 %v3762, %v4170
      %v4246 = vadd.f32 %v3763, %v4173
      %v4247 = vadd.f32 %v3764, %v4175
      %v4248 = vadd.f32 %v3765, %v4178
      %v4249 = vadd.f32 %v3766, %v4180
      %v4250 = vadd.f32 %v3767, %v4183
      %v4251 = vadd.f32 %v3768, %v4185
      %v4252 = vadd.f32 %v3769, %v4188
      %v4253 = vadd.f32 %v3770, %v4190
      %v4254 = vadd.f32 %v3771, %v4193
      %v4255 = vadd.f32 %v3772, %v4195
      %v4256 = vadd.f32 %v3773, %v4198
      %v4257 = vadd.f32 %v3774, %v4200
      %v4258 = vadd.f32 %v3775, %v4203
      %v4259 = vadd.f32 %v3776, %v4205
      %v4260 = vadd.f32 %v3777, %v4208
      %v4261 = vadd.f32 %v3778, %v4210
      %v4262 = vadd.f32 %v3779, %v4213
      %v4263 = vadd.f32 %v3780, %v4215
      %v4264 = vadd.f32 %v3781, %v4218
      %v4265 = vadd.f32 %v3782, %v4220
      %v4266 = vadd.f32 %v3783, %v4223
      %v4267 = vadd.f32 %v3784, %v4225
      %v4268 = vadd.f32 %v3785, %v4228
      %v4269 = vadd.f32 %v3786, %v4230
      %v4270 = vadd.f32 %v3787, %v4233
      %v4271 = vadd.f32 %v3788, %v4235
      %v4272 = vadd.f32 %v3789, %v4238
      %v4273 = vadd.f32 %v3790, %v4240
      %v4274 = vld [vmem:[#allocation2 + $0x10] sm:$0x8]
      %v4275 = vld [vmem:[#allocation2 + $0x14] sm:$0xf]
      %v4276 = vld [vmem:[#allocation2 + $0x18] sm:$0xf]
      %v4277 = vld [vmem:[#allocation2 + $0x1c] sm:$0xf]
      %v4278 = vld [vmem:[#allocation2 + $0x20] sm:$0xf]
      %v4279 = vld [vmem:[#allocation2 + $0x24] sm:$0xf]
      %v4280 = vld [vmem:[#allocation2 + $0x28] sm:$0xf]
      %v4281 = vld [vmem:[#allocation2 + $0x2c] sm:$0xf]
      %v4282 = vld [vmem:[#allocation2 + $0x30] sm:$0xf]
      %v4283 = vld [vmem:[#allocation2 + $0x34] sm:$0xf]
      %v4284 = vld [vmem:[#allocation2 + $0x38] sm:$0xf]
      %v4285 = vld [vmem:[#allocation2 + $0x3c] sm:$0xf]
      %v4286 = vld [vmem:[#allocation2 + $0x40] sm:$0xf]
      %v4287 = vld [vmem:[#allocation2 + $0x44] sm:$0xf]
      %v4288 = vld [vmem:[#allocation2 + $0x48] sm:$0xf]
      %v4289 = vld [vmem:[#allocation2 + $0x4c] sm:$0xf]
      %v4290 = vld [vmem:[#allocation2 + $0x50] sm:$0xf]
      %v4291 = vld [vmem:[#allocation2 + $0x54] sm:$0xf]
      %v4292 = vld [vmem:[#allocation2 + $0x58] sm:$0xf]
      %v4293 = vld [vmem:[#allocation2 + $0x5c] sm:$0xf]
      %v4294 = vld [vmem:[#allocation2 + $0x60] sm:$0xf]
      %v4295 = vld [vmem:[#allocation2 + $0x64] sm:$0xf]
      %v4296 = vld [vmem:[#allocation2 + $0x68] sm:$0xf]
      %v4297 = vld [vmem:[#allocation2 + $0x6c] sm:$0xf]
      %v4298 = vld [vmem:[#allocation2 + $0x70] sm:$0xf]
      %v4299 = vld [vmem:[#allocation2 + $0x74] sm:$0xf]
      %v4300 = vld [vmem:[#allocation2 + $0x78] sm:$0xf]
      %v4301 = vld [vmem:[#allocation2 + $0x7c] sm:$0xf]
      %v4302 = vld [vmem:[#allocation2 + $0x80] sm:$0xf]
      %v4303 = vld [vmem:[#allocation2 + $0x84] sm:$0xf]
      %v4304 = vld [vmem:[#allocation2 + $0x88] sm:$0xf]
      %v4305 = vld [vmem:[#allocation2 + $0x8c] sm:$0xf]
      %v4306 = vld [vmem:[#allocation2 + $0x90] sm:$0xf]
      %v4307 = vsel %vm960, %v4274, 0
      %v4308 = vsel %vm967, %v4275, 0
      %v4309 = vsel %vm974, %v4276, 0
      %v4310 = vsel %vm981, %v4277, 0
      %v4311 = vsel %vm988, %v4278, 0
      %v4312 = vsel %vm995, %v4279, 0
      %v4313 = vsel %vm1002, %v4280, 0
      %v4314 = vsel %vm1009, %v4281, 0
      %v4315 = vsel %vm1016, %v4282, 0
      %v4316 = vsel %vm1023, %v4283, 0
      %v4317 = vsel %vm1030, %v4284, 0
      %v4318 = vsel %vm1037, %v4285, 0
      %v4319 = vsel %vm1044, %v4286, 0
      %v4320 = vsel %vm1051, %v4287, 0
      %v4321 = vsel %vm1058, %v4288, 0
      %v4322 = vsel %vm1065, %v4289, 0
      %v4323 = vsel %vm1072, %v4290, 0
      %v4324 = vsel %vm1079, %v4291, 0
      %v4325 = vsel %vm1086, %v4292, 0
      %v4326 = vsel %vm1093, %v4293, 0
      %v4327 = vsel %vm1100, %v4294, 0
      %v4328 = vsel %vm1107, %v4295, 0
      %v4329 = vsel %vm1114, %v4296, 0
      %v4330 = vsel %vm1121, %v4297, 0
      %v4331 = vsel %vm1128, %v4298, 0
      %v4332 = vsel %vm1135, %v4299, 0
      %v4333 = vsel %vm1142, %v4300, 0
      %v4334 = vsel %vm1149, %v4301, 0
      %v4335 = vsel %vm1156, %v4302, 0
      %v4336 = vsel %vm1163, %v4303, 0
      %v4337 = vsel %vm1170, %v4304, 0
      %v4338 = vsel %vm1177, %v4305, 0
      %v4339 = vsel %vm1184, %v4306, 0
      %s4340 = scalar_lea.vmem %s3, 384
      %v4341 = vld [vmem:[%s4340] sm:$0xf]
      %v4342 = vld [vmem:[%s4340 + $0x4] sm:$0xf]
      %v4343 = vld [vmem:[%s4340 + $0x8] sm:$0xf]
      %v4344 = vld [vmem:[%s4340 + $0xc] sm:$0xf]
      %v4345 = vld [vmem:[%s4340 + $0x10] sm:$0xf]
      %v4346 = vld [vmem:[%s4340 + $0x14] sm:$0xf]
      %v4347 = vld [vmem:[%s4340 + $0x18] sm:$0xf]
      %v4348 = vld [vmem:[%s4340 + $0x1c] sm:$0xf]
      %v4349 = vld [vmem:[%s4340 + $0x20] sm:$0xf]
      %v4350 = vld [vmem:[%s4340 + $0x24] sm:$0xf]
      %v4351 = vld [vmem:[%s4340 + $0x28] sm:$0xf]
      %v4352 = vld [vmem:[%s4340 + $0x2c] sm:$0xf]
      %v4353 = vld [vmem:[%s4340 + $0x30] sm:$0xf]
      %v4354 = vld [vmem:[%s4340 + $0x34] sm:$0xf]
      %v4355 = vld [vmem:[%s4340 + $0x38] sm:$0xf]
      %v4356 = vld [vmem:[%s4340 + $0x3c] sm:$0xf]
      %v4390 = vunpack.c.l.b16 %v4307
      %v4391 = vunpack.c.l.b16 %v4308
      %v4392 = vunpack.c.l.b16 %v4309
      %v4393 = vunpack.c.l.b16 %v4310
      %v4394 = vunpack.c.l.b16 %v4311
      %v4395 = vunpack.c.l.b16 %v4312
      %v4396 = vunpack.c.l.b16 %v4313
      %v4397 = vunpack.c.l.b16 %v4314
      %v4398 = vunpack.c.l.b16 %v4315
      %v4399 = vunpack.c.l.b16 %v4316
      %v4400 = vunpack.c.l.b16 %v4317
      %v4401 = vunpack.c.l.b16 %v4318
      %v4402 = vunpack.c.l.b16 %v4319
      %v4403 = vunpack.c.l.b16 %v4320
      %v4404 = vunpack.c.l.b16 %v4321
      %v4405 = vunpack.c.l.b16 %v4322
      %v4406 = vunpack.c.l.b16 %v4323
      %v4407 = vunpack.c.l.b16 %v4324
      %v4408 = vunpack.c.l.b16 %v4325
      %v4409 = vunpack.c.l.b16 %v4326
      %v4410 = vunpack.c.l.b16 %v4327
      %v4411 = vunpack.c.l.b16 %v4328
      %v4412 = vunpack.c.l.b16 %v4329
      %v4413 = vunpack.c.l.b16 %v4330
      %v4414 = vunpack.c.l.b16 %v4331
      %v4415 = vunpack.c.l.b16 %v4332
      %v4416 = vunpack.c.l.b16 %v4333
      %v4417 = vunpack.c.l.b16 %v4334
      %v4418 = vunpack.c.l.b16 %v4335
      %v4419 = vunpack.c.l.b16 %v4336
      %v4420 = vunpack.c.l.b16 %v4337
      %v4421 = vunpack.c.l.b16 %v4338
      %v4422 = vunpack.c.l.b16 %v4339
      %v4423 = vpack.c.b16 %v4391, %v4390
      %v4424 = vpack.c.b16 %v4393, %v4392
      %v4425 = vpack.c.b16 %v4395, %v4394
      %v4426 = vpack.c.b16 %v4397, %v4396
      %v4427 = vpack.c.b16 %v4399, %v4398
      %v4428 = vpack.c.b16 %v4401, %v4400
      %v4429 = vpack.c.b16 %v4403, %v4402
      %v4430 = vpack.c.b16 %v4405, %v4404
      %v4431 = vpack.c.b16 %v4407, %v4406
      %v4432 = vpack.c.b16 %v4409, %v4408
      %v4433 = vpack.c.b16 %v4411, %v4410
      %v4434 = vpack.c.b16 %v4413, %v4412
      %v4435 = vpack.c.b16 %v4415, %v4414
      %v4436 = vpack.c.b16 %v4417, %v4416
      %v4437 = vpack.c.b16 %v4419, %v4418
      %v4438 = vpack.c.b16 %v4421, %v4420
      %v4439 = vpack.c.b16 %v4422, %v4422
      %v4441 = vshrl.u32 %v4423, 16
      %v4443 = vrot.slane %v4441, 3
      %v4444 = vshll.u32 %v4423, 16
      %v4446 = vrot.slane %v4444, 4
      %v4447 = vor.u32 %v4443, %v4446
      %v4449 = vshrl.u32 %v4424, 16
      %v4451 = vrot.slane %v4449, 3
      %v4452 = vshll.u32 %v4424, 16
      %v4454 = vrot.slane %v4452, 4
      %v4455 = vor.u32 %v4451, %v4454
      %v4456 = vsel %vm1567, %v4447, %v4455
      %v4458 = vshrl.u32 %v4425, 16
      %v4460 = vrot.slane %v4458, 3
      %v4461 = vshll.u32 %v4425, 16
      %v4463 = vrot.slane %v4461, 4
      %v4464 = vor.u32 %v4460, %v4463
      %v4465 = vsel %vm1567, %v4455, %v4464
      %v4467 = vshrl.u32 %v4426, 16
      %v4469 = vrot.slane %v4467, 3
      %v4470 = vshll.u32 %v4426, 16
      %v4472 = vrot.slane %v4470, 4
      %v4473 = vor.u32 %v4469, %v4472
      %v4474 = vsel %vm1567, %v4464, %v4473
      %v4476 = vshrl.u32 %v4427, 16
      %v4478 = vrot.slane %v4476, 3
      %v4479 = vshll.u32 %v4427, 16
      %v4481 = vrot.slane %v4479, 4
      %v4482 = vor.u32 %v4478, %v4481
      %v4483 = vsel %vm1567, %v4473, %v4482
      %v4485 = vshrl.u32 %v4428, 16
      %v4487 = vrot.slane %v4485, 3
      %v4488 = vshll.u32 %v4428, 16
      %v4490 = vrot.slane %v4488, 4
      %v4491 = vor.u32 %v4487, %v4490
      %v4492 = vsel %vm1567, %v4482, %v4491
      %v4494 = vshrl.u32 %v4429, 16
      %v4496 = vrot.slane %v4494, 3
      %v4497 = vshll.u32 %v4429, 16
      %v4499 = vrot.slane %v4497, 4
      %v4500 = vor.u32 %v4496, %v4499
      %v4501 = vsel %vm1567, %v4491, %v4500
      %v4503 = vshrl.u32 %v4430, 16
      %v4505 = vrot.slane %v4503, 3
      %v4506 = vshll.u32 %v4430, 16
      %v4508 = vrot.slane %v4506, 4
      %v4509 = vor.u32 %v4505, %v4508
      %v4510 = vsel %vm1567, %v4500, %v4509
      %v4512 = vshrl.u32 %v4431, 16
      %v4514 = vrot.slane %v4512, 3
      %v4515 = vshll.u32 %v4431, 16
      %v4517 = vrot.slane %v4515, 4
      %v4518 = vor.u32 %v4514, %v4517
      %v4519 = vsel %vm1567, %v4509, %v4518
      %v4521 = vshrl.u32 %v4432, 16
      %v4523 = vrot.slane %v4521, 3
      %v4524 = vshll.u32 %v4432, 16
      %v4526 = vrot.slane %v4524, 4
      %v4527 = vor.u32 %v4523, %v4526
      %v4528 = vsel %vm1567, %v4518, %v4527
      %v4530 = vshrl.u32 %v4433, 16
      %v4532 = vrot.slane %v4530, 3
      %v4533 = vshll.u32 %v4433, 16
      %v4535 = vrot.slane %v4533, 4
      %v4536 = vor.u32 %v4532, %v4535
      %v4537 = vsel %vm1567, %v4527, %v4536
      %v4539 = vshrl.u32 %v4434, 16
      %v4541 = vrot.slane %v4539, 3
      %v4542 = vshll.u32 %v4434, 16
      %v4544 = vrot.slane %v4542, 4
      %v4545 = vor.u32 %v4541, %v4544
      %v4546 = vsel %vm1567, %v4536, %v4545
      %v4548 = vshrl.u32 %v4435, 16
      %v4550 = vrot.slane %v4548, 3
      %v4551 = vshll.u32 %v4435, 16
      %v4553 = vrot.slane %v4551, 4
      %v4554 = vor.u32 %v4550, %v4553
      %v4555 = vsel %vm1567, %v4545, %v4554
      %v4557 = vshrl.u32 %v4436, 16
      %v4559 = vrot.slane %v4557, 3
      %v4560 = vshll.u32 %v4436, 16
      %v4562 = vrot.slane %v4560, 4
      %v4563 = vor.u32 %v4559, %v4562
      %v4564 = vsel %vm1567, %v4554, %v4563
      %v4566 = vshrl.u32 %v4437, 16
      %v4568 = vrot.slane %v4566, 3
      %v4569 = vshll.u32 %v4437, 16
      %v4571 = vrot.slane %v4569, 4
      %v4572 = vor.u32 %v4568, %v4571
      %v4573 = vsel %vm1567, %v4563, %v4572
      %v4575 = vshrl.u32 %v4438, 16
      %v4577 = vrot.slane %v4575, 3
      %v4578 = vshll.u32 %v4438, 16
      %v4580 = vrot.slane %v4578, 4
      %v4581 = vor.u32 %v4577, %v4580
      %v4582 = vsel %vm1567, %v4572, %v4581
      %v4584 = vshrl.u32 %v4439, 16
      %v4586 = vrot.slane %v4584, 3
      %v4587 = vshll.u32 %v4439, 16
      %v4589 = vrot.slane %v4587, 4
      %v4590 = vor.u32 %v4586, %v4589
      %v4591 = vsel %vm1567, %v4581, %v4590
      %v4624 = vunpack.c.l.b16 %v4341
      %v4625 = vunpack.c.l.b16 %v4342
      %v4626 = vunpack.c.l.b16 %v4343
      %v4627 = vunpack.c.l.b16 %v4344
      %v4628 = vunpack.c.l.b16 %v4345
      %v4629 = vunpack.c.l.b16 %v4346
      %v4630 = vunpack.c.l.b16 %v4347
      %v4631 = vunpack.c.l.b16 %v4348
      %v4632 = vunpack.c.l.b16 %v4349
      %v4633 = vunpack.c.l.b16 %v4350
      %v4634 = vunpack.c.l.b16 %v4351
      %v4635 = vunpack.c.l.b16 %v4352
      %v4636 = vunpack.c.l.b16 %v4353
      %v4637 = vunpack.c.l.b16 %v4354
      %v4638 = vunpack.c.l.b16 %v4355
      %v4639 = vunpack.c.l.b16 %v4356
      %v4640 = vpack.c.b16 %v4625, %v4624
      %v4641 = vpack.c.b16 %v4627, %v4626
      %v4642 = vpack.c.b16 %v4629, %v4628
      %v4643 = vpack.c.b16 %v4631, %v4630
      %v4644 = vpack.c.b16 %v4633, %v4632
      %v4645 = vpack.c.b16 %v4635, %v4634
      %v4646 = vpack.c.b16 %v4637, %v4636
      %v4647 = vpack.c.b16 %v4639, %v4638
      %4656 = vmatpush.bf16.msra.mxu0 %v4647
      %4657 = vmatpush.bf16.msra.mxu0 %v4646
      %4658 = vmatpush.bf16.msra.mxu0 %v4645
      %4659 = vmatpush.bf16.msra.mxu0 %v4644
      %4660 = vmatpush.bf16.msra.mxu0 %v4643
      %4661 = vmatpush.bf16.msra.mxu0 %v4642
      %4662 = vmatpush.bf16.msra.mxu0 %v4641
      %4663 = vmatpush.bf16.msra.mxu0 %v4640
      %4664 = vmatmul.bf16.gmra.mxu0 %v4456
      %v4665 = vpop.f32.mrf.mxu0
      %v4666 = vadd.f32 0.0, %v4665
      %v4667 = vpop.f32.mrf.mxu0
      %v4668 = vadd.f32 0.0, %v4667
      %4669 = vmatmul.bf16.gmra.mxu0 %v4465
      %v4670 = vpop.f32.mrf.mxu0
      %v4671 = vadd.f32 0.0, %v4670
      %v4672 = vpop.f32.mrf.mxu0
      %v4673 = vadd.f32 0.0, %v4672
      %4674 = vmatmul.bf16.gmra.mxu0 %v4474
      %v4675 = vpop.f32.mrf.mxu0
      %v4676 = vadd.f32 0.0, %v4675
      %v4677 = vpop.f32.mrf.mxu0
      %v4678 = vadd.f32 0.0, %v4677
      %4679 = vmatmul.bf16.gmra.mxu0 %v4483
      %v4680 = vpop.f32.mrf.mxu0
      %v4681 = vadd.f32 0.0, %v4680
      %v4682 = vpop.f32.mrf.mxu0
      %v4683 = vadd.f32 0.0, %v4682
      %4684 = vmatmul.bf16.gmra.mxu0 %v4492
      %v4685 = vpop.f32.mrf.mxu0
      %v4686 = vadd.f32 0.0, %v4685
      %v4687 = vpop.f32.mrf.mxu0
      %v4688 = vadd.f32 0.0, %v4687
      %4689 = vmatmul.bf16.gmra.mxu0 %v4501
      %v4690 = vpop.f32.mrf.mxu0
      %v4691 = vadd.f32 0.0, %v4690
      %v4692 = vpop.f32.mrf.mxu0
      %v4693 = vadd.f32 0.0, %v4692
      %4694 = vmatmul.bf16.gmra.mxu0 %v4510
      %v4695 = vpop.f32.mrf.mxu0
      %v4696 = vadd.f32 0.0, %v4695
      %v4697 = vpop.f32.mrf.mxu0
      %v4698 = vadd.f32 0.0, %v4697
      %4699 = vmatmul.bf16.gmra.mxu0 %v4519
      %v4700 = vpop.f32.mrf.mxu0
      %v4701 = vadd.f32 0.0, %v4700
      %v4702 = vpop.f32.mrf.mxu0
      %v4703 = vadd.f32 0.0, %v4702
      %4704 = vmatmul.bf16.gmra.mxu0 %v4528
      %v4705 = vpop.f32.mrf.mxu0
      %v4706 = vadd.f32 0.0, %v4705
      %v4707 = vpop.f32.mrf.mxu0
      %v4708 = vadd.f32 0.0, %v4707
      %4709 = vmatmul.bf16.gmra.mxu0 %v4537
      %v4710 = vpop.f32.mrf.mxu0
      %v4711 = vadd.f32 0.0, %v4710
      %v4712 = vpop.f32.mrf.mxu0
      %v4713 = vadd.f32 0.0, %v4712
      %4714 = vmatmul.bf16.gmra.mxu0 %v4546
      %v4715 = vpop.f32.mrf.mxu0
      %v4716 = vadd.f32 0.0, %v4715
      %v4717 = vpop.f32.mrf.mxu0
      %v4718 = vadd.f32 0.0, %v4717
      %4719 = vmatmul.bf16.gmra.mxu0 %v4555
      %v4720 = vpop.f32.mrf.mxu0
      %v4721 = vadd.f32 0.0, %v4720
      %v4722 = vpop.f32.mrf.mxu0
      %v4723 = vadd.f32 0.0, %v4722
      %4724 = vmatmul.bf16.gmra.mxu0 %v4564
      %v4725 = vpop.f32.mrf.mxu0
      %v4726 = vadd.f32 0.0, %v4725
      %v4727 = vpop.f32.mrf.mxu0
      %v4728 = vadd.f32 0.0, %v4727
      %4729 = vmatmul.bf16.gmra.mxu0 %v4573
      %v4730 = vpop.f32.mrf.mxu0
      %v4731 = vadd.f32 0.0, %v4730
      %v4732 = vpop.f32.mrf.mxu0
      %v4733 = vadd.f32 0.0, %v4732
      %4734 = vmatmul.bf16.gmra.mxu0 %v4582
      %v4735 = vpop.f32.mrf.mxu0
      %v4736 = vadd.f32 0.0, %v4735
      %v4737 = vpop.f32.mrf.mxu0
      %v4738 = vadd.f32 0.0, %v4737
      %4739 = vmatmul.bf16.gmra.mxu0 %v4591
      %v4740 = vpop.f32.mrf.mxu0
      %v4741 = vadd.f32 0.0, %v4740
      %v4742 = vpop.f32.mrf.mxu0
      %v4743 = vadd.f32 0.0, %v4742
      %4744 = vdwg.mxu0
      %v4745 = vadd.f32 %v4242, %v4666
      %v4746 = vadd.f32 %v4243, %v4668
      %v4747 = vadd.f32 %v4244, %v4671
      %v4748 = vadd.f32 %v4245, %v4673
      %v4749 = vadd.f32 %v4246, %v4676
      %v4750 = vadd.f32 %v4247, %v4678
      %v4751 = vadd.f32 %v4248, %v4681
      %v4752 = vadd.f32 %v4249, %v4683
      %v4753 = vadd.f32 %v4250, %v4686
      %v4754 = vadd.f32 %v4251, %v4688
      %v4755 = vadd.f32 %v4252, %v4691
      %v4756 = vadd.f32 %v4253, %v4693
      %v4757 = vadd.f32 %v4254, %v4696
      %v4758 = vadd.f32 %v4255, %v4698
      %v4759 = vadd.f32 %v4256, %v4701
      %v4760 = vadd.f32 %v4257, %v4703
      %v4761 = vadd.f32 %v4258, %v4706
      %v4762 = vadd.f32 %v4259, %v4708
      %v4763 = vadd.f32 %v4260, %v4711
      %v4764 = vadd.f32 %v4261, %v4713
      %v4765 = vadd.f32 %v4262, %v4716
      %v4766 = vadd.f32 %v4263, %v4718
      %v4767 = vadd.f32 %v4264, %v4721
      %v4768 = vadd.f32 %v4265, %v4723
      %v4769 = vadd.f32 %v4266, %v4726
      %v4770 = vadd.f32 %v4267, %v4728
      %v4771 = vadd.f32 %v4268, %v4731
      %v4772 = vadd.f32 %v4269, %v4733
      %v4773 = vadd.f32 %v4270, %v4736
      %v4774 = vadd.f32 %v4271, %v4738
      %v4775 = vadd.f32 %v4272, %v4741
      %v4776 = vadd.f32 %v4273, %v4743
      %s4777 = scalar_lea.vmem %s3, 448
      %v4778 = vld [vmem:[%s4777] sm:$0xf]
      %v4779 = vld [vmem:[%s4777 + $0x4] sm:$0xf]
      %v4780 = vld [vmem:[%s4777 + $0x8] sm:$0xf]
      %v4781 = vld [vmem:[%s4777 + $0xc] sm:$0xf]
      %v4782 = vld [vmem:[%s4777 + $0x10] sm:$0xf]
      %v4783 = vld [vmem:[%s4777 + $0x14] sm:$0xf]
      %v4784 = vld [vmem:[%s4777 + $0x18] sm:$0xf]
      %v4785 = vld [vmem:[%s4777 + $0x1c] sm:$0xf]
      %v4786 = vld [vmem:[%s4777 + $0x20] sm:$0xf]
      %v4787 = vld [vmem:[%s4777 + $0x24] sm:$0xf]
      %v4788 = vld [vmem:[%s4777 + $0x28] sm:$0xf]
      %v4789 = vld [vmem:[%s4777 + $0x2c] sm:$0xf]
      %v4790 = vld [vmem:[%s4777 + $0x30] sm:$0xf]
      %v4791 = vld [vmem:[%s4777 + $0x34] sm:$0xf]
      %v4792 = vld [vmem:[%s4777 + $0x38] sm:$0xf]
      %v4793 = vld [vmem:[%s4777 + $0x3c] sm:$0xf]
      %v4826 = vunpack.c.l.b16 %v4275
      %v4827 = vunpack.c.l.b16 %v4276
      %v4828 = vunpack.c.l.b16 %v4277
      %v4829 = vunpack.c.l.b16 %v4278
      %v4830 = vunpack.c.l.b16 %v4279
      %v4831 = vunpack.c.l.b16 %v4280
      %v4832 = vunpack.c.l.b16 %v4281
      %v4833 = vunpack.c.l.b16 %v4282
      %v4834 = vunpack.c.l.b16 %v4283
      %v4835 = vunpack.c.l.b16 %v4284
      %v4836 = vunpack.c.l.b16 %v4285
      %v4837 = vunpack.c.l.b16 %v4286
      %v4838 = vunpack.c.l.b16 %v4287
      %v4839 = vunpack.c.l.b16 %v4288
      %v4840 = vunpack.c.l.b16 %v4289
      %v4841 = vunpack.c.l.b16 %v4290
      %v4842 = vunpack.c.l.b16 %v4291
      %v4843 = vunpack.c.l.b16 %v4292
      %v4844 = vunpack.c.l.b16 %v4293
      %v4845 = vunpack.c.l.b16 %v4294
      %v4846 = vunpack.c.l.b16 %v4295
      %v4847 = vunpack.c.l.b16 %v4296
      %v4848 = vunpack.c.l.b16 %v4297
      %v4849 = vunpack.c.l.b16 %v4298
      %v4850 = vunpack.c.l.b16 %v4299
      %v4851 = vunpack.c.l.b16 %v4300
      %v4852 = vunpack.c.l.b16 %v4301
      %v4853 = vunpack.c.l.b16 %v4302
      %v4854 = vunpack.c.l.b16 %v4303
      %v4855 = vunpack.c.l.b16 %v4304
      %v4856 = vunpack.c.l.b16 %v4305
      %v4857 = vunpack.c.l.b16 %v4306
      %v4858 = vpack.c.b16 %v4827, %v4826
      %v4859 = vpack.c.b16 %v4829, %v4828
      %v4860 = vpack.c.b16 %v4831, %v4830
      %v4861 = vpack.c.b16 %v4833, %v4832
      %v4862 = vpack.c.b16 %v4835, %v4834
      %v4863 = vpack.c.b16 %v4837, %v4836
      %v4864 = vpack.c.b16 %v4839, %v4838
      %v4865 = vpack.c.b16 %v4841, %v4840
      %v4866 = vpack.c.b16 %v4843, %v4842
      %v4867 = vpack.c.b16 %v4845, %v4844
      %v4868 = vpack.c.b16 %v4847, %v4846
      %v4869 = vpack.c.b16 %v4849, %v4848
      %v4870 = vpack.c.b16 %v4851, %v4850
      %v4871 = vpack.c.b16 %v4853, %v4852
      %v4872 = vpack.c.b16 %v4855, %v4854
      %v4873 = vpack.c.b16 %v4857, %v4856
      %v4906 = vunpack.c.l.b16 %v4778
      %v4907 = vunpack.c.l.b16 %v4779
      %v4908 = vunpack.c.l.b16 %v4780
      %v4909 = vunpack.c.l.b16 %v4781
      %v4910 = vunpack.c.l.b16 %v4782
      %v4911 = vunpack.c.l.b16 %v4783
      %v4912 = vunpack.c.l.b16 %v4784
      %v4913 = vunpack.c.l.b16 %v4785
      %v4914 = vunpack.c.l.b16 %v4786
      %v4915 = vunpack.c.l.b16 %v4787
      %v4916 = vunpack.c.l.b16 %v4788
      %v4917 = vunpack.c.l.b16 %v4789
      %v4918 = vunpack.c.l.b16 %v4790
      %v4919 = vunpack.c.l.b16 %v4791
      %v4920 = vunpack.c.l.b16 %v4792
      %v4921 = vunpack.c.l.b16 %v4793
      %v4922 = vpack.c.b16 %v4907, %v4906
      %v4923 = vpack.c.b16 %v4909, %v4908
      %v4924 = vpack.c.b16 %v4911, %v4910
      %v4925 = vpack.c.b16 %v4913, %v4912
      %v4926 = vpack.c.b16 %v4915, %v4914
      %v4927 = vpack.c.b16 %v4917, %v4916
      %v4928 = vpack.c.b16 %v4919, %v4918
      %v4929 = vpack.c.b16 %v4921, %v4920
      %4938 = vmatpush.bf16.msra.mxu0 %v4929
      %4939 = vmatpush.bf16.msra.mxu0 %v4928
      %4940 = vmatpush.bf16.msra.mxu0 %v4927
      %4941 = vmatpush.bf16.msra.mxu0 %v4926
      %4942 = vmatpush.bf16.msra.mxu0 %v4925
      %4943 = vmatpush.bf16.msra.mxu0 %v4924
      %4944 = vmatpush.bf16.msra.mxu0 %v4923
      %4945 = vmatpush.bf16.msra.mxu0 %v4922
      %4946 = vmatmul.bf16.gmra.mxu0 %v4858
      %v4947 = vpop.f32.mrf.mxu0
      %v4948 = vadd.f32 0.0, %v4947
      %v4949 = vpop.f32.mrf.mxu0
      %v4950 = vadd.f32 0.0, %v4949
      %4951 = vmatmul.bf16.gmra.mxu0 %v4859
      %v4952 = vpop.f32.mrf.mxu0
      %v4953 = vadd.f32 0.0, %v4952
      %v4954 = vpop.f32.mrf.mxu0
      %v4955 = vadd.f32 0.0, %v4954
      %4956 = vmatmul.bf16.gmra.mxu0 %v4860
      %v4957 = vpop.f32.mrf.mxu0
      %v4958 = vadd.f32 0.0, %v4957
      %v4959 = vpop.f32.mrf.mxu0
      %v4960 = vadd.f32 0.0, %v4959
      %4961 = vmatmul.bf16.gmra.mxu0 %v4861
      %v4962 = vpop.f32.mrf.mxu0
      %v4963 = vadd.f32 0.0, %v4962
      %v4964 = vpop.f32.mrf.mxu0
      %v4965 = vadd.f32 0.0, %v4964
      %4966 = vmatmul.bf16.gmra.mxu0 %v4862
      %v4967 = vpop.f32.mrf.mxu0
      %v4968 = vadd.f32 0.0, %v4967
      %v4969 = vpop.f32.mrf.mxu0
      %v4970 = vadd.f32 0.0, %v4969
      %4971 = vmatmul.bf16.gmra.mxu0 %v4863
      %v4972 = vpop.f32.mrf.mxu0
      %v4973 = vadd.f32 0.0, %v4972
      %v4974 = vpop.f32.mrf.mxu0
      %v4975 = vadd.f32 0.0, %v4974
      %4976 = vmatmul.bf16.gmra.mxu0 %v4864
      %v4977 = vpop.f32.mrf.mxu0
      %v4978 = vadd.f32 0.0, %v4977
      %v4979 = vpop.f32.mrf.mxu0
      %v4980 = vadd.f32 0.0, %v4979
      %4981 = vmatmul.bf16.gmra.mxu0 %v4865
      %v4982 = vpop.f32.mrf.mxu0
      %v4983 = vadd.f32 0.0, %v4982
      %v4984 = vpop.f32.mrf.mxu0
      %v4985 = vadd.f32 0.0, %v4984
      %4986 = vmatmul.bf16.gmra.mxu0 %v4866
      %v4987 = vpop.f32.mrf.mxu0
      %v4988 = vadd.f32 0.0, %v4987
      %v4989 = vpop.f32.mrf.mxu0
      %v4990 = vadd.f32 0.0, %v4989
      %4991 = vmatmul.bf16.gmra.mxu0 %v4867
      %v4992 = vpop.f32.mrf.mxu0
      %v4993 = vadd.f32 0.0, %v4992
      %v4994 = vpop.f32.mrf.mxu0
      %v4995 = vadd.f32 0.0, %v4994
      %4996 = vmatmul.bf16.gmra.mxu0 %v4868
      %v4997 = vpop.f32.mrf.mxu0
      %v4998 = vadd.f32 0.0, %v4997
      %v4999 = vpop.f32.mrf.mxu0
      %v5000 = vadd.f32 0.0, %v4999
      %5001 = vmatmul.bf16.gmra.mxu0 %v4869
      %v5002 = vpop.f32.mrf.mxu0
      %v5003 = vadd.f32 0.0, %v5002
      %v5004 = vpop.f32.mrf.mxu0
      %v5005 = vadd.f32 0.0, %v5004
      %5006 = vmatmul.bf16.gmra.mxu0 %v4870
      %v5007 = vpop.f32.mrf.mxu0
      %v5008 = vadd.f32 0.0, %v5007
      %v5009 = vpop.f32.mrf.mxu0
      %v5010 = vadd.f32 0.0, %v5009
      %5011 = vmatmul.bf16.gmra.mxu0 %v4871
      %v5012 = vpop.f32.mrf.mxu0
      %v5013 = vadd.f32 0.0, %v5012
      %v5014 = vpop.f32.mrf.mxu0
      %v5015 = vadd.f32 0.0, %v5014
      %5016 = vmatmul.bf16.gmra.mxu0 %v4872
      %v5017 = vpop.f32.mrf.mxu0
      %v5018 = vadd.f32 0.0, %v5017
      %v5019 = vpop.f32.mrf.mxu0
      %v5020 = vadd.f32 0.0, %v5019
      %5021 = vmatmul.bf16.gmra.mxu0 %v4873
      %v5022 = vpop.f32.mrf.mxu0
      %v5023 = vadd.f32 0.0, %v5022
      %v5024 = vpop.f32.mrf.mxu0
      %v5025 = vadd.f32 0.0, %v5024
      %5026 = vdwg.mxu0
      %v5027 = vadd.f32 %v4745, %v4948
      %v5028 = vadd.f32 %v4746, %v4950
      %v5029 = vadd.f32 %v4747, %v4953
      %v5030 = vadd.f32 %v4748, %v4955
      %v5031 = vadd.f32 %v4749, %v4958
      %v5032 = vadd.f32 %v4750, %v4960
      %v5033 = vadd.f32 %v4751, %v4963
      %v5034 = vadd.f32 %v4752, %v4965
      %v5035 = vadd.f32 %v4753, %v4968
      %v5036 = vadd.f32 %v4754, %v4970
      %v5037 = vadd.f32 %v4755, %v4973
      %v5038 = vadd.f32 %v4756, %v4975
      %v5039 = vadd.f32 %v4757, %v4978
      %v5040 = vadd.f32 %v4758, %v4980
      %v5041 = vadd.f32 %v4759, %v4983
      %v5042 = vadd.f32 %v4760, %v4985
      %v5043 = vadd.f32 %v4761, %v4988
      %v5044 = vadd.f32 %v4762, %v4990
      %v5045 = vadd.f32 %v4763, %v4993
      %v5046 = vadd.f32 %v4764, %v4995
      %v5047 = vadd.f32 %v4765, %v4998
      %v5048 = vadd.f32 %v4766, %v5000
      %v5049 = vadd.f32 %v4767, %v5003
      %v5050 = vadd.f32 %v4768, %v5005
      %v5051 = vadd.f32 %v4769, %v5008
      %v5052 = vadd.f32 %v4770, %v5010
      %v5053 = vadd.f32 %v4771, %v5013
      %v5054 = vadd.f32 %v4772, %v5015
      %v5055 = vadd.f32 %v4773, %v5018
      %v5056 = vadd.f32 %v4774, %v5020
      %v5057 = vadd.f32 %v4775, %v5023
      %v5058 = vadd.f32 %v4776, %v5025
      %v5059 = vld [vmem:[#allocation2 + $0x14] sm:$0xf]
      %v5060 = vld [vmem:[#allocation2 + $0x18] sm:$0xf]
      %v5061 = vld [vmem:[#allocation2 + $0x1c] sm:$0xf]
      %v5062 = vld [vmem:[#allocation2 + $0x20] sm:$0xf]
      %v5063 = vld [vmem:[#allocation2 + $0x24] sm:$0xf]
      %v5064 = vld [vmem:[#allocation2 + $0x28] sm:$0xf]
      %v5065 = vld [vmem:[#allocation2 + $0x2c] sm:$0xf]
      %v5066 = vld [vmem:[#allocation2 + $0x30] sm:$0xf]
      %v5067 = vld [vmem:[#allocation2 + $0x34] sm:$0xf]
      %v5068 = vld [vmem:[#allocation2 + $0x38] sm:$0xf]
      %v5069 = vld [vmem:[#allocation2 + $0x3c] sm:$0xf]
      %v5070 = vld [vmem:[#allocation2 + $0x40] sm:$0xf]
      %v5071 = vld [vmem:[#allocation2 + $0x44] sm:$0xf]
      %v5072 = vld [vmem:[#allocation2 + $0x48] sm:$0xf]
      %v5073 = vld [vmem:[#allocation2 + $0x4c] sm:$0xf]
      %v5074 = vld [vmem:[#allocation2 + $0x50] sm:$0xf]
      %v5075 = vld [vmem:[#allocation2 + $0x54] sm:$0xf]
      %v5076 = vld [vmem:[#allocation2 + $0x58] sm:$0xf]
      %v5077 = vld [vmem:[#allocation2 + $0x5c] sm:$0xf]
      %v5078 = vld [vmem:[#allocation2 + $0x60] sm:$0xf]
      %v5079 = vld [vmem:[#allocation2 + $0x64] sm:$0xf]
      %v5080 = vld [vmem:[#allocation2 + $0x68] sm:$0xf]
      %v5081 = vld [vmem:[#allocation2 + $0x6c] sm:$0xf]
      %v5082 = vld [vmem:[#allocation2 + $0x70] sm:$0xf]
      %v5083 = vld [vmem:[#allocation2 + $0x74] sm:$0xf]
      %v5084 = vld [vmem:[#allocation2 + $0x78] sm:$0xf]
      %v5085 = vld [vmem:[#allocation2 + $0x7c] sm:$0xf]
      %v5086 = vld [vmem:[#allocation2 + $0x80] sm:$0xf]
      %v5087 = vld [vmem:[#allocation2 + $0x84] sm:$0xf]
      %v5088 = vld [vmem:[#allocation2 + $0x88] sm:$0xf]
      %v5089 = vld [vmem:[#allocation2 + $0x8c] sm:$0xf]
      %v5090 = vld [vmem:[#allocation2 + $0x90] sm:$0xf]
      %v5091 = vld [vmem:[#allocation2 + $0x94] sm:$0x1]
      %v5092 = vsel %vm2330, %v5059, 0
      %v5093 = vsel %vm2337, %v5060, 0
      %v5094 = vsel %vm2344, %v5061, 0
      %v5095 = vsel %vm2351, %v5062, 0
      %v5096 = vsel %vm2358, %v5063, 0
      %v5097 = vsel %vm2365, %v5064, 0
      %v5098 = vsel %vm2372, %v5065, 0
      %v5099 = vsel %vm2379, %v5066, 0
      %v5100 = vsel %vm2386, %v5067, 0
      %v5101 = vsel %vm2393, %v5068, 0
      %v5102 = vsel %vm2400, %v5069, 0
      %v5103 = vsel %vm2407, %v5070, 0
      %v5104 = vsel %vm2414, %v5071, 0
      %v5105 = vsel %vm2421, %v5072, 0
      %v5106 = vsel %vm2428, %v5073, 0
      %v5107 = vsel %vm2435, %v5074, 0
      %v5108 = vsel %vm2442, %v5075, 0
      %v5109 = vsel %vm2449, %v5076, 0
      %v5110 = vsel %vm2456, %v5077, 0
      %v5111 = vsel %vm2463, %v5078, 0
      %v5112 = vsel %vm2470, %v5079, 0
      %v5113 = vsel %vm2477, %v5080, 0
      %v5114 = vsel %vm2484, %v5081, 0
      %v5115 = vsel %vm2491, %v5082, 0
      %v5116 = vsel %vm2498, %v5083, 0
      %v5117 = vsel %vm2505, %v5084, 0
      %v5118 = vsel %vm2512, %v5085, 0
      %v5119 = vsel %vm2519, %v5086, 0
      %v5120 = vsel %vm2526, %v5087, 0
      %v5121 = vsel %vm2533, %v5088, 0
      %v5122 = vsel %vm2540, %v5089, 0
      %v5123 = vsel %vm2547, %v5090, 0
      %v5124 = vsel %vm2554, %v5091, 0
      %s5125 = scalar_lea.vmem %s3, 512
      %v5126 = vld [vmem:[%s5125] sm:$0xf]
      %v5127 = vld [vmem:[%s5125 + $0x4] sm:$0xf]
      %v5128 = vld [vmem:[%s5125 + $0x8] sm:$0xf]
      %v5129 = vld [vmem:[%s5125 + $0xc] sm:$0xf]
      %v5130 = vld [vmem:[%s5125 + $0x10] sm:$0xf]
      %v5131 = vld [vmem:[%s5125 + $0x14] sm:$0xf]
      %v5132 = vld [vmem:[%s5125 + $0x18] sm:$0xf]
      %v5133 = vld [vmem:[%s5125 + $0x1c] sm:$0xf]
      %v5134 = vld [vmem:[%s5125 + $0x20] sm:$0xf]
      %v5135 = vld [vmem:[%s5125 + $0x24] sm:$0xf]
      %v5136 = vld [vmem:[%s5125 + $0x28] sm:$0xf]
      %v5137 = vld [vmem:[%s5125 + $0x2c] sm:$0xf]
      %v5138 = vld [vmem:[%s5125 + $0x30] sm:$0xf]
      %v5139 = vld [vmem:[%s5125 + $0x34] sm:$0xf]
      %v5140 = vld [vmem:[%s5125 + $0x38] sm:$0xf]
      %v5141 = vld [vmem:[%s5125 + $0x3c] sm:$0xf]
      %v5175 = vunpack.c.l.b16 %v5092
      %v5176 = vunpack.c.l.b16 %v5093
      %v5177 = vunpack.c.l.b16 %v5094
      %v5178 = vunpack.c.l.b16 %v5095
      %v5179 = vunpack.c.l.b16 %v5096
      %v5180 = vunpack.c.l.b16 %v5097
      %v5181 = vunpack.c.l.b16 %v5098
      %v5182 = vunpack.c.l.b16 %v5099
      %v5183 = vunpack.c.l.b16 %v5100
      %v5184 = vunpack.c.l.b16 %v5101
      %v5185 = vunpack.c.l.b16 %v5102
      %v5186 = vunpack.c.l.b16 %v5103
      %v5187 = vunpack.c.l.b16 %v5104
      %v5188 = vunpack.c.l.b16 %v5105
      %v5189 = vunpack.c.l.b16 %v5106
      %v5190 = vunpack.c.l.b16 %v5107
      %v5191 = vunpack.c.l.b16 %v5108
      %v5192 = vunpack.c.l.b16 %v5109
      %v5193 = vunpack.c.l.b16 %v5110
      %v5194 = vunpack.c.l.b16 %v5111
      %v5195 = vunpack.c.l.b16 %v5112
      %v5196 = vunpack.c.l.b16 %v5113
      %v5197 = vunpack.c.l.b16 %v5114
      %v5198 = vunpack.c.l.b16 %v5115
      %v5199 = vunpack.c.l.b16 %v5116
      %v5200 = vunpack.c.l.b16 %v5117
      %v5201 = vunpack.c.l.b16 %v5118
      %v5202 = vunpack.c.l.b16 %v5119
      %v5203 = vunpack.c.l.b16 %v5120
      %v5204 = vunpack.c.l.b16 %v5121
      %v5205 = vunpack.c.l.b16 %v5122
      %v5206 = vunpack.c.l.b16 %v5123
      %v5207 = vunpack.c.l.b16 %v5124
      %v5208 = vpack.c.b16 %v5176, %v5175
      %v5209 = vpack.c.b16 %v5178, %v5177
      %v5210 = vpack.c.b16 %v5180, %v5179
      %v5211 = vpack.c.b16 %v5182, %v5181
      %v5212 = vpack.c.b16 %v5184, %v5183
      %v5213 = vpack.c.b16 %v5186, %v5185
      %v5214 = vpack.c.b16 %v5188, %v5187
      %v5215 = vpack.c.b16 %v5190, %v5189
      %v5216 = vpack.c.b16 %v5192, %v5191
      %v5217 = vpack.c.b16 %v5194, %v5193
      %v5218 = vpack.c.b16 %v5196, %v5195
      %v5219 = vpack.c.b16 %v5198, %v5197
      %v5220 = vpack.c.b16 %v5200, %v5199
      %v5221 = vpack.c.b16 %v5202, %v5201
      %v5222 = vpack.c.b16 %v5204, %v5203
      %v5223 = vpack.c.b16 %v5206, %v5205
      %v5224 = vpack.c.b16 %v5207, %v5207
      %v5226 = vshrl.u32 %v5208, 16
      %v5228 = vshll.u32 %v5208, 16
      %v5230 = vrot.slane %v5228, 1
      %v5231 = vor.u32 %v5226, %v5230
      %v5233 = vshll.u32 %v5209, 16
      %v5235 = vrot.slane %v5233, 1
      %v5236 = vsel %vm2688, %v5231, %v5235
      %v5237 = vshrl.u32 %v5209, 16
      %v5239 = vor.u32 %v5237, %v5235
      %v5241 = vshll.u32 %v5210, 16
      %v5243 = vrot.slane %v5241, 1
      %v5244 = vsel %vm2688, %v5239, %v5243
      %v5245 = vshrl.u32 %v5210, 16
      %v5247 = vor.u32 %v5245, %v5243
      %v5249 = vshll.u32 %v5211, 16
      %v5251 = vrot.slane %v5249, 1
      %v5252 = vsel %vm2688, %v5247, %v5251
      %v5253 = vshrl.u32 %v5211, 16
      %v5255 = vor.u32 %v5253, %v5251
      %v5257 = vshll.u32 %v5212, 16
      %v5259 = vrot.slane %v5257, 1
      %v5260 = vsel %vm2688, %v5255, %v5259
      %v5261 = vshrl.u32 %v5212, 16
      %v5263 = vor.u32 %v5261, %v5259
      %v5265 = vshll.u32 %v5213, 16
      %v5267 = vrot.slane %v5265, 1
      %v5268 = vsel %vm2688, %v5263, %v5267
      %v5269 = vshrl.u32 %v5213, 16
      %v5271 = vor.u32 %v5269, %v5267
      %v5273 = vshll.u32 %v5214, 16
      %v5275 = vrot.slane %v5273, 1
      %v5276 = vsel %vm2688, %v5271, %v5275
      %v5277 = vshrl.u32 %v5214, 16
      %v5279 = vor.u32 %v5277, %v5275
      %v5281 = vshll.u32 %v5215, 16
      %v5283 = vrot.slane %v5281, 1
      %v5284 = vsel %vm2688, %v5279, %v5283
      %v5285 = vshrl.u32 %v5215, 16
      %v5287 = vor.u32 %v5285, %v5283
      %v5289 = vshll.u32 %v5216, 16
      %v5291 = vrot.slane %v5289, 1
      %v5292 = vsel %vm2688, %v5287, %v5291
      %v5293 = vshrl.u32 %v5216, 16
      %v5295 = vor.u32 %v5293, %v5291
      %v5297 = vshll.u32 %v5217, 16
      %v5299 = vrot.slane %v5297, 1
      %v5300 = vsel %vm2688, %v5295, %v5299
      %v5301 = vshrl.u32 %v5217, 16
      %v5303 = vor.u32 %v5301, %v5299
      %v5305 = vshll.u32 %v5218, 16
      %v5307 = vrot.slane %v5305, 1
      %v5308 = vsel %vm2688, %v5303, %v5307
      %v5309 = vshrl.u32 %v5218, 16
      %v5311 = vor.u32 %v5309, %v5307
      %v5313 = vshll.u32 %v5219, 16
      %v5315 = vrot.slane %v5313, 1
      %v5316 = vsel %vm2688, %v5311, %v5315
      %v5317 = vshrl.u32 %v5219, 16
      %v5319 = vor.u32 %v5317, %v5315
      %v5321 = vshll.u32 %v5220, 16
      %v5323 = vrot.slane %v5321, 1
      %v5324 = vsel %vm2688, %v5319, %v5323
      %v5325 = vshrl.u32 %v5220, 16
      %v5327 = vor.u32 %v5325, %v5323
      %v5329 = vshll.u32 %v5221, 16
      %v5331 = vrot.slane %v5329, 1
      %v5332 = vsel %vm2688, %v5327, %v5331
      %v5333 = vshrl.u32 %v5221, 16
      %v5335 = vor.u32 %v5333, %v5331
      %v5337 = vshll.u32 %v5222, 16
      %v5339 = vrot.slane %v5337, 1
      %v5340 = vsel %vm2688, %v5335, %v5339
      %v5341 = vshrl.u32 %v5222, 16
      %v5343 = vor.u32 %v5341, %v5339
      %v5345 = vshll.u32 %v5223, 16
      %v5347 = vrot.slane %v5345, 1
      %v5348 = vsel %vm2688, %v5343, %v5347
      %v5349 = vshrl.u32 %v5223, 16
      %v5351 = vor.u32 %v5349, %v5347
      %v5353 = vshll.u32 %v5224, 16
      %v5355 = vrot.slane %v5353, 1
      %v5356 = vsel %vm2688, %v5351, %v5355
      %v5389 = vunpack.c.l.b16 %v5126
      %v5390 = vunpack.c.l.b16 %v5127
      %v5391 = vunpack.c.l.b16 %v5128
      %v5392 = vunpack.c.l.b16 %v5129
      %v5393 = vunpack.c.l.b16 %v5130
      %v5394 = vunpack.c.l.b16 %v5131
      %v5395 = vunpack.c.l.b16 %v5132
      %v5396 = vunpack.c.l.b16 %v5133
      %v5397 = vunpack.c.l.b16 %v5134
      %v5398 = vunpack.c.l.b16 %v5135
      %v5399 = vunpack.c.l.b16 %v5136
      %v5400 = vunpack.c.l.b16 %v5137
      %v5401 = vunpack.c.l.b16 %v5138
      %v5402 = vunpack.c.l.b16 %v5139
      %v5403 = vunpack.c.l.b16 %v5140
      %v5404 = vunpack.c.l.b16 %v5141
      %v5405 = vpack.c.b16 %v5390, %v5389
      %v5406 = vpack.c.b16 %v5392, %v5391
      %v5407 = vpack.c.b16 %v5394, %v5393
      %v5408 = vpack.c.b16 %v5396, %v5395
      %v5409 = vpack.c.b16 %v5398, %v5397
      %v5410 = vpack.c.b16 %v5400, %v5399
      %v5411 = vpack.c.b16 %v5402, %v5401
      %v5412 = vpack.c.b16 %v5404, %v5403
      %5421 = vmatpush.bf16.msra.mxu0 %v5412
      %5422 = vmatpush.bf16.msra.mxu0 %v5411
      %5423 = vmatpush.bf16.msra.mxu0 %v5410
      %5424 = vmatpush.bf16.msra.mxu0 %v5409
      %5425 = vmatpush.bf16.msra.mxu0 %v5408
      %5426 = vmatpush.bf16.msra.mxu0 %v5407
      %5427 = vmatpush.bf16.msra.mxu0 %v5406
      %5428 = vmatpush.bf16.msra.mxu0 %v5405
      %5429 = vmatmul.bf16.gmra.mxu0 %v5236
      %v5430 = vpop.f32.mrf.mxu0
      %v5431 = vadd.f32 0.0, %v5430
      %v5432 = vpop.f32.mrf.mxu0
      %v5433 = vadd.f32 0.0, %v5432
      %5434 = vmatmul.bf16.gmra.mxu0 %v5244
      %v5435 = vpop.f32.mrf.mxu0
      %v5436 = vadd.f32 0.0, %v5435
      %v5437 = vpop.f32.mrf.mxu0
      %v5438 = vadd.f32 0.0, %v5437
      %5439 = vmatmul.bf16.gmra.mxu0 %v5252
      %v5440 = vpop.f32.mrf.mxu0
      %v5441 = vadd.f32 0.0, %v5440
      %v5442 = vpop.f32.mrf.mxu0
      %v5443 = vadd.f32 0.0, %v5442
      %5444 = vmatmul.bf16.gmra.mxu0 %v5260
      %v5445 = vpop.f32.mrf.mxu0
      %v5446 = vadd.f32 0.0, %v5445
      %v5447 = vpop.f32.mrf.mxu0
      %v5448 = vadd.f32 0.0, %v5447
      %5449 = vmatmul.bf16.gmra.mxu0 %v5268
      %v5450 = vpop.f32.mrf.mxu0
      %v5451 = vadd.f32 0.0, %v5450
      %v5452 = vpop.f32.mrf.mxu0
      %v5453 = vadd.f32 0.0, %v5452
      %5454 = vmatmul.bf16.gmra.mxu0 %v5276
      %v5455 = vpop.f32.mrf.mxu0
      %v5456 = vadd.f32 0.0, %v5455
      %v5457 = vpop.f32.mrf.mxu0
      %v5458 = vadd.f32 0.0, %v5457
      %5459 = vmatmul.bf16.gmra.mxu0 %v5284
      %v5460 = vpop.f32.mrf.mxu0
      %v5461 = vadd.f32 0.0, %v5460
      %v5462 = vpop.f32.mrf.mxu0
      %v5463 = vadd.f32 0.0, %v5462
      %5464 = vmatmul.bf16.gmra.mxu0 %v5292
      %v5465 = vpop.f32.mrf.mxu0
      %v5466 = vadd.f32 0.0, %v5465
      %v5467 = vpop.f32.mrf.mxu0
      %v5468 = vadd.f32 0.0, %v5467
      %5469 = vmatmul.bf16.gmra.mxu0 %v5300
      %v5470 = vpop.f32.mrf.mxu0
      %v5471 = vadd.f32 0.0, %v5470
      %v5472 = vpop.f32.mrf.mxu0
      %v5473 = vadd.f32 0.0, %v5472
      %5474 = vmatmul.bf16.gmra.mxu0 %v5308
      %v5475 = vpop.f32.mrf.mxu0
      %v5476 = vadd.f32 0.0, %v5475
      %v5477 = vpop.f32.mrf.mxu0
      %v5478 = vadd.f32 0.0, %v5477
      %5479 = vmatmul.bf16.gmra.mxu0 %v5316
      %v5480 = vpop.f32.mrf.mxu0
      %v5481 = vadd.f32 0.0, %v5480
      %v5482 = vpop.f32.mrf.mxu0
      %v5483 = vadd.f32 0.0, %v5482
      %5484 = vmatmul.bf16.gmra.mxu0 %v5324
      %v5485 = vpop.f32.mrf.mxu0
      %v5486 = vadd.f32 0.0, %v5485
      %v5487 = vpop.f32.mrf.mxu0
      %v5488 = vadd.f32 0.0, %v5487
      %5489 = vmatmul.bf16.gmra.mxu0 %v5332
      %v5490 = vpop.f32.mrf.mxu0
      %v5491 = vadd.f32 0.0, %v5490
      %v5492 = vpop.f32.mrf.mxu0
      %v5493 = vadd.f32 0.0, %v5492
      %5494 = vmatmul.bf16.gmra.mxu0 %v5340
      %v5495 = vpop.f32.mrf.mxu0
      %v5496 = vadd.f32 0.0, %v5495
      %v5497 = vpop.f32.mrf.mxu0
      %v5498 = vadd.f32 0.0, %v5497
      %5499 = vmatmul.bf16.gmra.mxu0 %v5348
      %v5500 = vpop.f32.mrf.mxu0
      %v5501 = vadd.f32 0.0, %v5500
      %v5502 = vpop.f32.mrf.mxu0
      %v5503 = vadd.f32 0.0, %v5502
      %5504 = vmatmul.bf16.gmra.mxu0 %v5356
      %v5505 = vpop.f32.mrf.mxu0
      %v5506 = vadd.f32 0.0, %v5505
      %v5507 = vpop.f32.mrf.mxu0
      %v5508 = vadd.f32 0.0, %v5507
      %5509 = vdwg.mxu0
      %v5510 = vadd.f32 %v5027, %v5431
      %v5511 = vadd.f32 %v5028, %v5433
      %v5512 = vadd.f32 %v5029, %v5436
      %v5513 = vadd.f32 %v5030, %v5438
      %v5514 = vadd.f32 %v5031, %v5441
      %v5515 = vadd.f32 %v5032, %v5443
      %v5516 = vadd.f32 %v5033, %v5446
      %v5517 = vadd.f32 %v5034, %v5448
      %v5518 = vadd.f32 %v5035, %v5451
      %v5519 = vadd.f32 %v5036, %v5453
      %v5520 = vadd.f32 %v5037, %v5456
      %v5521 = vadd.f32 %v5038, %v5458
      %v5522 = vadd.f32 %v5039, %v5461
      %v5523 = vadd.f32 %v5040, %v5463
      %v5524 = vadd.f32 %v5041, %v5466
      %v5525 = vadd.f32 %v5042, %v5468
      %v5526 = vadd.f32 %v5043, %v5471
      %v5527 = vadd.f32 %v5044, %v5473
      %v5528 = vadd.f32 %v5045, %v5476
      %v5529 = vadd.f32 %v5046, %v5478
      %v5530 = vadd.f32 %v5047, %v5481
      %v5531 = vadd.f32 %v5048, %v5483
      %v5532 = vadd.f32 %v5049, %v5486
      %v5533 = vadd.f32 %v5050, %v5488
      %v5534 = vadd.f32 %v5051, %v5491
      %v5535 = vadd.f32 %v5052, %v5493
      %v5536 = vadd.f32 %v5053, %v5496
      %v5537 = vadd.f32 %v5054, %v5498
      %v5538 = vadd.f32 %v5055, %v5501
      %v5539 = vadd.f32 %v5056, %v5503
      %v5540 = vadd.f32 %v5057, %v5506
      %v5541 = vadd.f32 %v5058, %v5508
      %v5542 = vpack.c.bf16 %v5510, %v5510
      %v5543 = vpack.c.bf16 %v5511, %v5511
      %v5544 = vpack.c.bf16 %v5512, %v5512
      %v5545 = vpack.c.bf16 %v5513, %v5513
      %v5546 = vpack.c.bf16 %v5514, %v5514
      %v5547 = vpack.c.bf16 %v5515, %v5515
      %v5548 = vpack.c.bf16 %v5516, %v5516
      %v5549 = vpack.c.bf16 %v5517, %v5517
      %v5550 = vpack.c.bf16 %v5518, %v5518
      %v5551 = vpack.c.bf16 %v5519, %v5519
      %v5552 = vpack.c.bf16 %v5520, %v5520
      %v5553 = vpack.c.bf16 %v5521, %v5521
      %v5554 = vpack.c.bf16 %v5522, %v5522
      %v5555 = vpack.c.bf16 %v5523, %v5523
      %v5556 = vpack.c.bf16 %v5524, %v5524
      %v5557 = vpack.c.bf16 %v5525, %v5525
      %v5558 = vpack.c.bf16 %v5526, %v5526
      %v5559 = vpack.c.bf16 %v5527, %v5527
      %v5560 = vpack.c.bf16 %v5528, %v5528
      %v5561 = vpack.c.bf16 %v5529, %v5529
      %v5562 = vpack.c.bf16 %v5530, %v5530
      %v5563 = vpack.c.bf16 %v5531, %v5531
      %v5564 = vpack.c.bf16 %v5532, %v5532
      %v5565 = vpack.c.bf16 %v5533, %v5533
      %v5566 = vpack.c.bf16 %v5534, %v5534
      %v5567 = vpack.c.bf16 %v5535, %v5535
      %v5568 = vpack.c.bf16 %v5536, %v5536
      %v5569 = vpack.c.bf16 %v5537, %v5537
      %v5570 = vpack.c.bf16 %v5538, %v5538
      %v5571 = vpack.c.bf16 %v5539, %v5539
      %v5572 = vpack.c.bf16 %v5540, %v5540
      %v5573 = vpack.c.bf16 %v5541, %v5541
      %5574 = vst [vmem:[%s262] sm:$0xf] %v5542
      %5575 = vst [vmem:[%s262 + $0x4] sm:$0xf] %v5543
      %5576 = vst [vmem:[%s262 + $0x8] sm:$0xf] %v5544
      %5577 = vst [vmem:[%s262 + $0xc] sm:$0xf] %v5545
      %5578 = vst [vmem:[%s262 + $0x10] sm:$0xf] %v5546
      %5579 = vst [vmem:[%s262 + $0x14] sm:$0xf] %v5547
      %5580 = vst [vmem:[%s262 + $0x18] sm:$0xf] %v5548
      %5581 = vst [vmem:[%s262 + $0x1c] sm:$0xf] %v5549
      %5582 = vst [vmem:[%s262 + $0x20] sm:$0xf] %v5550
      %5583 = vst [vmem:[%s262 + $0x24] sm:$0xf] %v5551
      %5584 = vst [vmem:[%s262 + $0x28] sm:$0xf] %v5552
      %5585 = vst [vmem:[%s262 + $0x2c] sm:$0xf] %v5553
      %5586 = vst [vmem:[%s262 + $0x30] sm:$0xf] %v5554
      %5587 = vst [vmem:[%s262 + $0x34] sm:$0xf] %v5555
      %5588 = vst [vmem:[%s262 + $0x38] sm:$0xf] %v5556
      %5589 = vst [vmem:[%s262 + $0x3c] sm:$0xf] %v5557
      %5590 = vst [vmem:[%s262 + $0x40] sm:$0xf] %v5558
      %5591 = vst [vmem:[%s262 + $0x44] sm:$0xf] %v5559
      %5592 = vst [vmem:[%s262 + $0x48] sm:$0xf] %v5560
      %5593 = vst [vmem:[%s262 + $0x4c] sm:$0xf] %v5561
      %5594 = vst [vmem:[%s262 + $0x50] sm:$0xf] %v5562
      %5595 = vst [vmem:[%s262 + $0x54] sm:$0xf] %v5563
      %5596 = vst [vmem:[%s262 + $0x58] sm:$0xf] %v5564
      %5597 = vst [vmem:[%s262 + $0x5c] sm:$0xf] %v5565
      %5598 = vst [vmem:[%s262 + $0x60] sm:$0xf] %v5566
      %5599 = vst [vmem:[%s262 + $0x64] sm:$0xf] %v5567
      %5600 = vst [vmem:[%s262 + $0x68] sm:$0xf] %v5568
      %5601 = vst [vmem:[%s262 + $0x6c] sm:$0xf] %v5569
      %5602 = vst [vmem:[%s262 + $0x70] sm:$0xf] %v5570
      %5603 = vst [vmem:[%s262 + $0x74] sm:$0xf] %v5571
      %5604 = vst [vmem:[%s262 + $0x78] sm:$0xf] %v5572
      %5605 = vst [vmem:[%s262 + $0x7c] sm:$0xf] %v5573
      %v5606 = vadd.f32 %v5510, %v5511
      %v5607 = vadd.f32 %v5606, %v5512
      %v5608 = vadd.f32 %v5607, %v5513
      %v5609 = vadd.f32 %v5608, %v5514
      %v5610 = vadd.f32 %v5609, %v5515
      %v5611 = vadd.f32 %v5610, %v5516
      %v5612 = vadd.f32 %v5611, %v5517
      %v5613 = vadd.f32 %v5612, %v5518
      %v5614 = vadd.f32 %v5613, %v5519
      %v5615 = vadd.f32 %v5614, %v5520
      %v5616 = vadd.f32 %v5615, %v5521
      %v5617 = vadd.f32 %v5616, %v5522
      %v5618 = vadd.f32 %v5617, %v5523
      %v5619 = vadd.f32 %v5618, %v5524
      %v5620 = vadd.f32 %v5619, %v5525
      %v5621 = vadd.f32 %v5620, %v5526
      %v5622 = vadd.f32 %v5621, %v5527
      %v5623 = vadd.f32 %v5622, %v5528
      %v5624 = vadd.f32 %v5623, %v5529
      %v5625 = vadd.f32 %v5624, %v5530
      %v5626 = vadd.f32 %v5625, %v5531
      %v5627 = vadd.f32 %v5626, %v5532
      %v5628 = vadd.f32 %v5627, %v5533
      %v5629 = vadd.f32 %v5628, %v5534
      %v5630 = vadd.f32 %v5629, %v5535
      %v5631 = vadd.f32 %v5630, %v5536
      %v5632 = vadd.f32 %v5631, %v5537
      %v5633 = vadd.f32 %v5632, %v5538
      %v5634 = vadd.f32 %v5633, %v5539
      %v5635 = vadd.f32 %v5634, %v5540
      %v5636 = vadd.f32 %v5635, %v5541
      %v5637 = vrot.slane %v5636, 4
      %v5638 = vadd.f32 %v5636, %v5637
      %v5639 = vrot.slane %v5638, 2
      %v5640 = vadd.f32 %v5638, %v5639
      %v5641 = vrot.slane %v5640, 1
      %v5642 = vadd.f32 %v5640, %v5641
      %5643 = vst [vmem:[%s265] sm:$0x1] %v5642
      %v5644 = vmul.f32 %v5510, %v5510
      %v5645 = vmul.f32 %v5511, %v5511
      %v5646 = vmul.f32 %v5512, %v5512
      %v5647 = vmul.f32 %v5513, %v5513
      %v5648 = vmul.f32 %v5514, %v5514
      %v5649 = vmul.f32 %v5515, %v5515
      %v5650 = vmul.f32 %v5516, %v5516
      %v5651 = vmul.f32 %v5517, %v5517
      %v5652 = vmul.f32 %v5518, %v5518
      %v5653 = vmul.f32 %v5519, %v5519
      %v5654 = vmul.f32 %v5520, %v5520
      %v5655 = vmul.f32 %v5521, %v5521
      %v5656 = vmul.f32 %v5522, %v5522
      %v5657 = vmul.f32 %v5523, %v5523
      %v5658 = vmul.f32 %v5524, %v5524
      %v5659 = vmul.f32 %v5525, %v5525
      %v5660 = vmul.f32 %v5526, %v5526
      %v5661 = vmul.f32 %v5527, %v5527
      %v5662 = vmul.f32 %v5528, %v5528
      %v5663 = vmul.f32 %v5529, %v5529
      %v5664 = vmul.f32 %v5530, %v5530
      %v5665 = vmul.f32 %v5531, %v5531
      %v5666 = vmul.f32 %v5532, %v5532
      %v5667 = vmul.f32 %v5533, %v5533
      %v5668 = vmul.f32 %v5534, %v5534
      %v5669 = vmul.f32 %v5535, %v5535
      %v5670 = vmul.f32 %v5536, %v5536
      %v5671 = vmul.f32 %v5537, %v5537
      %v5672 = vmul.f32 %v5538, %v5538
      %v5673 = vmul.f32 %v5539, %v5539
      %v5674 = vmul.f32 %v5540, %v5540
      %v5675 = vmul.f32 %v5541, %v5541
      %v5676 = vadd.f32 %v5644, %v5645
      %v5677 = vadd.f32 %v5676, %v5646
      %v5678 = vadd.f32 %v5677, %v5647
      %v5679 = vadd.f32 %v5678, %v5648
      %v5680 = vadd.f32 %v5679, %v5649
      %v5681 = vadd.f32 %v5680, %v5650
      %v5682 = vadd.f32 %v5681, %v5651
      %v5683 = vadd.f32 %v5682, %v5652
      %v5684 = vadd.f32 %v5683, %v5653
      %v5685 = vadd.f32 %v5684, %v5654
      %v5686 = vadd.f32 %v5685, %v5655
      %v5687 = vadd.f32 %v5686, %v5656
      %v5688 = vadd.f32 %v5687, %v5657
      %v5689 = vadd.f32 %v5688, %v5658
      %v5690 = vadd.f32 %v5689, %v5659
      %v5691 = vadd.f32 %v5690, %v5660
      %v5692 = vadd.f32 %v5691, %v5661
      %v5693 = vadd.f32 %v5692, %v5662
      %v5694 = vadd.f32 %v5693, %v5663
      %v5695 = vadd.f32 %v5694, %v5664
      %v5696 = vadd.f32 %v5695, %v5665
      %v5697 = vadd.f32 %v5696, %v5666
      %v5698 = vadd.f32 %v5697, %v5667
      %v5699 = vadd.f32 %v5698, %v5668
      %v5700 = vadd.f32 %v5699, %v5669
      %v5701 = vadd.f32 %v5700, %v5670
      %v5702 = vadd.f32 %v5701, %v5671
      %v5703 = vadd.f32 %v5702, %v5672
      %v5704 = vadd.f32 %v5703, %v5673
      %v5705 = vadd.f32 %v5704, %v5674
      %v5706 = vadd.f32 %v5705, %v5675
      %v5707 = vrot.slane %v5706, 4
      %v5708 = vadd.f32 %v5706, %v5707
      %v5709 = vrot.slane %v5708, 2
      %v5710 = vadd.f32 %v5708, %v5709
      %v5711 = vrot.slane %v5710, 1
      %v5712 = vadd.f32 %v5710, %v5711
      %5713 = vst [vmem:[%s268] sm:$0x1] %v5712
      %p5714 = scmp.lt.s32.totalorder %s18, 1
      %s5715 = scalar_select %p5714, %s18, 1
      %s5716 = smul.addr %s5715, 32
      %s5717 = smul.addr %s5716, 4
      %s5718 = scalar_lea.vmem %s4, %s5717
      %p5719 = scmp.lt.s32.totalorder %s18, 1
      %s5720 = scalar_select %p5719, %s18, 1
      %s5721 = scalar_lea.vmem %s5, %s5720
      %p5722 = scmp.lt.s32.totalorder %s18, 1
      %s5723 = scalar_select %p5722, %s18, 1
      %s5724 = scalar_lea.vmem %s6, %s5723
      // Predicated region
      $region37: #{double_conv.3} parent=35 // pred_check
        %p5725 = pneg %p125
      $region38: #{double_conv.3} parent=35 // pred_check_branch
        %5727 = sbr.rel (%p5725) target = $region40
      $region39: #{double_conv.3} parent=35 // pred_region
        _
      $region40: #{double_conv.3} parent=35 // pred_fallthru
        _
      // Predicated region
      $region41: #{double_conv.3} parent=35 // pred_check
        %p5728 = pneg %p151
      $region42: #{double_conv.3} parent=35 // pred_check_branch
        %5730 = sbr.rel (%p5728) target = $region44
      $region43: #{double_conv.3} parent=35 // pred_region
        _
      $region44: #{double_conv.3} parent=35 // pred_fallthru
        _
      // Predicated region
      $region45: #{double_conv.3} parent=35 // pred_check
        %p5731 = pneg %p177
      $region46: #{double_conv.3} parent=35 // pred_check_branch
        %5733 = sbr.rel (%p5731) target = $region48
      $region47: #{double_conv.3} parent=35 // pred_region
        _
      $region48: #{double_conv.3} parent=35 // pred_fallthru
        _
    $region36: #{double_conv.3} parent=5 // pred_fallthru
      _
    %p5734 = scmp.le.s32.totalorder 2, %s13
    // Predicated region
    $region49: #{double_conv.3} parent=5 // pred_check
      %p5735 = pneg %p5734
    $region50: #{double_conv.3} parent=5 // pred_check_branch
      %5737 = sbr.rel (%p5735) target = $region52
    $region51: #{double_conv.3} parent=5 // pred_region
      %s5738 = ssub.s32 %s13, 2
      // Predicated region
      $region53: #{double_conv.3} parent=51 // pred_check
        %p5739 = pneg %p131
      $region54: #{double_conv.3} parent=51 // pred_check_branch
        %5741 = sbr.rel (%p5739) target = $region56
      $region55: #{double_conv.3} parent=51 // pred_region
        %p5742 = scmp.lt.s32.totalorder %s19, 1
        %s5743 = scalar_select %p5742, %s19, 1
        %s5744 = smul.addr %s5743, 32
        %s5745 = smul.addr %s5744, 4
        %s5746 = scalar_lea.vmem %s4, %s5745
      $region56: #{double_conv.3} parent=51 // pred_fallthru
        _
      // Predicated region
      $region57: #{double_conv.3} parent=51 // pred_check
        %p5747 = pneg %p157
      $region58: #{double_conv.3} parent=51 // pred_check_branch
        %5749 = sbr.rel (%p5747) target = $region60
      $region59: #{double_conv.3} parent=51 // pred_region
        %p5750 = scmp.lt.s32.totalorder %s19, 1
        %s5751 = scalar_select %p5750, %s19, 1
        %s5752 = scalar_lea.vmem %s5, %s5751
      $region60: #{double_conv.3} parent=51 // pred_fallthru
        _
      // Predicated region
      $region61: #{double_conv.3} parent=51 // pred_check
        %p5753 = pneg %p183
      $region62: #{double_conv.3} parent=51 // pred_check_branch
        %5755 = sbr.rel (%p5753) target = $region64
      $region63: #{double_conv.3} parent=51 // pred_region
        %p5756 = scmp.lt.s32.totalorder %s19, 1
        %s5757 = scalar_select %p5756, %s19, 1
        %s5758 = scalar_lea.vmem %s6, %s5757
      $region64: #{double_conv.3} parent=51 // pred_fallthru
        _
    $region52: #{double_conv.3} parent=5 // pred_fallthru
      _
  $region6: #{double_conv.3} parent=0 // loop_footer
    %s17 = sadd.s32 1, %s13
  $region7: #{double_conv.3} parent=0 // loop_footer_branch
    %12 = sbr.rel target = $region3
  $region8: #{double_conv.3} parent=0 // loop_exit
    _

// kernel: double_conv.4
$region0: #{double_conv.4}
  #allocation0 [shape = 'u32[]', space=smem, size = 0x4, offset = 0x4, fixed_abs, tag = 'smem constant byte address 0x4 - core index']
  #allocation1 [shape = 'u32[72,128]{1,0:T(1,128)}', space=vmem, size = 0x9000, scoped, tag = 'internal scratch']
  #allocation2 [shape = 'bf16[304,128]{1,0:T(8,128)(2,1)}', space=vmem, size = 0x13000, scoped, tag = 'scratch operand']
  %s0 = inlined_call_operand.vmem [shape: bf16[2,256,128], index: 0, kind: input, shape index: {}]
  %s1 = inlined_call_operand.vmem [shape: f32[1,128], index: 1, kind: input, shape index: {}]
  %s2 = inlined_call_operand.vmem [shape: f32[1,128], index: 2, kind: input, shape index: {}]
  %s3 = inlined_call_operand.vmem [shape: bf16[9,128,128], index: 3, kind: input, shape index: {}]
  %s4 = inlined_call_operand.vmem [shape: bf16[2,256,128], index: 4, kind: output, shape index: {0}]
  %s5 = inlined_call_operand.vmem [shape: f32[2,1,128], index: 5, kind: output, shape index: {1}]
  %s6 = inlined_call_operand.vmem [shape: f32[2,1,128], index: 6, kind: output, shape index: {2}]
  %7 = xla_tuple %s4, %s5, %s6
  %s8 = sld [smem:[#allocation0]]
  $region65: #{double_conv.4} parent=0
    _
  %s10 = ssub.s32 1, %s8
  %s11 = scalar_select 0, %s10, %s8
  loop: start=0, step=1, limit=4
  $region2: #{double_conv.4} parent=0 // loop_pre_header
    _
  $region3: #{double_conv.4} parent=0 // loop_header
    %s13 = sphi 0, %s17
    %p14 = scmp.ge.s32.totalorder %s13, 4
    %s23 = sphi 0, %s25
    %s26 = sphi 0, %s23
    %s27 = sphi 0, %s26
    %s43 = sphi 0, %s27
    %s47 = sphi 0, %s47
    %s49 = sphi 0, %s47
    %s50 = sphi 0, %s49
    %s64 = sphi 0, %s50
    %s68 = sphi 0, %s68
    %s70 = sphi 0, %s68
    %s71 = sphi 0, %s70
    %s85 = sphi 0, %s71
    %s89 = sphi 0, %s89
    %s91 = sphi 0, %s89
    %s92 = sphi 0, %s91
    %s106 = sphi 0, %s92
    %s112 = sphi 0, %s114
    %s115 = sphi 0, %s112
    %s116 = sphi 0, %s115
    %s132 = sphi 0, %s116
    %s138 = sphi 0, %s140
    %s141 = sphi 0, %s138
    %s142 = sphi 0, %s141
    %s158 = sphi 0, %s142
    %s164 = sphi 0, %s166
    %s167 = sphi 0, %s164
    %s168 = sphi 0, %s167
    %s184 = sphi 0, %s168
  $region4: #{double_conv.4} parent=0 // loop_header_branch
    %16 = sbr.rel (%p14) target = $region8
  $region5: #{double_conv.4} parent=0 // loop_body
    %s18 = ssub.s32 %s13, 1
    %s19 = ssub.s32 %s13, 2
    %s20 = sadd.s32 %s13, 1
    %s21 = ssub.s32 %s13, %s20
    %p22 = scmp.eq.s32.totalorder %s21, 0
    %s24 = sadd.s32 %s23, 1
    %s25 = scalar_select %p22, %s23, %s24
    %p28 = pneg %p22
    %p29 = scmp.eq.s32.totalorder %s13, 1
    %p30 = por %p28, %p29
    %p31 = scmp.ne.s32.totalorder %s23, %s26
    %p32 = scmp.eq.s32.totalorder %s13, 0
    %p33 = por %p31, %p32
    %p34 = scmp.ne.s32.totalorder %s23, %s26
    %p35 = scmp.eq.s32.totalorder %s18, 1
    %p36 = por %p34, %p35
    %p37 = scmp.ne.s32.totalorder %s26, %s27
    %p38 = scmp.eq.s32.totalorder %s18, 0
    %p39 = por %p37, %p38
    %p40 = scmp.ne.s32.totalorder %s26, %s27
    %p41 = scmp.eq.s32.totalorder %s19, 1
    %p42 = por %p40, %p41
    %p44 = scmp.ne.s32.totalorder %s27, %s43
    %p45 = scmp.eq.s32.totalorder %s19, 0
    %p46 = por %p44, %p45
    %s48 = sadd.s32 %s47, 1
    %p51 = scmp.eq.s32.totalorder %s13, 1
    %p52 = scmp.ne.s32.totalorder %s47, %s49
    %p53 = scmp.eq.s32.totalorder %s13, 0
    %p54 = por %p52, %p53
    %p55 = scmp.ne.s32.totalorder %s47, %s49
    %p56 = scmp.eq.s32.totalorder %s18, 1
    %p57 = por %p55, %p56
    %p58 = scmp.ne.s32.totalorder %s49, %s50
    %p59 = scmp.eq.s32.totalorder %s18, 0
    %p60 = por %p58, %p59
    %p61 = scmp.ne.s32.totalorder %s49, %s50
    %p62 = scmp.eq.s32.totalorder %s19, 1
    %p63 = por %p61, %p62
    %p65 = scmp.ne.s32.totalorder %s50, %s64
    %p66 = scmp.eq.s32.totalorder %s19, 0
    %p67 = por %p65, %p66
    %s69 = sadd.s32 %s68, 1
    %p72 = scmp.eq.s32.totalorder %s13, 1
    %p73 = scmp.ne.s32.totalorder %s68, %s70
    %p74 = scmp.eq.s32.totalorder %s13, 0
    %p75 = por %p73, %p74
    %p76 = scmp.ne.s32.totalorder %s68, %s70
    %p77 = scmp.eq.s32.totalorder %s18, 1
    %p78 = por %p76, %p77
    %p79 = scmp.ne.s32.totalorder %s70, %s71
    %p80 = scmp.eq.s32.totalorder %s18, 0
    %p81 = por %p79, %p80
    %p82 = scmp.ne.s32.totalorder %s70, %s71
    %p83 = scmp.eq.s32.totalorder %s19, 1
    %p84 = por %p82, %p83
    %p86 = scmp.ne.s32.totalorder %s71, %s85
    %p87 = scmp.eq.s32.totalorder %s19, 0
    %p88 = por %p86, %p87
    %s90 = sadd.s32 %s89, 1
    %p93 = scmp.eq.s32.totalorder %s13, 1
    %p94 = scmp.ne.s32.totalorder %s89, %s91
    %p95 = scmp.eq.s32.totalorder %s13, 0
    %p96 = por %p94, %p95
    %p97 = scmp.ne.s32.totalorder %s89, %s91
    %p98 = scmp.eq.s32.totalorder %s18, 1
    %p99 = por %p97, %p98
    %p100 = scmp.ne.s32.totalorder %s91, %s92
    %p101 = scmp.eq.s32.totalorder %s18, 0
    %p102 = por %p100, %p101
    %p103 = scmp.ne.s32.totalorder %s91, %s92
    %p104 = scmp.eq.s32.totalorder %s19, 1
    %p105 = por %p103, %p104
    %p107 = scmp.ne.s32.totalorder %s92, %s106
    %p108 = scmp.eq.s32.totalorder %s19, 0
    %p109 = por %p107, %p108
    %s110 = ssub.s32 %s13, %s20
    %p111 = scmp.eq.s32.totalorder %s110, 0
    %s113 = sadd.s32 %s112, 1
    %s114 = scalar_select %p111, %s112, %s113
    %p117 = pneg %p111
    %p118 = scmp.eq.s32.totalorder %s13, 1
    %p119 = por %p117, %p118
    %p120 = scmp.ne.s32.totalorder %s112, %s115
    %p121 = scmp.eq.s32.totalorder %s13, 0
    %p122 = por %p120, %p121
    %p123 = scmp.ne.s32.totalorder %s112, %s115
    %p124 = scmp.eq.s32.totalorder %s18, 1
    %p125 = por %p123, %p124
    %p126 = scmp.ne.s32.totalorder %s115, %s116
    %p127 = scmp.eq.s32.totalorder %s18, 0
    %p128 = por %p126, %p127
    %p129 = scmp.ne.s32.totalorder %s115, %s116
    %p130 = scmp.eq.s32.totalorder %s19, 1
    %p131 = por %p129, %p130
    %p133 = scmp.ne.s32.totalorder %s116, %s132
    %p134 = scmp.eq.s32.totalorder %s19, 0
    %p135 = por %p133, %p134
    %s136 = ssub.s32 %s13, %s20
    %p137 = scmp.eq.s32.totalorder %s136, 0
    %s139 = sadd.s32 %s138, 1
    %s140 = scalar_select %p137, %s138, %s139
    %p143 = pneg %p137
    %p144 = scmp.eq.s32.totalorder %s13, 1
    %p145 = por %p143, %p144
    %p146 = scmp.ne.s32.totalorder %s138, %s141
    %p147 = scmp.eq.s32.totalorder %s13, 0
    %p148 = por %p146, %p147
    %p149 = scmp.ne.s32.totalorder %s138, %s141
    %p150 = scmp.eq.s32.totalorder %s18, 1
    %p151 = por %p149, %p150
    %p152 = scmp.ne.s32.totalorder %s141, %s142
    %p153 = scmp.eq.s32.totalorder %s18, 0
    %p154 = por %p152, %p153
    %p155 = scmp.ne.s32.totalorder %s141, %s142
    %p156 = scmp.eq.s32.totalorder %s19, 1
    %p157 = por %p155, %p156
    %p159 = scmp.ne.s32.totalorder %s142, %s158
    %p160 = scmp.eq.s32.totalorder %s19, 0
    %p161 = por %p159, %p160
    %s162 = ssub.s32 %s13, %s20
    %p163 = scmp.eq.s32.totalorder %s162, 0
    %s165 = sadd.s32 %s164, 1
    %s166 = scalar_select %p163, %s164, %s165
    %p169 = pneg %p163
    %p170 = scmp.eq.s32.totalorder %s13, 1
    %p171 = por %p169, %p170
    %p172 = scmp.ne.s32.totalorder %s164, %s167
    %p173 = scmp.eq.s32.totalorder %s13, 0
    %p174 = por %p172, %p173
    %p175 = scmp.ne.s32.totalorder %s164, %s167
    %p176 = scmp.eq.s32.totalorder %s18, 1
    %p177 = por %p175, %p176
    %p178 = scmp.ne.s32.totalorder %s167, %s168
    %p179 = scmp.eq.s32.totalorder %s18, 0
    %p180 = por %p178, %p179
    %p181 = scmp.ne.s32.totalorder %s167, %s168
    %p182 = scmp.eq.s32.totalorder %s19, 1
    %p183 = por %p181, %p182
    %p185 = scmp.ne.s32.totalorder %s168, %s184
    %p186 = scmp.eq.s32.totalorder %s19, 0
    %p187 = por %p185, %p186
    %p188 = scmp.le.s32.totalorder 1, %s13
    %p189 = scmp.lt.s32.totalorder %s13, 3
    %p190 = pnand %p188, %p189
    %p191 = pneg %p190
    // Predicated region
    $region9: #{double_conv.4} parent=5 // pred_check
      _
    $region10: #{double_conv.4} parent=5 // pred_check_branch
      %193 = sbr.rel (%p190) target = $region12
    $region11: #{double_conv.4} parent=5 // pred_region
      %s194 = ssub.s32 %s13, 1
      // Predicated region
      $region13: #{double_conv.4} parent=11 // pred_check
        %p195 = pneg %p60
      $region14: #{double_conv.4} parent=11 // pred_check_branch
        %197 = sbr.rel (%p195) target = $region16
      $region15: #{double_conv.4} parent=11 // pred_region
        _
      $region16: #{double_conv.4} parent=11 // pred_fallthru
        _
      // Predicated region
      $region17: #{double_conv.4} parent=11 // pred_check
        %p198 = pneg %p81
      $region18: #{double_conv.4} parent=11 // pred_check_branch
        %200 = sbr.rel (%p198) target = $region20
      $region19: #{double_conv.4} parent=11 // pred_region
        _
      $region20: #{double_conv.4} parent=11 // pred_fallthru
        _
      // Predicated region
      $region21: #{double_conv.4} parent=11 // pred_check
        %p201 = pneg %p102
      $region22: #{double_conv.4} parent=11 // pred_check_branch
        %203 = sbr.rel (%p201) target = $region24
      $region23: #{double_conv.4} parent=11 // pred_region
        _
      $region24: #{double_conv.4} parent=11 // pred_fallthru
        _
    $region12: #{double_conv.4} parent=5 // pred_fallthru
      _
    %p204 = scmp.lt.s32.totalorder %s13, 2
    // Predicated region
    $region25: #{double_conv.4} parent=5 // pred_check
      %p205 = pneg %p204
    $region26: #{double_conv.4} parent=5 // pred_check_branch
      %207 = sbr.rel (%p205) target = $region28
    $region27: #{double_conv.4} parent=5 // pred_region
      // Predicated region
      $region29: #{double_conv.4} parent=27 // pred_check
        %p208 = pneg %p33
      $region30: #{double_conv.4} parent=27 // pred_check_branch
        %210 = sbr.rel (%p208) target = $region32
      $region31: #{double_conv.4} parent=27 // pred_region
        %p211 = scmp.lt.s32.totalorder %s13, 1
        %s212 = scalar_select %p211, %s13, 1
        %s213 = smul.addr %s212, 32
        %s214 = smul.addr %s213, 4
        %s215 = scalar_lea.vmem %s0, %s214
      $region32: #{double_conv.4} parent=27 // pred_fallthru
        _
    $region28: #{double_conv.4} parent=5 // pred_fallthru
      _
    %p216 = scmp.le.s32.totalorder 1, %s13
    %p217 = scmp.lt.s32.totalorder %s13, 3
    %p218 = pnand %p216, %p217
    %p219 = pneg %p218
    // Predicated region
    $region33: #{double_conv.4} parent=5 // pred_check
      _
    $region34: #{double_conv.4} parent=5 // pred_check_branch
      %221 = sbr.rel (%p218) target = $region36
    $region35: #{double_conv.4} parent=5 // pred_region
      %s222 = ssub.s32 %s13, 1
      %p223 = scmp.lt.s32.totalorder %s18, 1
      %s224 = scalar_select %p223, %s18, 1
      %s225 = smul.addr %s224, 32
      %s226 = smul.addr %s225, 4
      %s227 = scalar_lea.vmem %s0, %s226
      %p228 = pneg %p39
      %p229 = pneg %p36
      %p230 = pneg %p60
      %p231 = pneg %p57
      %p232 = pneg %p81
      %p233 = pneg %p78
      %p234 = pneg %p102
      %p235 = pneg %p99
      %p236 = pneg %p128
      %p237 = pneg %p125
      %p238 = scmp.lt.s32.totalorder %s18, 1
      %s239 = scalar_select %p238, %s18, 1
      %s240 = smul.addr %s239, 32
      %s241 = smul.addr %s240, 4
      %s242 = scalar_lea.vmem %s4, %s241
      %p243 = pneg %p154
      %p244 = pneg %p151
      %p245 = scmp.lt.s32.totalorder %s18, 1
      %s246 = scalar_select %p245, %s18, 1
      %s247 = scalar_lea.vmem %s5, %s246
      %p248 = pneg %p180
      %p249 = pneg %p177
      %p250 = scmp.lt.s32.totalorder %s18, 1
      %s251 = scalar_select %p250, %s18, 1
      %s252 = scalar_lea.vmem %s6, %s251
      %p253 = scmp.lt.s32.totalorder %s18, 1
      %s254 = scalar_select %p253, %s18, 1
      %s255 = smul.addr %s254, 32
      %s256 = smul.addr %s255, 4
      %s257 = scalar_lea.vmem %s0, %s256
      %p258 = scmp.lt.s32.totalorder %s18, 1
      %s259 = scalar_select %p258, %s18, 1
      %s260 = smul.addr %s259, 32
      %s261 = smul.addr %s260, 4
      %s262 = scalar_lea.vmem %s4, %s261
      %p263 = scmp.lt.s32.totalorder %s18, 1
      %s264 = scalar_select %p263, %s18, 1
      %s265 = scalar_lea.vmem %s5, %s264
      %p266 = scmp.lt.s32.totalorder %s18, 1
      %s267 = scalar_select %p266, %s18, 1
      %s268 = scalar_lea.vmem %s6, %s267
      %v272 = vld [vmem:[%s257] sm:$0xf]
      %v273 = vld [vmem:[%s257 + $0x4] sm:$0xf]
      %v274 = vld [vmem:[%s257 + $0x8] sm:$0xf]
      %v275 = vld [vmem:[%s257 + $0xc] sm:$0xf]
      %v276 = vld [vmem:[%s257 + $0x10] sm:$0xf]
      %v277 = vld [vmem:[%s257 + $0x14] sm:$0xf]
      %v278 = vld [vmem:[%s257 + $0x18] sm:$0xf]
      %v279 = vld [vmem:[%s257 + $0x1c] sm:$0xf]
      %v280 = vld [vmem:[%s257 + $0x20] sm:$0xf]
      %v281 = vld [vmem:[%s257 + $0x24] sm:$0xf]
      %v282 = vld [vmem:[%s257 + $0x28] sm:$0xf]
      %v283 = vld [vmem:[%s257 + $0x2c] sm:$0xf]
      %v284 = vld [vmem:[%s257 + $0x30] sm:$0xf]
      %v285 = vld [vmem:[%s257 + $0x34] sm:$0xf]
      %v286 = vld [vmem:[%s257 + $0x38] sm:$0xf]
      %v287 = vld [vmem:[%s257 + $0x3c] sm:$0xf]
      %v288 = vld [vmem:[%s257 + $0x40] sm:$0xf]
      %v289 = vld [vmem:[%s257 + $0x44] sm:$0xf]
      %v290 = vld [vmem:[%s257 + $0x48] sm:$0xf]
      %v291 = vld [vmem:[%s257 + $0x4c] sm:$0xf]
      %v292 = vld [vmem:[%s257 + $0x50] sm:$0xf]
      %v293 = vld [vmem:[%s257 + $0x54] sm:$0xf]
      %v294 = vld [vmem:[%s257 + $0x58] sm:$0xf]
      %v295 = vld [vmem:[%s257 + $0x5c] sm:$0xf]
      %v296 = vld [vmem:[%s257 + $0x60] sm:$0xf]
      %v297 = vld [vmem:[%s257 + $0x64] sm:$0xf]
      %v298 = vld [vmem:[%s257 + $0x68] sm:$0xf]
      %v299 = vld [vmem:[%s257 + $0x6c] sm:$0xf]
      %v300 = vld [vmem:[%s257 + $0x70] sm:$0xf]
      %v301 = vld [vmem:[%s257 + $0x74] sm:$0xf]
      %v302 = vld [vmem:[%s257 + $0x78] sm:$0xf]
      %v303 = vld [vmem:[%s257 + $0x7c] sm:$0xf]
      %v304 = vunpack.c.l.bf16 %v272
      %v305 = vunpack.c.l.bf16 %v273
      %v306 = vunpack.c.l.bf16 %v274
      %v307 = vunpack.c.l.bf16 %v275
      %v308 = vunpack.c.l.bf16 %v276
      %v309 = vunpack.c.l.bf16 %v277
      %v310 = vunpack.c.l.bf16 %v278
      %v311 = vunpack.c.l.bf16 %v279
      %v312 = vunpack.c.l.bf16 %v280
      %v313 = vunpack.c.l.bf16 %v281
      %v314 = vunpack.c.l.bf16 %v282
      %v315 = vunpack.c.l.bf16 %v283
      %v316 = vunpack.c.l.bf16 %v284
      %v317 = vunpack.c.l.bf16 %v285
      %v318 = vunpack.c.l.bf16 %v286
      %v319 = vunpack.c.l.bf16 %v287
      %v320 = vunpack.c.l.bf16 %v288
      %v321 = vunpack.c.l.bf16 %v289
      %v322 = vunpack.c.l.bf16 %v290
      %v323 = vunpack.c.l.bf16 %v291
      %v324 = vunpack.c.l.bf16 %v292
      %v325 = vunpack.c.l.bf16 %v293
      %v326 = vunpack.c.l.bf16 %v294
      %v327 = vunpack.c.l.bf16 %v295
      %v328 = vunpack.c.l.bf16 %v296
      %v329 = vunpack.c.l.bf16 %v297
      %v330 = vunpack.c.l.bf16 %v298
      %v331 = vunpack.c.l.bf16 %v299
      %v332 = vunpack.c.l.bf16 %v300
      %v333 = vunpack.c.l.bf16 %v301
      %v334 = vunpack.c.l.bf16 %v302
      %v335 = vunpack.c.l.bf16 %v303
      %v336 = vld [vmem:[%s1] sm:$0x1]
      %v338 = vperm.slane %v336, 0
      %v340 = vmul.f32 %v304, %v338
      %v341 = vmul.f32 %v305, %v338
      %v342 = vmul.f32 %v306, %v338
      %v343 = vmul.f32 %v307, %v338
      %v344 = vmul.f32 %v308, %v338
      %v345 = vmul.f32 %v309, %v338
      %v346 = vmul.f32 %v310, %v338
      %v347 = vmul.f32 %v311, %v338
      %v348 = vmul.f32 %v312, %v338
      %v349 = vmul.f32 %v313, %v338
      %v350 = vmul.f32 %v314, %v338
      %v351 = vmul.f32 %v315, %v338
      %v352 = vmul.f32 %v316, %v338
      %v353 = vmul.f32 %v317, %v338
      %v354 = vmul.f32 %v318, %v338
      %v355 = vmul.f32 %v319, %v338
      %v356 = vmul.f32 %v320, %v338
      %v357 = vmul.f32 %v321, %v338
      %v358 = vmul.f32 %v322, %v338
      %v359 = vmul.f32 %v323, %v338
      %v360 = vmul.f32 %v324, %v338
      %v361 = vmul.f32 %v325, %v338
      %v362 = vmul.f32 %v326, %v338
      %v363 = vmul.f32 %v327, %v338
      %v364 = vmul.f32 %v328, %v338
      %v365 = vmul.f32 %v329, %v338
      %v366 = vmul.f32 %v330, %v338
      %v367 = vmul.f32 %v331, %v338
      %v368 = vmul.f32 %v332, %v338
      %v369 = vmul.f32 %v333, %v338
      %v370 = vmul.f32 %v334, %v338
      %v371 = vmul.f32 %v335, %v338
      %v372 = vld [vmem:[%s2] sm:$0x1]
      %v374 = vperm.slane %v372, 0
      %v376 = vadd.f32 %v340, %v374
      %v377 = vadd.f32 %v341, %v374
      %v378 = vadd.f32 %v342, %v374
      %v379 = vadd.f32 %v343, %v374
      %v380 = vadd.f32 %v344, %v374
      %v381 = vadd.f32 %v345, %v374
      %v382 = vadd.f32 %v346, %v374
      %v383 = vadd.f32 %v347, %v374
      %v384 = vadd.f32 %v348, %v374
      %v385 = vadd.f32 %v349, %v374
      %v386 = vadd.f32 %v350, %v374
      %v387 = vadd.f32 %v351, %v374
      %v388 = vadd.f32 %v352, %v374
      %v389 = vadd.f32 %v353, %v374
      %v390 = vadd.f32 %v354, %v374
      %v391 = vadd.f32 %v355, %v374
      %v392 = vadd.f32 %v356, %v374
      %v393 = vadd.f32 %v357, %v374
      %v394 = vadd.f32 %v358, %v374
      %v395 = vadd.f32 %v359, %v374
      %v396 = vadd.f32 %v360, %v374
      %v397 = vadd.f32 %v361, %v374
      %v398 = vadd.f32 %v362, %v374
      %v399 = vadd.f32 %v363, %v374
      %v400 = vadd.f32 %v364, %v374
      %v401 = vadd.f32 %v365, %v374
      %v402 = vadd.f32 %v366, %v374
      %v403 = vadd.f32 %v367, %v374
      %v404 = vadd.f32 %v368, %v374
      %v405 = vadd.f32 %v369, %v374
      %v406 = vadd.f32 %v370, %v374
      %v407 = vadd.f32 %v371, %v374
      %v408 = vmax.f32 %v376, 0.0
      %v409 = vmax.f32 %v377, 0.0
      %v410 = vmax.f32 %v378, 0.0
      %v411 = vmax.f32 %v379, 0.0
      %v412 = vmax.f32 %v380, 0.0
      %v413 = vmax.f32 %v381, 0.0
      %v414 = vmax.f32 %v382, 0.0
      %v415 = vmax.f32 %v383, 0.0
      %v416 = vmax.f32 %v384, 0.0
      %v417 = vmax.f32 %v385, 0.0
      %v418 = vmax.f32 %v386, 0.0
      %v419 = vmax.f32 %v387, 0.0
      %v420 = vmax.f32 %v388, 0.0
      %v421 = vmax.f32 %v389, 0.0
      %v422 = vmax.f32 %v390, 0.0
      %v423 = vmax.f32 %v391, 0.0
      %v424 = vmax.f32 %v392, 0.0
      %v425 = vmax.f32 %v393, 0.0
      %v426 = vmax.f32 %v394, 0.0
      %v427 = vmax.f32 %v395, 0.0
      %v428 = vmax.f32 %v396, 0.0
      %v429 = vmax.f32 %v397, 0.0
      %v430 = vmax.f32 %v398, 0.0
      %v431 = vmax.f32 %v399, 0.0
      %v432 = vmax.f32 %v400, 0.0
      %v433 = vmax.f32 %v401, 0.0
      %v434 = vmax.f32 %v402, 0.0
      %v435 = vmax.f32 %v403, 0.0
      %v436 = vmax.f32 %v404, 0.0
      %v437 = vmax.f32 %v405, 0.0
      %v438 = vmax.f32 %v406, 0.0
      %v439 = vmax.f32 %v407, 0.0
      %v440 = vpack.c.bf16 %v408, %v408
      %v441 = vpack.c.bf16 %v409, %v409
      %v442 = vpack.c.bf16 %v410, %v410
      %v443 = vpack.c.bf16 %v411, %v411
      %v444 = vpack.c.bf16 %v412, %v412
      %v445 = vpack.c.bf16 %v413, %v413
      %v446 = vpack.c.bf16 %v414, %v414
      %v447 = vpack.c.bf16 %v415, %v415
      %v448 = vpack.c.bf16 %v416, %v416
      %v449 = vpack.c.bf16 %v417, %v417
      %v450 = vpack.c.bf16 %v418, %v418
      %v451 = vpack.c.bf16 %v419, %v419
      %v452 = vpack.c.bf16 %v420, %v420
      %v453 = vpack.c.bf16 %v421, %v421
      %v454 = vpack.c.bf16 %v422, %v422
      %v455 = vpack.c.bf16 %v423, %v423
      %v456 = vpack.c.bf16 %v424, %v424
      %v457 = vpack.c.bf16 %v425, %v425
      %v458 = vpack.c.bf16 %v426, %v426
      %v459 = vpack.c.bf16 %v427, %v427
      %v460 = vpack.c.bf16 %v428, %v428
      %v461 = vpack.c.bf16 %v429, %v429
      %v462 = vpack.c.bf16 %v430, %v430
      %v463 = vpack.c.bf16 %v431, %v431
      %v464 = vpack.c.bf16 %v432, %v432
      %v465 = vpack.c.bf16 %v433, %v433
      %v466 = vpack.c.bf16 %v434, %v434
      %v467 = vpack.c.bf16 %v435, %v435
      %v468 = vpack.c.bf16 %v436, %v436
      %v469 = vpack.c.bf16 %v437, %v437
      %v470 = vpack.c.bf16 %v438, %v438
      %v471 = vpack.c.bf16 %v439, %v439
      %472 = vst [vmem:[#allocation2] sm:$0xf] 0
      %473 = vst [vmem:[#allocation2 + $0x4] sm:$0xf] 0
      %474 = vst [vmem:[#allocation2 + $0x8] sm:$0xf] 0
      %475 = vst [vmem:[#allocation2 + $0x8c] sm:$0xf] 0
      %476 = vst [vmem:[#allocation2 + $0x90] sm:$0xf] 0
      %477 = vst [vmem:[#allocation2 + $0x94] sm:$0xf] 0
      %478 = vst [vmem:[#allocation2 + $0xc] sm:$0xf] %v440
      %479 = vst [vmem:[#allocation2 + $0x10] sm:$0xf] %v441
      %480 = vst [vmem:[#allocation2 + $0x14] sm:$0xf] %v442
      %481 = vst [vmem:[#allocation2 + $0x18] sm:$0xf] %v443
      %482 = vst [vmem:[#allocation2 + $0x1c] sm:$0xf] %v444
      %483 = vst [vmem:[#allocation2 + $0x20] sm:$0xf] %v445
      %484 = vst [vmem:[#allocation2 + $0x24] sm:$0xf] %v446
      %485 = vst [vmem:[#allocation2 + $0x28] sm:$0xf] %v447
      %486 = vst [vmem:[#allocation2 + $0x2c] sm:$0xf] %v448
      %487 = vst [vmem:[#allocation2 + $0x30] sm:$0xf] %v449
      %488 = vst [vmem:[#allocation2 + $0x34] sm:$0xf] %v450
      %489 = vst [vmem:[#allocation2 + $0x38] sm:$0xf] %v451
      %490 = vst [vmem:[#allocation2 + $0x3c] sm:$0xf] %v452
      %491 = vst [vmem:[#allocation2 + $0x40] sm:$0xf] %v453
      %492 = vst [vmem:[#allocation2 + $0x44] sm:$0xf] %v454
      %493 = vst [vmem:[#allocation2 + $0x48] sm:$0xf] %v455
      %494 = vst [vmem:[#allocation2 + $0x4c] sm:$0xf] %v456
      %495 = vst [vmem:[#allocation2 + $0x50] sm:$0xf] %v457
      %496 = vst [vmem:[#allocation2 + $0x54] sm:$0xf] %v458
      %497 = vst [vmem:[#allocation2 + $0x58] sm:$0xf] %v459
      %498 = vst [vmem:[#allocation2 + $0x5c] sm:$0xf] %v460
      %499 = vst [vmem:[#allocation2 + $0x60] sm:$0xf] %v461
      %500 = vst [vmem:[#allocation2 + $0x64] sm:$0xf] %v462
      %501 = vst [vmem:[#allocation2 + $0x68] sm:$0xf] %v463
      %502 = vst [vmem:[#allocation2 + $0x6c] sm:$0xf] %v464
      %503 = vst [vmem:[#allocation2 + $0x70] sm:$0xf] %v465
      %504 = vst [vmem:[#allocation2 + $0x74] sm:$0xf] %v466
      %505 = vst [vmem:[#allocation2 + $0x78] sm:$0xf] %v467
      %506 = vst [vmem:[#allocation2 + $0x7c] sm:$0xf] %v468
      %507 = vst [vmem:[#allocation2 + $0x80] sm:$0xf] %v469
      %508 = vst [vmem:[#allocation2 + $0x84] sm:$0xf] %v470
      %509 = vst [vmem:[#allocation2 + $0x88] sm:$0xf] %v471
      %v510 = vlaneseq
      %v511 = vshrl.u32 %v510, 7
      %v512 = vadd.s32 %v511, 8
      %v513 = vadd.s32 %v511, 16
      %v514 = vadd.s32 %v511, 24
      %v515 = vadd.s32 %v511, 32
      %v516 = vadd.s32 %v511, 40
      %v517 = vadd.s32 %v511, 48
      %v518 = vadd.s32 %v511, 56
      %v519 = vadd.s32 %v511, 64
      %v520 = vadd.s32 %v511, 72
      %v521 = vadd.s32 %v511, 80
      %v522 = vadd.s32 %v511, 88
      %v523 = vadd.s32 %v511, 96
      %v524 = vadd.s32 %v511, 104
      %v525 = vadd.s32 %v511, 112
      %v526 = vadd.s32 %v511, 120
      %v527 = vadd.s32 %v511, 128
      %v528 = vadd.s32 %v511, 136
      %v529 = vadd.s32 %v511, 144
      %v530 = vadd.s32 %v511, 152
      %v531 = vadd.s32 %v511, 160
      %v532 = vadd.s32 %v511, 168
      %v533 = vadd.s32 %v511, 176
      %v534 = vadd.s32 %v511, 184
      %v535 = vadd.s32 %v511, 192
      %v536 = vadd.s32 %v511, 200
      %v537 = vadd.s32 %v511, 208
      %v538 = vadd.s32 %v511, 216
      %v539 = vadd.s32 %v511, 224
      %v540 = vadd.s32 %v511, 232
      %v541 = vadd.s32 %v511, 240
      %v542 = vadd.s32 %v511, 248
      %v543 = vand.u32 %v511, 15
      %v544 = vand.u32 %v512, 15
      %v545 = vand.u32 %v513, 15
      %v546 = vand.u32 %v514, 15
      %v547 = vand.u32 %v515, 15
      %v548 = vand.u32 %v516, 15
      %v549 = vand.u32 %v517, 15
      %v550 = vand.u32 %v518, 15
      %v551 = vand.u32 %v519, 15
      %v552 = vand.u32 %v520, 15
      %v553 = vand.u32 %v521, 15
      %v554 = vand.u32 %v522, 15
      %v555 = vand.u32 %v523, 15
      %v556 = vand.u32 %v524, 15
      %v557 = vand.u32 %v525, 15
      %v558 = vand.u32 %v526, 15
      %v559 = vand.u32 %v527, 15
      %v560 = vand.u32 %v528, 15
      %v561 = vand.u32 %v529, 15
      %v562 = vand.u32 %v530, 15
      %v563 = vand.u32 %v531, 15
      %v564 = vand.u32 %v532, 15
      %v565 = vand.u32 %v533, 15
      %v566 = vand.u32 %v534, 15
      %v567 = vand.u32 %v535, 15
      %v568 = vand.u32 %v536, 15
      %v569 = vand.u32 %v537, 15
      %v570 = vand.u32 %v538, 15
      %v571 = vand.u32 %v539, 15
      %v572 = vand.u32 %v540, 15
      %v573 = vand.u32 %v541, 15
      %v574 = vand.u32 %v542, 15
      %vm575 = vcmp.ne.s32.totalorder %v543, 0
      %vm576 = vcmp.ne.s32.totalorder %v544, 0
      %vm577 = vcmp.ne.s32.totalorder %v545, 0
      %vm578 = vcmp.ne.s32.totalorder %v546, 0
      %vm579 = vcmp.ne.s32.totalorder %v547, 0
      %vm580 = vcmp.ne.s32.totalorder %v548, 0
      %vm581 = vcmp.ne.s32.totalorder %v549, 0
      %vm582 = vcmp.ne.s32.totalorder %v550, 0
      %vm583 = vcmp.ne.s32.totalorder %v551, 0
      %vm584 = vcmp.ne.s32.totalorder %v552, 0
      %vm585 = vcmp.ne.s32.totalorder %v553, 0
      %vm586 = vcmp.ne.s32.totalorder %v554, 0
      %vm587 = vcmp.ne.s32.totalorder %v555, 0
      %vm588 = vcmp.ne.s32.totalorder %v556, 0
      %vm589 = vcmp.ne.s32.totalorder %v557, 0
      %vm590 = vcmp.ne.s32.totalorder %v558, 0
      %vm591 = vcmp.ne.s32.totalorder %v559, 0
      %vm592 = vcmp.ne.s32.totalorder %v560, 0
      %vm593 = vcmp.ne.s32.totalorder %v561, 0
      %vm594 = vcmp.ne.s32.totalorder %v562, 0
      %vm595 = vcmp.ne.s32.totalorder %v563, 0
      %vm596 = vcmp.ne.s32.totalorder %v564, 0
      %vm597 = vcmp.ne.s32.totalorder %v565, 0
      %vm598 = vcmp.ne.s32.totalorder %v566, 0
      %vm599 = vcmp.ne.s32.totalorder %v567, 0
      %vm600 = vcmp.ne.s32.totalorder %v568, 0
      %vm601 = vcmp.ne.s32.totalorder %v569, 0
      %vm602 = vcmp.ne.s32.totalorder %v570, 0
      %vm603 = vcmp.ne.s32.totalorder %v571, 0
      %vm604 = vcmp.ne.s32.totalorder %v572, 0
      %vm605 = vcmp.ne.s32.totalorder %v573, 0
      %vm606 = vcmp.ne.s32.totalorder %v574, 0
      %vm607 = vcmp.ne.s32.totalorder %v543, 15
      %vm608 = vcmp.ne.s32.totalorder %v544, 15
      %vm609 = vcmp.ne.s32.totalorder %v545, 15
      %vm610 = vcmp.ne.s32.totalorder %v546, 15
      %vm611 = vcmp.ne.s32.totalorder %v547, 15
      %vm612 = vcmp.ne.s32.totalorder %v548, 15
      %vm613 = vcmp.ne.s32.totalorder %v549, 15
      %vm614 = vcmp.ne.s32.totalorder %v550, 15
      %vm615 = vcmp.ne.s32.totalorder %v551, 15
      %vm616 = vcmp.ne.s32.totalorder %v552, 15
      %vm617 = vcmp.ne.s32.totalorder %v553, 15
      %vm618 = vcmp.ne.s32.totalorder %v554, 15
      %vm619 = vcmp.ne.s32.totalorder %v555, 15
      %vm620 = vcmp.ne.s32.totalorder %v556, 15
      %vm621 = vcmp.ne.s32.totalorder %v557, 15
      %vm622 = vcmp.ne.s32.totalorder %v558, 15
      %vm623 = vcmp.ne.s32.totalorder %v559, 15
      %vm624 = vcmp.ne.s32.totalorder %v560, 15
      %vm625 = vcmp.ne.s32.totalorder %v561, 15
      %vm626 = vcmp.ne.s32.totalorder %v562, 15
      %vm627 = vcmp.ne.s32.totalorder %v563, 15
      %vm628 = vcmp.ne.s32.totalorder %v564, 15
      %vm629 = vcmp.ne.s32.totalorder %v565, 15
      %vm630 = vcmp.ne.s32.totalorder %v566, 15
      %vm631 = vcmp.ne.s32.totalorder %v567, 15
      %vm632 = vcmp.ne.s32.totalorder %v568, 15
      %vm633 = vcmp.ne.s32.totalorder %v569, 15
      %vm634 = vcmp.ne.s32.totalorder %v570, 15
      %vm635 = vcmp.ne.s32.totalorder %v571, 15
      %vm636 = vcmp.ne.s32.totalorder %v572, 15
      %vm637 = vcmp.ne.s32.totalorder %v573, 15
      %vm638 = vcmp.ne.s32.totalorder %v574, 15
      %v639 = vld [vmem:[#allocation2] sm:$0x8]
      %v640 = vld [vmem:[#allocation2 + $0x4] sm:$0xf]
      %v641 = vld [vmem:[#allocation2 + $0x8] sm:$0xf]
      %v642 = vld [vmem:[#allocation2 + $0xc] sm:$0xf]
      %v643 = vld [vmem:[#allocation2 + $0x10] sm:$0xf]
      %v644 = vld [vmem:[#allocation2 + $0x14] sm:$0xf]
      %v645 = vld [vmem:[#allocation2 + $0x18] sm:$0xf]
      %v646 = vld [vmem:[#allocation2 + $0x1c] sm:$0xf]
      %v647 = vld [vmem:[#allocation2 + $0x20] sm:$0xf]
      %v648 = vld [vmem:[#allocation2 + $0x24] sm:$0xf]
      %v649 = vld [vmem:[#allocation2 + $0x28] sm:$0xf]
      %v650 = vld [vmem:[#allocation2 + $0x2c] sm:$0xf]
      %v651 = vld [vmem:[#allocation2 + $0x30] sm:$0xf]
      %v652 = vld [vmem:[#allocation2 + $0x34] sm:$0xf]
      %v653 = vld [vmem:[#allocation2 + $0x38] sm:$0xf]
      %v654 = vld [vmem:[#allocation2 + $0x3c] sm:$0xf]
      %v655 = vld [vmem:[#allocation2 + $0x40] sm:$0xf]
      %v656 = vld [vmem:[#allocation2 + $0x44] sm:$0xf]
      %v657 = vld [vmem:[#allocation2 + $0x48] sm:$0xf]
      %v658 = vld [vmem:[#allocation2 + $0x4c] sm:$0xf]
      %v659 = vld [vmem:[#allocation2 + $0x50] sm:$0xf]
      %v660 = vld [vmem:[#allocation2 + $0x54] sm:$0xf]
      %v661 = vld [vmem:[#allocation2 + $0x58] sm:$0xf]
      %v662 = vld [vmem:[#allocation2 + $0x5c] sm:$0xf]
      %v663 = vld [vmem:[#allocation2 + $0x60] sm:$0xf]
      %v664 = vld [vmem:[#allocation2 + $0x64] sm:$0xf]
      %v665 = vld [vmem:[#allocation2 + $0x68] sm:$0xf]
      %v666 = vld [vmem:[#allocation2 + $0x6c] sm:$0xf]
      %v667 = vld [vmem:[#allocation2 + $0x70] sm:$0xf]
      %v668 = vld [vmem:[#allocation2 + $0x74] sm:$0xf]
      %v669 = vld [vmem:[#allocation2 + $0x78] sm:$0xf]
      %v670 = vld [vmem:[#allocation2 + $0x7c] sm:$0xf]
      %v671 = vld [vmem:[#allocation2 + $0x80] sm:$0xf]
      %v672 = vsel %vm575, 1, 0
      %v673 = vsel %vm576, 1, 0
      %v674 = vsel %vm577, 1, 0
      %v675 = vsel %vm578, 1, 0
      %v676 = vsel %vm579, 1, 0
      %v677 = vsel %vm580, 1, 0
      %v678 = vsel %vm581, 1, 0
      %v679 = vsel %vm582, 1, 0
      %v680 = vsel %vm583, 1, 0
      %v681 = vsel %vm584, 1, 0
      %v682 = vsel %vm585, 1, 0
      %v683 = vsel %vm586, 1, 0
      %v684 = vsel %vm587, 1, 0
      %v685 = vsel %vm588, 1, 0
      %v686 = vsel %vm589, 1, 0
      %v687 = vsel %vm590, 1, 0
      %v688 = vsel %vm591, 1, 0
      %v689 = vsel %vm592, 1, 0
      %v690 = vsel %vm593, 1, 0
      %v691 = vsel %vm594, 1, 0
      %v692 = vsel %vm595, 1, 0
      %v693 = vsel %vm596, 1, 0
      %v694 = vsel %vm597, 1, 0
      %v695 = vsel %vm598, 1, 0
      %v696 = vsel %vm599, 1, 0
      %v697 = vsel %vm600, 1, 0
      %v698 = vsel %vm601, 1, 0
      %v699 = vsel %vm602, 1, 0
      %v700 = vsel %vm603, 1, 0
      %v701 = vsel %vm604, 1, 0
      %v702 = vsel %vm605, 1, 0
      %v703 = vsel %vm606, 1, 0
      %vm704 = vcmp.eq.s32.totalorder %v672, 1
      %vm705 = vcmp.eq.s32.totalorder %v673, 1
      %vm706 = vcmp.eq.s32.totalorder %v674, 1
      %vm707 = vcmp.eq.s32.totalorder %v675, 1
      %vm708 = vcmp.eq.s32.totalorder %v676, 1
      %vm709 = vcmp.eq.s32.totalorder %v677, 1
      %vm710 = vcmp.eq.s32.totalorder %v678, 1
      %vm711 = vcmp.eq.s32.totalorder %v679, 1
      %vm712 = vcmp.eq.s32.totalorder %v680, 1
      %vm713 = vcmp.eq.s32.totalorder %v681, 1
      %vm714 = vcmp.eq.s32.totalorder %v682, 1
      %vm715 = vcmp.eq.s32.totalorder %v683, 1
      %vm716 = vcmp.eq.s32.totalorder %v684, 1
      %vm717 = vcmp.eq.s32.totalorder %v685, 1
      %vm718 = vcmp.eq.s32.totalorder %v686, 1
      %vm719 = vcmp.eq.s32.totalorder %v687, 1
      %vm720 = vcmp.eq.s32.totalorder %v688, 1
      %vm721 = vcmp.eq.s32.totalorder %v689, 1
      %vm722 = vcmp.eq.s32.totalorder %v690, 1
      %vm723 = vcmp.eq.s32.totalorder %v691, 1
      %vm724 = vcmp.eq.s32.totalorder %v692, 1
      %vm725 = vcmp.eq.s32.totalorder %v693, 1
      %vm726 = vcmp.eq.s32.totalorder %v694, 1
      %vm727 = vcmp.eq.s32.totalorder %v695, 1
      %vm728 = vcmp.eq.s32.totalorder %v696, 1
      %vm729 = vcmp.eq.s32.totalorder %v697, 1
      %vm730 = vcmp.eq.s32.totalorder %v698, 1
      %vm731 = vcmp.eq.s32.totalorder %v699, 1
      %vm732 = vcmp.eq.s32.totalorder %v700, 1
      %vm733 = vcmp.eq.s32.totalorder %v701, 1
      %vm734 = vcmp.eq.s32.totalorder %v702, 1
      %vm735 = vcmp.eq.s32.totalorder %v703, 1
      %vm736 = vmpackc.low %vm704, %vm704
      %vm737 = vmpackc.low %vm705, %vm705
      %vm738 = vmpackc.low %vm706, %vm706
      %vm739 = vmpackc.low %vm707, %vm707
      %vm740 = vmpackc.low %vm708, %vm708
      %vm741 = vmpackc.low %vm709, %vm709
      %vm742 = vmpackc.low %vm710, %vm710
      %vm743 = vmpackc.low %vm711, %vm711
      %vm744 = vmpackc.low %vm712, %vm712
      %vm745 = vmpackc.low %vm713, %vm713
      %vm746 = vmpackc.low %vm714, %vm714
      %vm747 = vmpackc.low %vm715, %vm715
      %vm748 = vmpackc.low %vm716, %vm716
      %vm749 = vmpackc.low %vm717, %vm717
      %vm750 = vmpackc.low %vm718, %vm718
      %vm751 = vmpackc.low %vm719, %vm719
      %vm752 = vmpackc.low %vm720, %vm720
      %vm753 = vmpackc.low %vm721, %vm721
      %vm754 = vmpackc.low %vm722, %vm722
      %vm755 = vmpackc.low %vm723, %vm723
      %vm756 = vmpackc.low %vm724, %vm724
      %vm757 = vmpackc.low %vm725, %vm725
      %vm758 = vmpackc.low %vm726, %vm726
      %vm759 = vmpackc.low %vm727, %vm727
      %vm760 = vmpackc.low %vm728, %vm728
      %vm761 = vmpackc.low %vm729, %vm729
      %vm762 = vmpackc.low %vm730, %vm730
      %vm763 = vmpackc.low %vm731, %vm731
      %vm764 = vmpackc.low %vm732, %vm732
      %vm765 = vmpackc.low %vm733, %vm733
      %vm766 = vmpackc.low %vm734, %vm734
      %vm767 = vmpackc.low %vm735, %vm735
      %v768 = vsel %vm736, 65537, 0
      %v769 = vsel %vm737, 65537, 0
      %v770 = vsel %vm738, 65537, 0
      %v771 = vsel %vm739, 65537, 0
      %v772 = vsel %vm740, 65537, 0
      %v773 = vsel %vm741, 65537, 0
      %v774 = vsel %vm742, 65537, 0
      %v775 = vsel %vm743, 65537, 0
      %v776 = vsel %vm744, 65537, 0
      %v777 = vsel %vm745, 65537, 0
      %v778 = vsel %vm746, 65537, 0
      %v779 = vsel %vm747, 65537, 0
      %v780 = vsel %vm748, 65537, 0
      %v781 = vsel %vm749, 65537, 0
      %v782 = vsel %vm750, 65537, 0
      %v783 = vsel %vm751, 65537, 0
      %v784 = vsel %vm752, 65537, 0
      %v785 = vsel %vm753, 65537, 0
      %v786 = vsel %vm754, 65537, 0
      %v787 = vsel %vm755, 65537, 0
      %v788 = vsel %vm756, 65537, 0
      %v789 = vsel %vm757, 65537, 0
      %v790 = vsel %vm758, 65537, 0
      %v791 = vsel %vm759, 65537, 0
      %v792 = vsel %vm760, 65537, 0
      %v793 = vsel %vm761, 65537, 0
      %v794 = vsel %vm762, 65537, 0
      %v795 = vsel %vm763, 65537, 0
      %v796 = vsel %vm764, 65537, 0
      %v797 = vsel %vm765, 65537, 0
      %v798 = vsel %vm766, 65537, 0
      %v799 = vsel %vm767, 65537, 0
      %vm800 = vsmask.f32 3328
      %vm801 = vsmask.f32 7440
      %vm802 = vmor %vm800, %vm801
      %v804 = vshll.u32 %v768, 16
      %v806 = vrot.slane %v804, 5
      %v807 = vshrl.u32 %v768, 16
      %v809 = vrot.slane %v807, 4
      %v810 = vor.u32 %v809, %v806
      %v811 = vrot.slane %v810, 4
      %v813 = vshll.u32 %v769, 16
      %v815 = vrot.slane %v813, 5
      %v816 = vsel %vm802, %v811, %v815
      %v817 = vshrl.u32 %v769, 16
      %v819 = vrot.slane %v817, 4
      %v820 = vor.u32 %v819, %v815
      %v821 = vrot.slane %v820, 4
      %v823 = vshll.u32 %v770, 16
      %v825 = vrot.slane %v823, 5
      %v826 = vsel %vm802, %v821, %v825
      %v827 = vshrl.u32 %v770, 16
      %v829 = vrot.slane %v827, 4
      %v830 = vor.u32 %v829, %v825
      %v831 = vrot.slane %v830, 4
      %v833 = vshll.u32 %v771, 16
      %v835 = vrot.slane %v833, 5
      %v836 = vsel %vm802, %v831, %v835
      %v837 = vshrl.u32 %v771, 16
      %v839 = vrot.slane %v837, 4
      %v840 = vor.u32 %v839, %v835
      %v841 = vrot.slane %v840, 4
      %v843 = vshll.u32 %v772, 16
      %v845 = vrot.slane %v843, 5
      %v846 = vsel %vm802, %v841, %v845
      %v847 = vshrl.u32 %v772, 16
      %v849 = vrot.slane %v847, 4
      %v850 = vor.u32 %v849, %v845
      %v851 = vrot.slane %v850, 4
      %v853 = vshll.u32 %v773, 16
      %v855 = vrot.slane %v853, 5
      %v856 = vsel %vm802, %v851, %v855
      %v857 = vshrl.u32 %v773, 16
      %v859 = vrot.slane %v857, 4
      %v860 = vor.u32 %v859, %v855
      %v861 = vrot.slane %v860, 4
      %v863 = vshll.u32 %v774, 16
      %v865 = vrot.slane %v863, 5
      %v866 = vsel %vm802, %v861, %v865
      %v867 = vshrl.u32 %v774, 16
      %v869 = vrot.slane %v867, 4
      %v870 = vor.u32 %v869, %v865
      %v871 = vrot.slane %v870, 4
      %v873 = vshll.u32 %v775, 16
      %v875 = vrot.slane %v873, 5
      %v876 = vsel %vm802, %v871, %v875
      %v877 = vshrl.u32 %v775, 16
      %v879 = vrot.slane %v877, 4
      %v880 = vor.u32 %v879, %v875
      %v881 = vrot.slane %v880, 4
      %v883 = vshll.u32 %v776, 16
      %v885 = vrot.slane %v883, 5
      %v886 = vsel %vm802, %v881, %v885
      %v887 = vshrl.u32 %v776, 16
      %v889 = vrot.slane %v887, 4
      %v890 = vor.u32 %v889, %v885
      %v891 = vrot.slane %v890, 4
      %v893 = vshll.u32 %v777, 16
      %v895 = vrot.slane %v893, 5
      %v896 = vsel %vm802, %v891, %v895
      %v897 = vshrl.u32 %v777, 16
      %v899 = vrot.slane %v897, 4
      %v900 = vor.u32 %v899, %v895
      %v901 = vrot.slane %v900, 4
      %v903 = vshll.u32 %v778, 16
      %v905 = vrot.slane %v903, 5
      %v906 = vsel %vm802, %v901, %v905
      %v907 = vshrl.u32 %v778, 16
      %v909 = vrot.slane %v907, 4
      %v910 = vor.u32 %v909, %v905
      %v911 = vrot.slane %v910, 4
      %v913 = vshll.u32 %v779, 16
      %v915 = vrot.slane %v913, 5
      %v916 = vsel %vm802, %v911, %v915
      %v917 = vshrl.u32 %v779, 16
      %v919 = vrot.slane %v917, 4
      %v920 = vor.u32 %v919, %v915
      %v921 = vrot.slane %v920, 4
      %v923 = vshll.u32 %v780, 16
      %v925 = vrot.slane %v923, 5
      %v926 = vsel %vm802, %v921, %v925
      %v927 = vshrl.u32 %v780, 16
      %v929 = vrot.slane %v927, 4
      %v930 = vor.u32 %v929, %v925
      %v931 = vrot.slane %v930, 4
      %v933 = vshll.u32 %v781, 16
      %v935 = vrot.slane %v933, 5
      %v936 = vsel %vm802, %v931, %v935
      %v937 = vshrl.u32 %v781, 16
      %v939 = vrot.slane %v937, 4
      %v940 = vor.u32 %v939, %v935
      %v941 = vrot.slane %v940, 4
      %v943 = vshll.u32 %v782, 16
      %v945 = vrot.slane %v943, 5
      %v946 = vsel %vm802, %v941, %v945
      %v947 = vshrl.u32 %v782, 16
      %v949 = vrot.slane %v947, 4
      %v950 = vor.u32 %v949, %v945
      %v951 = vrot.slane %v950, 4
      %v953 = vshll.u32 %v783, 16
      %v955 = vrot.slane %v953, 5
      %v956 = vsel %vm802, %v951, %v955
      %v957 = vshrl.u32 %v783, 16
      %v959 = vrot.slane %v957, 4
      %v960 = vor.u32 %v959, %v955
      %v961 = vrot.slane %v960, 4
      %v963 = vshll.u32 %v784, 16
      %v965 = vrot.slane %v963, 5
      %v966 = vsel %vm802, %v961, %v965
      %v967 = vshrl.u32 %v784, 16
      %v969 = vrot.slane %v967, 4
      %v970 = vor.u32 %v969, %v965
      %v971 = vrot.slane %v970, 4
      %v973 = vshll.u32 %v785, 16
      %v975 = vrot.slane %v973, 5
      %v976 = vsel %vm802, %v971, %v975
      %v977 = vshrl.u32 %v785, 16
      %v979 = vrot.slane %v977, 4
      %v980 = vor.u32 %v979, %v975
      %v981 = vrot.slane %v980, 4
      %v983 = vshll.u32 %v786, 16
      %v985 = vrot.slane %v983, 5
      %v986 = vsel %vm802, %v981, %v985
      %v987 = vshrl.u32 %v786, 16
      %v989 = vrot.slane %v987, 4
      %v990 = vor.u32 %v989, %v985
      %v991 = vrot.slane %v990, 4
      %v993 = vshll.u32 %v787, 16
      %v995 = vrot.slane %v993, 5
      %v996 = vsel %vm802, %v991, %v995
      %v997 = vshrl.u32 %v787, 16
      %v999 = vrot.slane %v997, 4
      %v1000 = vor.u32 %v999, %v995
      %v1001 = vrot.slane %v1000, 4
      %v1003 = vshll.u32 %v788, 16
      %v1005 = vrot.slane %v1003, 5
      %v1006 = vsel %vm802, %v1001, %v1005
      %v1007 = vshrl.u32 %v788, 16
      %v1009 = vrot.slane %v1007, 4
      %v1010 = vor.u32 %v1009, %v1005
      %v1011 = vrot.slane %v1010, 4
      %v1013 = vshll.u32 %v789, 16
      %v1015 = vrot.slane %v1013, 5
      %v1016 = vsel %vm802, %v1011, %v1015
      %v1017 = vshrl.u32 %v789, 16
      %v1019 = vrot.slane %v1017, 4
      %v1020 = vor.u32 %v1019, %v1015
      %v1021 = vrot.slane %v1020, 4
      %v1023 = vshll.u32 %v790, 16
      %v1025 = vrot.slane %v1023, 5
      %v1026 = vsel %vm802, %v1021, %v1025
      %v1027 = vshrl.u32 %v790, 16
      %v1029 = vrot.slane %v1027, 4
      %v1030 = vor.u32 %v1029, %v1025
      %v1031 = vrot.slane %v1030, 4
      %v1033 = vshll.u32 %v791, 16
      %v1035 = vrot.slane %v1033, 5
      %v1036 = vsel %vm802, %v1031, %v1035
      %v1037 = vshrl.u32 %v791, 16
      %v1039 = vrot.slane %v1037, 4
      %v1040 = vor.u32 %v1039, %v1035
      %v1041 = vrot.slane %v1040, 4
      %v1043 = vshll.u32 %v792, 16
      %v1045 = vrot.slane %v1043, 5
      %v1046 = vsel %vm802, %v1041, %v1045
      %v1047 = vshrl.u32 %v792, 16
      %v1049 = vrot.slane %v1047, 4
      %v1050 = vor.u32 %v1049, %v1045
      %v1051 = vrot.slane %v1050, 4
      %v1053 = vshll.u32 %v793, 16
      %v1055 = vrot.slane %v1053, 5
      %v1056 = vsel %vm802, %v1051, %v1055
      %v1057 = vshrl.u32 %v793, 16
      %v1059 = vrot.slane %v1057, 4
      %v1060 = vor.u32 %v1059, %v1055
      %v1061 = vrot.slane %v1060, 4
      %v1063 = vshll.u32 %v794, 16
      %v1065 = vrot.slane %v1063, 5
      %v1066 = vsel %vm802, %v1061, %v1065
      %v1067 = vshrl.u32 %v794, 16
      %v1069 = vrot.slane %v1067, 4
      %v1070 = vor.u32 %v1069, %v1065
      %v1071 = vrot.slane %v1070, 4
      %v1073 = vshll.u32 %v795, 16
      %v1075 = vrot.slane %v1073, 5
      %v1076 = vsel %vm802, %v1071, %v1075
      %v1077 = vshrl.u32 %v795, 16
      %v1079 = vrot.slane %v1077, 4
      %v1080 = vor.u32 %v1079, %v1075
      %v1081 = vrot.slane %v1080, 4
      %v1083 = vshll.u32 %v796, 16
      %v1085 = vrot.slane %v1083, 5
      %v1086 = vsel %vm802, %v1081, %v1085
      %v1087 = vshrl.u32 %v796, 16
      %v1089 = vrot.slane %v1087, 4
      %v1090 = vor.u32 %v1089, %v1085
      %v1091 = vrot.slane %v1090, 4
      %v1093 = vshll.u32 %v797, 16
      %v1095 = vrot.slane %v1093, 5
      %v1096 = vsel %vm802, %v1091, %v1095
      %v1097 = vshrl.u32 %v797, 16
      %v1099 = vrot.slane %v1097, 4
      %v1100 = vor.u32 %v1099, %v1095
      %v1101 = vrot.slane %v1100, 4
      %v1103 = vshll.u32 %v798, 16
      %v1105 = vrot.slane %v1103, 5
      %v1106 = vsel %vm802, %v1101, %v1105
      %v1107 = vshrl.u32 %v798, 16
      %v1109 = vrot.slane %v1107, 4
      %v1110 = vor.u32 %v1109, %v1105
      %v1111 = vrot.slane %v1110, 4
      %v1113 = vshll.u32 %v799, 16
      %v1115 = vrot.slane %v1113, 5
      %v1116 = vsel %vm802, %v1111, %v1115
      %v1117 = vshrl.u32 %v799, 16
      %v1119 = vrot.slane %v1117, 4
      %v1120 = vor.u32 %v1119, %v1115
      %v1121 = vrot.slane %v1120, 4
      %v1122 = vunpack.c.l.b16 %v806
      %v1123 = vunpack.c.h.b16 %v806
      %v1124 = vunpack.c.l.b16 0
      %v1125 = vunpack.c.h.b16 0
      %vm1126 = vcmp.ne.s32.totalorder %v1122, %v1124
      %vm1127 = vcmp.ne.s32.totalorder %v1123, %v1125
      %vm1128 = vmpackc.low %vm1127, %vm1126
      %v1129 = vunpack.c.l.b16 %v816
      %v1130 = vunpack.c.h.b16 %v816
      %v1131 = vunpack.c.l.b16 0
      %v1132 = vunpack.c.h.b16 0
      %vm1133 = vcmp.ne.s32.totalorder %v1129, %v1131
      %vm1134 = vcmp.ne.s32.totalorder %v1130, %v1132
      %vm1135 = vmpackc.low %vm1134, %vm1133
      %v1136 = vunpack.c.l.b16 %v826
      %v1137 = vunpack.c.h.b16 %v826
      %v1138 = vunpack.c.l.b16 0
      %v1139 = vunpack.c.h.b16 0
      %vm1140 = vcmp.ne.s32.totalorder %v1136, %v1138
      %vm1141 = vcmp.ne.s32.totalorder %v1137, %v1139
      %vm1142 = vmpackc.low %vm1141, %vm1140
      %v1143 = vunpack.c.l.b16 %v836
      %v1144 = vunpack.c.h.b16 %v836
      %v1145 = vunpack.c.l.b16 0
      %v1146 = vunpack.c.h.b16 0
      %vm1147 = vcmp.ne.s32.totalorder %v1143, %v1145
      %vm1148 = vcmp.ne.s32.totalorder %v1144, %v1146
      %vm1149 = vmpackc.low %vm1148, %vm1147
      %v1150 = vunpack.c.l.b16 %v846
      %v1151 = vunpack.c.h.b16 %v846
      %v1152 = vunpack.c.l.b16 0
      %v1153 = vunpack.c.h.b16 0
      %vm1154 = vcmp.ne.s32.totalorder %v1150, %v1152
      %vm1155 = vcmp.ne.s32.totalorder %v1151, %v1153
      %vm1156 = vmpackc.low %vm1155, %vm1154
      %v1157 = vunpack.c.l.b16 %v856
      %v1158 = vunpack.c.h.b16 %v856
      %v1159 = vunpack.c.l.b16 0
      %v1160 = vunpack.c.h.b16 0
      %vm1161 = vcmp.ne.s32.totalorder %v1157, %v1159
      %vm1162 = vcmp.ne.s32.totalorder %v1158, %v1160
      %vm1163 = vmpackc.low %vm1162, %vm1161
      %v1164 = vunpack.c.l.b16 %v866
      %v1165 = vunpack.c.h.b16 %v866
      %v1166 = vunpack.c.l.b16 0
      %v1167 = vunpack.c.h.b16 0
      %vm1168 = vcmp.ne.s32.totalorder %v1164, %v1166
      %vm1169 = vcmp.ne.s32.totalorder %v1165, %v1167
      %vm1170 = vmpackc.low %vm1169, %vm1168
      %v1171 = vunpack.c.l.b16 %v876
      %v1172 = vunpack.c.h.b16 %v876
      %v1173 = vunpack.c.l.b16 0
      %v1174 = vunpack.c.h.b16 0
      %vm1175 = vcmp.ne.s32.totalorder %v1171, %v1173
      %vm1176 = vcmp.ne.s32.totalorder %v1172, %v1174
      %vm1177 = vmpackc.low %vm1176, %vm1175
      %v1178 = vunpack.c.l.b16 %v886
      %v1179 = vunpack.c.h.b16 %v886
      %v1180 = vunpack.c.l.b16 0
      %v1181 = vunpack.c.h.b16 0
      %vm1182 = vcmp.ne.s32.totalorder %v1178, %v1180
      %vm1183 = vcmp.ne.s32.totalorder %v1179, %v1181
      %vm1184 = vmpackc.low %vm1183, %vm1182
      %v1185 = vunpack.c.l.b16 %v896
      %v1186 = vunpack.c.h.b16 %v896
      %v1187 = vunpack.c.l.b16 0
      %v1188 = vunpack.c.h.b16 0
      %vm1189 = vcmp.ne.s32.totalorder %v1185, %v1187
      %vm1190 = vcmp.ne.s32.totalorder %v1186, %v1188
      %vm1191 = vmpackc.low %vm1190, %vm1189
      %v1192 = vunpack.c.l.b16 %v906
      %v1193 = vunpack.c.h.b16 %v906
      %v1194 = vunpack.c.l.b16 0
      %v1195 = vunpack.c.h.b16 0
      %vm1196 = vcmp.ne.s32.totalorder %v1192, %v1194
      %vm1197 = vcmp.ne.s32.totalorder %v1193, %v1195
      %vm1198 = vmpackc.low %vm1197, %vm1196
      %v1199 = vunpack.c.l.b16 %v916
      %v1200 = vunpack.c.h.b16 %v916
      %v1201 = vunpack.c.l.b16 0
      %v1202 = vunpack.c.h.b16 0
      %vm1203 = vcmp.ne.s32.totalorder %v1199, %v1201
      %vm1204 = vcmp.ne.s32.totalorder %v1200, %v1202
      %vm1205 = vmpackc.low %vm1204, %vm1203
      %v1206 = vunpack.c.l.b16 %v926
      %v1207 = vunpack.c.h.b16 %v926
      %v1208 = vunpack.c.l.b16 0
      %v1209 = vunpack.c.h.b16 0
      %vm1210 = vcmp.ne.s32.totalorder %v1206, %v1208
      %vm1211 = vcmp.ne.s32.totalorder %v1207, %v1209
      %vm1212 = vmpackc.low %vm1211, %vm1210
      %v1213 = vunpack.c.l.b16 %v936
      %v1214 = vunpack.c.h.b16 %v936
      %v1215 = vunpack.c.l.b16 0
      %v1216 = vunpack.c.h.b16 0
      %vm1217 = vcmp.ne.s32.totalorder %v1213, %v1215
      %vm1218 = vcmp.ne.s32.totalorder %v1214, %v1216
      %vm1219 = vmpackc.low %vm1218, %vm1217
      %v1220 = vunpack.c.l.b16 %v946
      %v1221 = vunpack.c.h.b16 %v946
      %v1222 = vunpack.c.l.b16 0
      %v1223 = vunpack.c.h.b16 0
      %vm1224 = vcmp.ne.s32.totalorder %v1220, %v1222
      %vm1225 = vcmp.ne.s32.totalorder %v1221, %v1223
      %vm1226 = vmpackc.low %vm1225, %vm1224
      %v1227 = vunpack.c.l.b16 %v956
      %v1228 = vunpack.c.h.b16 %v956
      %v1229 = vunpack.c.l.b16 0
      %v1230 = vunpack.c.h.b16 0
      %vm1231 = vcmp.ne.s32.totalorder %v1227, %v1229
      %vm1232 = vcmp.ne.s32.totalorder %v1228, %v1230
      %vm1233 = vmpackc.low %vm1232, %vm1231
      %v1234 = vunpack.c.l.b16 %v966
      %v1235 = vunpack.c.h.b16 %v966
      %v1236 = vunpack.c.l.b16 0
      %v1237 = vunpack.c.h.b16 0
      %vm1238 = vcmp.ne.s32.totalorder %v1234, %v1236
      %vm1239 = vcmp.ne.s32.totalorder %v1235, %v1237
      %vm1240 = vmpackc.low %vm1239, %vm1238
      %v1241 = vunpack.c.l.b16 %v976
      %v1242 = vunpack.c.h.b16 %v976
      %v1243 = vunpack.c.l.b16 0
      %v1244 = vunpack.c.h.b16 0
      %vm1245 = vcmp.ne.s32.totalorder %v1241, %v1243
      %vm1246 = vcmp.ne.s32.totalorder %v1242, %v1244
      %vm1247 = vmpackc.low %vm1246, %vm1245
      %v1248 = vunpack.c.l.b16 %v986
      %v1249 = vunpack.c.h.b16 %v986
      %v1250 = vunpack.c.l.b16 0
      %v1251 = vunpack.c.h.b16 0
      %vm1252 = vcmp.ne.s32.totalorder %v1248, %v1250
      %vm1253 = vcmp.ne.s32.totalorder %v1249, %v1251
      %vm1254 = vmpackc.low %vm1253, %vm1252
      %v1255 = vunpack.c.l.b16 %v996
      %v1256 = vunpack.c.h.b16 %v996
      %v1257 = vunpack.c.l.b16 0
      %v1258 = vunpack.c.h.b16 0
      %vm1259 = vcmp.ne.s32.totalorder %v1255, %v1257
      %vm1260 = vcmp.ne.s32.totalorder %v1256, %v1258
      %vm1261 = vmpackc.low %vm1260, %vm1259
      %v1262 = vunpack.c.l.b16 %v1006
      %v1263 = vunpack.c.h.b16 %v1006
      %v1264 = vunpack.c.l.b16 0
      %v1265 = vunpack.c.h.b16 0
      %vm1266 = vcmp.ne.s32.totalorder %v1262, %v1264
      %vm1267 = vcmp.ne.s32.totalorder %v1263, %v1265
      %vm1268 = vmpackc.low %vm1267, %vm1266
      %v1269 = vunpack.c.l.b16 %v1016
      %v1270 = vunpack.c.h.b16 %v1016
      %v1271 = vunpack.c.l.b16 0
      %v1272 = vunpack.c.h.b16 0
      %vm1273 = vcmp.ne.s32.totalorder %v1269, %v1271
      %vm1274 = vcmp.ne.s32.totalorder %v1270, %v1272
      %vm1275 = vmpackc.low %vm1274, %vm1273
      %v1276 = vunpack.c.l.b16 %v1026
      %v1277 = vunpack.c.h.b16 %v1026
      %v1278 = vunpack.c.l.b16 0
      %v1279 = vunpack.c.h.b16 0
      %vm1280 = vcmp.ne.s32.totalorder %v1276, %v1278
      %vm1281 = vcmp.ne.s32.totalorder %v1277, %v1279
      %vm1282 = vmpackc.low %vm1281, %vm1280
      %v1283 = vunpack.c.l.b16 %v1036
      %v1284 = vunpack.c.h.b16 %v1036
      %v1285 = vunpack.c.l.b16 0
      %v1286 = vunpack.c.h.b16 0
      %vm1287 = vcmp.ne.s32.totalorder %v1283, %v1285
      %vm1288 = vcmp.ne.s32.totalorder %v1284, %v1286
      %vm1289 = vmpackc.low %vm1288, %vm1287
      %v1290 = vunpack.c.l.b16 %v1046
      %v1291 = vunpack.c.h.b16 %v1046
      %v1292 = vunpack.c.l.b16 0
      %v1293 = vunpack.c.h.b16 0
      %vm1294 = vcmp.ne.s32.totalorder %v1290, %v1292
      %vm1295 = vcmp.ne.s32.totalorder %v1291, %v1293
      %vm1296 = vmpackc.low %vm1295, %vm1294
      %v1297 = vunpack.c.l.b16 %v1056
      %v1298 = vunpack.c.h.b16 %v1056
      %v1299 = vunpack.c.l.b16 0
      %v1300 = vunpack.c.h.b16 0
      %vm1301 = vcmp.ne.s32.totalorder %v1297, %v1299
      %vm1302 = vcmp.ne.s32.totalorder %v1298, %v1300
      %vm1303 = vmpackc.low %vm1302, %vm1301
      %v1304 = vunpack.c.l.b16 %v1066
      %v1305 = vunpack.c.h.b16 %v1066
      %v1306 = vunpack.c.l.b16 0
      %v1307 = vunpack.c.h.b16 0
      %vm1308 = vcmp.ne.s32.totalorder %v1304, %v1306
      %vm1309 = vcmp.ne.s32.totalorder %v1305, %v1307
      %vm1310 = vmpackc.low %vm1309, %vm1308
      %v1311 = vunpack.c.l.b16 %v1076
      %v1312 = vunpack.c.h.b16 %v1076
      %v1313 = vunpack.c.l.b16 0
      %v1314 = vunpack.c.h.b16 0
      %vm1315 = vcmp.ne.s32.totalorder %v1311, %v1313
      %vm1316 = vcmp.ne.s32.totalorder %v1312, %v1314
      %vm1317 = vmpackc.low %vm1316, %vm1315
      %v1318 = vunpack.c.l.b16 %v1086
      %v1319 = vunpack.c.h.b16 %v1086
      %v1320 = vunpack.c.l.b16 0
      %v1321 = vunpack.c.h.b16 0
      %vm1322 = vcmp.ne.s32.totalorder %v1318, %v1320
      %vm1323 = vcmp.ne.s32.totalorder %v1319, %v1321
      %vm1324 = vmpackc.low %vm1323, %vm1322
      %v1325 = vunpack.c.l.b16 %v1096
      %v1326 = vunpack.c.h.b16 %v1096
      %v1327 = vunpack.c.l.b16 0
      %v1328 = vunpack.c.h.b16 0
      %vm1329 = vcmp.ne.s32.totalorder %v1325, %v1327
      %vm1330 = vcmp.ne.s32.totalorder %v1326, %v1328
      %vm1331 = vmpackc.low %vm1330, %vm1329
      %v1332 = vunpack.c.l.b16 %v1106
      %v1333 = vunpack.c.h.b16 %v1106
      %v1334 = vunpack.c.l.b16 0
      %v1335 = vunpack.c.h.b16 0
      %vm1336 = vcmp.ne.s32.totalorder %v1332, %v1334
      %vm1337 = vcmp.ne.s32.totalorder %v1333, %v1335
      %vm1338 = vmpackc.low %vm1337, %vm1336
      %v1339 = vunpack.c.l.b16 %v1116
      %v1340 = vunpack.c.h.b16 %v1116
      %v1341 = vunpack.c.l.b16 0
      %v1342 = vunpack.c.h.b16 0
      %vm1343 = vcmp.ne.s32.totalorder %v1339, %v1341
      %vm1344 = vcmp.ne.s32.totalorder %v1340, %v1342
      %vm1345 = vmpackc.low %vm1344, %vm1343
      %v1346 = vunpack.c.l.b16 %v1121
      %v1347 = vunpack.c.h.b16 %v1121
      %v1348 = vunpack.c.l.b16 0
      %v1349 = vunpack.c.h.b16 0
      %vm1350 = vcmp.ne.s32.totalorder %v1346, %v1348
      %vm1351 = vcmp.ne.s32.totalorder %v1347, %v1349
      %vm1352 = vmpackc.low %vm1351, %vm1350
      %v1353 = vsel %vm1128, %v639, 0
      %v1354 = vsel %vm1135, %v640, 0
      %v1355 = vsel %vm1142, %v641, 0
      %v1356 = vsel %vm1149, %v642, 0
      %v1357 = vsel %vm1156, %v643, 0
      %v1358 = vsel %vm1163, %v644, 0
      %v1359 = vsel %vm1170, %v645, 0
      %v1360 = vsel %vm1177, %v646, 0
      %v1361 = vsel %vm1184, %v647, 0
      %v1362 = vsel %vm1191, %v648, 0
      %v1363 = vsel %vm1198, %v649, 0
      %v1364 = vsel %vm1205, %v650, 0
      %v1365 = vsel %vm1212, %v651, 0
      %v1366 = vsel %vm1219, %v652, 0
      %v1367 = vsel %vm1226, %v653, 0
      %v1368 = vsel %vm1233, %v654, 0
      %v1369 = vsel %vm1240, %v655, 0
      %v1370 = vsel %vm1247, %v656, 0
      %v1371 = vsel %vm1254, %v657, 0
      %v1372 = vsel %vm1261, %v658, 0
      %v1373 = vsel %vm1268, %v659, 0
      %v1374 = vsel %vm1275, %v660, 0
      %v1375 = vsel %vm1282, %v661, 0
      %v1376 = vsel %vm1289, %v662, 0
      %v1377 = vsel %vm1296, %v663, 0
      %v1378 = vsel %vm1303, %v664, 0
      %v1379 = vsel %vm1310, %v665, 0
      %v1380 = vsel %vm1317, %v666, 0
      %v1381 = vsel %vm1324, %v667, 0
      %v1382 = vsel %vm1331, %v668, 0
      %v1383 = vsel %vm1338, %v669, 0
      %v1384 = vsel %vm1345, %v670, 0
      %v1385 = vsel %vm1352, %v671, 0
      %v1386 = vld [vmem:[%s3] sm:$0xf]
      %v1387 = vld [vmem:[%s3 + $0x4] sm:$0xf]
      %v1388 = vld [vmem:[%s3 + $0x8] sm:$0xf]
      %v1389 = vld [vmem:[%s3 + $0xc] sm:$0xf]
      %v1390 = vld [vmem:[%s3 + $0x10] sm:$0xf]
      %v1391 = vld [vmem:[%s3 + $0x14] sm:$0xf]
      %v1392 = vld [vmem:[%s3 + $0x18] sm:$0xf]
      %v1393 = vld [vmem:[%s3 + $0x1c] sm:$0xf]
      %v1394 = vld [vmem:[%s3 + $0x20] sm:$0xf]
      %v1395 = vld [vmem:[%s3 + $0x24] sm:$0xf]
      %v1396 = vld [vmem:[%s3 + $0x28] sm:$0xf]
      %v1397 = vld [vmem:[%s3 + $0x2c] sm:$0xf]
      %v1398 = vld [vmem:[%s3 + $0x30] sm:$0xf]
      %v1399 = vld [vmem:[%s3 + $0x34] sm:$0xf]
      %v1400 = vld [vmem:[%s3 + $0x38] sm:$0xf]
      %v1401 = vld [vmem:[%s3 + $0x3c] sm:$0xf]
      %s1402 = scalar_lea.vmem %s3, 64
      %v1403 = vld [vmem:[%s1402] sm:$0xf]
      %v1404 = vld [vmem:[%s1402 + $0x4] sm:$0xf]
      %v1405 = vld [vmem:[%s1402 + $0x8] sm:$0xf]
      %v1406 = vld [vmem:[%s1402 + $0xc] sm:$0xf]
      %v1407 = vld [vmem:[%s1402 + $0x10] sm:$0xf]
      %v1408 = vld [vmem:[%s1402 + $0x14] sm:$0xf]
      %v1409 = vld [vmem:[%s1402 + $0x18] sm:$0xf]
      %v1410 = vld [vmem:[%s1402 + $0x1c] sm:$0xf]
      %v1411 = vld [vmem:[%s1402 + $0x20] sm:$0xf]
      %v1412 = vld [vmem:[%s1402 + $0x24] sm:$0xf]
      %v1413 = vld [vmem:[%s1402 + $0x28] sm:$0xf]
      %v1414 = vld [vmem:[%s1402 + $0x2c] sm:$0xf]
      %v1415 = vld [vmem:[%s1402 + $0x30] sm:$0xf]
      %v1416 = vld [vmem:[%s1402 + $0x34] sm:$0xf]
      %v1417 = vld [vmem:[%s1402 + $0x38] sm:$0xf]
      %v1418 = vld [vmem:[%s1402 + $0x3c] sm:$0xf]
      %v1451 = vunpack.c.l.b16 %v640
      %v1452 = vunpack.c.l.b16 %v641
      %v1453 = vunpack.c.l.b16 %v642
      %v1454 = vunpack.c.l.b16 %v643
      %v1455 = vunpack.c.l.b16 %v644
      %v1456 = vunpack.c.l.b16 %v645
      %v1457 = vunpack.c.l.b16 %v646
      %v1458 = vunpack.c.l.b16 %v647
      %v1459 = vunpack.c.l.b16 %v648
      %v1460 = vunpack.c.l.b16 %v649
      %v1461 = vunpack.c.l.b16 %v650
      %v1462 = vunpack.c.l.b16 %v651
      %v1463 = vunpack.c.l.b16 %v652
      %v1464 = vunpack.c.l.b16 %v653
      %v1465 = vunpack.c.l.b16 %v654
      %v1466 = vunpack.c.l.b16 %v655
      %v1467 = vunpack.c.l.b16 %v656
      %v1468 = vunpack.c.l.b16 %v657
      %v1469 = vunpack.c.l.b16 %v658
      %v1470 = vunpack.c.l.b16 %v659
      %v1471 = vunpack.c.l.b16 %v660
      %v1472 = vunpack.c.l.b16 %v661
      %v1473 = vunpack.c.l.b16 %v662
      %v1474 = vunpack.c.l.b16 %v663
      %v1475 = vunpack.c.l.b16 %v664
      %v1476 = vunpack.c.l.b16 %v665
      %v1477 = vunpack.c.l.b16 %v666
      %v1478 = vunpack.c.l.b16 %v667
      %v1479 = vunpack.c.l.b16 %v668
      %v1480 = vunpack.c.l.b16 %v669
      %v1481 = vunpack.c.l.b16 %v670
      %v1482 = vunpack.c.l.b16 %v671
      %v1483 = vpack.c.b16 %v1452, %v1451
      %v1484 = vpack.c.b16 %v1454, %v1453
      %v1485 = vpack.c.b16 %v1456, %v1455
      %v1486 = vpack.c.b16 %v1458, %v1457
      %v1487 = vpack.c.b16 %v1460, %v1459
      %v1488 = vpack.c.b16 %v1462, %v1461
      %v1489 = vpack.c.b16 %v1464, %v1463
      %v1490 = vpack.c.b16 %v1466, %v1465
      %v1491 = vpack.c.b16 %v1468, %v1467
      %v1492 = vpack.c.b16 %v1470, %v1469
      %v1493 = vpack.c.b16 %v1472, %v1471
      %v1494 = vpack.c.b16 %v1474, %v1473
      %v1495 = vpack.c.b16 %v1476, %v1475
      %v1496 = vpack.c.b16 %v1478, %v1477
      %v1497 = vpack.c.b16 %v1480, %v1479
      %v1498 = vpack.c.b16 %v1482, %v1481
      %v1531 = vunpack.c.l.b16 %v1403
      %v1532 = vunpack.c.l.b16 %v1404
      %v1533 = vunpack.c.l.b16 %v1405
      %v1534 = vunpack.c.l.b16 %v1406
      %v1535 = vunpack.c.l.b16 %v1407
      %v1536 = vunpack.c.l.b16 %v1408
      %v1537 = vunpack.c.l.b16 %v1409
      %v1538 = vunpack.c.l.b16 %v1410
      %v1539 = vunpack.c.l.b16 %v1411
      %v1540 = vunpack.c.l.b16 %v1412
      %v1541 = vunpack.c.l.b16 %v1413
      %v1542 = vunpack.c.l.b16 %v1414
      %v1543 = vunpack.c.l.b16 %v1415
      %v1544 = vunpack.c.l.b16 %v1416
      %v1545 = vunpack.c.l.b16 %v1417
      %v1546 = vunpack.c.l.b16 %v1418
      %v1547 = vpack.c.b16 %v1532, %v1531
      %v1548 = vpack.c.b16 %v1534, %v1533
      %v1549 = vpack.c.b16 %v1536, %v1535
      %v1550 = vpack.c.b16 %v1538, %v1537
      %v1551 = vpack.c.b16 %v1540, %v1539
      %v1552 = vpack.c.b16 %v1542, %v1541
      %v1553 = vpack.c.b16 %v1544, %v1543
      %v1554 = vpack.c.b16 %v1546, %v1545
      %1563 = vmatpush.bf16.msra.mxu0 %v1554
      %1564 = vmatpush.bf16.msra.mxu0 %v1553
      %1565 = vmatpush.bf16.msra.mxu0 %v1552
      %1566 = vmatpush.bf16.msra.mxu0 %v1551
      %1567 = vmatpush.bf16.msra.mxu0 %v1550
      %1568 = vmatpush.bf16.msra.mxu0 %v1549
      %1569 = vmatpush.bf16.msra.mxu0 %v1548
      %1570 = vmatpush.bf16.msra.mxu0 %v1547
      %1571 = vmatmul.bf16.gmra.mxu0 %v1483
      %v1572 = vpop.f32.mrf.mxu0
      %v1573 = vadd.f32 0.0, %v1572
      %v1574 = vpop.f32.mrf.mxu0
      %v1575 = vadd.f32 0.0, %v1574
      %1576 = vmatmul.bf16.gmra.mxu0 %v1484
      %v1577 = vpop.f32.mrf.mxu0
      %v1578 = vadd.f32 0.0, %v1577
      %v1579 = vpop.f32.mrf.mxu0
      %v1580 = vadd.f32 0.0, %v1579
      %1581 = vmatmul.bf16.gmra.mxu0 %v1485
      %v1582 = vpop.f32.mrf.mxu0
      %v1583 = vadd.f32 0.0, %v1582
      %v1584 = vpop.f32.mrf.mxu0
      %v1585 = vadd.f32 0.0, %v1584
      %1586 = vmatmul.bf16.gmra.mxu0 %v1486
      %v1587 = vpop.f32.mrf.mxu0
      %v1588 = vadd.f32 0.0, %v1587
      %v1589 = vpop.f32.mrf.mxu0
      %v1590 = vadd.f32 0.0, %v1589
      %1591 = vmatmul.bf16.gmra.mxu0 %v1487
      %v1592 = vpop.f32.mrf.mxu0
      %v1593 = vadd.f32 0.0, %v1592
      %v1594 = vpop.f32.mrf.mxu0
      %v1595 = vadd.f32 0.0, %v1594
      %1596 = vmatmul.bf16.gmra.mxu0 %v1488
      %v1597 = vpop.f32.mrf.mxu0
      %v1598 = vadd.f32 0.0, %v1597
      %v1599 = vpop.f32.mrf.mxu0
      %v1600 = vadd.f32 0.0, %v1599
      %1601 = vmatmul.bf16.gmra.mxu0 %v1489
      %v1602 = vpop.f32.mrf.mxu0
      %v1603 = vadd.f32 0.0, %v1602
      %v1604 = vpop.f32.mrf.mxu0
      %v1605 = vadd.f32 0.0, %v1604
      %1606 = vmatmul.bf16.gmra.mxu0 %v1490
      %v1607 = vpop.f32.mrf.mxu0
      %v1608 = vadd.f32 0.0, %v1607
      %v1609 = vpop.f32.mrf.mxu0
      %v1610 = vadd.f32 0.0, %v1609
      %1611 = vmatmul.bf16.gmra.mxu0 %v1491
      %v1612 = vpop.f32.mrf.mxu0
      %v1613 = vadd.f32 0.0, %v1612
      %v1614 = vpop.f32.mrf.mxu0
      %v1615 = vadd.f32 0.0, %v1614
      %1616 = vmatmul.bf16.gmra.mxu0 %v1492
      %v1617 = vpop.f32.mrf.mxu0
      %v1618 = vadd.f32 0.0, %v1617
      %v1619 = vpop.f32.mrf.mxu0
      %v1620 = vadd.f32 0.0, %v1619
      %1621 = vmatmul.bf16.gmra.mxu0 %v1493
      %v1622 = vpop.f32.mrf.mxu0
      %v1623 = vadd.f32 0.0, %v1622
      %v1624 = vpop.f32.mrf.mxu0
      %v1625 = vadd.f32 0.0, %v1624
      %1626 = vmatmul.bf16.gmra.mxu0 %v1494
      %v1627 = vpop.f32.mrf.mxu0
      %v1628 = vadd.f32 0.0, %v1627
      %v1629 = vpop.f32.mrf.mxu0
      %v1630 = vadd.f32 0.0, %v1629
      %1631 = vmatmul.bf16.gmra.mxu0 %v1495
      %v1632 = vpop.f32.mrf.mxu0
      %v1633 = vadd.f32 0.0, %v1632
      %v1634 = vpop.f32.mrf.mxu0
      %v1635 = vadd.f32 0.0, %v1634
      %1636 = vmatmul.bf16.gmra.mxu0 %v1496
      %v1637 = vpop.f32.mrf.mxu0
      %v1638 = vadd.f32 0.0, %v1637
      %v1639 = vpop.f32.mrf.mxu0
      %v1640 = vadd.f32 0.0, %v1639
      %1641 = vmatmul.bf16.gmra.mxu0 %v1497
      %v1642 = vpop.f32.mrf.mxu0
      %v1643 = vadd.f32 0.0, %v1642
      %v1644 = vpop.f32.mrf.mxu0
      %v1645 = vadd.f32 0.0, %v1644
      %1646 = vmatmul.bf16.gmra.mxu0 %v1498
      %v1647 = vpop.f32.mrf.mxu0
      %v1648 = vadd.f32 0.0, %v1647
      %v1649 = vpop.f32.mrf.mxu0
      %v1650 = vadd.f32 0.0, %v1649
      %1651 = vdwg.mxu0
      %v1685 = vunpack.c.l.b16 %v1353
      %v1686 = vunpack.c.l.b16 %v1354
      %v1687 = vunpack.c.l.b16 %v1355
      %v1688 = vunpack.c.l.b16 %v1356
      %v1689 = vunpack.c.l.b16 %v1357
      %v1690 = vunpack.c.l.b16 %v1358
      %v1691 = vunpack.c.l.b16 %v1359
      %v1692 = vunpack.c.l.b16 %v1360
      %v1693 = vunpack.c.l.b16 %v1361
      %v1694 = vunpack.c.l.b16 %v1362
      %v1695 = vunpack.c.l.b16 %v1363
      %v1696 = vunpack.c.l.b16 %v1364
      %v1697 = vunpack.c.l.b16 %v1365
      %v1698 = vunpack.c.l.b16 %v1366
      %v1699 = vunpack.c.l.b16 %v1367
      %v1700 = vunpack.c.l.b16 %v1368
      %v1701 = vunpack.c.l.b16 %v1369
      %v1702 = vunpack.c.l.b16 %v1370
      %v1703 = vunpack.c.l.b16 %v1371
      %v1704 = vunpack.c.l.b16 %v1372
      %v1705 = vunpack.c.l.b16 %v1373
      %v1706 = vunpack.c.l.b16 %v1374
      %v1707 = vunpack.c.l.b16 %v1375
      %v1708 = vunpack.c.l.b16 %v1376
      %v1709 = vunpack.c.l.b16 %v1377
      %v1710 = vunpack.c.l.b16 %v1378
      %v1711 = vunpack.c.l.b16 %v1379
      %v1712 = vunpack.c.l.b16 %v1380
      %v1713 = vunpack.c.l.b16 %v1381
      %v1714 = vunpack.c.l.b16 %v1382
      %v1715 = vunpack.c.l.b16 %v1383
      %v1716 = vunpack.c.l.b16 %v1384
      %v1717 = vunpack.c.l.b16 %v1385
      %v1718 = vpack.c.b16 %v1686, %v1685
      %v1719 = vpack.c.b16 %v1688, %v1687
      %v1720 = vpack.c.b16 %v1690, %v1689
      %v1721 = vpack.c.b16 %v1692, %v1691
      %v1722 = vpack.c.b16 %v1694, %v1693
      %v1723 = vpack.c.b16 %v1696, %v1695
      %v1724 = vpack.c.b16 %v1698, %v1697
      %v1725 = vpack.c.b16 %v1700, %v1699
      %v1726 = vpack.c.b16 %v1702, %v1701
      %v1727 = vpack.c.b16 %v1704, %v1703
      %v1728 = vpack.c.b16 %v1706, %v1705
      %v1729 = vpack.c.b16 %v1708, %v1707
      %v1730 = vpack.c.b16 %v1710, %v1709
      %v1731 = vpack.c.b16 %v1712, %v1711
      %v1732 = vpack.c.b16 %v1714, %v1713
      %v1733 = vpack.c.b16 %v1716, %v1715
      %v1734 = vpack.c.b16 %v1717, %v1717
      %vm1735 = vsmask.f32 4352
      %v1737 = vshrl.u32 %v1718, 16
      %v1739 = vrot.slane %v1737, 3
      %v1740 = vshll.u32 %v1718, 16
      %v1742 = vrot.slane %v1740, 4
      %v1743 = vor.u32 %v1739, %v1742
      %v1745 = vshrl.u32 %v1719, 16
      %v1747 = vrot.slane %v1745, 3
      %v1748 = vshll.u32 %v1719, 16
      %v1750 = vrot.slane %v1748, 4
      %v1751 = vor.u32 %v1747, %v1750
      %v1752 = vsel %vm1735, %v1743, %v1751
      %v1754 = vshrl.u32 %v1720, 16
      %v1756 = vrot.slane %v1754, 3
      %v1757 = vshll.u32 %v1720, 16
      %v1759 = vrot.slane %v1757, 4
      %v1760 = vor.u32 %v1756, %v1759
      %v1761 = vsel %vm1735, %v1751, %v1760
      %v1763 = vshrl.u32 %v1721, 16
      %v1765 = vrot.slane %v1763, 3
      %v1766 = vshll.u32 %v1721, 16
      %v1768 = vrot.slane %v1766, 4
      %v1769 = vor.u32 %v1765, %v1768
      %v1770 = vsel %vm1735, %v1760, %v1769
      %v1772 = vshrl.u32 %v1722, 16
      %v1774 = vrot.slane %v1772, 3
      %v1775 = vshll.u32 %v1722, 16
      %v1777 = vrot.slane %v1775, 4
      %v1778 = vor.u32 %v1774, %v1777
      %v1779 = vsel %vm1735, %v1769, %v1778
      %v1781 = vshrl.u32 %v1723, 16
      %v1783 = vrot.slane %v1781, 3
      %v1784 = vshll.u32 %v1723, 16
      %v1786 = vrot.slane %v1784, 4
      %v1787 = vor.u32 %v1783, %v1786
      %v1788 = vsel %vm1735, %v1778, %v1787
      %v1790 = vshrl.u32 %v1724, 16
      %v1792 = vrot.slane %v1790, 3
      %v1793 = vshll.u32 %v1724, 16
      %v1795 = vrot.slane %v1793, 4
      %v1796 = vor.u32 %v1792, %v1795
      %v1797 = vsel %vm1735, %v1787, %v1796
      %v1799 = vshrl.u32 %v1725, 16
      %v1801 = vrot.slane %v1799, 3
      %v1802 = vshll.u32 %v1725, 16
      %v1804 = vrot.slane %v1802, 4
      %v1805 = vor.u32 %v1801, %v1804
      %v1806 = vsel %vm1735, %v1796, %v1805
      %v1808 = vshrl.u32 %v1726, 16
      %v1810 = vrot.slane %v1808, 3
      %v1811 = vshll.u32 %v1726, 16
      %v1813 = vrot.slane %v1811, 4
      %v1814 = vor.u32 %v1810, %v1813
      %v1815 = vsel %vm1735, %v1805, %v1814
      %v1817 = vshrl.u32 %v1727, 16
      %v1819 = vrot.slane %v1817, 3
      %v1820 = vshll.u32 %v1727, 16
      %v1822 = vrot.slane %v1820, 4
      %v1823 = vor.u32 %v1819, %v1822
      %v1824 = vsel %vm1735, %v1814, %v1823
      %v1826 = vshrl.u32 %v1728, 16
      %v1828 = vrot.slane %v1826, 3
      %v1829 = vshll.u32 %v1728, 16
      %v1831 = vrot.slane %v1829, 4
      %v1832 = vor.u32 %v1828, %v1831
      %v1833 = vsel %vm1735, %v1823, %v1832
      %v1835 = vshrl.u32 %v1729, 16
      %v1837 = vrot.slane %v1835, 3
      %v1838 = vshll.u32 %v1729, 16
      %v1840 = vrot.slane %v1838, 4
      %v1841 = vor.u32 %v1837, %v1840
      %v1842 = vsel %vm1735, %v1832, %v1841
      %v1844 = vshrl.u32 %v1730, 16
      %v1846 = vrot.slane %v1844, 3
      %v1847 = vshll.u32 %v1730, 16
      %v1849 = vrot.slane %v1847, 4
      %v1850 = vor.u32 %v1846, %v1849
      %v1851 = vsel %vm1735, %v1841, %v1850
      %v1853 = vshrl.u32 %v1731, 16
      %v1855 = vrot.slane %v1853, 3
      %v1856 = vshll.u32 %v1731, 16
      %v1858 = vrot.slane %v1856, 4
      %v1859 = vor.u32 %v1855, %v1858
      %v1860 = vsel %vm1735, %v1850, %v1859
      %v1862 = vshrl.u32 %v1732, 16
      %v1864 = vrot.slane %v1862, 3
      %v1865 = vshll.u32 %v1732, 16
      %v1867 = vrot.slane %v1865, 4
      %v1868 = vor.u32 %v1864, %v1867
      %v1869 = vsel %vm1735, %v1859, %v1868
      %v1871 = vshrl.u32 %v1733, 16
      %v1873 = vrot.slane %v1871, 3
      %v1874 = vshll.u32 %v1733, 16
      %v1876 = vrot.slane %v1874, 4
      %v1877 = vor.u32 %v1873, %v1876
      %v1878 = vsel %vm1735, %v1868, %v1877
      %v1880 = vshrl.u32 %v1734, 16
      %v1882 = vrot.slane %v1880, 3
      %v1883 = vshll.u32 %v1734, 16
      %v1885 = vrot.slane %v1883, 4
      %v1886 = vor.u32 %v1882, %v1885
      %v1887 = vsel %vm1735, %v1877, %v1886
      %v1920 = vunpack.c.l.b16 %v1386
      %v1921 = vunpack.c.l.b16 %v1387
      %v1922 = vunpack.c.l.b16 %v1388
      %v1923 = vunpack.c.l.b16 %v1389
      %v1924 = vunpack.c.l.b16 %v1390
      %v1925 = vunpack.c.l.b16 %v1391
      %v1926 = vunpack.c.l.b16 %v1392
      %v1927 = vunpack.c.l.b16 %v1393
      %v1928 = vunpack.c.l.b16 %v1394
      %v1929 = vunpack.c.l.b16 %v1395
      %v1930 = vunpack.c.l.b16 %v1396
      %v1931 = vunpack.c.l.b16 %v1397
      %v1932 = vunpack.c.l.b16 %v1398
      %v1933 = vunpack.c.l.b16 %v1399
      %v1934 = vunpack.c.l.b16 %v1400
      %v1935 = vunpack.c.l.b16 %v1401
      %v1936 = vpack.c.b16 %v1921, %v1920
      %v1937 = vpack.c.b16 %v1923, %v1922
      %v1938 = vpack.c.b16 %v1925, %v1924
      %v1939 = vpack.c.b16 %v1927, %v1926
      %v1940 = vpack.c.b16 %v1929, %v1928
      %v1941 = vpack.c.b16 %v1931, %v1930
      %v1942 = vpack.c.b16 %v1933, %v1932
      %v1943 = vpack.c.b16 %v1935, %v1934
      %1952 = vmatpush.bf16.msra.mxu0 %v1943
      %1953 = vmatpush.bf16.msra.mxu0 %v1942
      %1954 = vmatpush.bf16.msra.mxu0 %v1941
      %1955 = vmatpush.bf16.msra.mxu0 %v1940
      %1956 = vmatpush.bf16.msra.mxu0 %v1939
      %1957 = vmatpush.bf16.msra.mxu0 %v1938
      %1958 = vmatpush.bf16.msra.mxu0 %v1937
      %1959 = vmatpush.bf16.msra.mxu0 %v1936
      %1960 = vmatmul.bf16.gmra.mxu0 %v1752
      %v1961 = vpop.f32.mrf.mxu0
      %v1962 = vadd.f32 %v1573, %v1961
      %v1963 = vpop.f32.mrf.mxu0
      %v1964 = vadd.f32 %v1575, %v1963
      %1965 = vmatmul.bf16.gmra.mxu0 %v1761
      %v1966 = vpop.f32.mrf.mxu0
      %v1967 = vadd.f32 %v1578, %v1966
      %v1968 = vpop.f32.mrf.mxu0
      %v1969 = vadd.f32 %v1580, %v1968
      %1970 = vmatmul.bf16.gmra.mxu0 %v1770
      %v1971 = vpop.f32.mrf.mxu0
      %v1972 = vadd.f32 %v1583, %v1971
      %v1973 = vpop.f32.mrf.mxu0
      %v1974 = vadd.f32 %v1585, %v1973
      %1975 = vmatmul.bf16.gmra.mxu0 %v1779
      %v1976 = vpop.f32.mrf.mxu0
      %v1977 = vadd.f32 %v1588, %v1976
      %v1978 = vpop.f32.mrf.mxu0
      %v1979 = vadd.f32 %v1590, %v1978
      %1980 = vmatmul.bf16.gmra.mxu0 %v1788
      %v1981 = vpop.f32.mrf.mxu0
      %v1982 = vadd.f32 %v1593, %v1981
      %v1983 = vpop.f32.mrf.mxu0
      %v1984 = vadd.f32 %v1595, %v1983
      %1985 = vmatmul.bf16.gmra.mxu0 %v1797
      %v1986 = vpop.f32.mrf.mxu0
      %v1987 = vadd.f32 %v1598, %v1986
      %v1988 = vpop.f32.mrf.mxu0
      %v1989 = vadd.f32 %v1600, %v1988
      %1990 = vmatmul.bf16.gmra.mxu0 %v1806
      %v1991 = vpop.f32.mrf.mxu0
      %v1992 = vadd.f32 %v1603, %v1991
      %v1993 = vpop.f32.mrf.mxu0
      %v1994 = vadd.f32 %v1605, %v1993
      %1995 = vmatmul.bf16.gmra.mxu0 %v1815
      %v1996 = vpop.f32.mrf.mxu0
      %v1997 = vadd.f32 %v1608, %v1996
      %v1998 = vpop.f32.mrf.mxu0
      %v1999 = vadd.f32 %v1610, %v1998
      %2000 = vmatmul.bf16.gmra.mxu0 %v1824
      %v2001 = vpop.f32.mrf.mxu0
      %v2002 = vadd.f32 %v1613, %v2001
      %v2003 = vpop.f32.mrf.mxu0
      %v2004 = vadd.f32 %v1615, %v2003
      %2005 = vmatmul.bf16.gmra.mxu0 %v1833
      %v2006 = vpop.f32.mrf.mxu0
      %v2007 = vadd.f32 %v1618, %v2006
      %v2008 = vpop.f32.mrf.mxu0
      %v2009 = vadd.f32 %v1620, %v2008
      %2010 = vmatmul.bf16.gmra.mxu0 %v1842
      %v2011 = vpop.f32.mrf.mxu0
      %v2012 = vadd.f32 %v1623, %v2011
      %v2013 = vpop.f32.mrf.mxu0
      %v2014 = vadd.f32 %v1625, %v2013
      %2015 = vmatmul.bf16.gmra.mxu0 %v1851
      %v2016 = vpop.f32.mrf.mxu0
      %v2017 = vadd.f32 %v1628, %v2016
      %v2018 = vpop.f32.mrf.mxu0
      %v2019 = vadd.f32 %v1630, %v2018
      %2020 = vmatmul.bf16.gmra.mxu0 %v1860
      %v2021 = vpop.f32.mrf.mxu0
      %v2022 = vadd.f32 %v1633, %v2021
      %v2023 = vpop.f32.mrf.mxu0
      %v2024 = vadd.f32 %v1635, %v2023
      %2025 = vmatmul.bf16.gmra.mxu0 %v1869
      %v2026 = vpop.f32.mrf.mxu0
      %v2027 = vadd.f32 %v1638, %v2026
      %v2028 = vpop.f32.mrf.mxu0
      %v2029 = vadd.f32 %v1640, %v2028
      %2030 = vmatmul.bf16.gmra.mxu0 %v1878
      %v2031 = vpop.f32.mrf.mxu0
      %v2032 = vadd.f32 %v1643, %v2031
      %v2033 = vpop.f32.mrf.mxu0
      %v2034 = vadd.f32 %v1645, %v2033
      %2035 = vmatmul.bf16.gmra.mxu0 %v1887
      %v2036 = vpop.f32.mrf.mxu0
      %v2037 = vadd.f32 %v1648, %v2036
      %v2038 = vpop.f32.mrf.mxu0
      %v2039 = vadd.f32 %v1650, %v2038
      %2040 = vdwg.mxu0
      %v2041 = vld [vmem:[#allocation2 + $0x4] sm:$0xf]
      %v2042 = vld [vmem:[#allocation2 + $0x8] sm:$0xf]
      %v2043 = vld [vmem:[#allocation2 + $0xc] sm:$0xf]
      %v2044 = vld [vmem:[#allocation2 + $0x10] sm:$0xf]
      %v2045 = vld [vmem:[#allocation2 + $0x14] sm:$0xf]
      %v2046 = vld [vmem:[#allocation2 + $0x18] sm:$0xf]
      %v2047 = vld [vmem:[#allocation2 + $0x1c] sm:$0xf]
      %v2048 = vld [vmem:[#allocation2 + $0x20] sm:$0xf]
      %v2049 = vld [vmem:[#allocation2 + $0x24] sm:$0xf]
      %v2050 = vld [vmem:[#allocation2 + $0x28] sm:$0xf]
      %v2051 = vld [vmem:[#allocation2 + $0x2c] sm:$0xf]
      %v2052 = vld [vmem:[#allocation2 + $0x30] sm:$0xf]
      %v2053 = vld [vmem:[#allocation2 + $0x34] sm:$0xf]
      %v2054 = vld [vmem:[#allocation2 + $0x38] sm:$0xf]
      %v2055 = vld [vmem:[#allocation2 + $0x3c] sm:$0xf]
      %v2056 = vld [vmem:[#allocation2 + $0x40] sm:$0xf]
      %v2057 = vld [vmem:[#allocation2 + $0x44] sm:$0xf]
      %v2058 = vld [vmem:[#allocation2 + $0x48] sm:$0xf]
      %v2059 = vld [vmem:[#allocation2 + $0x4c] sm:$0xf]
      %v2060 = vld [vmem:[#allocation2 + $0x50] sm:$0xf]
      %v2061 = vld [vmem:[#allocation2 + $0x54] sm:$0xf]
      %v2062 = vld [vmem:[#allocation2 + $0x58] sm:$0xf]
      %v2063 = vld [vmem:[#allocation2 + $0x5c] sm:$0xf]
      %v2064 = vld [vmem:[#allocation2 + $0x60] sm:$0xf]
      %v2065 = vld [vmem:[#allocation2 + $0x64] sm:$0xf]
      %v2066 = vld [vmem:[#allocation2 + $0x68] sm:$0xf]
      %v2067 = vld [vmem:[#allocation2 + $0x6c] sm:$0xf]
      %v2068 = vld [vmem:[#allocation2 + $0x70] sm:$0xf]
      %v2069 = vld [vmem:[#allocation2 + $0x74] sm:$0xf]
      %v2070 = vld [vmem:[#allocation2 + $0x78] sm:$0xf]
      %v2071 = vld [vmem:[#allocation2 + $0x7c] sm:$0xf]
      %v2072 = vld [vmem:[#allocation2 + $0x80] sm:$0xf]
      %v2073 = vld [vmem:[#allocation2 + $0x84] sm:$0x1]
      %v2074 = vsel %vm607, 1, 0
      %v2075 = vsel %vm608, 1, 0
      %v2076 = vsel %vm609, 1, 0
      %v2077 = vsel %vm610, 1, 0
      %v2078 = vsel %vm611, 1, 0
      %v2079 = vsel %vm612, 1, 0
      %v2080 = vsel %vm613, 1, 0
      %v2081 = vsel %vm614, 1, 0
      %v2082 = vsel %vm615, 1, 0
      %v2083 = vsel %vm616, 1, 0
      %v2084 = vsel %vm617, 1, 0
      %v2085 = vsel %vm618, 1, 0
      %v2086 = vsel %vm619, 1, 0
      %v2087 = vsel %vm620, 1, 0
      %v2088 = vsel %vm621, 1, 0
      %v2089 = vsel %vm622, 1, 0
      %v2090 = vsel %vm623, 1, 0
      %v2091 = vsel %vm624, 1, 0
      %v2092 = vsel %vm625, 1, 0
      %v2093 = vsel %vm626, 1, 0
      %v2094 = vsel %vm627, 1, 0
      %v2095 = vsel %vm628, 1, 0
      %v2096 = vsel %vm629, 1, 0
      %v2097 = vsel %vm630, 1, 0
      %v2098 = vsel %vm631, 1, 0
      %v2099 = vsel %vm632, 1, 0
      %v2100 = vsel %vm633, 1, 0
      %v2101 = vsel %vm634, 1, 0
      %v2102 = vsel %vm635, 1, 0
      %v2103 = vsel %vm636, 1, 0
      %v2104 = vsel %vm637, 1, 0
      %v2105 = vsel %vm638, 1, 0
      %vm2106 = vcmp.eq.s32.totalorder %v2074, 1
      %vm2107 = vcmp.eq.s32.totalorder %v2075, 1
      %vm2108 = vcmp.eq.s32.totalorder %v2076, 1
      %vm2109 = vcmp.eq.s32.totalorder %v2077, 1
      %vm2110 = vcmp.eq.s32.totalorder %v2078, 1
      %vm2111 = vcmp.eq.s32.totalorder %v2079, 1
      %vm2112 = vcmp.eq.s32.totalorder %v2080, 1
      %vm2113 = vcmp.eq.s32.totalorder %v2081, 1
      %vm2114 = vcmp.eq.s32.totalorder %v2082, 1
      %vm2115 = vcmp.eq.s32.totalorder %v2083, 1
      %vm2116 = vcmp.eq.s32.totalorder %v2084, 1
      %vm2117 = vcmp.eq.s32.totalorder %v2085, 1
      %vm2118 = vcmp.eq.s32.totalorder %v2086, 1
      %vm2119 = vcmp.eq.s32.totalorder %v2087, 1
      %vm2120 = vcmp.eq.s32.totalorder %v2088, 1
      %vm2121 = vcmp.eq.s32.totalorder %v2089, 1
      %vm2122 = vcmp.eq.s32.totalorder %v2090, 1
      %vm2123 = vcmp.eq.s32.totalorder %v2091, 1
      %vm2124 = vcmp.eq.s32.totalorder %v2092, 1
      %vm2125 = vcmp.eq.s32.totalorder %v2093, 1
      %vm2126 = vcmp.eq.s32.totalorder %v2094, 1
      %vm2127 = vcmp.eq.s32.totalorder %v2095, 1
      %vm2128 = vcmp.eq.s32.totalorder %v2096, 1
      %vm2129 = vcmp.eq.s32.totalorder %v2097, 1
      %vm2130 = vcmp.eq.s32.totalorder %v2098, 1
      %vm2131 = vcmp.eq.s32.totalorder %v2099, 1
      %vm2132 = vcmp.eq.s32.totalorder %v2100, 1
      %vm2133 = vcmp.eq.s32.totalorder %v2101, 1
      %vm2134 = vcmp.eq.s32.totalorder %v2102, 1
      %vm2135 = vcmp.eq.s32.totalorder %v2103, 1
      %vm2136 = vcmp.eq.s32.totalorder %v2104, 1
      %vm2137 = vcmp.eq.s32.totalorder %v2105, 1
      %vm2138 = vmpackc.low %vm2106, %vm2106
      %vm2139 = vmpackc.low %vm2107, %vm2107
      %vm2140 = vmpackc.low %vm2108, %vm2108
      %vm2141 = vmpackc.low %vm2109, %vm2109
      %vm2142 = vmpackc.low %vm2110, %vm2110
      %vm2143 = vmpackc.low %vm2111, %vm2111
      %vm2144 = vmpackc.low %vm2112, %vm2112
      %vm2145 = vmpackc.low %vm2113, %vm2113
      %vm2146 = vmpackc.low %vm2114, %vm2114
      %vm2147 = vmpackc.low %vm2115, %vm2115
      %vm2148 = vmpackc.low %vm2116, %vm2116
      %vm2149 = vmpackc.low %vm2117, %vm2117
      %vm2150 = vmpackc.low %vm2118, %vm2118
      %vm2151 = vmpackc.low %vm2119, %vm2119
      %vm2152 = vmpackc.low %vm2120, %vm2120
      %vm2153 = vmpackc.low %vm2121, %vm2121
      %vm2154 = vmpackc.low %vm2122, %vm2122
      %vm2155 = vmpackc.low %vm2123, %vm2123
      %vm2156 = vmpackc.low %vm2124, %vm2124
      %vm2157 = vmpackc.low %vm2125, %vm2125
      %vm2158 = vmpackc.low %vm2126, %vm2126
      %vm2159 = vmpackc.low %vm2127, %vm2127
      %vm2160 = vmpackc.low %vm2128, %vm2128
      %vm2161 = vmpackc.low %vm2129, %vm2129
      %vm2162 = vmpackc.low %vm2130, %vm2130
      %vm2163 = vmpackc.low %vm2131, %vm2131
      %vm2164 = vmpackc.low %vm2132, %vm2132
      %vm2165 = vmpackc.low %vm2133, %vm2133
      %vm2166 = vmpackc.low %vm2134, %vm2134
      %vm2167 = vmpackc.low %vm2135, %vm2135
      %vm2168 = vmpackc.low %vm2136, %vm2136
      %vm2169 = vmpackc.low %vm2137, %vm2137
      %v2170 = vsel %vm2138, 65537, 0
      %v2171 = vsel %vm2139, 65537, 0
      %v2172 = vsel %vm2140, 65537, 0
      %v2173 = vsel %vm2141, 65537, 0
      %v2174 = vsel %vm2142, 65537, 0
      %v2175 = vsel %vm2143, 65537, 0
      %v2176 = vsel %vm2144, 65537, 0
      %v2177 = vsel %vm2145, 65537, 0
      %v2178 = vsel %vm2146, 65537, 0
      %v2179 = vsel %vm2147, 65537, 0
      %v2180 = vsel %vm2148, 65537, 0
      %v2181 = vsel %vm2149, 65537, 0
      %v2182 = vsel %vm2150, 65537, 0
      %v2183 = vsel %vm2151, 65537, 0
      %v2184 = vsel %vm2152, 65537, 0
      %v2185 = vsel %vm2153, 65537, 0
      %v2186 = vsel %vm2154, 65537, 0
      %v2187 = vsel %vm2155, 65537, 0
      %v2188 = vsel %vm2156, 65537, 0
      %v2189 = vsel %vm2157, 65537, 0
      %v2190 = vsel %vm2158, 65537, 0
      %v2191 = vsel %vm2159, 65537, 0
      %v2192 = vsel %vm2160, 65537, 0
      %v2193 = vsel %vm2161, 65537, 0
      %v2194 = vsel %vm2162, 65537, 0
      %v2195 = vsel %vm2163, 65537, 0
      %v2196 = vsel %vm2164, 65537, 0
      %v2197 = vsel %vm2165, 65537, 0
      %v2198 = vsel %vm2166, 65537, 0
      %v2199 = vsel %vm2167, 65537, 0
      %v2200 = vsel %vm2168, 65537, 0
      %v2201 = vsel %vm2169, 65537, 0
      %vm2202 = vsmask.f32 256
      %vm2203 = vsmask.f32 4368
      %vm2204 = vmor %vm2202, %vm2203
      %v2206 = vshrl.u32 %v2170, 16
      %v2208 = vrot.slane %v2206, 7
      %v2209 = vshll.u32 %v2170, 16
      %v2211 = vor.u32 %v2208, %v2209
      %v2212 = vrot.slane %v2208, 4
      %v2214 = vshrl.u32 %v2171, 16
      %v2216 = vrot.slane %v2214, 7
      %v2217 = vshll.u32 %v2171, 16
      %v2219 = vor.u32 %v2216, %v2217
      %v2220 = vsel %vm2204, %v2212, %v2219
      %v2221 = vrot.slane %v2216, 4
      %v2223 = vshrl.u32 %v2172, 16
      %v2225 = vrot.slane %v2223, 7
      %v2226 = vshll.u32 %v2172, 16
      %v2228 = vor.u32 %v2225, %v2226
      %v2229 = vsel %vm2204, %v2221, %v2228
      %v2230 = vrot.slane %v2225, 4
      %v2232 = vshrl.u32 %v2173, 16
      %v2234 = vrot.slane %v2232, 7
      %v2235 = vshll.u32 %v2173, 16
      %v2237 = vor.u32 %v2234, %v2235
      %v2238 = vsel %vm2204, %v2230, %v2237
      %v2239 = vrot.slane %v2234, 4
      %v2241 = vshrl.u32 %v2174, 16
      %v2243 = vrot.slane %v2241, 7
      %v2244 = vshll.u32 %v2174, 16
      %v2246 = vor.u32 %v2243, %v2244
      %v2247 = vsel %vm2204, %v2239, %v2246
      %v2248 = vrot.slane %v2243, 4
      %v2250 = vshrl.u32 %v2175, 16
      %v2252 = vrot.slane %v2250, 7
      %v2253 = vshll.u32 %v2175, 16
      %v2255 = vor.u32 %v2252, %v2253
      %v2256 = vsel %vm2204, %v2248, %v2255
      %v2257 = vrot.slane %v2252, 4
      %v2259 = vshrl.u32 %v2176, 16
      %v2261 = vrot.slane %v2259, 7
      %v2262 = vshll.u32 %v2176, 16
      %v2264 = vor.u32 %v2261, %v2262
      %v2265 = vsel %vm2204, %v2257, %v2264
      %v2266 = vrot.slane %v2261, 4
      %v2268 = vshrl.u32 %v2177, 16
      %v2270 = vrot.slane %v2268, 7
      %v2271 = vshll.u32 %v2177, 16
      %v2273 = vor.u32 %v2270, %v2271
      %v2274 = vsel %vm2204, %v2266, %v2273
      %v2275 = vrot.slane %v2270, 4
      %v2277 = vshrl.u32 %v2178, 16
      %v2279 = vrot.slane %v2277, 7
      %v2280 = vshll.u32 %v2178, 16
      %v2282 = vor.u32 %v2279, %v2280
      %v2283 = vsel %vm2204, %v2275, %v2282
      %v2284 = vrot.slane %v2279, 4
      %v2286 = vshrl.u32 %v2179, 16
      %v2288 = vrot.slane %v2286, 7
      %v2289 = vshll.u32 %v2179, 16
      %v2291 = vor.u32 %v2288, %v2289
      %v2292 = vsel %vm2204, %v2284, %v2291
      %v2293 = vrot.slane %v2288, 4
      %v2295 = vshrl.u32 %v2180, 16
      %v2297 = vrot.slane %v2295, 7
      %v2298 = vshll.u32 %v2180, 16
      %v2300 = vor.u32 %v2297, %v2298
      %v2301 = vsel %vm2204, %v2293, %v2300
      %v2302 = vrot.slane %v2297, 4
      %v2304 = vshrl.u32 %v2181, 16
      %v2306 = vrot.slane %v2304, 7
      %v2307 = vshll.u32 %v2181, 16
      %v2309 = vor.u32 %v2306, %v2307
      %v2310 = vsel %vm2204, %v2302, %v2309
      %v2311 = vrot.slane %v2306, 4
      %v2313 = vshrl.u32 %v2182, 16
      %v2315 = vrot.slane %v2313, 7
      %v2316 = vshll.u32 %v2182, 16
      %v2318 = vor.u32 %v2315, %v2316
      %v2319 = vsel %vm2204, %v2311, %v2318
      %v2320 = vrot.slane %v2315, 4
      %v2322 = vshrl.u32 %v2183, 16
      %v2324 = vrot.slane %v2322, 7
      %v2325 = vshll.u32 %v2183, 16
      %v2327 = vor.u32 %v2324, %v2325
      %v2328 = vsel %vm2204, %v2320, %v2327
      %v2329 = vrot.slane %v2324, 4
      %v2331 = vshrl.u32 %v2184, 16
      %v2333 = vrot.slane %v2331, 7
      %v2334 = vshll.u32 %v2184, 16
      %v2336 = vor.u32 %v2333, %v2334
      %v2337 = vsel %vm2204, %v2329, %v2336
      %v2338 = vrot.slane %v2333, 4
      %v2340 = vshrl.u32 %v2185, 16
      %v2342 = vrot.slane %v2340, 7
      %v2343 = vshll.u32 %v2185, 16
      %v2345 = vor.u32 %v2342, %v2343
      %v2346 = vsel %vm2204, %v2338, %v2345
      %v2347 = vrot.slane %v2342, 4
      %v2349 = vshrl.u32 %v2186, 16
      %v2351 = vrot.slane %v2349, 7
      %v2352 = vshll.u32 %v2186, 16
      %v2354 = vor.u32 %v2351, %v2352
      %v2355 = vsel %vm2204, %v2347, %v2354
      %v2356 = vrot.slane %v2351, 4
      %v2358 = vshrl.u32 %v2187, 16
      %v2360 = vrot.slane %v2358, 7
      %v2361 = vshll.u32 %v2187, 16
      %v2363 = vor.u32 %v2360, %v2361
      %v2364 = vsel %vm2204, %v2356, %v2363
      %v2365 = vrot.slane %v2360, 4
      %v2367 = vshrl.u32 %v2188, 16
      %v2369 = vrot.slane %v2367, 7
      %v2370 = vshll.u32 %v2188, 16
      %v2372 = vor.u32 %v2369, %v2370
      %v2373 = vsel %vm2204, %v2365, %v2372
      %v2374 = vrot.slane %v2369, 4
      %v2376 = vshrl.u32 %v2189, 16
      %v2378 = vrot.slane %v2376, 7
      %v2379 = vshll.u32 %v2189, 16
      %v2381 = vor.u32 %v2378, %v2379
      %v2382 = vsel %vm2204, %v2374, %v2381
      %v2383 = vrot.slane %v2378, 4
      %v2385 = vshrl.u32 %v2190, 16
      %v2387 = vrot.slane %v2385, 7
      %v2388 = vshll.u32 %v2190, 16
      %v2390 = vor.u32 %v2387, %v2388
      %v2391 = vsel %vm2204, %v2383, %v2390
      %v2392 = vrot.slane %v2387, 4
      %v2394 = vshrl.u32 %v2191, 16
      %v2396 = vrot.slane %v2394, 7
      %v2397 = vshll.u32 %v2191, 16
      %v2399 = vor.u32 %v2396, %v2397
      %v2400 = vsel %vm2204, %v2392, %v2399
      %v2401 = vrot.slane %v2396, 4
      %v2403 = vshrl.u32 %v2192, 16
      %v2405 = vrot.slane %v2403, 7
      %v2406 = vshll.u32 %v2192, 16
      %v2408 = vor.u32 %v2405, %v2406
      %v2409 = vsel %vm2204, %v2401, %v2408
      %v2410 = vrot.slane %v2405, 4
      %v2412 = vshrl.u32 %v2193, 16
      %v2414 = vrot.slane %v2412, 7
      %v2415 = vshll.u32 %v2193, 16
      %v2417 = vor.u32 %v2414, %v2415
      %v2418 = vsel %vm2204, %v2410, %v2417
      %v2419 = vrot.slane %v2414, 4
      %v2421 = vshrl.u32 %v2194, 16
      %v2423 = vrot.slane %v2421, 7
      %v2424 = vshll.u32 %v2194, 16
      %v2426 = vor.u32 %v2423, %v2424
      %v2427 = vsel %vm2204, %v2419, %v2426
      %v2428 = vrot.slane %v2423, 4
      %v2430 = vshrl.u32 %v2195, 16
      %v2432 = vrot.slane %v2430, 7
      %v2433 = vshll.u32 %v2195, 16
      %v2435 = vor.u32 %v2432, %v2433
      %v2436 = vsel %vm2204, %v2428, %v2435
      %v2437 = vrot.slane %v2432, 4
      %v2439 = vshrl.u32 %v2196, 16
      %v2441 = vrot.slane %v2439, 7
      %v2442 = vshll.u32 %v2196, 16
      %v2444 = vor.u32 %v2441, %v2442
      %v2445 = vsel %vm2204, %v2437, %v2444
      %v2446 = vrot.slane %v2441, 4
      %v2448 = vshrl.u32 %v2197, 16
      %v2450 = vrot.slane %v2448, 7
      %v2451 = vshll.u32 %v2197, 16
      %v2453 = vor.u32 %v2450, %v2451
      %v2454 = vsel %vm2204, %v2446, %v2453
      %v2455 = vrot.slane %v2450, 4
      %v2457 = vshrl.u32 %v2198, 16
      %v2459 = vrot.slane %v2457, 7
      %v2460 = vshll.u32 %v2198, 16
      %v2462 = vor.u32 %v2459, %v2460
      %v2463 = vsel %vm2204, %v2455, %v2462
      %v2464 = vrot.slane %v2459, 4
      %v2466 = vshrl.u32 %v2199, 16
      %v2468 = vrot.slane %v2466, 7
      %v2469 = vshll.u32 %v2199, 16
      %v2471 = vor.u32 %v2468, %v2469
      %v2472 = vsel %vm2204, %v2464, %v2471
      %v2473 = vrot.slane %v2468, 4
      %v2475 = vshrl.u32 %v2200, 16
      %v2477 = vrot.slane %v2475, 7
      %v2478 = vshll.u32 %v2200, 16
      %v2480 = vor.u32 %v2477, %v2478
      %v2481 = vsel %vm2204, %v2473, %v2480
      %v2482 = vrot.slane %v2477, 4
      %v2484 = vshrl.u32 %v2201, 16
      %v2486 = vrot.slane %v2484, 7
      %v2487 = vshll.u32 %v2201, 16
      %v2489 = vor.u32 %v2486, %v2487
      %v2490 = vsel %vm2204, %v2482, %v2489
      %v2491 = vrot.slane %v2486, 4
      %v2492 = vunpack.c.l.b16 %v2211
      %v2493 = vunpack.c.h.b16 %v2211
      %v2494 = vunpack.c.l.b16 0
      %v2495 = vunpack.c.h.b16 0
      %vm2496 = vcmp.ne.s32.totalorder %v2492, %v2494
      %vm2497 = vcmp.ne.s32.totalorder %v2493, %v2495
      %vm2498 = vmpackc.low %vm2497, %vm2496
      %v2499 = vunpack.c.l.b16 %v2220
      %v2500 = vunpack.c.h.b16 %v2220
      %v2501 = vunpack.c.l.b16 0
      %v2502 = vunpack.c.h.b16 0
      %vm2503 = vcmp.ne.s32.totalorder %v2499, %v2501
      %vm2504 = vcmp.ne.s32.totalorder %v2500, %v2502
      %vm2505 = vmpackc.low %vm2504, %vm2503
      %v2506 = vunpack.c.l.b16 %v2229
      %v2507 = vunpack.c.h.b16 %v2229
      %v2508 = vunpack.c.l.b16 0
      %v2509 = vunpack.c.h.b16 0
      %vm2510 = vcmp.ne.s32.totalorder %v2506, %v2508
      %vm2511 = vcmp.ne.s32.totalorder %v2507, %v2509
      %vm2512 = vmpackc.low %vm2511, %vm2510
      %v2513 = vunpack.c.l.b16 %v2238
      %v2514 = vunpack.c.h.b16 %v2238
      %v2515 = vunpack.c.l.b16 0
      %v2516 = vunpack.c.h.b16 0
      %vm2517 = vcmp.ne.s32.totalorder %v2513, %v2515
      %vm2518 = vcmp.ne.s32.totalorder %v2514, %v2516
      %vm2519 = vmpackc.low %vm2518, %vm2517
      %v2520 = vunpack.c.l.b16 %v2247
      %v2521 = vunpack.c.h.b16 %v2247
      %v2522 = vunpack.c.l.b16 0
      %v2523 = vunpack.c.h.b16 0
      %vm2524 = vcmp.ne.s32.totalorder %v2520, %v2522
      %vm2525 = vcmp.ne.s32.totalorder %v2521, %v2523
      %vm2526 = vmpackc.low %vm2525, %vm2524
      %v2527 = vunpack.c.l.b16 %v2256
      %v2528 = vunpack.c.h.b16 %v2256
      %v2529 = vunpack.c.l.b16 0
      %v2530 = vunpack.c.h.b16 0
      %vm2531 = vcmp.ne.s32.totalorder %v2527, %v2529
      %vm2532 = vcmp.ne.s32.totalorder %v2528, %v2530
      %vm2533 = vmpackc.low %vm2532, %vm2531
      %v2534 = vunpack.c.l.b16 %v2265
      %v2535 = vunpack.c.h.b16 %v2265
      %v2536 = vunpack.c.l.b16 0
      %v2537 = vunpack.c.h.b16 0
      %vm2538 = vcmp.ne.s32.totalorder %v2534, %v2536
      %vm2539 = vcmp.ne.s32.totalorder %v2535, %v2537
      %vm2540 = vmpackc.low %vm2539, %vm2538
      %v2541 = vunpack.c.l.b16 %v2274
      %v2542 = vunpack.c.h.b16 %v2274
      %v2543 = vunpack.c.l.b16 0
      %v2544 = vunpack.c.h.b16 0
      %vm2545 = vcmp.ne.s32.totalorder %v2541, %v2543
      %vm2546 = vcmp.ne.s32.totalorder %v2542, %v2544
      %vm2547 = vmpackc.low %vm2546, %vm2545
      %v2548 = vunpack.c.l.b16 %v2283
      %v2549 = vunpack.c.h.b16 %v2283
      %v2550 = vunpack.c.l.b16 0
      %v2551 = vunpack.c.h.b16 0
      %vm2552 = vcmp.ne.s32.totalorder %v2548, %v2550
      %vm2553 = vcmp.ne.s32.totalorder %v2549, %v2551
      %vm2554 = vmpackc.low %vm2553, %vm2552
      %v2555 = vunpack.c.l.b16 %v2292
      %v2556 = vunpack.c.h.b16 %v2292
      %v2557 = vunpack.c.l.b16 0
      %v2558 = vunpack.c.h.b16 0
      %vm2559 = vcmp.ne.s32.totalorder %v2555, %v2557
      %vm2560 = vcmp.ne.s32.totalorder %v2556, %v2558
      %vm2561 = vmpackc.low %vm2560, %vm2559
      %v2562 = vunpack.c.l.b16 %v2301
      %v2563 = vunpack.c.h.b16 %v2301
      %v2564 = vunpack.c.l.b16 0
      %v2565 = vunpack.c.h.b16 0
      %vm2566 = vcmp.ne.s32.totalorder %v2562, %v2564
      %vm2567 = vcmp.ne.s32.totalorder %v2563, %v2565
      %vm2568 = vmpackc.low %vm2567, %vm2566
      %v2569 = vunpack.c.l.b16 %v2310
      %v2570 = vunpack.c.h.b16 %v2310
      %v2571 = vunpack.c.l.b16 0
      %v2572 = vunpack.c.h.b16 0
      %vm2573 = vcmp.ne.s32.totalorder %v2569, %v2571
      %vm2574 = vcmp.ne.s32.totalorder %v2570, %v2572
      %vm2575 = vmpackc.low %vm2574, %vm2573
      %v2576 = vunpack.c.l.b16 %v2319
      %v2577 = vunpack.c.h.b16 %v2319
      %v2578 = vunpack.c.l.b16 0
      %v2579 = vunpack.c.h.b16 0
      %vm2580 = vcmp.ne.s32.totalorder %v2576, %v2578
      %vm2581 = vcmp.ne.s32.totalorder %v2577, %v2579
      %vm2582 = vmpackc.low %vm2581, %vm2580
      %v2583 = vunpack.c.l.b16 %v2328
      %v2584 = vunpack.c.h.b16 %v2328
      %v2585 = vunpack.c.l.b16 0
      %v2586 = vunpack.c.h.b16 0
      %vm2587 = vcmp.ne.s32.totalorder %v2583, %v2585
      %vm2588 = vcmp.ne.s32.totalorder %v2584, %v2586
      %vm2589 = vmpackc.low %vm2588, %vm2587
      %v2590 = vunpack.c.l.b16 %v2337
      %v2591 = vunpack.c.h.b16 %v2337
      %v2592 = vunpack.c.l.b16 0
      %v2593 = vunpack.c.h.b16 0
      %vm2594 = vcmp.ne.s32.totalorder %v2590, %v2592
      %vm2595 = vcmp.ne.s32.totalorder %v2591, %v2593
      %vm2596 = vmpackc.low %vm2595, %vm2594
      %v2597 = vunpack.c.l.b16 %v2346
      %v2598 = vunpack.c.h.b16 %v2346
      %v2599 = vunpack.c.l.b16 0
      %v2600 = vunpack.c.h.b16 0
      %vm2601 = vcmp.ne.s32.totalorder %v2597, %v2599
      %vm2602 = vcmp.ne.s32.totalorder %v2598, %v2600
      %vm2603 = vmpackc.low %vm2602, %vm2601
      %v2604 = vunpack.c.l.b16 %v2355
      %v2605 = vunpack.c.h.b16 %v2355
      %v2606 = vunpack.c.l.b16 0
      %v2607 = vunpack.c.h.b16 0
      %vm2608 = vcmp.ne.s32.totalorder %v2604, %v2606
      %vm2609 = vcmp.ne.s32.totalorder %v2605, %v2607
      %vm2610 = vmpackc.low %vm2609, %vm2608
      %v2611 = vunpack.c.l.b16 %v2364
      %v2612 = vunpack.c.h.b16 %v2364
      %v2613 = vunpack.c.l.b16 0
      %v2614 = vunpack.c.h.b16 0
      %vm2615 = vcmp.ne.s32.totalorder %v2611, %v2613
      %vm2616 = vcmp.ne.s32.totalorder %v2612, %v2614
      %vm2617 = vmpackc.low %vm2616, %vm2615
      %v2618 = vunpack.c.l.b16 %v2373
      %v2619 = vunpack.c.h.b16 %v2373
      %v2620 = vunpack.c.l.b16 0
      %v2621 = vunpack.c.h.b16 0
      %vm2622 = vcmp.ne.s32.totalorder %v2618, %v2620
      %vm2623 = vcmp.ne.s32.totalorder %v2619, %v2621
      %vm2624 = vmpackc.low %vm2623, %vm2622
      %v2625 = vunpack.c.l.b16 %v2382
      %v2626 = vunpack.c.h.b16 %v2382
      %v2627 = vunpack.c.l.b16 0
      %v2628 = vunpack.c.h.b16 0
      %vm2629 = vcmp.ne.s32.totalorder %v2625, %v2627
      %vm2630 = vcmp.ne.s32.totalorder %v2626, %v2628
      %vm2631 = vmpackc.low %vm2630, %vm2629
      %v2632 = vunpack.c.l.b16 %v2391
      %v2633 = vunpack.c.h.b16 %v2391
      %v2634 = vunpack.c.l.b16 0
      %v2635 = vunpack.c.h.b16 0
      %vm2636 = vcmp.ne.s32.totalorder %v2632, %v2634
      %vm2637 = vcmp.ne.s32.totalorder %v2633, %v2635
      %vm2638 = vmpackc.low %vm2637, %vm2636
      %v2639 = vunpack.c.l.b16 %v2400
      %v2640 = vunpack.c.h.b16 %v2400
      %v2641 = vunpack.c.l.b16 0
      %v2642 = vunpack.c.h.b16 0
      %vm2643 = vcmp.ne.s32.totalorder %v2639, %v2641
      %vm2644 = vcmp.ne.s32.totalorder %v2640, %v2642
      %vm2645 = vmpackc.low %vm2644, %vm2643
      %v2646 = vunpack.c.l.b16 %v2409
      %v2647 = vunpack.c.h.b16 %v2409
      %v2648 = vunpack.c.l.b16 0
      %v2649 = vunpack.c.h.b16 0
      %vm2650 = vcmp.ne.s32.totalorder %v2646, %v2648
      %vm2651 = vcmp.ne.s32.totalorder %v2647, %v2649
      %vm2652 = vmpackc.low %vm2651, %vm2650
      %v2653 = vunpack.c.l.b16 %v2418
      %v2654 = vunpack.c.h.b16 %v2418
      %v2655 = vunpack.c.l.b16 0
      %v2656 = vunpack.c.h.b16 0
      %vm2657 = vcmp.ne.s32.totalorder %v2653, %v2655
      %vm2658 = vcmp.ne.s32.totalorder %v2654, %v2656
      %vm2659 = vmpackc.low %vm2658, %vm2657
      %v2660 = vunpack.c.l.b16 %v2427
      %v2661 = vunpack.c.h.b16 %v2427
      %v2662 = vunpack.c.l.b16 0
      %v2663 = vunpack.c.h.b16 0
      %vm2664 = vcmp.ne.s32.totalorder %v2660, %v2662
      %vm2665 = vcmp.ne.s32.totalorder %v2661, %v2663
      %vm2666 = vmpackc.low %vm2665, %vm2664
      %v2667 = vunpack.c.l.b16 %v2436
      %v2668 = vunpack.c.h.b16 %v2436
      %v2669 = vunpack.c.l.b16 0
      %v2670 = vunpack.c.h.b16 0
      %vm2671 = vcmp.ne.s32.totalorder %v2667, %v2669
      %vm2672 = vcmp.ne.s32.totalorder %v2668, %v2670
      %vm2673 = vmpackc.low %vm2672, %vm2671
      %v2674 = vunpack.c.l.b16 %v2445
      %v2675 = vunpack.c.h.b16 %v2445
      %v2676 = vunpack.c.l.b16 0
      %v2677 = vunpack.c.h.b16 0
      %vm2678 = vcmp.ne.s32.totalorder %v2674, %v2676
      %vm2679 = vcmp.ne.s32.totalorder %v2675, %v2677
      %vm2680 = vmpackc.low %vm2679, %vm2678
      %v2681 = vunpack.c.l.b16 %v2454
      %v2682 = vunpack.c.h.b16 %v2454
      %v2683 = vunpack.c.l.b16 0
      %v2684 = vunpack.c.h.b16 0
      %vm2685 = vcmp.ne.s32.totalorder %v2681, %v2683
      %vm2686 = vcmp.ne.s32.totalorder %v2682, %v2684
      %vm2687 = vmpackc.low %vm2686, %vm2685
      %v2688 = vunpack.c.l.b16 %v2463
      %v2689 = vunpack.c.h.b16 %v2463
      %v2690 = vunpack.c.l.b16 0
      %v2691 = vunpack.c.h.b16 0
      %vm2692 = vcmp.ne.s32.totalorder %v2688, %v2690
      %vm2693 = vcmp.ne.s32.totalorder %v2689, %v2691
      %vm2694 = vmpackc.low %vm2693, %vm2692
      %v2695 = vunpack.c.l.b16 %v2472
      %v2696 = vunpack.c.h.b16 %v2472
      %v2697 = vunpack.c.l.b16 0
      %v2698 = vunpack.c.h.b16 0
      %vm2699 = vcmp.ne.s32.totalorder %v2695, %v2697
      %vm2700 = vcmp.ne.s32.totalorder %v2696, %v2698
      %vm2701 = vmpackc.low %vm2700, %vm2699
      %v2702 = vunpack.c.l.b16 %v2481
      %v2703 = vunpack.c.h.b16 %v2481
      %v2704 = vunpack.c.l.b16 0
      %v2705 = vunpack.c.h.b16 0
      %vm2706 = vcmp.ne.s32.totalorder %v2702, %v2704
      %vm2707 = vcmp.ne.s32.totalorder %v2703, %v2705
      %vm2708 = vmpackc.low %vm2707, %vm2706
      %v2709 = vunpack.c.l.b16 %v2490
      %v2710 = vunpack.c.h.b16 %v2490
      %v2711 = vunpack.c.l.b16 0
      %v2712 = vunpack.c.h.b16 0
      %vm2713 = vcmp.ne.s32.totalorder %v2709, %v2711
      %vm2714 = vcmp.ne.s32.totalorder %v2710, %v2712
      %vm2715 = vmpackc.low %vm2714, %vm2713
      %v2716 = vunpack.c.l.b16 %v2491
      %v2717 = vunpack.c.h.b16 %v2491
      %v2718 = vunpack.c.l.b16 0
      %v2719 = vunpack.c.h.b16 0
      %vm2720 = vcmp.ne.s32.totalorder %v2716, %v2718
      %vm2721 = vcmp.ne.s32.totalorder %v2717, %v2719
      %vm2722 = vmpackc.low %vm2721, %vm2720
      %v2723 = vsel %vm2498, %v2041, 0
      %v2724 = vsel %vm2505, %v2042, 0
      %v2725 = vsel %vm2512, %v2043, 0
      %v2726 = vsel %vm2519, %v2044, 0
      %v2727 = vsel %vm2526, %v2045, 0
      %v2728 = vsel %vm2533, %v2046, 0
      %v2729 = vsel %vm2540, %v2047, 0
      %v2730 = vsel %vm2547, %v2048, 0
      %v2731 = vsel %vm2554, %v2049, 0
      %v2732 = vsel %vm2561, %v2050, 0
      %v2733 = vsel %vm2568, %v2051, 0
      %v2734 = vsel %vm2575, %v2052, 0
      %v2735 = vsel %vm2582, %v2053, 0
      %v2736 = vsel %vm2589, %v2054, 0
      %v2737 = vsel %vm2596, %v2055, 0
      %v2738 = vsel %vm2603, %v2056, 0
      %v2739 = vsel %vm2610, %v2057, 0
      %v2740 = vsel %vm2617, %v2058, 0
      %v2741 = vsel %vm2624, %v2059, 0
      %v2742 = vsel %vm2631, %v2060, 0
      %v2743 = vsel %vm2638, %v2061, 0
      %v2744 = vsel %vm2645, %v2062, 0
      %v2745 = vsel %vm2652, %v2063, 0
      %v2746 = vsel %vm2659, %v2064, 0
      %v2747 = vsel %vm2666, %v2065, 0
      %v2748 = vsel %vm2673, %v2066, 0
      %v2749 = vsel %vm2680, %v2067, 0
      %v2750 = vsel %vm2687, %v2068, 0
      %v2751 = vsel %vm2694, %v2069, 0
      %v2752 = vsel %vm2701, %v2070, 0
      %v2753 = vsel %vm2708, %v2071, 0
      %v2754 = vsel %vm2715, %v2072, 0
      %v2755 = vsel %vm2722, %v2073, 0
      %s2756 = scalar_lea.vmem %s3, 128
      %v2757 = vld [vmem:[%s2756] sm:$0xf]
      %v2758 = vld [vmem:[%s2756 + $0x4] sm:$0xf]
      %v2759 = vld [vmem:[%s2756 + $0x8] sm:$0xf]
      %v2760 = vld [vmem:[%s2756 + $0xc] sm:$0xf]
      %v2761 = vld [vmem:[%s2756 + $0x10] sm:$0xf]
      %v2762 = vld [vmem:[%s2756 + $0x14] sm:$0xf]
      %v2763 = vld [vmem:[%s2756 + $0x18] sm:$0xf]
      %v2764 = vld [vmem:[%s2756 + $0x1c] sm:$0xf]
      %v2765 = vld [vmem:[%s2756 + $0x20] sm:$0xf]
      %v2766 = vld [vmem:[%s2756 + $0x24] sm:$0xf]
      %v2767 = vld [vmem:[%s2756 + $0x28] sm:$0xf]
      %v2768 = vld [vmem:[%s2756 + $0x2c] sm:$0xf]
      %v2769 = vld [vmem:[%s2756 + $0x30] sm:$0xf]
      %v2770 = vld [vmem:[%s2756 + $0x34] sm:$0xf]
      %v2771 = vld [vmem:[%s2756 + $0x38] sm:$0xf]
      %v2772 = vld [vmem:[%s2756 + $0x3c] sm:$0xf]
      %v2806 = vunpack.c.l.b16 %v2723
      %v2807 = vunpack.c.l.b16 %v2724
      %v2808 = vunpack.c.l.b16 %v2725
      %v2809 = vunpack.c.l.b16 %v2726
      %v2810 = vunpack.c.l.b16 %v2727
      %v2811 = vunpack.c.l.b16 %v2728
      %v2812 = vunpack.c.l.b16 %v2729
      %v2813 = vunpack.c.l.b16 %v2730
      %v2814 = vunpack.c.l.b16 %v2731
      %v2815 = vunpack.c.l.b16 %v2732
      %v2816 = vunpack.c.l.b16 %v2733
      %v2817 = vunpack.c.l.b16 %v2734
      %v2818 = vunpack.c.l.b16 %v2735
      %v2819 = vunpack.c.l.b16 %v2736
      %v2820 = vunpack.c.l.b16 %v2737
      %v2821 = vunpack.c.l.b16 %v2738
      %v2822 = vunpack.c.l.b16 %v2739
      %v2823 = vunpack.c.l.b16 %v2740
      %v2824 = vunpack.c.l.b16 %v2741
      %v2825 = vunpack.c.l.b16 %v2742
      %v2826 = vunpack.c.l.b16 %v2743
      %v2827 = vunpack.c.l.b16 %v2744
      %v2828 = vunpack.c.l.b16 %v2745
      %v2829 = vunpack.c.l.b16 %v2746
      %v2830 = vunpack.c.l.b16 %v2747
      %v2831 = vunpack.c.l.b16 %v2748
      %v2832 = vunpack.c.l.b16 %v2749
      %v2833 = vunpack.c.l.b16 %v2750
      %v2834 = vunpack.c.l.b16 %v2751
      %v2835 = vunpack.c.l.b16 %v2752
      %v2836 = vunpack.c.l.b16 %v2753
      %v2837 = vunpack.c.l.b16 %v2754
      %v2838 = vunpack.c.l.b16 %v2755
      %v2839 = vpack.c.b16 %v2807, %v2806
      %v2840 = vpack.c.b16 %v2809, %v2808
      %v2841 = vpack.c.b16 %v2811, %v2810
      %v2842 = vpack.c.b16 %v2813, %v2812
      %v2843 = vpack.c.b16 %v2815, %v2814
      %v2844 = vpack.c.b16 %v2817, %v2816
      %v2845 = vpack.c.b16 %v2819, %v2818
      %v2846 = vpack.c.b16 %v2821, %v2820
      %v2847 = vpack.c.b16 %v2823, %v2822
      %v2848 = vpack.c.b16 %v2825, %v2824
      %v2849 = vpack.c.b16 %v2827, %v2826
      %v2850 = vpack.c.b16 %v2829, %v2828
      %v2851 = vpack.c.b16 %v2831, %v2830
      %v2852 = vpack.c.b16 %v2833, %v2832
      %v2853 = vpack.c.b16 %v2835, %v2834
      %v2854 = vpack.c.b16 %v2837, %v2836
      %v2855 = vpack.c.b16 %v2838, %v2838
      %vm2856 = vsmask.f32 7424
      %v2858 = vshrl.u32 %v2839, 16
      %v2860 = vshll.u32 %v2839, 16
      %v2862 = vrot.slane %v2860, 1
      %v2863 = vor.u32 %v2858, %v2862
      %v2865 = vshll.u32 %v2840, 16
      %v2867 = vrot.slane %v2865, 1
      %v2868 = vsel %vm2856, %v2863, %v2867
      %v2869 = vshrl.u32 %v2840, 16
      %v2871 = vor.u32 %v2869, %v2867
      %v2873 = vshll.u32 %v2841, 16
      %v2875 = vrot.slane %v2873, 1
      %v2876 = vsel %vm2856, %v2871, %v2875
      %v2877 = vshrl.u32 %v2841, 16
      %v2879 = vor.u32 %v2877, %v2875
      %v2881 = vshll.u32 %v2842, 16
      %v2883 = vrot.slane %v2881, 1
      %v2884 = vsel %vm2856, %v2879, %v2883
      %v2885 = vshrl.u32 %v2842, 16
      %v2887 = vor.u32 %v2885, %v2883
      %v2889 = vshll.u32 %v2843, 16
      %v2891 = vrot.slane %v2889, 1
      %v2892 = vsel %vm2856, %v2887, %v2891
      %v2893 = vshrl.u32 %v2843, 16
      %v2895 = vor.u32 %v2893, %v2891
      %v2897 = vshll.u32 %v2844, 16
      %v2899 = vrot.slane %v2897, 1
      %v2900 = vsel %vm2856, %v2895, %v2899
      %v2901 = vshrl.u32 %v2844, 16
      %v2903 = vor.u32 %v2901, %v2899
      %v2905 = vshll.u32 %v2845, 16
      %v2907 = vrot.slane %v2905, 1
      %v2908 = vsel %vm2856, %v2903, %v2907
      %v2909 = vshrl.u32 %v2845, 16
      %v2911 = vor.u32 %v2909, %v2907
      %v2913 = vshll.u32 %v2846, 16
      %v2915 = vrot.slane %v2913, 1
      %v2916 = vsel %vm2856, %v2911, %v2915
      %v2917 = vshrl.u32 %v2846, 16
      %v2919 = vor.u32 %v2917, %v2915
      %v2921 = vshll.u32 %v2847, 16
      %v2923 = vrot.slane %v2921, 1
      %v2924 = vsel %vm2856, %v2919, %v2923
      %v2925 = vshrl.u32 %v2847, 16
      %v2927 = vor.u32 %v2925, %v2923
      %v2929 = vshll.u32 %v2848, 16
      %v2931 = vrot.slane %v2929, 1
      %v2932 = vsel %vm2856, %v2927, %v2931
      %v2933 = vshrl.u32 %v2848, 16
      %v2935 = vor.u32 %v2933, %v2931
      %v2937 = vshll.u32 %v2849, 16
      %v2939 = vrot.slane %v2937, 1
      %v2940 = vsel %vm2856, %v2935, %v2939
      %v2941 = vshrl.u32 %v2849, 16
      %v2943 = vor.u32 %v2941, %v2939
      %v2945 = vshll.u32 %v2850, 16
      %v2947 = vrot.slane %v2945, 1
      %v2948 = vsel %vm2856, %v2943, %v2947
      %v2949 = vshrl.u32 %v2850, 16
      %v2951 = vor.u32 %v2949, %v2947
      %v2953 = vshll.u32 %v2851, 16
      %v2955 = vrot.slane %v2953, 1
      %v2956 = vsel %vm2856, %v2951, %v2955
      %v2957 = vshrl.u32 %v2851, 16
      %v2959 = vor.u32 %v2957, %v2955
      %v2961 = vshll.u32 %v2852, 16
      %v2963 = vrot.slane %v2961, 1
      %v2964 = vsel %vm2856, %v2959, %v2963
      %v2965 = vshrl.u32 %v2852, 16
      %v2967 = vor.u32 %v2965, %v2963
      %v2969 = vshll.u32 %v2853, 16
      %v2971 = vrot.slane %v2969, 1
      %v2972 = vsel %vm2856, %v2967, %v2971
      %v2973 = vshrl.u32 %v2853, 16
      %v2975 = vor.u32 %v2973, %v2971
      %v2977 = vshll.u32 %v2854, 16
      %v2979 = vrot.slane %v2977, 1
      %v2980 = vsel %vm2856, %v2975, %v2979
      %v2981 = vshrl.u32 %v2854, 16
      %v2983 = vor.u32 %v2981, %v2979
      %v2985 = vshll.u32 %v2855, 16
      %v2987 = vrot.slane %v2985, 1
      %v2988 = vsel %vm2856, %v2983, %v2987
      %v3021 = vunpack.c.l.b16 %v2757
      %v3022 = vunpack.c.l.b16 %v2758
      %v3023 = vunpack.c.l.b16 %v2759
      %v3024 = vunpack.c.l.b16 %v2760
      %v3025 = vunpack.c.l.b16 %v2761
      %v3026 = vunpack.c.l.b16 %v2762
      %v3027 = vunpack.c.l.b16 %v2763
      %v3028 = vunpack.c.l.b16 %v2764
      %v3029 = vunpack.c.l.b16 %v2765
      %v3030 = vunpack.c.l.b16 %v2766
      %v3031 = vunpack.c.l.b16 %v2767
      %v3032 = vunpack.c.l.b16 %v2768
      %v3033 = vunpack.c.l.b16 %v2769
      %v3034 = vunpack.c.l.b16 %v2770
      %v3035 = vunpack.c.l.b16 %v2771
      %v3036 = vunpack.c.l.b16 %v2772
      %v3037 = vpack.c.b16 %v3022, %v3021
      %v3038 = vpack.c.b16 %v3024, %v3023
      %v3039 = vpack.c.b16 %v3026, %v3025
      %v3040 = vpack.c.b16 %v3028, %v3027
      %v3041 = vpack.c.b16 %v3030, %v3029
      %v3042 = vpack.c.b16 %v3032, %v3031
      %v3043 = vpack.c.b16 %v3034, %v3033
      %v3044 = vpack.c.b16 %v3036, %v3035
      %3053 = vmatpush.bf16.msra.mxu0 %v3044
      %3054 = vmatpush.bf16.msra.mxu0 %v3043
      %3055 = vmatpush.bf16.msra.mxu0 %v3042
      %3056 = vmatpush.bf16.msra.mxu0 %v3041
      %3057 = vmatpush.bf16.msra.mxu0 %v3040
      %3058 = vmatpush.bf16.msra.mxu0 %v3039
      %3059 = vmatpush.bf16.msra.mxu0 %v3038
      %3060 = vmatpush.bf16.msra.mxu0 %v3037
      %3061 = vmatmul.bf16.gmra.mxu0 %v2868
      %v3062 = vpop.f32.mrf.mxu0
      %v3063 = vadd.f32 0.0, %v3062
      %v3064 = vpop.f32.mrf.mxu0
      %v3065 = vadd.f32 0.0, %v3064
      %3066 = vmatmul.bf16.gmra.mxu0 %v2876
      %v3067 = vpop.f32.mrf.mxu0
      %v3068 = vadd.f32 0.0, %v3067
      %v3069 = vpop.f32.mrf.mxu0
      %v3070 = vadd.f32 0.0, %v3069
      %3071 = vmatmul.bf16.gmra.mxu0 %v2884
      %v3072 = vpop.f32.mrf.mxu0
      %v3073 = vadd.f32 0.0, %v3072
      %v3074 = vpop.f32.mrf.mxu0
      %v3075 = vadd.f32 0.0, %v3074
      %3076 = vmatmul.bf16.gmra.mxu0 %v2892
      %v3077 = vpop.f32.mrf.mxu0
      %v3078 = vadd.f32 0.0, %v3077
      %v3079 = vpop.f32.mrf.mxu0
      %v3080 = vadd.f32 0.0, %v3079
      %3081 = vmatmul.bf16.gmra.mxu0 %v2900
      %v3082 = vpop.f32.mrf.mxu0
      %v3083 = vadd.f32 0.0, %v3082
      %v3084 = vpop.f32.mrf.mxu0
      %v3085 = vadd.f32 0.0, %v3084
      %3086 = vmatmul.bf16.gmra.mxu0 %v2908
      %v3087 = vpop.f32.mrf.mxu0
      %v3088 = vadd.f32 0.0, %v3087
      %v3089 = vpop.f32.mrf.mxu0
      %v3090 = vadd.f32 0.0, %v3089
      %3091 = vmatmul.bf16.gmra.mxu0 %v2916
      %v3092 = vpop.f32.mrf.mxu0
      %v3093 = vadd.f32 0.0, %v3092
      %v3094 = vpop.f32.mrf.mxu0
      %v3095 = vadd.f32 0.0, %v3094
      %3096 = vmatmul.bf16.gmra.mxu0 %v2924
      %v3097 = vpop.f32.mrf.mxu0
      %v3098 = vadd.f32 0.0, %v3097
      %v3099 = vpop.f32.mrf.mxu0
      %v3100 = vadd.f32 0.0, %v3099
      %3101 = vmatmul.bf16.gmra.mxu0 %v2932
      %v3102 = vpop.f32.mrf.mxu0
      %v3103 = vadd.f32 0.0, %v3102
      %v3104 = vpop.f32.mrf.mxu0
      %v3105 = vadd.f32 0.0, %v3104
      %3106 = vmatmul.bf16.gmra.mxu0 %v2940
      %v3107 = vpop.f32.mrf.mxu0
      %v3108 = vadd.f32 0.0, %v3107
      %v3109 = vpop.f32.mrf.mxu0
      %v3110 = vadd.f32 0.0, %v3109
      %3111 = vmatmul.bf16.gmra.mxu0 %v2948
      %v3112 = vpop.f32.mrf.mxu0
      %v3113 = vadd.f32 0.0, %v3112
      %v3114 = vpop.f32.mrf.mxu0
      %v3115 = vadd.f32 0.0, %v3114
      %3116 = vmatmul.bf16.gmra.mxu0 %v2956
      %v3117 = vpop.f32.mrf.mxu0
      %v3118 = vadd.f32 0.0, %v3117
      %v3119 = vpop.f32.mrf.mxu0
      %v3120 = vadd.f32 0.0, %v3119
      %3121 = vmatmul.bf16.gmra.mxu0 %v2964
      %v3122 = vpop.f32.mrf.mxu0
      %v3123 = vadd.f32 0.0, %v3122
      %v3124 = vpop.f32.mrf.mxu0
      %v3125 = vadd.f32 0.0, %v3124
      %3126 = vmatmul.bf16.gmra.mxu0 %v2972
      %v3127 = vpop.f32.mrf.mxu0
      %v3128 = vadd.f32 0.0, %v3127
      %v3129 = vpop.f32.mrf.mxu0
      %v3130 = vadd.f32 0.0, %v3129
      %3131 = vmatmul.bf16.gmra.mxu0 %v2980
      %v3132 = vpop.f32.mrf.mxu0
      %v3133 = vadd.f32 0.0, %v3132
      %v3134 = vpop.f32.mrf.mxu0
      %v3135 = vadd.f32 0.0, %v3134
      %3136 = vmatmul.bf16.gmra.mxu0 %v2988
      %v3137 = vpop.f32.mrf.mxu0
      %v3138 = vadd.f32 0.0, %v3137
      %v3139 = vpop.f32.mrf.mxu0
      %v3140 = vadd.f32 0.0, %v3139
      %3141 = vdwg.mxu0
      %v3142 = vadd.f32 %v1962, %v3063
      %v3143 = vadd.f32 %v1964, %v3065
      %v3144 = vadd.f32 %v1967, %v3068
      %v3145 = vadd.f32 %v1969, %v3070
      %v3146 = vadd.f32 %v1972, %v3073
      %v3147 = vadd.f32 %v1974, %v3075
      %v3148 = vadd.f32 %v1977, %v3078
      %v3149 = vadd.f32 %v1979, %v3080
      %v3150 = vadd.f32 %v1982, %v3083
      %v3151 = vadd.f32 %v1984, %v3085
      %v3152 = vadd.f32 %v1987, %v3088
      %v3153 = vadd.f32 %v1989, %v3090
      %v3154 = vadd.f32 %v1992, %v3093
      %v3155 = vadd.f32 %v1994, %v3095
      %v3156 = vadd.f32 %v1997, %v3098
      %v3157 = vadd.f32 %v1999, %v3100
      %v3158 = vadd.f32 %v2002, %v3103
      %v3159 = vadd.f32 %v2004, %v3105
      %v3160 = vadd.f32 %v2007, %v3108
      %v3161 = vadd.f32 %v2009, %v3110
      %v3162 = vadd.f32 %v2012, %v3113
      %v3163 = vadd.f32 %v2014, %v3115
      %v3164 = vadd.f32 %v2017, %v3118
      %v3165 = vadd.f32 %v2019, %v3120
      %v3166 = vadd.f32 %v2022, %v3123
      %v3167 = vadd.f32 %v2024, %v3125
      %v3168 = vadd.f32 %v2027, %v3128
      %v3169 = vadd.f32 %v2029, %v3130
      %v3170 = vadd.f32 %v2032, %v3133
      %v3171 = vadd.f32 %v2034, %v3135
      %v3172 = vadd.f32 %v2037, %v3138
      %v3173 = vadd.f32 %v2039, %v3140
      %v3174 = vld [vmem:[#allocation2 + $0x8] sm:$0x8]
      %v3175 = vld [vmem:[#allocation2 + $0xc] sm:$0xf]
      %v3176 = vld [vmem:[#allocation2 + $0x10] sm:$0xf]
      %v3177 = vld [vmem:[#allocation2 + $0x14] sm:$0xf]
      %v3178 = vld [vmem:[#allocation2 + $0x18] sm:$0xf]
      %v3179 = vld [vmem:[#allocation2 + $0x1c] sm:$0xf]
      %v3180 = vld [vmem:[#allocation2 + $0x20] sm:$0xf]
      %v3181 = vld [vmem:[#allocation2 + $0x24] sm:$0xf]
      %v3182 = vld [vmem:[#allocation2 + $0x28] sm:$0xf]
      %v3183 = vld [vmem:[#allocation2 + $0x2c] sm:$0xf]
      %v3184 = vld [vmem:[#allocation2 + $0x30] sm:$0xf]
      %v3185 = vld [vmem:[#allocation2 + $0x34] sm:$0xf]
      %v3186 = vld [vmem:[#allocation2 + $0x38] sm:$0xf]
      %v3187 = vld [vmem:[#allocation2 + $0x3c] sm:$0xf]
      %v3188 = vld [vmem:[#allocation2 + $0x40] sm:$0xf]
      %v3189 = vld [vmem:[#allocation2 + $0x44] sm:$0xf]
      %v3190 = vld [vmem:[#allocation2 + $0x48] sm:$0xf]
      %v3191 = vld [vmem:[#allocation2 + $0x4c] sm:$0xf]
      %v3192 = vld [vmem:[#allocation2 + $0x50] sm:$0xf]
      %v3193 = vld [vmem:[#allocation2 + $0x54] sm:$0xf]
      %v3194 = vld [vmem:[#allocation2 + $0x58] sm:$0xf]
      %v3195 = vld [vmem:[#allocation2 + $0x5c] sm:$0xf]
      %v3196 = vld [vmem:[#allocation2 + $0x60] sm:$0xf]
      %v3197 = vld [vmem:[#allocation2 + $0x64] sm:$0xf]
      %v3198 = vld [vmem:[#allocation2 + $0x68] sm:$0xf]
      %v3199 = vld [vmem:[#allocation2 + $0x6c] sm:$0xf]
      %v3200 = vld [vmem:[#allocation2 + $0x70] sm:$0xf]
      %v3201 = vld [vmem:[#allocation2 + $0x74] sm:$0xf]
      %v3202 = vld [vmem:[#allocation2 + $0x78] sm:$0xf]
      %v3203 = vld [vmem:[#allocation2 + $0x7c] sm:$0xf]
      %v3204 = vld [vmem:[#allocation2 + $0x80] sm:$0xf]
      %v3205 = vld [vmem:[#allocation2 + $0x84] sm:$0xf]
      %v3206 = vld [vmem:[#allocation2 + $0x88] sm:$0xf]
      %v3207 = vsel %vm1128, %v3174, 0
      %v3208 = vsel %vm1135, %v3175, 0
      %v3209 = vsel %vm1142, %v3176, 0
      %v3210 = vsel %vm1149, %v3177, 0
      %v3211 = vsel %vm1156, %v3178, 0
      %v3212 = vsel %vm1163, %v3179, 0
      %v3213 = vsel %vm1170, %v3180, 0
      %v3214 = vsel %vm1177, %v3181, 0
      %v3215 = vsel %vm1184, %v3182, 0
      %v3216 = vsel %vm1191, %v3183, 0
      %v3217 = vsel %vm1198, %v3184, 0
      %v3218 = vsel %vm1205, %v3185, 0
      %v3219 = vsel %vm1212, %v3186, 0
      %v3220 = vsel %vm1219, %v3187, 0
      %v3221 = vsel %vm1226, %v3188, 0
      %v3222 = vsel %vm1233, %v3189, 0
      %v3223 = vsel %vm1240, %v3190, 0
      %v3224 = vsel %vm1247, %v3191, 0
      %v3225 = vsel %vm1254, %v3192, 0
      %v3226 = vsel %vm1261, %v3193, 0
      %v3227 = vsel %vm1268, %v3194, 0
      %v3228 = vsel %vm1275, %v3195, 0
      %v3229 = vsel %vm1282, %v3196, 0
      %v3230 = vsel %vm1289, %v3197, 0
      %v3231 = vsel %vm1296, %v3198, 0
      %v3232 = vsel %vm1303, %v3199, 0
      %v3233 = vsel %vm1310, %v3200, 0
      %v3234 = vsel %vm1317, %v3201, 0
      %v3235 = vsel %vm1324, %v3202, 0
      %v3236 = vsel %vm1331, %v3203, 0
      %v3237 = vsel %vm1338, %v3204, 0
      %v3238 = vsel %vm1345, %v3205, 0
      %v3239 = vsel %vm1352, %v3206, 0
      %s3240 = scalar_lea.vmem %s3, 192
      %v3241 = vld [vmem:[%s3240] sm:$0xf]
      %v3242 = vld [vmem:[%s3240 + $0x4] sm:$0xf]
      %v3243 = vld [vmem:[%s3240 + $0x8] sm:$0xf]
      %v3244 = vld [vmem:[%s3240 + $0xc] sm:$0xf]
      %v3245 = vld [vmem:[%s3240 + $0x10] sm:$0xf]
      %v3246 = vld [vmem:[%s3240 + $0x14] sm:$0xf]
      %v3247 = vld [vmem:[%s3240 + $0x18] sm:$0xf]
      %v3248 = vld [vmem:[%s3240 + $0x1c] sm:$0xf]
      %v3249 = vld [vmem:[%s3240 + $0x20] sm:$0xf]
      %v3250 = vld [vmem:[%s3240 + $0x24] sm:$0xf]
      %v3251 = vld [vmem:[%s3240 + $0x28] sm:$0xf]
      %v3252 = vld [vmem:[%s3240 + $0x2c] sm:$0xf]
      %v3253 = vld [vmem:[%s3240 + $0x30] sm:$0xf]
      %v3254 = vld [vmem:[%s3240 + $0x34] sm:$0xf]
      %v3255 = vld [vmem:[%s3240 + $0x38] sm:$0xf]
      %v3256 = vld [vmem:[%s3240 + $0x3c] sm:$0xf]
      %v3290 = vunpack.c.l.b16 %v3207
      %v3291 = vunpack.c.l.b16 %v3208
      %v3292 = vunpack.c.l.b16 %v3209
      %v3293 = vunpack.c.l.b16 %v3210
      %v3294 = vunpack.c.l.b16 %v3211
      %v3295 = vunpack.c.l.b16 %v3212
      %v3296 = vunpack.c.l.b16 %v3213
      %v3297 = vunpack.c.l.b16 %v3214
      %v3298 = vunpack.c.l.b16 %v3215
      %v3299 = vunpack.c.l.b16 %v3216
      %v3300 = vunpack.c.l.b16 %v3217
      %v3301 = vunpack.c.l.b16 %v3218
      %v3302 = vunpack.c.l.b16 %v3219
      %v3303 = vunpack.c.l.b16 %v3220
      %v3304 = vunpack.c.l.b16 %v3221
      %v3305 = vunpack.c.l.b16 %v3222
      %v3306 = vunpack.c.l.b16 %v3223
      %v3307 = vunpack.c.l.b16 %v3224
      %v3308 = vunpack.c.l.b16 %v3225
      %v3309 = vunpack.c.l.b16 %v3226
      %v3310 = vunpack.c.l.b16 %v3227
      %v3311 = vunpack.c.l.b16 %v3228
      %v3312 = vunpack.c.l.b16 %v3229
      %v3313 = vunpack.c.l.b16 %v3230
      %v3314 = vunpack.c.l.b16 %v3231
      %v3315 = vunpack.c.l.b16 %v3232
      %v3316 = vunpack.c.l.b16 %v3233
      %v3317 = vunpack.c.l.b16 %v3234
      %v3318 = vunpack.c.l.b16 %v3235
      %v3319 = vunpack.c.l.b16 %v3236
      %v3320 = vunpack.c.l.b16 %v3237
      %v3321 = vunpack.c.l.b16 %v3238
      %v3322 = vunpack.c.l.b16 %v3239
      %v3323 = vpack.c.b16 %v3291, %v3290
      %v3324 = vpack.c.b16 %v3293, %v3292
      %v3325 = vpack.c.b16 %v3295, %v3294
      %v3326 = vpack.c.b16 %v3297, %v3296
      %v3327 = vpack.c.b16 %v3299, %v3298
      %v3328 = vpack.c.b16 %v3301, %v3300
      %v3329 = vpack.c.b16 %v3303, %v3302
      %v3330 = vpack.c.b16 %v3305, %v3304
      %v3331 = vpack.c.b16 %v3307, %v3306
      %v3332 = vpack.c.b16 %v3309, %v3308
      %v3333 = vpack.c.b16 %v3311, %v3310
      %v3334 = vpack.c.b16 %v3313, %v3312
      %v3335 = vpack.c.b16 %v3315, %v3314
      %v3336 = vpack.c.b16 %v3317, %v3316
      %v3337 = vpack.c.b16 %v3319, %v3318
      %v3338 = vpack.c.b16 %v3321, %v3320
      %v3339 = vpack.c.b16 %v3322, %v3322
      %v3341 = vshrl.u32 %v3323, 16
      %v3343 = vrot.slane %v3341, 3
      %v3344 = vshll.u32 %v3323, 16
      %v3346 = vrot.slane %v3344, 4
      %v3347 = vor.u32 %v3343, %v3346
      %v3349 = vshrl.u32 %v3324, 16
      %v3351 = vrot.slane %v3349, 3
      %v3352 = vshll.u32 %v3324, 16
      %v3354 = vrot.slane %v3352, 4
      %v3355 = vor.u32 %v3351, %v3354
      %v3356 = vsel %vm1735, %v3347, %v3355
      %v3358 = vshrl.u32 %v3325, 16
      %v3360 = vrot.slane %v3358, 3
      %v3361 = vshll.u32 %v3325, 16
      %v3363 = vrot.slane %v3361, 4
      %v3364 = vor.u32 %v3360, %v3363
      %v3365 = vsel %vm1735, %v3355, %v3364
      %v3367 = vshrl.u32 %v3326, 16
      %v3369 = vrot.slane %v3367, 3
      %v3370 = vshll.u32 %v3326, 16
      %v3372 = vrot.slane %v3370, 4
      %v3373 = vor.u32 %v3369, %v3372
      %v3374 = vsel %vm1735, %v3364, %v3373
      %v3376 = vshrl.u32 %v3327, 16
      %v3378 = vrot.slane %v3376, 3
      %v3379 = vshll.u32 %v3327, 16
      %v3381 = vrot.slane %v3379, 4
      %v3382 = vor.u32 %v3378, %v3381
      %v3383 = vsel %vm1735, %v3373, %v3382
      %v3385 = vshrl.u32 %v3328, 16
      %v3387 = vrot.slane %v3385, 3
      %v3388 = vshll.u32 %v3328, 16
      %v3390 = vrot.slane %v3388, 4
      %v3391 = vor.u32 %v3387, %v3390
      %v3392 = vsel %vm1735, %v3382, %v3391
      %v3394 = vshrl.u32 %v3329, 16
      %v3396 = vrot.slane %v3394, 3
      %v3397 = vshll.u32 %v3329, 16
      %v3399 = vrot.slane %v3397, 4
      %v3400 = vor.u32 %v3396, %v3399
      %v3401 = vsel %vm1735, %v3391, %v3400
      %v3403 = vshrl.u32 %v3330, 16
      %v3405 = vrot.slane %v3403, 3
      %v3406 = vshll.u32 %v3330, 16
      %v3408 = vrot.slane %v3406, 4
      %v3409 = vor.u32 %v3405, %v3408
      %v3410 = vsel %vm1735, %v3400, %v3409
      %v3412 = vshrl.u32 %v3331, 16
      %v3414 = vrot.slane %v3412, 3
      %v3415 = vshll.u32 %v3331, 16
      %v3417 = vrot.slane %v3415, 4
      %v3418 = vor.u32 %v3414, %v3417
      %v3419 = vsel %vm1735, %v3409, %v3418
      %v3421 = vshrl.u32 %v3332, 16
      %v3423 = vrot.slane %v3421, 3
      %v3424 = vshll.u32 %v3332, 16
      %v3426 = vrot.slane %v3424, 4
      %v3427 = vor.u32 %v3423, %v3426
      %v3428 = vsel %vm1735, %v3418, %v3427
      %v3430 = vshrl.u32 %v3333, 16
      %v3432 = vrot.slane %v3430, 3
      %v3433 = vshll.u32 %v3333, 16
      %v3435 = vrot.slane %v3433, 4
      %v3436 = vor.u32 %v3432, %v3435
      %v3437 = vsel %vm1735, %v3427, %v3436
      %v3439 = vshrl.u32 %v3334, 16
      %v3441 = vrot.slane %v3439, 3
      %v3442 = vshll.u32 %v3334, 16
      %v3444 = vrot.slane %v3442, 4
      %v3445 = vor.u32 %v3441, %v3444
      %v3446 = vsel %vm1735, %v3436, %v3445
      %v3448 = vshrl.u32 %v3335, 16
      %v3450 = vrot.slane %v3448, 3
      %v3451 = vshll.u32 %v3335, 16
      %v3453 = vrot.slane %v3451, 4
      %v3454 = vor.u32 %v3450, %v3453
      %v3455 = vsel %vm1735, %v3445, %v3454
      %v3457 = vshrl.u32 %v3336, 16
      %v3459 = vrot.slane %v3457, 3
      %v3460 = vshll.u32 %v3336, 16
      %v3462 = vrot.slane %v3460, 4
      %v3463 = vor.u32 %v3459, %v3462
      %v3464 = vsel %vm1735, %v3454, %v3463
      %v3466 = vshrl.u32 %v3337, 16
      %v3468 = vrot.slane %v3466, 3
      %v3469 = vshll.u32 %v3337, 16
      %v3471 = vrot.slane %v3469, 4
      %v3472 = vor.u32 %v3468, %v3471
      %v3473 = vsel %vm1735, %v3463, %v3472
      %v3475 = vshrl.u32 %v3338, 16
      %v3477 = vrot.slane %v3475, 3
      %v3478 = vshll.u32 %v3338, 16
      %v3480 = vrot.slane %v3478, 4
      %v3481 = vor.u32 %v3477, %v3480
      %v3482 = vsel %vm1735, %v3472, %v3481
      %v3484 = vshrl.u32 %v3339, 16
      %v3486 = vrot.slane %v3484, 3
      %v3487 = vshll.u32 %v3339, 16
      %v3489 = vrot.slane %v3487, 4
      %v3490 = vor.u32 %v3486, %v3489
      %v3491 = vsel %vm1735, %v3481, %v3490
      %v3524 = vunpack.c.l.b16 %v3241
      %v3525 = vunpack.c.l.b16 %v3242
      %v3526 = vunpack.c.l.b16 %v3243
      %v3527 = vunpack.c.l.b16 %v3244
      %v3528 = vunpack.c.l.b16 %v3245
      %v3529 = vunpack.c.l.b16 %v3246
      %v3530 = vunpack.c.l.b16 %v3247
      %v3531 = vunpack.c.l.b16 %v3248
      %v3532 = vunpack.c.l.b16 %v3249
      %v3533 = vunpack.c.l.b16 %v3250
      %v3534 = vunpack.c.l.b16 %v3251
      %v3535 = vunpack.c.l.b16 %v3252
      %v3536 = vunpack.c.l.b16 %v3253
      %v3537 = vunpack.c.l.b16 %v3254
      %v3538 = vunpack.c.l.b16 %v3255
      %v3539 = vunpack.c.l.b16 %v3256
      %v3540 = vpack.c.b16 %v3525, %v3524
      %v3541 = vpack.c.b16 %v3527, %v3526
      %v3542 = vpack.c.b16 %v3529, %v3528
      %v3543 = vpack.c.b16 %v3531, %v3530
      %v3544 = vpack.c.b16 %v3533, %v3532
      %v3545 = vpack.c.b16 %v3535, %v3534
      %v3546 = vpack.c.b16 %v3537, %v3536
      %v3547 = vpack.c.b16 %v3539, %v3538
      %3556 = vmatpush.bf16.msra.mxu0 %v3547
      %3557 = vmatpush.bf16.msra.mxu0 %v3546
      %3558 = vmatpush.bf16.msra.mxu0 %v3545
      %3559 = vmatpush.bf16.msra.mxu0 %v3544
      %3560 = vmatpush.bf16.msra.mxu0 %v3543
      %3561 = vmatpush.bf16.msra.mxu0 %v3542
      %3562 = vmatpush.bf16.msra.mxu0 %v3541
      %3563 = vmatpush.bf16.msra.mxu0 %v3540
      %3564 = vmatmul.bf16.gmra.mxu0 %v3356
      %v3565 = vpop.f32.mrf.mxu0
      %v3566 = vadd.f32 0.0, %v3565
      %v3567 = vpop.f32.mrf.mxu0
      %v3568 = vadd.f32 0.0, %v3567
      %3569 = vmatmul.bf16.gmra.mxu0 %v3365
      %v3570 = vpop.f32.mrf.mxu0
      %v3571 = vadd.f32 0.0, %v3570
      %v3572 = vpop.f32.mrf.mxu0
      %v3573 = vadd.f32 0.0, %v3572
      %3574 = vmatmul.bf16.gmra.mxu0 %v3374
      %v3575 = vpop.f32.mrf.mxu0
      %v3576 = vadd.f32 0.0, %v3575
      %v3577 = vpop.f32.mrf.mxu0
      %v3578 = vadd.f32 0.0, %v3577
      %3579 = vmatmul.bf16.gmra.mxu0 %v3383
      %v3580 = vpop.f32.mrf.mxu0
      %v3581 = vadd.f32 0.0, %v3580
      %v3582 = vpop.f32.mrf.mxu0
      %v3583 = vadd.f32 0.0, %v3582
      %3584 = vmatmul.bf16.gmra.mxu0 %v3392
      %v3585 = vpop.f32.mrf.mxu0
      %v3586 = vadd.f32 0.0, %v3585
      %v3587 = vpop.f32.mrf.mxu0
      %v3588 = vadd.f32 0.0, %v3587
      %3589 = vmatmul.bf16.gmra.mxu0 %v3401
      %v3590 = vpop.f32.mrf.mxu0
      %v3591 = vadd.f32 0.0, %v3590
      %v3592 = vpop.f32.mrf.mxu0
      %v3593 = vadd.f32 0.0, %v3592
      %3594 = vmatmul.bf16.gmra.mxu0 %v3410
      %v3595 = vpop.f32.mrf.mxu0
      %v3596 = vadd.f32 0.0, %v3595
      %v3597 = vpop.f32.mrf.mxu0
      %v3598 = vadd.f32 0.0, %v3597
      %3599 = vmatmul.bf16.gmra.mxu0 %v3419
      %v3600 = vpop.f32.mrf.mxu0
      %v3601 = vadd.f32 0.0, %v3600
      %v3602 = vpop.f32.mrf.mxu0
      %v3603 = vadd.f32 0.0, %v3602
      %3604 = vmatmul.bf16.gmra.mxu0 %v3428
      %v3605 = vpop.f32.mrf.mxu0
      %v3606 = vadd.f32 0.0, %v3605
      %v3607 = vpop.f32.mrf.mxu0
      %v3608 = vadd.f32 0.0, %v3607
      %3609 = vmatmul.bf16.gmra.mxu0 %v3437
      %v3610 = vpop.f32.mrf.mxu0
      %v3611 = vadd.f32 0.0, %v3610
      %v3612 = vpop.f32.mrf.mxu0
      %v3613 = vadd.f32 0.0, %v3612
      %3614 = vmatmul.bf16.gmra.mxu0 %v3446
      %v3615 = vpop.f32.mrf.mxu0
      %v3616 = vadd.f32 0.0, %v3615
      %v3617 = vpop.f32.mrf.mxu0
      %v3618 = vadd.f32 0.0, %v3617
      %3619 = vmatmul.bf16.gmra.mxu0 %v3455
      %v3620 = vpop.f32.mrf.mxu0
      %v3621 = vadd.f32 0.0, %v3620
      %v3622 = vpop.f32.mrf.mxu0
      %v3623 = vadd.f32 0.0, %v3622
      %3624 = vmatmul.bf16.gmra.mxu0 %v3464
      %v3625 = vpop.f32.mrf.mxu0
      %v3626 = vadd.f32 0.0, %v3625
      %v3627 = vpop.f32.mrf.mxu0
      %v3628 = vadd.f32 0.0, %v3627
      %3629 = vmatmul.bf16.gmra.mxu0 %v3473
      %v3630 = vpop.f32.mrf.mxu0
      %v3631 = vadd.f32 0.0, %v3630
      %v3632 = vpop.f32.mrf.mxu0
      %v3633 = vadd.f32 0.0, %v3632
      %3634 = vmatmul.bf16.gmra.mxu0 %v3482
      %v3635 = vpop.f32.mrf.mxu0
      %v3636 = vadd.f32 0.0, %v3635
      %v3637 = vpop.f32.mrf.mxu0
      %v3638 = vadd.f32 0.0, %v3637
      %3639 = vmatmul.bf16.gmra.mxu0 %v3491
      %v3640 = vpop.f32.mrf.mxu0
      %v3641 = vadd.f32 0.0, %v3640
      %v3642 = vpop.f32.mrf.mxu0
      %v3643 = vadd.f32 0.0, %v3642
      %3644 = vdwg.mxu0
      %v3645 = vadd.f32 %v3142, %v3566
      %v3646 = vadd.f32 %v3143, %v3568
      %v3647 = vadd.f32 %v3144, %v3571
      %v3648 = vadd.f32 %v3145, %v3573
      %v3649 = vadd.f32 %v3146, %v3576
      %v3650 = vadd.f32 %v3147, %v3578
      %v3651 = vadd.f32 %v3148, %v3581
      %v3652 = vadd.f32 %v3149, %v3583
      %v3653 = vadd.f32 %v3150, %v3586
      %v3654 = vadd.f32 %v3151, %v3588
      %v3655 = vadd.f32 %v3152, %v3591
      %v3656 = vadd.f32 %v3153, %v3593
      %v3657 = vadd.f32 %v3154, %v3596
      %v3658 = vadd.f32 %v3155, %v3598
      %v3659 = vadd.f32 %v3156, %v3601
      %v3660 = vadd.f32 %v3157, %v3603
      %v3661 = vadd.f32 %v3158, %v3606
      %v3662 = vadd.f32 %v3159, %v3608
      %v3663 = vadd.f32 %v3160, %v3611
      %v3664 = vadd.f32 %v3161, %v3613
      %v3665 = vadd.f32 %v3162, %v3616
      %v3666 = vadd.f32 %v3163, %v3618
      %v3667 = vadd.f32 %v3164, %v3621
      %v3668 = vadd.f32 %v3165, %v3623
      %v3669 = vadd.f32 %v3166, %v3626
      %v3670 = vadd.f32 %v3167, %v3628
      %v3671 = vadd.f32 %v3168, %v3631
      %v3672 = vadd.f32 %v3169, %v3633
      %v3673 = vadd.f32 %v3170, %v3636
      %v3674 = vadd.f32 %v3171, %v3638
      %v3675 = vadd.f32 %v3172, %v3641
      %v3676 = vadd.f32 %v3173, %v3643
      %s3677 = scalar_lea.vmem %s3, 256
      %v3678 = vld [vmem:[%s3677] sm:$0xf]
      %v3679 = vld [vmem:[%s3677 + $0x4] sm:$0xf]
      %v3680 = vld [vmem:[%s3677 + $0x8] sm:$0xf]
      %v3681 = vld [vmem:[%s3677 + $0xc] sm:$0xf]
      %v3682 = vld [vmem:[%s3677 + $0x10] sm:$0xf]
      %v3683 = vld [vmem:[%s3677 + $0x14] sm:$0xf]
      %v3684 = vld [vmem:[%s3677 + $0x18] sm:$0xf]
      %v3685 = vld [vmem:[%s3677 + $0x1c] sm:$0xf]
      %v3686 = vld [vmem:[%s3677 + $0x20] sm:$0xf]
      %v3687 = vld [vmem:[%s3677 + $0x24] sm:$0xf]
      %v3688 = vld [vmem:[%s3677 + $0x28] sm:$0xf]
      %v3689 = vld [vmem:[%s3677 + $0x2c] sm:$0xf]
      %v3690 = vld [vmem:[%s3677 + $0x30] sm:$0xf]
      %v3691 = vld [vmem:[%s3677 + $0x34] sm:$0xf]
      %v3692 = vld [vmem:[%s3677 + $0x38] sm:$0xf]
      %v3693 = vld [vmem:[%s3677 + $0x3c] sm:$0xf]
      %v3726 = vunpack.c.l.b16 %v3175
      %v3727 = vunpack.c.l.b16 %v3176
      %v3728 = vunpack.c.l.b16 %v3177
      %v3729 = vunpack.c.l.b16 %v3178
      %v3730 = vunpack.c.l.b16 %v3179
      %v3731 = vunpack.c.l.b16 %v3180
      %v3732 = vunpack.c.l.b16 %v3181
      %v3733 = vunpack.c.l.b16 %v3182
      %v3734 = vunpack.c.l.b16 %v3183
      %v3735 = vunpack.c.l.b16 %v3184
      %v3736 = vunpack.c.l.b16 %v3185
      %v3737 = vunpack.c.l.b16 %v3186
      %v3738 = vunpack.c.l.b16 %v3187
      %v3739 = vunpack.c.l.b16 %v3188
      %v3740 = vunpack.c.l.b16 %v3189
      %v3741 = vunpack.c.l.b16 %v3190
      %v3742 = vunpack.c.l.b16 %v3191
      %v3743 = vunpack.c.l.b16 %v3192
      %v3744 = vunpack.c.l.b16 %v3193
      %v3745 = vunpack.c.l.b16 %v3194
      %v3746 = vunpack.c.l.b16 %v3195
      %v3747 = vunpack.c.l.b16 %v3196
      %v3748 = vunpack.c.l.b16 %v3197
      %v3749 = vunpack.c.l.b16 %v3198
      %v3750 = vunpack.c.l.b16 %v3199
      %v3751 = vunpack.c.l.b16 %v3200
      %v3752 = vunpack.c.l.b16 %v3201
      %v3753 = vunpack.c.l.b16 %v3202
      %v3754 = vunpack.c.l.b16 %v3203
      %v3755 = vunpack.c.l.b16 %v3204
      %v3756 = vunpack.c.l.b16 %v3205
      %v3757 = vunpack.c.l.b16 %v3206
      %v3758 = vpack.c.b16 %v3727, %v3726
      %v3759 = vpack.c.b16 %v3729, %v3728
      %v3760 = vpack.c.b16 %v3731, %v3730
      %v3761 = vpack.c.b16 %v3733, %v3732
      %v3762 = vpack.c.b16 %v3735, %v3734
      %v3763 = vpack.c.b16 %v3737, %v3736
      %v3764 = vpack.c.b16 %v3739, %v3738
      %v3765 = vpack.c.b16 %v3741, %v3740
      %v3766 = vpack.c.b16 %v3743, %v3742
      %v3767 = vpack.c.b16 %v3745, %v3744
      %v3768 = vpack.c.b16 %v3747, %v3746
      %v3769 = vpack.c.b16 %v3749, %v3748
      %v3770 = vpack.c.b16 %v3751, %v3750
      %v3771 = vpack.c.b16 %v3753, %v3752
      %v3772 = vpack.c.b16 %v3755, %v3754
      %v3773 = vpack.c.b16 %v3757, %v3756
      %v3806 = vunpack.c.l.b16 %v3678
      %v3807 = vunpack.c.l.b16 %v3679
      %v3808 = vunpack.c.l.b16 %v3680
      %v3809 = vunpack.c.l.b16 %v3681
      %v3810 = vunpack.c.l.b16 %v3682
      %v3811 = vunpack.c.l.b16 %v3683
      %v3812 = vunpack.c.l.b16 %v3684
      %v3813 = vunpack.c.l.b16 %v3685
      %v3814 = vunpack.c.l.b16 %v3686
      %v3815 = vunpack.c.l.b16 %v3687
      %v3816 = vunpack.c.l.b16 %v3688
      %v3817 = vunpack.c.l.b16 %v3689
      %v3818 = vunpack.c.l.b16 %v3690
      %v3819 = vunpack.c.l.b16 %v3691
      %v3820 = vunpack.c.l.b16 %v3692
      %v3821 = vunpack.c.l.b16 %v3693
      %v3822 = vpack.c.b16 %v3807, %v3806
      %v3823 = vpack.c.b16 %v3809, %v3808
      %v3824 = vpack.c.b16 %v3811, %v3810
      %v3825 = vpack.c.b16 %v3813, %v3812
      %v3826 = vpack.c.b16 %v3815, %v3814
      %v3827 = vpack.c.b16 %v3817, %v3816
      %v3828 = vpack.c.b16 %v3819, %v3818
      %v3829 = vpack.c.b16 %v3821, %v3820
      %3838 = vmatpush.bf16.msra.mxu0 %v3829
      %3839 = vmatpush.bf16.msra.mxu0 %v3828
      %3840 = vmatpush.bf16.msra.mxu0 %v3827
      %3841 = vmatpush.bf16.msra.mxu0 %v3826
      %3842 = vmatpush.bf16.msra.mxu0 %v3825
      %3843 = vmatpush.bf16.msra.mxu0 %v3824
      %3844 = vmatpush.bf16.msra.mxu0 %v3823
      %3845 = vmatpush.bf16.msra.mxu0 %v3822
      %3846 = vmatmul.bf16.gmra.mxu0 %v3758
      %v3847 = vpop.f32.mrf.mxu0
      %v3848 = vadd.f32 0.0, %v3847
      %v3849 = vpop.f32.mrf.mxu0
      %v3850 = vadd.f32 0.0, %v3849
      %3851 = vmatmul.bf16.gmra.mxu0 %v3759
      %v3852 = vpop.f32.mrf.mxu0
      %v3853 = vadd.f32 0.0, %v3852
      %v3854 = vpop.f32.mrf.mxu0
      %v3855 = vadd.f32 0.0, %v3854
      %3856 = vmatmul.bf16.gmra.mxu0 %v3760
      %v3857 = vpop.f32.mrf.mxu0
      %v3858 = vadd.f32 0.0, %v3857
      %v3859 = vpop.f32.mrf.mxu0
      %v3860 = vadd.f32 0.0, %v3859
      %3861 = vmatmul.bf16.gmra.mxu0 %v3761
      %v3862 = vpop.f32.mrf.mxu0
      %v3863 = vadd.f32 0.0, %v3862
      %v3864 = vpop.f32.mrf.mxu0
      %v3865 = vadd.f32 0.0, %v3864
      %3866 = vmatmul.bf16.gmra.mxu0 %v3762
      %v3867 = vpop.f32.mrf.mxu0
      %v3868 = vadd.f32 0.0, %v3867
      %v3869 = vpop.f32.mrf.mxu0
      %v3870 = vadd.f32 0.0, %v3869
      %3871 = vmatmul.bf16.gmra.mxu0 %v3763
      %v3872 = vpop.f32.mrf.mxu0
      %v3873 = vadd.f32 0.0, %v3872
      %v3874 = vpop.f32.mrf.mxu0
      %v3875 = vadd.f32 0.0, %v3874
      %3876 = vmatmul.bf16.gmra.mxu0 %v3764
      %v3877 = vpop.f32.mrf.mxu0
      %v3878 = vadd.f32 0.0, %v3877
      %v3879 = vpop.f32.mrf.mxu0
      %v3880 = vadd.f32 0.0, %v3879
      %3881 = vmatmul.bf16.gmra.mxu0 %v3765
      %v3882 = vpop.f32.mrf.mxu0
      %v3883 = vadd.f32 0.0, %v3882
      %v3884 = vpop.f32.mrf.mxu0
      %v3885 = vadd.f32 0.0, %v3884
      %3886 = vmatmul.bf16.gmra.mxu0 %v3766
      %v3887 = vpop.f32.mrf.mxu0
      %v3888 = vadd.f32 0.0, %v3887
      %v3889 = vpop.f32.mrf.mxu0
      %v3890 = vadd.f32 0.0, %v3889
      %3891 = vmatmul.bf16.gmra.mxu0 %v3767
      %v3892 = vpop.f32.mrf.mxu0
      %v3893 = vadd.f32 0.0, %v3892
      %v3894 = vpop.f32.mrf.mxu0
      %v3895 = vadd.f32 0.0, %v3894
      %3896 = vmatmul.bf16.gmra.mxu0 %v3768
      %v3897 = vpop.f32.mrf.mxu0
      %v3898 = vadd.f32 0.0, %v3897
      %v3899 = vpop.f32.mrf.mxu0
      %v3900 = vadd.f32 0.0, %v3899
      %3901 = vmatmul.bf16.gmra.mxu0 %v3769
      %v3902 = vpop.f32.mrf.mxu0
      %v3903 = vadd.f32 0.0, %v3902
      %v3904 = vpop.f32.mrf.mxu0
      %v3905 = vadd.f32 0.0, %v3904
      %3906 = vmatmul.bf16.gmra.mxu0 %v3770
      %v3907 = vpop.f32.mrf.mxu0
      %v3908 = vadd.f32 0.0, %v3907
      %v3909 = vpop.f32.mrf.mxu0
      %v3910 = vadd.f32 0.0, %v3909
      %3911 = vmatmul.bf16.gmra.mxu0 %v3771
      %v3912 = vpop.f32.mrf.mxu0
      %v3913 = vadd.f32 0.0, %v3912
      %v3914 = vpop.f32.mrf.mxu0
      %v3915 = vadd.f32 0.0, %v3914
      %3916 = vmatmul.bf16.gmra.mxu0 %v3772
      %v3917 = vpop.f32.mrf.mxu0
      %v3918 = vadd.f32 0.0, %v3917
      %v3919 = vpop.f32.mrf.mxu0
      %v3920 = vadd.f32 0.0, %v3919
      %3921 = vmatmul.bf16.gmra.mxu0 %v3773
      %v3922 = vpop.f32.mrf.mxu0
      %v3923 = vadd.f32 0.0, %v3922
      %v3924 = vpop.f32.mrf.mxu0
      %v3925 = vadd.f32 0.0, %v3924
      %3926 = vdwg.mxu0
      %v3927 = vadd.f32 %v3645, %v3848
      %v3928 = vadd.f32 %v3646, %v3850
      %v3929 = vadd.f32 %v3647, %v3853
      %v3930 = vadd.f32 %v3648, %v3855
      %v3931 = vadd.f32 %v3649, %v3858
      %v3932 = vadd.f32 %v3650, %v3860
      %v3933 = vadd.f32 %v3651, %v3863
      %v3934 = vadd.f32 %v3652, %v3865
      %v3935 = vadd.f32 %v3653, %v3868
      %v3936 = vadd.f32 %v3654, %v3870
      %v3937 = vadd.f32 %v3655, %v3873
      %v3938 = vadd.f32 %v3656, %v3875
      %v3939 = vadd.f32 %v3657, %v3878
      %v3940 = vadd.f32 %v3658, %v3880
      %v3941 = vadd.f32 %v3659, %v3883
      %v3942 = vadd.f32 %v3660, %v3885
      %v3943 = vadd.f32 %v3661, %v3888
      %v3944 = vadd.f32 %v3662, %v3890
      %v3945 = vadd.f32 %v3663, %v3893
      %v3946 = vadd.f32 %v3664, %v3895
      %v3947 = vadd.f32 %v3665, %v3898
      %v3948 = vadd.f32 %v3666, %v3900
      %v3949 = vadd.f32 %v3667, %v3903
      %v3950 = vadd.f32 %v3668, %v3905
      %v3951 = vadd.f32 %v3669, %v3908
      %v3952 = vadd.f32 %v3670, %v3910
      %v3953 = vadd.f32 %v3671, %v3913
      %v3954 = vadd.f32 %v3672, %v3915
      %v3955 = vadd.f32 %v3673, %v3918
      %v3956 = vadd.f32 %v3674, %v3920
      %v3957 = vadd.f32 %v3675, %v3923
      %v3958 = vadd.f32 %v3676, %v3925
      %v3959 = vld [vmem:[#allocation2 + $0xc] sm:$0xf]
      %v3960 = vld [vmem:[#allocation2 + $0x10] sm:$0xf]
      %v3961 = vld [vmem:[#allocation2 + $0x14] sm:$0xf]
      %v3962 = vld [vmem:[#allocation2 + $0x18] sm:$0xf]
      %v3963 = vld [vmem:[#allocation2 + $0x1c] sm:$0xf]
      %v3964 = vld [vmem:[#allocation2 + $0x20] sm:$0xf]
      %v3965 = vld [vmem:[#allocation2 + $0x24] sm:$0xf]
      %v3966 = vld [vmem:[#allocation2 + $0x28] sm:$0xf]
      %v3967 = vld [vmem:[#allocation2 + $0x2c] sm:$0xf]
      %v3968 = vld [vmem:[#allocation2 + $0x30] sm:$0xf]
      %v3969 = vld [vmem:[#allocation2 + $0x34] sm:$0xf]
      %v3970 = vld [vmem:[#allocation2 + $0x38] sm:$0xf]
      %v3971 = vld [vmem:[#allocation2 + $0x3c] sm:$0xf]
      %v3972 = vld [vmem:[#allocation2 + $0x40] sm:$0xf]
      %v3973 = vld [vmem:[#allocation2 + $0x44] sm:$0xf]
      %v3974 = vld [vmem:[#allocation2 + $0x48] sm:$0xf]
      %v3975 = vld [vmem:[#allocation2 + $0x4c] sm:$0xf]
      %v3976 = vld [vmem:[#allocation2 + $0x50] sm:$0xf]
      %v3977 = vld [vmem:[#allocation2 + $0x54] sm:$0xf]
      %v3978 = vld [vmem:[#allocation2 + $0x58] sm:$0xf]
      %v3979 = vld [vmem:[#allocation2 + $0x5c] sm:$0xf]
      %v3980 = vld [vmem:[#allocation2 + $0x60] sm:$0xf]
      %v3981 = vld [vmem:[#allocation2 + $0x64] sm:$0xf]
      %v3982 = vld [vmem:[#allocation2 + $0x68] sm:$0xf]
      %v3983 = vld [vmem:[#allocation2 + $0x6c] sm:$0xf]
      %v3984 = vld [vmem:[#allocation2 + $0x70] sm:$0xf]
      %v3985 = vld [vmem:[#allocation2 + $0x74] sm:$0xf]
      %v3986 = vld [vmem:[#allocation2 + $0x78] sm:$0xf]
      %v3987 = vld [vmem:[#allocation2 + $0x7c] sm:$0xf]
      %v3988 = vld [vmem:[#allocation2 + $0x80] sm:$0xf]
      %v3989 = vld [vmem:[#allocation2 + $0x84] sm:$0xf]
      %v3990 = vld [vmem:[#allocation2 + $0x88] sm:$0xf]
      %v3991 = vld [vmem:[#allocation2 + $0x8c] sm:$0x1]
      %v3992 = vsel %vm2498, %v3959, 0
      %v3993 = vsel %vm2505, %v3960, 0
      %v3994 = vsel %vm2512, %v3961, 0
      %v3995 = vsel %vm2519, %v3962, 0
      %v3996 = vsel %vm2526, %v3963, 0
      %v3997 = vsel %vm2533, %v3964, 0
      %v3998 = vsel %vm2540, %v3965, 0
      %v3999 = vsel %vm2547, %v3966, 0
      %v4000 = vsel %vm2554, %v3967, 0
      %v4001 = vsel %vm2561, %v3968, 0
      %v4002 = vsel %vm2568, %v3969, 0
      %v4003 = vsel %vm2575, %v3970, 0
      %v4004 = vsel %vm2582, %v3971, 0
      %v4005 = vsel %vm2589, %v3972, 0
      %v4006 = vsel %vm2596, %v3973, 0
      %v4007 = vsel %vm2603, %v3974, 0
      %v4008 = vsel %vm2610, %v3975, 0
      %v4009 = vsel %vm2617, %v3976, 0
      %v4010 = vsel %vm2624, %v3977, 0
      %v4011 = vsel %vm2631, %v3978, 0
      %v4012 = vsel %vm2638, %v3979, 0
      %v4013 = vsel %vm2645, %v3980, 0
      %v4014 = vsel %vm2652, %v3981, 0
      %v4015 = vsel %vm2659, %v3982, 0
      %v4016 = vsel %vm2666, %v3983, 0
      %v4017 = vsel %vm2673, %v3984, 0
      %v4018 = vsel %vm2680, %v3985, 0
      %v4019 = vsel %vm2687, %v3986, 0
      %v4020 = vsel %vm2694, %v3987, 0
      %v4021 = vsel %vm2701, %v3988, 0
      %v4022 = vsel %vm2708, %v3989, 0
      %v4023 = vsel %vm2715, %v3990, 0
      %v4024 = vsel %vm2722, %v3991, 0
      %s4025 = scalar_lea.vmem %s3, 320
      %v4026 = vld [vmem:[%s4025] sm:$0xf]
      %v4027 = vld [vmem:[%s4025 + $0x4] sm:$0xf]
      %v4028 = vld [vmem:[%s4025 + $0x8] sm:$0xf]
      %v4029 = vld [vmem:[%s4025 + $0xc] sm:$0xf]
      %v4030 = vld [vmem:[%s4025 + $0x10] sm:$0xf]
      %v4031 = vld [vmem:[%s4025 + $0x14] sm:$0xf]
      %v4032 = vld [vmem:[%s4025 + $0x18] sm:$0xf]
      %v4033 = vld [vmem:[%s4025 + $0x1c] sm:$0xf]
      %v4034 = vld [vmem:[%s4025 + $0x20] sm:$0xf]
      %v4035 = vld [vmem:[%s4025 + $0x24] sm:$0xf]
      %v4036 = vld [vmem:[%s4025 + $0x28] sm:$0xf]
      %v4037 = vld [vmem:[%s4025 + $0x2c] sm:$0xf]
      %v4038 = vld [vmem:[%s4025 + $0x30] sm:$0xf]
      %v4039 = vld [vmem:[%s4025 + $0x34] sm:$0xf]
      %v4040 = vld [vmem:[%s4025 + $0x38] sm:$0xf]
      %v4041 = vld [vmem:[%s4025 + $0x3c] sm:$0xf]
      %v4075 = vunpack.c.l.b16 %v3992
      %v4076 = vunpack.c.l.b16 %v3993
      %v4077 = vunpack.c.l.b16 %v3994
      %v4078 = vunpack.c.l.b16 %v3995
      %v4079 = vunpack.c.l.b16 %v3996
      %v4080 = vunpack.c.l.b16 %v3997
      %v4081 = vunpack.c.l.b16 %v3998
      %v4082 = vunpack.c.l.b16 %v3999
      %v4083 = vunpack.c.l.b16 %v4000
      %v4084 = vunpack.c.l.b16 %v4001
      %v4085 = vunpack.c.l.b16 %v4002
      %v4086 = vunpack.c.l.b16 %v4003
      %v4087 = vunpack.c.l.b16 %v4004
      %v4088 = vunpack.c.l.b16 %v4005
      %v4089 = vunpack.c.l.b16 %v4006
      %v4090 = vunpack.c.l.b16 %v4007
      %v4091 = vunpack.c.l.b16 %v4008
      %v4092 = vunpack.c.l.b16 %v4009
      %v4093 = vunpack.c.l.b16 %v4010
      %v4094 = vunpack.c.l.b16 %v4011
      %v4095 = vunpack.c.l.b16 %v4012
      %v4096 = vunpack.c.l.b16 %v4013
      %v4097 = vunpack.c.l.b16 %v4014
      %v4098 = vunpack.c.l.b16 %v4015
      %v4099 = vunpack.c.l.b16 %v4016
      %v4100 = vunpack.c.l.b16 %v4017
      %v4101 = vunpack.c.l.b16 %v4018
      %v4102 = vunpack.c.l.b16 %v4019
      %v4103 = vunpack.c.l.b16 %v4020
      %v4104 = vunpack.c.l.b16 %v4021
      %v4105 = vunpack.c.l.b16 %v4022
      %v4106 = vunpack.c.l.b16 %v4023
      %v4107 = vunpack.c.l.b16 %v4024
      %v4108 = vpack.c.b16 %v4076, %v4075
      %v4109 = vpack.c.b16 %v4078, %v4077
      %v4110 = vpack.c.b16 %v4080, %v4079
      %v4111 = vpack.c.b16 %v4082, %v4081
      %v4112 = vpack.c.b16 %v4084, %v4083
      %v4113 = vpack.c.b16 %v4086, %v4085
      %v4114 = vpack.c.b16 %v4088, %v4087
      %v4115 = vpack.c.b16 %v4090, %v4089
      %v4116 = vpack.c.b16 %v4092, %v4091
      %v4117 = vpack.c.b16 %v4094, %v4093
      %v4118 = vpack.c.b16 %v4096, %v4095
      %v4119 = vpack.c.b16 %v4098, %v4097
      %v4120 = vpack.c.b16 %v4100, %v4099
      %v4121 = vpack.c.b16 %v4102, %v4101
      %v4122 = vpack.c.b16 %v4104, %v4103
      %v4123 = vpack.c.b16 %v4106, %v4105
      %v4124 = vpack.c.b16 %v4107, %v4107
      %v4126 = vshrl.u32 %v4108, 16
      %v4128 = vshll.u32 %v4108, 16
      %v4130 = vrot.slane %v4128, 1
      %v4131 = vor.u32 %v4126, %v4130
      %v4133 = vshll.u32 %v4109, 16
      %v4135 = vrot.slane %v4133, 1
      %v4136 = vsel %vm2856, %v4131, %v4135
      %v4137 = vshrl.u32 %v4109, 16
      %v4139 = vor.u32 %v4137, %v4135
      %v4141 = vshll.u32 %v4110, 16
      %v4143 = vrot.slane %v4141, 1
      %v4144 = vsel %vm2856, %v4139, %v4143
      %v4145 = vshrl.u32 %v4110, 16
      %v4147 = vor.u32 %v4145, %v4143
      %v4149 = vshll.u32 %v4111, 16
      %v4151 = vrot.slane %v4149, 1
      %v4152 = vsel %vm2856, %v4147, %v4151
      %v4153 = vshrl.u32 %v4111, 16
      %v4155 = vor.u32 %v4153, %v4151
      %v4157 = vshll.u32 %v4112, 16
      %v4159 = vrot.slane %v4157, 1
      %v4160 = vsel %vm2856, %v4155, %v4159
      %v4161 = vshrl.u32 %v4112, 16
      %v4163 = vor.u32 %v4161, %v4159
      %v4165 = vshll.u32 %v4113, 16
      %v4167 = vrot.slane %v4165, 1
      %v4168 = vsel %vm2856, %v4163, %v4167
      %v4169 = vshrl.u32 %v4113, 16
      %v4171 = vor.u32 %v4169, %v4167
      %v4173 = vshll.u32 %v4114, 16
      %v4175 = vrot.slane %v4173, 1
      %v4176 = vsel %vm2856, %v4171, %v4175
      %v4177 = vshrl.u32 %v4114, 16
      %v4179 = vor.u32 %v4177, %v4175
      %v4181 = vshll.u32 %v4115, 16
      %v4183 = vrot.slane %v4181, 1
      %v4184 = vsel %vm2856, %v4179, %v4183
      %v4185 = vshrl.u32 %v4115, 16
      %v4187 = vor.u32 %v4185, %v4183
      %v4189 = vshll.u32 %v4116, 16
      %v4191 = vrot.slane %v4189, 1
      %v4192 = vsel %vm2856, %v4187, %v4191
      %v4193 = vshrl.u32 %v4116, 16
      %v4195 = vor.u32 %v4193, %v4191
      %v4197 = vshll.u32 %v4117, 16
      %v4199 = vrot.slane %v4197, 1
      %v4200 = vsel %vm2856, %v4195, %v4199
      %v4201 = vshrl.u32 %v4117, 16
      %v4203 = vor.u32 %v4201, %v4199
      %v4205 = vshll.u32 %v4118, 16
      %v4207 = vrot.slane %v4205, 1
      %v4208 = vsel %vm2856, %v4203, %v4207
      %v4209 = vshrl.u32 %v4118, 16
      %v4211 = vor.u32 %v4209, %v4207
      %v4213 = vshll.u32 %v4119, 16
      %v4215 = vrot.slane %v4213, 1
      %v4216 = vsel %vm2856, %v4211, %v4215
      %v4217 = vshrl.u32 %v4119, 16
      %v4219 = vor.u32 %v4217, %v4215
      %v4221 = vshll.u32 %v4120, 16
      %v4223 = vrot.slane %v4221, 1
      %v4224 = vsel %vm2856, %v4219, %v4223
      %v4225 = vshrl.u32 %v4120, 16
      %v4227 = vor.u32 %v4225, %v4223
      %v4229 = vshll.u32 %v4121, 16
      %v4231 = vrot.slane %v4229, 1
      %v4232 = vsel %vm2856, %v4227, %v4231
      %v4233 = vshrl.u32 %v4121, 16
      %v4235 = vor.u32 %v4233, %v4231
      %v4237 = vshll.u32 %v4122, 16
      %v4239 = vrot.slane %v4237, 1
      %v4240 = vsel %vm2856, %v4235, %v4239
      %v4241 = vshrl.u32 %v4122, 16
      %v4243 = vor.u32 %v4241, %v4239
      %v4245 = vshll.u32 %v4123, 16
      %v4247 = vrot.slane %v4245, 1
      %v4248 = vsel %vm2856, %v4243, %v4247
      %v4249 = vshrl.u32 %v4123, 16
      %v4251 = vor.u32 %v4249, %v4247
      %v4253 = vshll.u32 %v4124, 16
      %v4255 = vrot.slane %v4253, 1
      %v4256 = vsel %vm2856, %v4251, %v4255
      %v4289 = vunpack.c.l.b16 %v4026
      %v4290 = vunpack.c.l.b16 %v4027
      %v4291 = vunpack.c.l.b16 %v4028
      %v4292 = vunpack.c.l.b16 %v4029
      %v4293 = vunpack.c.l.b16 %v4030
      %v4294 = vunpack.c.l.b16 %v4031
      %v4295 = vunpack.c.l.b16 %v4032
      %v4296 = vunpack.c.l.b16 %v4033
      %v4297 = vunpack.c.l.b16 %v4034
      %v4298 = vunpack.c.l.b16 %v4035
      %v4299 = vunpack.c.l.b16 %v4036
      %v4300 = vunpack.c.l.b16 %v4037
      %v4301 = vunpack.c.l.b16 %v4038
      %v4302 = vunpack.c.l.b16 %v4039
      %v4303 = vunpack.c.l.b16 %v4040
      %v4304 = vunpack.c.l.b16 %v4041
      %v4305 = vpack.c.b16 %v4290, %v4289
      %v4306 = vpack.c.b16 %v4292, %v4291
      %v4307 = vpack.c.b16 %v4294, %v4293
      %v4308 = vpack.c.b16 %v4296, %v4295
      %v4309 = vpack.c.b16 %v4298, %v4297
      %v4310 = vpack.c.b16 %v4300, %v4299
      %v4311 = vpack.c.b16 %v4302, %v4301
      %v4312 = vpack.c.b16 %v4304, %v4303
      %4321 = vmatpush.bf16.msra.mxu0 %v4312
      %4322 = vmatpush.bf16.msra.mxu0 %v4311
      %4323 = vmatpush.bf16.msra.mxu0 %v4310
      %4324 = vmatpush.bf16.msra.mxu0 %v4309
      %4325 = vmatpush.bf16.msra.mxu0 %v4308
      %4326 = vmatpush.bf16.msra.mxu0 %v4307
      %4327 = vmatpush.bf16.msra.mxu0 %v4306
      %4328 = vmatpush.bf16.msra.mxu0 %v4305
      %4329 = vmatmul.bf16.gmra.mxu0 %v4136
      %v4330 = vpop.f32.mrf.mxu0
      %v4331 = vadd.f32 0.0, %v4330
      %v4332 = vpop.f32.mrf.mxu0
      %v4333 = vadd.f32 0.0, %v4332
      %4334 = vmatmul.bf16.gmra.mxu0 %v4144
      %v4335 = vpop.f32.mrf.mxu0
      %v4336 = vadd.f32 0.0, %v4335
      %v4337 = vpop.f32.mrf.mxu0
      %v4338 = vadd.f32 0.0, %v4337
      %4339 = vmatmul.bf16.gmra.mxu0 %v4152
      %v4340 = vpop.f32.mrf.mxu0
      %v4341 = vadd.f32 0.0, %v4340
      %v4342 = vpop.f32.mrf.mxu0
      %v4343 = vadd.f32 0.0, %v4342
      %4344 = vmatmul.bf16.gmra.mxu0 %v4160
      %v4345 = vpop.f32.mrf.mxu0
      %v4346 = vadd.f32 0.0, %v4345
      %v4347 = vpop.f32.mrf.mxu0
      %v4348 = vadd.f32 0.0, %v4347
      %4349 = vmatmul.bf16.gmra.mxu0 %v4168
      %v4350 = vpop.f32.mrf.mxu0
      %v4351 = vadd.f32 0.0, %v4350
      %v4352 = vpop.f32.mrf.mxu0
      %v4353 = vadd.f32 0.0, %v4352
      %4354 = vmatmul.bf16.gmra.mxu0 %v4176
      %v4355 = vpop.f32.mrf.mxu0
      %v4356 = vadd.f32 0.0, %v4355
      %v4357 = vpop.f32.mrf.mxu0
      %v4358 = vadd.f32 0.0, %v4357
      %4359 = vmatmul.bf16.gmra.mxu0 %v4184
      %v4360 = vpop.f32.mrf.mxu0
      %v4361 = vadd.f32 0.0, %v4360
      %v4362 = vpop.f32.mrf.mxu0
      %v4363 = vadd.f32 0.0, %v4362
      %4364 = vmatmul.bf16.gmra.mxu0 %v4192
      %v4365 = vpop.f32.mrf.mxu0
      %v4366 = vadd.f32 0.0, %v4365
      %v4367 = vpop.f32.mrf.mxu0
      %v4368 = vadd.f32 0.0, %v4367
      %4369 = vmatmul.bf16.gmra.mxu0 %v4200
      %v4370 = vpop.f32.mrf.mxu0
      %v4371 = vadd.f32 0.0, %v4370
      %v4372 = vpop.f32.mrf.mxu0
      %v4373 = vadd.f32 0.0, %v4372
      %4374 = vmatmul.bf16.gmra.mxu0 %v4208
      %v4375 = vpop.f32.mrf.mxu0
      %v4376 = vadd.f32 0.0, %v4375
      %v4377 = vpop.f32.mrf.mxu0
      %v4378 = vadd.f32 0.0, %v4377
      %4379 = vmatmul.bf16.gmra.mxu0 %v4216
      %v4380 = vpop.f32.mrf.mxu0
      %v4381 = vadd.f32 0.0, %v4380
      %v4382 = vpop.f32.mrf.mxu0
      %v4383 = vadd.f32 0.0, %v4382
      %4384 = vmatmul.bf16.gmra.mxu0 %v4224
      %v4385 = vpop.f32.mrf.mxu0
      %v4386 = vadd.f32 0.0, %v4385
      %v4387 = vpop.f32.mrf.mxu0
      %v4388 = vadd.f32 0.0, %v4387
      %4389 = vmatmul.bf16.gmra.mxu0 %v4232
      %v4390 = vpop.f32.mrf.mxu0
      %v4391 = vadd.f32 0.0, %v4390
      %v4392 = vpop.f32.mrf.mxu0
      %v4393 = vadd.f32 0.0, %v4392
      %4394 = vmatmul.bf16.gmra.mxu0 %v4240
      %v4395 = vpop.f32.mrf.mxu0
      %v4396 = vadd.f32 0.0, %v4395
      %v4397 = vpop.f32.mrf.mxu0
      %v4398 = vadd.f32 0.0, %v4397
      %4399 = vmatmul.bf16.gmra.mxu0 %v4248
      %v4400 = vpop.f32.mrf.mxu0
      %v4401 = vadd.f32 0.0, %v4400
      %v4402 = vpop.f32.mrf.mxu0
      %v4403 = vadd.f32 0.0, %v4402
      %4404 = vmatmul.bf16.gmra.mxu0 %v4256
      %v4405 = vpop.f32.mrf.mxu0
      %v4406 = vadd.f32 0.0, %v4405
      %v4407 = vpop.f32.mrf.mxu0
      %v4408 = vadd.f32 0.0, %v4407
      %4409 = vdwg.mxu0
      %v4410 = vadd.f32 %v3927, %v4331
      %v4411 = vadd.f32 %v3928, %v4333
      %v4412 = vadd.f32 %v3929, %v4336
      %v4413 = vadd.f32 %v3930, %v4338
      %v4414 = vadd.f32 %v3931, %v4341
      %v4415 = vadd.f32 %v3932, %v4343
      %v4416 = vadd.f32 %v3933, %v4346
      %v4417 = vadd.f32 %v3934, %v4348
      %v4418 = vadd.f32 %v3935, %v4351
      %v4419 = vadd.f32 %v3936, %v4353
      %v4420 = vadd.f32 %v3937, %v4356
      %v4421 = vadd.f32 %v3938, %v4358
      %v4422 = vadd.f32 %v3939, %v4361
      %v4423 = vadd.f32 %v3940, %v4363
      %v4424 = vadd.f32 %v3941, %v4366
      %v4425 = vadd.f32 %v3942, %v4368
      %v4426 = vadd.f32 %v3943, %v4371
      %v4427 = vadd.f32 %v3944, %v4373
      %v4428 = vadd.f32 %v3945, %v4376
      %v4429 = vadd.f32 %v3946, %v4378
      %v4430 = vadd.f32 %v3947, %v4381
      %v4431 = vadd.f32 %v3948, %v4383
      %v4432 = vadd.f32 %v3949, %v4386
      %v4433 = vadd.f32 %v3950, %v4388
      %v4434 = vadd.f32 %v3951, %v4391
      %v4435 = vadd.f32 %v3952, %v4393
      %v4436 = vadd.f32 %v3953, %v4396
      %v4437 = vadd.f32 %v3954, %v4398
      %v4438 = vadd.f32 %v3955, %v4401
      %v4439 = vadd.f32 %v3956, %v4403
      %v4440 = vadd.f32 %v3957, %v4406
      %v4441 = vadd.f32 %v3958, %v4408
      %v4442 = vld [vmem:[#allocation2 + $0x10] sm:$0x8]
      %v4443 = vld [vmem:[#allocation2 + $0x14] sm:$0xf]
      %v4444 = vld [vmem:[#allocation2 + $0x18] sm:$0xf]
      %v4445 = vld [vmem:[#allocation2 + $0x1c] sm:$0xf]
      %v4446 = vld [vmem:[#allocation2 + $0x20] sm:$0xf]
      %v4447 = vld [vmem:[#allocation2 + $0x24] sm:$0xf]
      %v4448 = vld [vmem:[#allocation2 + $0x28] sm:$0xf]
      %v4449 = vld [vmem:[#allocation2 + $0x2c] sm:$0xf]
      %v4450 = vld [vmem:[#allocation2 + $0x30] sm:$0xf]
      %v4451 = vld [vmem:[#allocation2 + $0x34] sm:$0xf]
      %v4452 = vld [vmem:[#allocation2 + $0x38] sm:$0xf]
      %v4453 = vld [vmem:[#allocation2 + $0x3c] sm:$0xf]
      %v4454 = vld [vmem:[#allocation2 + $0x40] sm:$0xf]
      %v4455 = vld [vmem:[#allocation2 + $0x44] sm:$0xf]
      %v4456 = vld [vmem:[#allocation2 + $0x48] sm:$0xf]
      %v4457 = vld [vmem:[#allocation2 + $0x4c] sm:$0xf]
      %v4458 = vld [vmem:[#allocation2 + $0x50] sm:$0xf]
      %v4459 = vld [vmem:[#allocation2 + $0x54] sm:$0xf]
      %v4460 = vld [vmem:[#allocation2 + $0x58] sm:$0xf]
      %v4461 = vld [vmem:[#allocation2 + $0x5c] sm:$0xf]
      %v4462 = vld [vmem:[#allocation2 + $0x60] sm:$0xf]
      %v4463 = vld [vmem:[#allocation2 + $0x64] sm:$0xf]
      %v4464 = vld [vmem:[#allocation2 + $0x68] sm:$0xf]
      %v4465 = vld [vmem:[#allocation2 + $0x6c] sm:$0xf]
      %v4466 = vld [vmem:[#allocation2 + $0x70] sm:$0xf]
      %v4467 = vld [vmem:[#allocation2 + $0x74] sm:$0xf]
      %v4468 = vld [vmem:[#allocation2 + $0x78] sm:$0xf]
      %v4469 = vld [vmem:[#allocation2 + $0x7c] sm:$0xf]
      %v4470 = vld [vmem:[#allocation2 + $0x80] sm:$0xf]
      %v4471 = vld [vmem:[#allocation2 + $0x84] sm:$0xf]
      %v4472 = vld [vmem:[#allocation2 + $0x88] sm:$0xf]
      %v4473 = vld [vmem:[#allocation2 + $0x8c] sm:$0xf]
      %v4474 = vld [vmem:[#allocation2 + $0x90] sm:$0xf]
      %v4475 = vsel %vm1128, %v4442, 0
      %v4476 = vsel %vm1135, %v4443, 0
      %v4477 = vsel %vm1142, %v4444, 0
      %v4478 = vsel %vm1149, %v4445, 0
      %v4479 = vsel %vm1156, %v4446, 0
      %v4480 = vsel %vm1163, %v4447, 0
      %v4481 = vsel %vm1170, %v4448, 0
      %v4482 = vsel %vm1177, %v4449, 0
      %v4483 = vsel %vm1184, %v4450, 0
      %v4484 = vsel %vm1191, %v4451, 0
      %v4485 = vsel %vm1198, %v4452, 0
      %v4486 = vsel %vm1205, %v4453, 0
      %v4487 = vsel %vm1212, %v4454, 0
      %v4488 = vsel %vm1219, %v4455, 0
      %v4489 = vsel %vm1226, %v4456, 0
      %v4490 = vsel %vm1233, %v4457, 0
      %v4491 = vsel %vm1240, %v4458, 0
      %v4492 = vsel %vm1247, %v4459, 0
      %v4493 = vsel %vm1254, %v4460, 0
      %v4494 = vsel %vm1261, %v4461, 0
      %v4495 = vsel %vm1268, %v4462, 0
      %v4496 = vsel %vm1275, %v4463, 0
      %v4497 = vsel %vm1282, %v4464, 0
      %v4498 = vsel %vm1289, %v4465, 0
      %v4499 = vsel %vm1296, %v4466, 0
      %v4500 = vsel %vm1303, %v4467, 0
      %v4501 = vsel %vm1310, %v4468, 0
      %v4502 = vsel %vm1317, %v4469, 0
      %v4503 = vsel %vm1324, %v4470, 0
      %v4504 = vsel %vm1331, %v4471, 0
      %v4505 = vsel %vm1338, %v4472, 0
      %v4506 = vsel %vm1345, %v4473, 0
      %v4507 = vsel %vm1352, %v4474, 0
      %s4508 = scalar_lea.vmem %s3, 384
      %v4509 = vld [vmem:[%s4508] sm:$0xf]
      %v4510 = vld [vmem:[%s4508 + $0x4] sm:$0xf]
      %v4511 = vld [vmem:[%s4508 + $0x8] sm:$0xf]
      %v4512 = vld [vmem:[%s4508 + $0xc] sm:$0xf]
      %v4513 = vld [vmem:[%s4508 + $0x10] sm:$0xf]
      %v4514 = vld [vmem:[%s4508 + $0x14] sm:$0xf]
      %v4515 = vld [vmem:[%s4508 + $0x18] sm:$0xf]
      %v4516 = vld [vmem:[%s4508 + $0x1c] sm:$0xf]
      %v4517 = vld [vmem:[%s4508 + $0x20] sm:$0xf]
      %v4518 = vld [vmem:[%s4508 + $0x24] sm:$0xf]
      %v4519 = vld [vmem:[%s4508 + $0x28] sm:$0xf]
      %v4520 = vld [vmem:[%s4508 + $0x2c] sm:$0xf]
      %v4521 = vld [vmem:[%s4508 + $0x30] sm:$0xf]
      %v4522 = vld [vmem:[%s4508 + $0x34] sm:$0xf]
      %v4523 = vld [vmem:[%s4508 + $0x38] sm:$0xf]
      %v4524 = vld [vmem:[%s4508 + $0x3c] sm:$0xf]
      %v4558 = vunpack.c.l.b16 %v4475
      %v4559 = vunpack.c.l.b16 %v4476
      %v4560 = vunpack.c.l.b16 %v4477
      %v4561 = vunpack.c.l.b16 %v4478
      %v4562 = vunpack.c.l.b16 %v4479
      %v4563 = vunpack.c.l.b16 %v4480
      %v4564 = vunpack.c.l.b16 %v4481
      %v4565 = vunpack.c.l.b16 %v4482
      %v4566 = vunpack.c.l.b16 %v4483
      %v4567 = vunpack.c.l.b16 %v4484
      %v4568 = vunpack.c.l.b16 %v4485
      %v4569 = vunpack.c.l.b16 %v4486
      %v4570 = vunpack.c.l.b16 %v4487
      %v4571 = vunpack.c.l.b16 %v4488
      %v4572 = vunpack.c.l.b16 %v4489
      %v4573 = vunpack.c.l.b16 %v4490
      %v4574 = vunpack.c.l.b16 %v4491
      %v4575 = vunpack.c.l.b16 %v4492
      %v4576 = vunpack.c.l.b16 %v4493
      %v4577 = vunpack.c.l.b16 %v4494
      %v4578 = vunpack.c.l.b16 %v4495
      %v4579 = vunpack.c.l.b16 %v4496
      %v4580 = vunpack.c.l.b16 %v4497
      %v4581 = vunpack.c.l.b16 %v4498
      %v4582 = vunpack.c.l.b16 %v4499
      %v4583 = vunpack.c.l.b16 %v4500
      %v4584 = vunpack.c.l.b16 %v4501
      %v4585 = vunpack.c.l.b16 %v4502
      %v4586 = vunpack.c.l.b16 %v4503
      %v4587 = vunpack.c.l.b16 %v4504
      %v4588 = vunpack.c.l.b16 %v4505
      %v4589 = vunpack.c.l.b16 %v4506
      %v4590 = vunpack.c.l.b16 %v4507
      %v4591 = vpack.c.b16 %v4559, %v4558
      %v4592 = vpack.c.b16 %v4561, %v4560
      %v4593 = vpack.c.b16 %v4563, %v4562
      %v4594 = vpack.c.b16 %v4565, %v4564
      %v4595 = vpack.c.b16 %v4567, %v4566
      %v4596 = vpack.c.b16 %v4569, %v4568
      %v4597 = vpack.c.b16 %v4571, %v4570
      %v4598 = vpack.c.b16 %v4573, %v4572
      %v4599 = vpack.c.b16 %v4575, %v4574
      %v4600 = vpack.c.b16 %v4577, %v4576
      %v4601 = vpack.c.b16 %v4579, %v4578
      %v4602 = vpack.c.b16 %v4581, %v4580
      %v4603 = vpack.c.b16 %v4583, %v4582
      %v4604 = vpack.c.b16 %v4585, %v4584
      %v4605 = vpack.c.b16 %v4587, %v4586
      %v4606 = vpack.c.b16 %v4589, %v4588
      %v4607 = vpack.c.b16 %v4590, %v4590
      %v4609 = vshrl.u32 %v4591, 16
      %v4611 = vrot.slane %v4609, 3
      %v4612 = vshll.u32 %v4591, 16
      %v4614 = vrot.slane %v4612, 4
      %v4615 = vor.u32 %v4611, %v4614
      %v4617 = vshrl.u32 %v4592, 16
      %v4619 = vrot.slane %v4617, 3
      %v4620 = vshll.u32 %v4592, 16
      %v4622 = vrot.slane %v4620, 4
      %v4623 = vor.u32 %v4619, %v4622
      %v4624 = vsel %vm1735, %v4615, %v4623
      %v4626 = vshrl.u32 %v4593, 16
      %v4628 = vrot.slane %v4626, 3
      %v4629 = vshll.u32 %v4593, 16
      %v4631 = vrot.slane %v4629, 4
      %v4632 = vor.u32 %v4628, %v4631
      %v4633 = vsel %vm1735, %v4623, %v4632
      %v4635 = vshrl.u32 %v4594, 16
      %v4637 = vrot.slane %v4635, 3
      %v4638 = vshll.u32 %v4594, 16
      %v4640 = vrot.slane %v4638, 4
      %v4641 = vor.u32 %v4637, %v4640
      %v4642 = vsel %vm1735, %v4632, %v4641
      %v4644 = vshrl.u32 %v4595, 16
      %v4646 = vrot.slane %v4644, 3
      %v4647 = vshll.u32 %v4595, 16
      %v4649 = vrot.slane %v4647, 4
      %v4650 = vor.u32 %v4646, %v4649
      %v4651 = vsel %vm1735, %v4641, %v4650
      %v4653 = vshrl.u32 %v4596, 16
      %v4655 = vrot.slane %v4653, 3
      %v4656 = vshll.u32 %v4596, 16
      %v4658 = vrot.slane %v4656, 4
      %v4659 = vor.u32 %v4655, %v4658
      %v4660 = vsel %vm1735, %v4650, %v4659
      %v4662 = vshrl.u32 %v4597, 16
      %v4664 = vrot.slane %v4662, 3
      %v4665 = vshll.u32 %v4597, 16
      %v4667 = vrot.slane %v4665, 4
      %v4668 = vor.u32 %v4664, %v4667
      %v4669 = vsel %vm1735, %v4659, %v4668
      %v4671 = vshrl.u32 %v4598, 16
      %v4673 = vrot.slane %v4671, 3
      %v4674 = vshll.u32 %v4598, 16
      %v4676 = vrot.slane %v4674, 4
      %v4677 = vor.u32 %v4673, %v4676
      %v4678 = vsel %vm1735, %v4668, %v4677
      %v4680 = vshrl.u32 %v4599, 16
      %v4682 = vrot.slane %v4680, 3
      %v4683 = vshll.u32 %v4599, 16
      %v4685 = vrot.slane %v4683, 4
      %v4686 = vor.u32 %v4682, %v4685
      %v4687 = vsel %vm1735, %v4677, %v4686
      %v4689 = vshrl.u32 %v4600, 16
      %v4691 = vrot.slane %v4689, 3
      %v4692 = vshll.u32 %v4600, 16
      %v4694 = vrot.slane %v4692, 4
      %v4695 = vor.u32 %v4691, %v4694
      %v4696 = vsel %vm1735, %v4686, %v4695
      %v4698 = vshrl.u32 %v4601, 16
      %v4700 = vrot.slane %v4698, 3
      %v4701 = vshll.u32 %v4601, 16
      %v4703 = vrot.slane %v4701, 4
      %v4704 = vor.u32 %v4700, %v4703
      %v4705 = vsel %vm1735, %v4695, %v4704
      %v4707 = vshrl.u32 %v4602, 16
      %v4709 = vrot.slane %v4707, 3
      %v4710 = vshll.u32 %v4602, 16
      %v4712 = vrot.slane %v4710, 4
      %v4713 = vor.u32 %v4709, %v4712
      %v4714 = vsel %vm1735, %v4704, %v4713
      %v4716 = vshrl.u32 %v4603, 16
      %v4718 = vrot.slane %v4716, 3
      %v4719 = vshll.u32 %v4603, 16
      %v4721 = vrot.slane %v4719, 4
      %v4722 = vor.u32 %v4718, %v4721
      %v4723 = vsel %vm1735, %v4713, %v4722
      %v4725 = vshrl.u32 %v4604, 16
      %v4727 = vrot.slane %v4725, 3
      %v4728 = vshll.u32 %v4604, 16
      %v4730 = vrot.slane %v4728, 4
      %v4731 = vor.u32 %v4727, %v4730
      %v4732 = vsel %vm1735, %v4722, %v4731
      %v4734 = vshrl.u32 %v4605, 16
      %v4736 = vrot.slane %v4734, 3
      %v4737 = vshll.u32 %v4605, 16
      %v4739 = vrot.slane %v4737, 4
      %v4740 = vor.u32 %v4736, %v4739
      %v4741 = vsel %vm1735, %v4731, %v4740
      %v4743 = vshrl.u32 %v4606, 16
      %v4745 = vrot.slane %v4743, 3
      %v4746 = vshll.u32 %v4606, 16
      %v4748 = vrot.slane %v4746, 4
      %v4749 = vor.u32 %v4745, %v4748
      %v4750 = vsel %vm1735, %v4740, %v4749
      %v4752 = vshrl.u32 %v4607, 16
      %v4754 = vrot.slane %v4752, 3
      %v4755 = vshll.u32 %v4607, 16
      %v4757 = vrot.slane %v4755, 4
      %v4758 = vor.u32 %v4754, %v4757
      %v4759 = vsel %vm1735, %v4749, %v4758
      %v4792 = vunpack.c.l.b16 %v4509
      %v4793 = vunpack.c.l.b16 %v4510
      %v4794 = vunpack.c.l.b16 %v4511
      %v4795 = vunpack.c.l.b16 %v4512
      %v4796 = vunpack.c.l.b16 %v4513
      %v4797 = vunpack.c.l.b16 %v4514
      %v4798 = vunpack.c.l.b16 %v4515
      %v4799 = vunpack.c.l.b16 %v4516
      %v4800 = vunpack.c.l.b16 %v4517
      %v4801 = vunpack.c.l.b16 %v4518
      %v4802 = vunpack.c.l.b16 %v4519
      %v4803 = vunpack.c.l.b16 %v4520
      %v4804 = vunpack.c.l.b16 %v4521
      %v4805 = vunpack.c.l.b16 %v4522
      %v4806 = vunpack.c.l.b16 %v4523
      %v4807 = vunpack.c.l.b16 %v4524
      %v4808 = vpack.c.b16 %v4793, %v4792
      %v4809 = vpack.c.b16 %v4795, %v4794
      %v4810 = vpack.c.b16 %v4797, %v4796
      %v4811 = vpack.c.b16 %v4799, %v4798
      %v4812 = vpack.c.b16 %v4801, %v4800
      %v4813 = vpack.c.b16 %v4803, %v4802
      %v4814 = vpack.c.b16 %v4805, %v4804
      %v4815 = vpack.c.b16 %v4807, %v4806
      %4824 = vmatpush.bf16.msra.mxu0 %v4815
      %4825 = vmatpush.bf16.msra.mxu0 %v4814
      %4826 = vmatpush.bf16.msra.mxu0 %v4813
      %4827 = vmatpush.bf16.msra.mxu0 %v4812
      %4828 = vmatpush.bf16.msra.mxu0 %v4811
      %4829 = vmatpush.bf16.msra.mxu0 %v4810
      %4830 = vmatpush.bf16.msra.mxu0 %v4809
      %4831 = vmatpush.bf16.msra.mxu0 %v4808
      %4832 = vmatmul.bf16.gmra.mxu0 %v4624
      %v4833 = vpop.f32.mrf.mxu0
      %v4834 = vadd.f32 0.0, %v4833
      %v4835 = vpop.f32.mrf.mxu0
      %v4836 = vadd.f32 0.0, %v4835
      %4837 = vmatmul.bf16.gmra.mxu0 %v4633
      %v4838 = vpop.f32.mrf.mxu0
      %v4839 = vadd.f32 0.0, %v4838
      %v4840 = vpop.f32.mrf.mxu0
      %v4841 = vadd.f32 0.0, %v4840
      %4842 = vmatmul.bf16.gmra.mxu0 %v4642
      %v4843 = vpop.f32.mrf.mxu0
      %v4844 = vadd.f32 0.0, %v4843
      %v4845 = vpop.f32.mrf.mxu0
      %v4846 = vadd.f32 0.0, %v4845
      %4847 = vmatmul.bf16.gmra.mxu0 %v4651
      %v4848 = vpop.f32.mrf.mxu0
      %v4849 = vadd.f32 0.0, %v4848
      %v4850 = vpop.f32.mrf.mxu0
      %v4851 = vadd.f32 0.0, %v4850
      %4852 = vmatmul.bf16.gmra.mxu0 %v4660
      %v4853 = vpop.f32.mrf.mxu0
      %v4854 = vadd.f32 0.0, %v4853
      %v4855 = vpop.f32.mrf.mxu0
      %v4856 = vadd.f32 0.0, %v4855
      %4857 = vmatmul.bf16.gmra.mxu0 %v4669
      %v4858 = vpop.f32.mrf.mxu0
      %v4859 = vadd.f32 0.0, %v4858
      %v4860 = vpop.f32.mrf.mxu0
      %v4861 = vadd.f32 0.0, %v4860
      %4862 = vmatmul.bf16.gmra.mxu0 %v4678
      %v4863 = vpop.f32.mrf.mxu0
      %v4864 = vadd.f32 0.0, %v4863
      %v4865 = vpop.f32.mrf.mxu0
      %v4866 = vadd.f32 0.0, %v4865
      %4867 = vmatmul.bf16.gmra.mxu0 %v4687
      %v4868 = vpop.f32.mrf.mxu0
      %v4869 = vadd.f32 0.0, %v4868
      %v4870 = vpop.f32.mrf.mxu0
      %v4871 = vadd.f32 0.0, %v4870
      %4872 = vmatmul.bf16.gmra.mxu0 %v4696
      %v4873 = vpop.f32.mrf.mxu0
      %v4874 = vadd.f32 0.0, %v4873
      %v4875 = vpop.f32.mrf.mxu0
      %v4876 = vadd.f32 0.0, %v4875
      %4877 = vmatmul.bf16.gmra.mxu0 %v4705
      %v4878 = vpop.f32.mrf.mxu0
      %v4879 = vadd.f32 0.0, %v4878
      %v4880 = vpop.f32.mrf.mxu0
      %v4881 = vadd.f32 0.0, %v4880
      %4882 = vmatmul.bf16.gmra.mxu0 %v4714
      %v4883 = vpop.f32.mrf.mxu0
      %v4884 = vadd.f32 0.0, %v4883
      %v4885 = vpop.f32.mrf.mxu0
      %v4886 = vadd.f32 0.0, %v4885
      %4887 = vmatmul.bf16.gmra.mxu0 %v4723
      %v4888 = vpop.f32.mrf.mxu0
      %v4889 = vadd.f32 0.0, %v4888
      %v4890 = vpop.f32.mrf.mxu0
      %v4891 = vadd.f32 0.0, %v4890
      %4892 = vmatmul.bf16.gmra.mxu0 %v4732
      %v4893 = vpop.f32.mrf.mxu0
      %v4894 = vadd.f32 0.0, %v4893
      %v4895 = vpop.f32.mrf.mxu0
      %v4896 = vadd.f32 0.0, %v4895
      %4897 = vmatmul.bf16.gmra.mxu0 %v4741
      %v4898 = vpop.f32.mrf.mxu0
      %v4899 = vadd.f32 0.0, %v4898
      %v4900 = vpop.f32.mrf.mxu0
      %v4901 = vadd.f32 0.0, %v4900
      %4902 = vmatmul.bf16.gmra.mxu0 %v4750
      %v4903 = vpop.f32.mrf.mxu0
      %v4904 = vadd.f32 0.0, %v4903
      %v4905 = vpop.f32.mrf.mxu0
      %v4906 = vadd.f32 0.0, %v4905
      %4907 = vmatmul.bf16.gmra.mxu0 %v4759
      %v4908 = vpop.f32.mrf.mxu0
      %v4909 = vadd.f32 0.0, %v4908
      %v4910 = vpop.f32.mrf.mxu0
      %v4911 = vadd.f32 0.0, %v4910
      %4912 = vdwg.mxu0
      %v4913 = vadd.f32 %v4410, %v4834
      %v4914 = vadd.f32 %v4411, %v4836
      %v4915 = vadd.f32 %v4412, %v4839
      %v4916 = vadd.f32 %v4413, %v4841
      %v4917 = vadd.f32 %v4414, %v4844
      %v4918 = vadd.f32 %v4415, %v4846
      %v4919 = vadd.f32 %v4416, %v4849
      %v4920 = vadd.f32 %v4417, %v4851
      %v4921 = vadd.f32 %v4418, %v4854
      %v4922 = vadd.f32 %v4419, %v4856
      %v4923 = vadd.f32 %v4420, %v4859
      %v4924 = vadd.f32 %v4421, %v4861
      %v4925 = vadd.f32 %v4422, %v4864
      %v4926 = vadd.f32 %v4423, %v4866
      %v4927 = vadd.f32 %v4424, %v4869
      %v4928 = vadd.f32 %v4425, %v4871
      %v4929 = vadd.f32 %v4426, %v4874
      %v4930 = vadd.f32 %v4427, %v4876
      %v4931 = vadd.f32 %v4428, %v4879
      %v4932 = vadd.f32 %v4429, %v4881
      %v4933 = vadd.f32 %v4430, %v4884
      %v4934 = vadd.f32 %v4431, %v4886
      %v4935 = vadd.f32 %v4432, %v4889
      %v4936 = vadd.f32 %v4433, %v4891
      %v4937 = vadd.f32 %v4434, %v4894
      %v4938 = vadd.f32 %v4435, %v4896
      %v4939 = vadd.f32 %v4436, %v4899
      %v4940 = vadd.f32 %v4437, %v4901
      %v4941 = vadd.f32 %v4438, %v4904
      %v4942 = vadd.f32 %v4439, %v4906
      %v4943 = vadd.f32 %v4440, %v4909
      %v4944 = vadd.f32 %v4441, %v4911
      %s4945 = scalar_lea.vmem %s3, 448
      %v4946 = vld [vmem:[%s4945] sm:$0xf]
      %v4947 = vld [vmem:[%s4945 + $0x4] sm:$0xf]
      %v4948 = vld [vmem:[%s4945 + $0x8] sm:$0xf]
      %v4949 = vld [vmem:[%s4945 + $0xc] sm:$0xf]
      %v4950 = vld [vmem:[%s4945 + $0x10] sm:$0xf]
      %v4951 = vld [vmem:[%s4945 + $0x14] sm:$0xf]
      %v4952 = vld [vmem:[%s4945 + $0x18] sm:$0xf]
      %v4953 = vld [vmem:[%s4945 + $0x1c] sm:$0xf]
      %v4954 = vld [vmem:[%s4945 + $0x20] sm:$0xf]
      %v4955 = vld [vmem:[%s4945 + $0x24] sm:$0xf]
      %v4956 = vld [vmem:[%s4945 + $0x28] sm:$0xf]
      %v4957 = vld [vmem:[%s4945 + $0x2c] sm:$0xf]
      %v4958 = vld [vmem:[%s4945 + $0x30] sm:$0xf]
      %v4959 = vld [vmem:[%s4945 + $0x34] sm:$0xf]
      %v4960 = vld [vmem:[%s4945 + $0x38] sm:$0xf]
      %v4961 = vld [vmem:[%s4945 + $0x3c] sm:$0xf]
      %v4994 = vunpack.c.l.b16 %v4443
      %v4995 = vunpack.c.l.b16 %v4444
      %v4996 = vunpack.c.l.b16 %v4445
      %v4997 = vunpack.c.l.b16 %v4446
      %v4998 = vunpack.c.l.b16 %v4447
      %v4999 = vunpack.c.l.b16 %v4448
      %v5000 = vunpack.c.l.b16 %v4449
      %v5001 = vunpack.c.l.b16 %v4450
      %v5002 = vunpack.c.l.b16 %v4451
      %v5003 = vunpack.c.l.b16 %v4452
      %v5004 = vunpack.c.l.b16 %v4453
      %v5005 = vunpack.c.l.b16 %v4454
      %v5006 = vunpack.c.l.b16 %v4455
      %v5007 = vunpack.c.l.b16 %v4456
      %v5008 = vunpack.c.l.b16 %v4457
      %v5009 = vunpack.c.l.b16 %v4458
      %v5010 = vunpack.c.l.b16 %v4459
      %v5011 = vunpack.c.l.b16 %v4460
      %v5012 = vunpack.c.l.b16 %v4461
      %v5013 = vunpack.c.l.b16 %v4462
      %v5014 = vunpack.c.l.b16 %v4463
      %v5015 = vunpack.c.l.b16 %v4464
      %v5016 = vunpack.c.l.b16 %v4465
      %v5017 = vunpack.c.l.b16 %v4466
      %v5018 = vunpack.c.l.b16 %v4467
      %v5019 = vunpack.c.l.b16 %v4468
      %v5020 = vunpack.c.l.b16 %v4469
      %v5021 = vunpack.c.l.b16 %v4470
      %v5022 = vunpack.c.l.b16 %v4471
      %v5023 = vunpack.c.l.b16 %v4472
      %v5024 = vunpack.c.l.b16 %v4473
      %v5025 = vunpack.c.l.b16 %v4474
      %v5026 = vpack.c.b16 %v4995, %v4994
      %v5027 = vpack.c.b16 %v4997, %v4996
      %v5028 = vpack.c.b16 %v4999, %v4998
      %v5029 = vpack.c.b16 %v5001, %v5000
      %v5030 = vpack.c.b16 %v5003, %v5002
      %v5031 = vpack.c.b16 %v5005, %v5004
      %v5032 = vpack.c.b16 %v5007, %v5006
      %v5033 = vpack.c.b16 %v5009, %v5008
      %v5034 = vpack.c.b16 %v5011, %v5010
      %v5035 = vpack.c.b16 %v5013, %v5012
      %v5036 = vpack.c.b16 %v5015, %v5014
      %v5037 = vpack.c.b16 %v5017, %v5016
      %v5038 = vpack.c.b16 %v5019, %v5018
      %v5039 = vpack.c.b16 %v5021, %v5020
      %v5040 = vpack.c.b16 %v5023, %v5022
      %v5041 = vpack.c.b16 %v5025, %v5024
      %v5074 = vunpack.c.l.b16 %v4946
      %v5075 = vunpack.c.l.b16 %v4947
      %v5076 = vunpack.c.l.b16 %v4948
      %v5077 = vunpack.c.l.b16 %v4949
      %v5078 = vunpack.c.l.b16 %v4950
      %v5079 = vunpack.c.l.b16 %v4951
      %v5080 = vunpack.c.l.b16 %v4952
      %v5081 = vunpack.c.l.b16 %v4953
      %v5082 = vunpack.c.l.b16 %v4954
      %v5083 = vunpack.c.l.b16 %v4955
      %v5084 = vunpack.c.l.b16 %v4956
      %v5085 = vunpack.c.l.b16 %v4957
      %v5086 = vunpack.c.l.b16 %v4958
      %v5087 = vunpack.c.l.b16 %v4959
      %v5088 = vunpack.c.l.b16 %v4960
      %v5089 = vunpack.c.l.b16 %v4961
      %v5090 = vpack.c.b16 %v5075, %v5074
      %v5091 = vpack.c.b16 %v5077, %v5076
      %v5092 = vpack.c.b16 %v5079, %v5078
      %v5093 = vpack.c.b16 %v5081, %v5080
      %v5094 = vpack.c.b16 %v5083, %v5082
      %v5095 = vpack.c.b16 %v5085, %v5084
      %v5096 = vpack.c.b16 %v5087, %v5086
      %v5097 = vpack.c.b16 %v5089, %v5088
      %5106 = vmatpush.bf16.msra.mxu0 %v5097
      %5107 = vmatpush.bf16.msra.mxu0 %v5096
      %5108 = vmatpush.bf16.msra.mxu0 %v5095
      %5109 = vmatpush.bf16.msra.mxu0 %v5094
      %5110 = vmatpush.bf16.msra.mxu0 %v5093
      %5111 = vmatpush.bf16.msra.mxu0 %v5092
      %5112 = vmatpush.bf16.msra.mxu0 %v5091
      %5113 = vmatpush.bf16.msra.mxu0 %v5090
      %5114 = vmatmul.bf16.gmra.mxu0 %v5026
      %v5115 = vpop.f32.mrf.mxu0
      %v5116 = vadd.f32 0.0, %v5115
      %v5117 = vpop.f32.mrf.mxu0
      %v5118 = vadd.f32 0.0, %v5117
      %5119 = vmatmul.bf16.gmra.mxu0 %v5027
      %v5120 = vpop.f32.mrf.mxu0
      %v5121 = vadd.f32 0.0, %v5120
      %v5122 = vpop.f32.mrf.mxu0
      %v5123 = vadd.f32 0.0, %v5122
      %5124 = vmatmul.bf16.gmra.mxu0 %v5028
      %v5125 = vpop.f32.mrf.mxu0
      %v5126 = vadd.f32 0.0, %v5125
      %v5127 = vpop.f32.mrf.mxu0
      %v5128 = vadd.f32 0.0, %v5127
      %5129 = vmatmul.bf16.gmra.mxu0 %v5029
      %v5130 = vpop.f32.mrf.mxu0
      %v5131 = vadd.f32 0.0, %v5130
      %v5132 = vpop.f32.mrf.mxu0
      %v5133 = vadd.f32 0.0, %v5132
      %5134 = vmatmul.bf16.gmra.mxu0 %v5030
      %v5135 = vpop.f32.mrf.mxu0
      %v5136 = vadd.f32 0.0, %v5135
      %v5137 = vpop.f32.mrf.mxu0
      %v5138 = vadd.f32 0.0, %v5137
      %5139 = vmatmul.bf16.gmra.mxu0 %v5031
      %v5140 = vpop.f32.mrf.mxu0
      %v5141 = vadd.f32 0.0, %v5140
      %v5142 = vpop.f32.mrf.mxu0
      %v5143 = vadd.f32 0.0, %v5142
      %5144 = vmatmul.bf16.gmra.mxu0 %v5032
      %v5145 = vpop.f32.mrf.mxu0
      %v5146 = vadd.f32 0.0, %v5145
      %v5147 = vpop.f32.mrf.mxu0
      %v5148 = vadd.f32 0.0, %v5147
      %5149 = vmatmul.bf16.gmra.mxu0 %v5033
      %v5150 = vpop.f32.mrf.mxu0
      %v5151 = vadd.f32 0.0, %v5150
      %v5152 = vpop.f32.mrf.mxu0
      %v5153 = vadd.f32 0.0, %v5152
      %5154 = vmatmul.bf16.gmra.mxu0 %v5034
      %v5155 = vpop.f32.mrf.mxu0
      %v5156 = vadd.f32 0.0, %v5155
      %v5157 = vpop.f32.mrf.mxu0
      %v5158 = vadd.f32 0.0, %v5157
      %5159 = vmatmul.bf16.gmra.mxu0 %v5035
      %v5160 = vpop.f32.mrf.mxu0
      %v5161 = vadd.f32 0.0, %v5160
      %v5162 = vpop.f32.mrf.mxu0
      %v5163 = vadd.f32 0.0, %v5162
      %5164 = vmatmul.bf16.gmra.mxu0 %v5036
      %v5165 = vpop.f32.mrf.mxu0
      %v5166 = vadd.f32 0.0, %v5165
      %v5167 = vpop.f32.mrf.mxu0
      %v5168 = vadd.f32 0.0, %v5167
      %5169 = vmatmul.bf16.gmra.mxu0 %v5037
      %v5170 = vpop.f32.mrf.mxu0
      %v5171 = vadd.f32 0.0, %v5170
      %v5172 = vpop.f32.mrf.mxu0
      %v5173 = vadd.f32 0.0, %v5172
      %5174 = vmatmul.bf16.gmra.mxu0 %v5038
      %v5175 = vpop.f32.mrf.mxu0
      %v5176 = vadd.f32 0.0, %v5175
      %v5177 = vpop.f32.mrf.mxu0
      %v5178 = vadd.f32 0.0, %v5177
      %5179 = vmatmul.bf16.gmra.mxu0 %v5039
      %v5180 = vpop.f32.mrf.mxu0
      %v5181 = vadd.f32 0.0, %v5180
      %v5182 = vpop.f32.mrf.mxu0
      %v5183 = vadd.f32 0.0, %v5182
      %5184 = vmatmul.bf16.gmra.mxu0 %v5040
      %v5185 = vpop.f32.mrf.mxu0
      %v5186 = vadd.f32 0.0, %v5185
      %v5187 = vpop.f32.mrf.mxu0
      %v5188 = vadd.f32 0.0, %v5187
      %5189 = vmatmul.bf16.gmra.mxu0 %v5041
      %v5190 = vpop.f32.mrf.mxu0
      %v5191 = vadd.f32 0.0, %v5190
      %v5192 = vpop.f32.mrf.mxu0
      %v5193 = vadd.f32 0.0, %v5192
      %5194 = vdwg.mxu0
      %v5195 = vadd.f32 %v4913, %v5116
      %v5196 = vadd.f32 %v4914, %v5118
      %v5197 = vadd.f32 %v4915, %v5121
      %v5198 = vadd.f32 %v4916, %v5123
      %v5199 = vadd.f32 %v4917, %v5126
      %v5200 = vadd.f32 %v4918, %v5128
      %v5201 = vadd.f32 %v4919, %v5131
      %v5202 = vadd.f32 %v4920, %v5133
      %v5203 = vadd.f32 %v4921, %v5136
      %v5204 = vadd.f32 %v4922, %v5138
      %v5205 = vadd.f32 %v4923, %v5141
      %v5206 = vadd.f32 %v4924, %v5143
      %v5207 = vadd.f32 %v4925, %v5146
      %v5208 = vadd.f32 %v4926, %v5148
      %v5209 = vadd.f32 %v4927, %v5151
      %v5210 = vadd.f32 %v4928, %v5153
      %v5211 = vadd.f32 %v4929, %v5156
      %v5212 = vadd.f32 %v4930, %v5158
      %v5213 = vadd.f32 %v4931, %v5161
      %v5214 = vadd.f32 %v4932, %v5163
      %v5215 = vadd.f32 %v4933, %v5166
      %v5216 = vadd.f32 %v4934, %v5168
      %v5217 = vadd.f32 %v4935, %v5171
      %v5218 = vadd.f32 %v4936, %v5173
      %v5219 = vadd.f32 %v4937, %v5176
      %v5220 = vadd.f32 %v4938, %v5178
      %v5221 = vadd.f32 %v4939, %v5181
      %v5222 = vadd.f32 %v4940, %v5183
      %v5223 = vadd.f32 %v4941, %v5186
      %v5224 = vadd.f32 %v4942, %v5188
      %v5225 = vadd.f32 %v4943, %v5191
      %v5226 = vadd.f32 %v4944, %v5193
      %v5227 = vld [vmem:[#allocation2 + $0x14] sm:$0xf]
      %v5228 = vld [vmem:[#allocation2 + $0x18] sm:$0xf]
      %v5229 = vld [vmem:[#allocation2 + $0x1c] sm:$0xf]
      %v5230 = vld [vmem:[#allocation2 + $0x20] sm:$0xf]
      %v5231 = vld [vmem:[#allocation2 + $0x24] sm:$0xf]
      %v5232 = vld [vmem:[#allocation2 + $0x28] sm:$0xf]
      %v5233 = vld [vmem:[#allocation2 + $0x2c] sm:$0xf]
      %v5234 = vld [vmem:[#allocation2 + $0x30] sm:$0xf]
      %v5235 = vld [vmem:[#allocation2 + $0x34] sm:$0xf]
      %v5236 = vld [vmem:[#allocation2 + $0x38] sm:$0xf]
      %v5237 = vld [vmem:[#allocation2 + $0x3c] sm:$0xf]
      %v5238 = vld [vmem:[#allocation2 + $0x40] sm:$0xf]
      %v5239 = vld [vmem:[#allocation2 + $0x44] sm:$0xf]
      %v5240 = vld [vmem:[#allocation2 + $0x48] sm:$0xf]
      %v5241 = vld [vmem:[#allocation2 + $0x4c] sm:$0xf]
      %v5242 = vld [vmem:[#allocation2 + $0x50] sm:$0xf]
      %v5243 = vld [vmem:[#allocation2 + $0x54] sm:$0xf]
      %v5244 = vld [vmem:[#allocation2 + $0x58] sm:$0xf]
      %v5245 = vld [vmem:[#allocation2 + $0x5c] sm:$0xf]
      %v5246 = vld [vmem:[#allocation2 + $0x60] sm:$0xf]
      %v5247 = vld [vmem:[#allocation2 + $0x64] sm:$0xf]
      %v5248 = vld [vmem:[#allocation2 + $0x68] sm:$0xf]
      %v5249 = vld [vmem:[#allocation2 + $0x6c] sm:$0xf]
      %v5250 = vld [vmem:[#allocation2 + $0x70] sm:$0xf]
      %v5251 = vld [vmem:[#allocation2 + $0x74] sm:$0xf]
      %v5252 = vld [vmem:[#allocation2 + $0x78] sm:$0xf]
      %v5253 = vld [vmem:[#allocation2 + $0x7c] sm:$0xf]
      %v5254 = vld [vmem:[#allocation2 + $0x80] sm:$0xf]
      %v5255 = vld [vmem:[#allocation2 + $0x84] sm:$0xf]
      %v5256 = vld [vmem:[#allocation2 + $0x88] sm:$0xf]
      %v5257 = vld [vmem:[#allocation2 + $0x8c] sm:$0xf]
      %v5258 = vld [vmem:[#allocation2 + $0x90] sm:$0xf]
      %v5259 = vld [vmem:[#allocation2 + $0x94] sm:$0x1]
      %v5260 = vsel %vm2498, %v5227, 0
      %v5261 = vsel %vm2505, %v5228, 0
      %v5262 = vsel %vm2512, %v5229, 0
      %v5263 = vsel %vm2519, %v5230, 0
      %v5264 = vsel %vm2526, %v5231, 0
      %v5265 = vsel %vm2533, %v5232, 0
      %v5266 = vsel %vm2540, %v5233, 0
      %v5267 = vsel %vm2547, %v5234, 0
      %v5268 = vsel %vm2554, %v5235, 0
      %v5269 = vsel %vm2561, %v5236, 0
      %v5270 = vsel %vm2568, %v5237, 0
      %v5271 = vsel %vm2575, %v5238, 0
      %v5272 = vsel %vm2582, %v5239, 0
      %v5273 = vsel %vm2589, %v5240, 0
      %v5274 = vsel %vm2596, %v5241, 0
      %v5275 = vsel %vm2603, %v5242, 0
      %v5276 = vsel %vm2610, %v5243, 0
      %v5277 = vsel %vm2617, %v5244, 0
      %v5278 = vsel %vm2624, %v5245, 0
      %v5279 = vsel %vm2631, %v5246, 0
      %v5280 = vsel %vm2638, %v5247, 0
      %v5281 = vsel %vm2645, %v5248, 0
      %v5282 = vsel %vm2652, %v5249, 0
      %v5283 = vsel %vm2659, %v5250, 0
      %v5284 = vsel %vm2666, %v5251, 0
      %v5285 = vsel %vm2673, %v5252, 0
      %v5286 = vsel %vm2680, %v5253, 0
      %v5287 = vsel %vm2687, %v5254, 0
      %v5288 = vsel %vm2694, %v5255, 0
      %v5289 = vsel %vm2701, %v5256, 0
      %v5290 = vsel %vm2708, %v5257, 0
      %v5291 = vsel %vm2715, %v5258, 0
      %v5292 = vsel %vm2722, %v5259, 0
      %s5293 = scalar_lea.vmem %s3, 512
      %v5294 = vld [vmem:[%s5293] sm:$0xf]
      %v5295 = vld [vmem:[%s5293 + $0x4] sm:$0xf]
      %v5296 = vld [vmem:[%s5293 + $0x8] sm:$0xf]
      %v5297 = vld [vmem:[%s5293 + $0xc] sm:$0xf]
      %v5298 = vld [vmem:[%s5293 + $0x10] sm:$0xf]
      %v5299 = vld [vmem:[%s5293 + $0x14] sm:$0xf]
      %v5300 = vld [vmem:[%s5293 + $0x18] sm:$0xf]
      %v5301 = vld [vmem:[%s5293 + $0x1c] sm:$0xf]
      %v5302 = vld [vmem:[%s5293 + $0x20] sm:$0xf]
      %v5303 = vld [vmem:[%s5293 + $0x24] sm:$0xf]
      %v5304 = vld [vmem:[%s5293 + $0x28] sm:$0xf]
      %v5305 = vld [vmem:[%s5293 + $0x2c] sm:$0xf]
      %v5306 = vld [vmem:[%s5293 + $0x30] sm:$0xf]
      %v5307 = vld [vmem:[%s5293 + $0x34] sm:$0xf]
      %v5308 = vld [vmem:[%s5293 + $0x38] sm:$0xf]
      %v5309 = vld [vmem:[%s5293 + $0x3c] sm:$0xf]
      %v5343 = vunpack.c.l.b16 %v5260
      %v5344 = vunpack.c.l.b16 %v5261
      %v5345 = vunpack.c.l.b16 %v5262
      %v5346 = vunpack.c.l.b16 %v5263
      %v5347 = vunpack.c.l.b16 %v5264
      %v5348 = vunpack.c.l.b16 %v5265
      %v5349 = vunpack.c.l.b16 %v5266
      %v5350 = vunpack.c.l.b16 %v5267
      %v5351 = vunpack.c.l.b16 %v5268
      %v5352 = vunpack.c.l.b16 %v5269
      %v5353 = vunpack.c.l.b16 %v5270
      %v5354 = vunpack.c.l.b16 %v5271
      %v5355 = vunpack.c.l.b16 %v5272
      %v5356 = vunpack.c.l.b16 %v5273
      %v5357 = vunpack.c.l.b16 %v5274
      %v5358 = vunpack.c.l.b16 %v5275
      %v5359 = vunpack.c.l.b16 %v5276
      %v5360 = vunpack.c.l.b16 %v5277
      %v5361 = vunpack.c.l.b16 %v5278
      %v5362 = vunpack.c.l.b16 %v5279
      %v5363 = vunpack.c.l.b16 %v5280
      %v5364 = vunpack.c.l.b16 %v5281
      %v5365 = vunpack.c.l.b16 %v5282
      %v5366 = vunpack.c.l.b16 %v5283
      %v5367 = vunpack.c.l.b16 %v5284
      %v5368 = vunpack.c.l.b16 %v5285
      %v5369 = vunpack.c.l.b16 %v5286
      %v5370 = vunpack.c.l.b16 %v5287
      %v5371 = vunpack.c.l.b16 %v5288
      %v5372 = vunpack.c.l.b16 %v5289
      %v5373 = vunpack.c.l.b16 %v5290
      %v5374 = vunpack.c.l.b16 %v5291
      %v5375 = vunpack.c.l.b16 %v5292
      %v5376 = vpack.c.b16 %v5344, %v5343
      %v5377 = vpack.c.b16 %v5346, %v5345
      %v5378 = vpack.c.b16 %v5348, %v5347
      %v5379 = vpack.c.b16 %v5350, %v5349
      %v5380 = vpack.c.b16 %v5352, %v5351
      %v5381 = vpack.c.b16 %v5354, %v5353
      %v5382 = vpack.c.b16 %v5356, %v5355
      %v5383 = vpack.c.b16 %v5358, %v5357
      %v5384 = vpack.c.b16 %v5360, %v5359
      %v5385 = vpack.c.b16 %v5362, %v5361
      %v5386 = vpack.c.b16 %v5364, %v5363
      %v5387 = vpack.c.b16 %v5366, %v5365
      %v5388 = vpack.c.b16 %v5368, %v5367
      %v5389 = vpack.c.b16 %v5370, %v5369
      %v5390 = vpack.c.b16 %v5372, %v5371
      %v5391 = vpack.c.b16 %v5374, %v5373
      %v5392 = vpack.c.b16 %v5375, %v5375
      %v5394 = vshrl.u32 %v5376, 16
      %v5396 = vshll.u32 %v5376, 16
      %v5398 = vrot.slane %v5396, 1
      %v5399 = vor.u32 %v5394, %v5398
      %v5401 = vshll.u32 %v5377, 16
      %v5403 = vrot.slane %v5401, 1
      %v5404 = vsel %vm2856, %v5399, %v5403
      %v5405 = vshrl.u32 %v5377, 16
      %v5407 = vor.u32 %v5405, %v5403
      %v5409 = vshll.u32 %v5378, 16
      %v5411 = vrot.slane %v5409, 1
      %v5412 = vsel %vm2856, %v5407, %v5411
      %v5413 = vshrl.u32 %v5378, 16
      %v5415 = vor.u32 %v5413, %v5411
      %v5417 = vshll.u32 %v5379, 16
      %v5419 = vrot.slane %v5417, 1
      %v5420 = vsel %vm2856, %v5415, %v5419
      %v5421 = vshrl.u32 %v5379, 16
      %v5423 = vor.u32 %v5421, %v5419
      %v5425 = vshll.u32 %v5380, 16
      %v5427 = vrot.slane %v5425, 1
      %v5428 = vsel %vm2856, %v5423, %v5427
      %v5429 = vshrl.u32 %v5380, 16
      %v5431 = vor.u32 %v5429, %v5427
      %v5433 = vshll.u32 %v5381, 16
      %v5435 = vrot.slane %v5433, 1
      %v5436 = vsel %vm2856, %v5431, %v5435
      %v5437 = vshrl.u32 %v5381, 16
      %v5439 = vor.u32 %v5437, %v5435
      %v5441 = vshll.u32 %v5382, 16
      %v5443 = vrot.slane %v5441, 1
      %v5444 = vsel %vm2856, %v5439, %v5443
      %v5445 = vshrl.u32 %v5382, 16
      %v5447 = vor.u32 %v5445, %v5443
      %v5449 = vshll.u32 %v5383, 16
      %v5451 = vrot.slane %v5449, 1
      %v5452 = vsel %vm2856, %v5447, %v5451
      %v5453 = vshrl.u32 %v5383, 16
      %v5455 = vor.u32 %v5453, %v5451
      %v5457 = vshll.u32 %v5384, 16
      %v5459 = vrot.slane %v5457, 1
      %v5460 = vsel %vm2856, %v5455, %v5459
      %v5461 = vshrl.u32 %v5384, 16
      %v5463 = vor.u32 %v5461, %v5459
      %v5465 = vshll.u32 %v5385, 16
      %v5467 = vrot.slane %v5465, 1
      %v5468 = vsel %vm2856, %v5463, %v5467
      %v5469 = vshrl.u32 %v5385, 16
      %v5471 = vor.u32 %v5469, %v5467
      %v5473 = vshll.u32 %v5386, 16
      %v5475 = vrot.slane %v5473, 1
      %v5476 = vsel %vm2856, %v5471, %v5475
      %v5477 = vshrl.u32 %v5386, 16
      %v5479 = vor.u32 %v5477, %v5475
      %v5481 = vshll.u32 %v5387, 16
      %v5483 = vrot.slane %v5481, 1
      %v5484 = vsel %vm2856, %v5479, %v5483
      %v5485 = vshrl.u32 %v5387, 16
      %v5487 = vor.u32 %v5485, %v5483
      %v5489 = vshll.u32 %v5388, 16
      %v5491 = vrot.slane %v5489, 1
      %v5492 = vsel %vm2856, %v5487, %v5491
      %v5493 = vshrl.u32 %v5388, 16
      %v5495 = vor.u32 %v5493, %v5491
      %v5497 = vshll.u32 %v5389, 16
      %v5499 = vrot.slane %v5497, 1
      %v5500 = vsel %vm2856, %v5495, %v5499
      %v5501 = vshrl.u32 %v5389, 16
      %v5503 = vor.u32 %v5501, %v5499
      %v5505 = vshll.u32 %v5390, 16
      %v5507 = vrot.slane %v5505, 1
      %v5508 = vsel %vm2856, %v5503, %v5507
      %v5509 = vshrl.u32 %v5390, 16
      %v5511 = vor.u32 %v5509, %v5507
      %v5513 = vshll.u32 %v5391, 16
      %v5515 = vrot.slane %v5513, 1
      %v5516 = vsel %vm2856, %v5511, %v5515
      %v5517 = vshrl.u32 %v5391, 16
      %v5519 = vor.u32 %v5517, %v5515
      %v5521 = vshll.u32 %v5392, 16
      %v5523 = vrot.slane %v5521, 1
      %v5524 = vsel %vm2856, %v5519, %v5523
      %v5557 = vunpack.c.l.b16 %v5294
      %v5558 = vunpack.c.l.b16 %v5295
      %v5559 = vunpack.c.l.b16 %v5296
      %v5560 = vunpack.c.l.b16 %v5297
      %v5561 = vunpack.c.l.b16 %v5298
      %v5562 = vunpack.c.l.b16 %v5299
      %v5563 = vunpack.c.l.b16 %v5300
      %v5564 = vunpack.c.l.b16 %v5301
      %v5565 = vunpack.c.l.b16 %v5302
      %v5566 = vunpack.c.l.b16 %v5303
      %v5567 = vunpack.c.l.b16 %v5304
      %v5568 = vunpack.c.l.b16 %v5305
      %v5569 = vunpack.c.l.b16 %v5306
      %v5570 = vunpack.c.l.b16 %v5307
      %v5571 = vunpack.c.l.b16 %v5308
      %v5572 = vunpack.c.l.b16 %v5309
      %v5573 = vpack.c.b16 %v5558, %v5557
      %v5574 = vpack.c.b16 %v5560, %v5559
      %v5575 = vpack.c.b16 %v5562, %v5561
      %v5576 = vpack.c.b16 %v5564, %v5563
      %v5577 = vpack.c.b16 %v5566, %v5565
      %v5578 = vpack.c.b16 %v5568, %v5567
      %v5579 = vpack.c.b16 %v5570, %v5569
      %v5580 = vpack.c.b16 %v5572, %v5571
      %5589 = vmatpush.bf16.msra.mxu0 %v5580
      %5590 = vmatpush.bf16.msra.mxu0 %v5579
      %5591 = vmatpush.bf16.msra.mxu0 %v5578
      %5592 = vmatpush.bf16.msra.mxu0 %v5577
      %5593 = vmatpush.bf16.msra.mxu0 %v5576
      %5594 = vmatpush.bf16.msra.mxu0 %v5575
      %5595 = vmatpush.bf16.msra.mxu0 %v5574
      %5596 = vmatpush.bf16.msra.mxu0 %v5573
      %5597 = vmatmul.bf16.gmra.mxu0 %v5404
      %v5598 = vpop.f32.mrf.mxu0
      %v5599 = vadd.f32 0.0, %v5598
      %v5600 = vpop.f32.mrf.mxu0
      %v5601 = vadd.f32 0.0, %v5600
      %5602 = vmatmul.bf16.gmra.mxu0 %v5412
      %v5603 = vpop.f32.mrf.mxu0
      %v5604 = vadd.f32 0.0, %v5603
      %v5605 = vpop.f32.mrf.mxu0
      %v5606 = vadd.f32 0.0, %v5605
      %5607 = vmatmul.bf16.gmra.mxu0 %v5420
      %v5608 = vpop.f32.mrf.mxu0
      %v5609 = vadd.f32 0.0, %v5608
      %v5610 = vpop.f32.mrf.mxu0
      %v5611 = vadd.f32 0.0, %v5610
      %5612 = vmatmul.bf16.gmra.mxu0 %v5428
      %v5613 = vpop.f32.mrf.mxu0
      %v5614 = vadd.f32 0.0, %v5613
      %v5615 = vpop.f32.mrf.mxu0
      %v5616 = vadd.f32 0.0, %v5615
      %5617 = vmatmul.bf16.gmra.mxu0 %v5436
      %v5618 = vpop.f32.mrf.mxu0
      %v5619 = vadd.f32 0.0, %v5618
      %v5620 = vpop.f32.mrf.mxu0
      %v5621 = vadd.f32 0.0, %v5620
      %5622 = vmatmul.bf16.gmra.mxu0 %v5444
      %v5623 = vpop.f32.mrf.mxu0
      %v5624 = vadd.f32 0.0, %v5623
      %v5625 = vpop.f32.mrf.mxu0
      %v5626 = vadd.f32 0.0, %v5625
      %5627 = vmatmul.bf16.gmra.mxu0 %v5452
      %v5628 = vpop.f32.mrf.mxu0
      %v5629 = vadd.f32 0.0, %v5628
      %v5630 = vpop.f32.mrf.mxu0
      %v5631 = vadd.f32 0.0, %v5630
      %5632 = vmatmul.bf16.gmra.mxu0 %v5460
      %v5633 = vpop.f32.mrf.mxu0
      %v5634 = vadd.f32 0.0, %v5633
      %v5635 = vpop.f32.mrf.mxu0
      %v5636 = vadd.f32 0.0, %v5635
      %5637 = vmatmul.bf16.gmra.mxu0 %v5468
      %v5638 = vpop.f32.mrf.mxu0
      %v5639 = vadd.f32 0.0, %v5638
      %v5640 = vpop.f32.mrf.mxu0
      %v5641 = vadd.f32 0.0, %v5640
      %5642 = vmatmul.bf16.gmra.mxu0 %v5476
      %v5643 = vpop.f32.mrf.mxu0
      %v5644 = vadd.f32 0.0, %v5643
      %v5645 = vpop.f32.mrf.mxu0
      %v5646 = vadd.f32 0.0, %v5645
      %5647 = vmatmul.bf16.gmra.mxu0 %v5484
      %v5648 = vpop.f32.mrf.mxu0
      %v5649 = vadd.f32 0.0, %v5648
      %v5650 = vpop.f32.mrf.mxu0
      %v5651 = vadd.f32 0.0, %v5650
      %5652 = vmatmul.bf16.gmra.mxu0 %v5492
      %v5653 = vpop.f32.mrf.mxu0
      %v5654 = vadd.f32 0.0, %v5653
      %v5655 = vpop.f32.mrf.mxu0
      %v5656 = vadd.f32 0.0, %v5655
      %5657 = vmatmul.bf16.gmra.mxu0 %v5500
      %v5658 = vpop.f32.mrf.mxu0
      %v5659 = vadd.f32 0.0, %v5658
      %v5660 = vpop.f32.mrf.mxu0
      %v5661 = vadd.f32 0.0, %v5660
      %5662 = vmatmul.bf16.gmra.mxu0 %v5508
      %v5663 = vpop.f32.mrf.mxu0
      %v5664 = vadd.f32 0.0, %v5663
      %v5665 = vpop.f32.mrf.mxu0
      %v5666 = vadd.f32 0.0, %v5665
      %5667 = vmatmul.bf16.gmra.mxu0 %v5516
      %v5668 = vpop.f32.mrf.mxu0
      %v5669 = vadd.f32 0.0, %v5668
      %v5670 = vpop.f32.mrf.mxu0
      %v5671 = vadd.f32 0.0, %v5670
      %5672 = vmatmul.bf16.gmra.mxu0 %v5524
      %v5673 = vpop.f32.mrf.mxu0
      %v5674 = vadd.f32 0.0, %v5673
      %v5675 = vpop.f32.mrf.mxu0
      %v5676 = vadd.f32 0.0, %v5675
      %5677 = vdwg.mxu0
      %v5678 = vadd.f32 %v5195, %v5599
      %v5679 = vadd.f32 %v5196, %v5601
      %v5680 = vadd.f32 %v5197, %v5604
      %v5681 = vadd.f32 %v5198, %v5606
      %v5682 = vadd.f32 %v5199, %v5609
      %v5683 = vadd.f32 %v5200, %v5611
      %v5684 = vadd.f32 %v5201, %v5614
      %v5685 = vadd.f32 %v5202, %v5616
      %v5686 = vadd.f32 %v5203, %v5619
      %v5687 = vadd.f32 %v5204, %v5621
      %v5688 = vadd.f32 %v5205, %v5624
      %v5689 = vadd.f32 %v5206, %v5626
      %v5690 = vadd.f32 %v5207, %v5629
      %v5691 = vadd.f32 %v5208, %v5631
      %v5692 = vadd.f32 %v5209, %v5634
      %v5693 = vadd.f32 %v5210, %v5636
      %v5694 = vadd.f32 %v5211, %v5639
      %v5695 = vadd.f32 %v5212, %v5641
      %v5696 = vadd.f32 %v5213, %v5644
      %v5697 = vadd.f32 %v5214, %v5646
      %v5698 = vadd.f32 %v5215, %v5649
      %v5699 = vadd.f32 %v5216, %v5651
      %v5700 = vadd.f32 %v5217, %v5654
      %v5701 = vadd.f32 %v5218, %v5656
      %v5702 = vadd.f32 %v5219, %v5659
      %v5703 = vadd.f32 %v5220, %v5661
      %v5704 = vadd.f32 %v5221, %v5664
      %v5705 = vadd.f32 %v5222, %v5666
      %v5706 = vadd.f32 %v5223, %v5669
      %v5707 = vadd.f32 %v5224, %v5671
      %v5708 = vadd.f32 %v5225, %v5674
      %v5709 = vadd.f32 %v5226, %v5676
      %v5710 = vpack.c.bf16 %v5678, %v5678
      %v5711 = vpack.c.bf16 %v5679, %v5679
      %v5712 = vpack.c.bf16 %v5680, %v5680
      %v5713 = vpack.c.bf16 %v5681, %v5681
      %v5714 = vpack.c.bf16 %v5682, %v5682
      %v5715 = vpack.c.bf16 %v5683, %v5683
      %v5716 = vpack.c.bf16 %v5684, %v5684
      %v5717 = vpack.c.bf16 %v5685, %v5685
      %v5718 = vpack.c.bf16 %v5686, %v5686
      %v5719 = vpack.c.bf16 %v5687, %v5687
      %v5720 = vpack.c.bf16 %v5688, %v5688
      %v5721 = vpack.c.bf16 %v5689, %v5689
      %v5722 = vpack.c.bf16 %v5690, %v5690
      %v5723 = vpack.c.bf16 %v5691, %v5691
      %v5724 = vpack.c.bf16 %v5692, %v5692
      %v5725 = vpack.c.bf16 %v5693, %v5693
      %v5726 = vpack.c.bf16 %v5694, %v5694
      %v5727 = vpack.c.bf16 %v5695, %v5695
      %v5728 = vpack.c.bf16 %v5696, %v5696
      %v5729 = vpack.c.bf16 %v5697, %v5697
      %v5730 = vpack.c.bf16 %v5698, %v5698
      %v5731 = vpack.c.bf16 %v5699, %v5699
      %v5732 = vpack.c.bf16 %v5700, %v5700
      %v5733 = vpack.c.bf16 %v5701, %v5701
      %v5734 = vpack.c.bf16 %v5702, %v5702
      %v5735 = vpack.c.bf16 %v5703, %v5703
      %v5736 = vpack.c.bf16 %v5704, %v5704
      %v5737 = vpack.c.bf16 %v5705, %v5705
      %v5738 = vpack.c.bf16 %v5706, %v5706
      %v5739 = vpack.c.bf16 %v5707, %v5707
      %v5740 = vpack.c.bf16 %v5708, %v5708
      %v5741 = vpack.c.bf16 %v5709, %v5709
      %5742 = vst [vmem:[%s262] sm:$0xf] %v5710
      %5743 = vst [vmem:[%s262 + $0x4] sm:$0xf] %v5711
      %5744 = vst [vmem:[%s262 + $0x8] sm:$0xf] %v5712
      %5745 = vst [vmem:[%s262 + $0xc] sm:$0xf] %v5713
      %5746 = vst [vmem:[%s262 + $0x10] sm:$0xf] %v5714
      %5747 = vst [vmem:[%s262 + $0x14] sm:$0xf] %v5715
      %5748 = vst [vmem:[%s262 + $0x18] sm:$0xf] %v5716
      %5749 = vst [vmem:[%s262 + $0x1c] sm:$0xf] %v5717
      %5750 = vst [vmem:[%s262 + $0x20] sm:$0xf] %v5718
      %5751 = vst [vmem:[%s262 + $0x24] sm:$0xf] %v5719
      %5752 = vst [vmem:[%s262 + $0x28] sm:$0xf] %v5720
      %5753 = vst [vmem:[%s262 + $0x2c] sm:$0xf] %v5721
      %5754 = vst [vmem:[%s262 + $0x30] sm:$0xf] %v5722
      %5755 = vst [vmem:[%s262 + $0x34] sm:$0xf] %v5723
      %5756 = vst [vmem:[%s262 + $0x38] sm:$0xf] %v5724
      %5757 = vst [vmem:[%s262 + $0x3c] sm:$0xf] %v5725
      %5758 = vst [vmem:[%s262 + $0x40] sm:$0xf] %v5726
      %5759 = vst [vmem:[%s262 + $0x44] sm:$0xf] %v5727
      %5760 = vst [vmem:[%s262 + $0x48] sm:$0xf] %v5728
      %5761 = vst [vmem:[%s262 + $0x4c] sm:$0xf] %v5729
      %5762 = vst [vmem:[%s262 + $0x50] sm:$0xf] %v5730
      %5763 = vst [vmem:[%s262 + $0x54] sm:$0xf] %v5731
      %5764 = vst [vmem:[%s262 + $0x58] sm:$0xf] %v5732
      %5765 = vst [vmem:[%s262 + $0x5c] sm:$0xf] %v5733
      %5766 = vst [vmem:[%s262 + $0x60] sm:$0xf] %v5734
      %5767 = vst [vmem:[%s262 + $0x64] sm:$0xf] %v5735
      %5768 = vst [vmem:[%s262 + $0x68] sm:$0xf] %v5736
      %5769 = vst [vmem:[%s262 + $0x6c] sm:$0xf] %v5737
      %5770 = vst [vmem:[%s262 + $0x70] sm:$0xf] %v5738
      %5771 = vst [vmem:[%s262 + $0x74] sm:$0xf] %v5739
      %5772 = vst [vmem:[%s262 + $0x78] sm:$0xf] %v5740
      %5773 = vst [vmem:[%s262 + $0x7c] sm:$0xf] %v5741
      %v5774 = vadd.f32 %v5678, %v5679
      %v5775 = vadd.f32 %v5774, %v5680
      %v5776 = vadd.f32 %v5775, %v5681
      %v5777 = vadd.f32 %v5776, %v5682
      %v5778 = vadd.f32 %v5777, %v5683
      %v5779 = vadd.f32 %v5778, %v5684
      %v5780 = vadd.f32 %v5779, %v5685
      %v5781 = vadd.f32 %v5780, %v5686
      %v5782 = vadd.f32 %v5781, %v5687
      %v5783 = vadd.f32 %v5782, %v5688
      %v5784 = vadd.f32 %v5783, %v5689
      %v5785 = vadd.f32 %v5784, %v5690
      %v5786 = vadd.f32 %v5785, %v5691
      %v5787 = vadd.f32 %v5786, %v5692
      %v5788 = vadd.f32 %v5787, %v5693
      %v5789 = vadd.f32 %v5788, %v5694
      %v5790 = vadd.f32 %v5789, %v5695
      %v5791 = vadd.f32 %v5790, %v5696
      %v5792 = vadd.f32 %v5791, %v5697
      %v5793 = vadd.f32 %v5792, %v5698
      %v5794 = vadd.f32 %v5793, %v5699
      %v5795 = vadd.f32 %v5794, %v5700
      %v5796 = vadd.f32 %v5795, %v5701
      %v5797 = vadd.f32 %v5796, %v5702
      %v5798 = vadd.f32 %v5797, %v5703
      %v5799 = vadd.f32 %v5798, %v5704
      %v5800 = vadd.f32 %v5799, %v5705
      %v5801 = vadd.f32 %v5800, %v5706
      %v5802 = vadd.f32 %v5801, %v5707
      %v5803 = vadd.f32 %v5802, %v5708
      %v5804 = vadd.f32 %v5803, %v5709
      %v5805 = vrot.slane %v5804, 4
      %v5806 = vadd.f32 %v5804, %v5805
      %v5807 = vrot.slane %v5806, 2
      %v5808 = vadd.f32 %v5806, %v5807
      %v5809 = vrot.slane %v5808, 1
      %v5810 = vadd.f32 %v5808, %v5809
      %5811 = vst [vmem:[%s265] sm:$0x1] %v5810
      %v5812 = vmul.f32 %v5678, %v5678
      %v5813 = vmul.f32 %v5679, %v5679
      %v5814 = vmul.f32 %v5680, %v5680
      %v5815 = vmul.f32 %v5681, %v5681
      %v5816 = vmul.f32 %v5682, %v5682
      %v5817 = vmul.f32 %v5683, %v5683
      %v5818 = vmul.f32 %v5684, %v5684
      %v5819 = vmul.f32 %v5685, %v5685
      %v5820 = vmul.f32 %v5686, %v5686
      %v5821 = vmul.f32 %v5687, %v5687
      %v5822 = vmul.f32 %v5688, %v5688
      %v5823 = vmul.f32 %v5689, %v5689
      %v5824 = vmul.f32 %v5690, %v5690
      %v5825 = vmul.f32 %v5691, %v5691
      %v5826 = vmul.f32 %v5692, %v5692
      %v5827 = vmul.f32 %v5693, %v5693
      %v5828 = vmul.f32 %v5694, %v5694
      %v5829 = vmul.f32 %v5695, %v5695
      %v5830 = vmul.f32 %v5696, %v5696
      %v5831 = vmul.f32 %v5697, %v5697
      %v5832 = vmul.f32 %v5698, %v5698
      %v5833 = vmul.f32 %v5699, %v5699
      %v5834 = vmul.f32 %v5700, %v5700
      %v5835 = vmul.f32 %v5701, %v5701
      %v5836 = vmul.f32 %v5702, %v5702
      %v5837 = vmul.f32 %v5703, %v5703
      %v5838 = vmul.f32 %v5704, %v5704
      %v5839 = vmul.f32 %v5705, %v5705
      %v5840 = vmul.f32 %v5706, %v5706
      %v5841 = vmul.f32 %v5707, %v5707
      %v5842 = vmul.f32 %v5708, %v5708
      %v5843 = vmul.f32 %v5709, %v5709
      %v5844 = vadd.f32 %v5812, %v5813
      %v5845 = vadd.f32 %v5844, %v5814
      %v5846 = vadd.f32 %v5845, %v5815
      %v5847 = vadd.f32 %v5846, %v5816
      %v5848 = vadd.f32 %v5847, %v5817
      %v5849 = vadd.f32 %v5848, %v5818
      %v5850 = vadd.f32 %v5849, %v5819
      %v5851 = vadd.f32 %v5850, %v5820
      %v5852 = vadd.f32 %v5851, %v5821
      %v5853 = vadd.f32 %v5852, %v5822
      %v5854 = vadd.f32 %v5853, %v5823
      %v5855 = vadd.f32 %v5854, %v5824
      %v5856 = vadd.f32 %v5855, %v5825
      %v5857 = vadd.f32 %v5856, %v5826
      %v5858 = vadd.f32 %v5857, %v5827
      %v5859 = vadd.f32 %v5858, %v5828
      %v5860 = vadd.f32 %v5859, %v5829
      %v5861 = vadd.f32 %v5860, %v5830
      %v5862 = vadd.f32 %v5861, %v5831
      %v5863 = vadd.f32 %v5862, %v5832
      %v5864 = vadd.f32 %v5863, %v5833
      %v5865 = vadd.f32 %v5864, %v5834
      %v5866 = vadd.f32 %v5865, %v5835
      %v5867 = vadd.f32 %v5866, %v5836
      %v5868 = vadd.f32 %v5867, %v5837
      %v5869 = vadd.f32 %v5868, %v5838
      %v5870 = vadd.f32 %v5869, %v5839
      %v5871 = vadd.f32 %v5870, %v5840
      %v5872 = vadd.f32 %v5871, %v5841
      %v5873 = vadd.f32 %v5872, %v5842
      %v5874 = vadd.f32 %v5873, %v5843
      %v5875 = vrot.slane %v5874, 4
      %v5876 = vadd.f32 %v5874, %v5875
      %v5877 = vrot.slane %v5876, 2
      %v5878 = vadd.f32 %v5876, %v5877
      %v5879 = vrot.slane %v5878, 1
      %v5880 = vadd.f32 %v5878, %v5879
      %5881 = vst [vmem:[%s268] sm:$0x1] %v5880
      %p5882 = scmp.lt.s32.totalorder %s18, 1
      %s5883 = scalar_select %p5882, %s18, 1
      %s5884 = smul.addr %s5883, 32
      %s5885 = smul.addr %s5884, 4
      %s5886 = scalar_lea.vmem %s4, %s5885
      %p5887 = scmp.lt.s32.totalorder %s18, 1
      %s5888 = scalar_select %p5887, %s18, 1
      %s5889 = scalar_lea.vmem %s5, %s5888
      %p5890 = scmp.lt.s32.totalorder %s18, 1
      %s5891 = scalar_select %p5890, %s18, 1
      %s5892 = scalar_lea.vmem %s6, %s5891
      // Predicated region
      $region37: #{double_conv.4} parent=35 // pred_check
        %p5893 = pneg %p125
      $region38: #{double_conv.4} parent=35 // pred_check_branch
        %5895 = sbr.rel (%p5893) target = $region40
      $region39: #{double_conv.4} parent=35 // pred_region
        _
      $region40: #{double_conv.4} parent=35 // pred_fallthru
        _
      // Predicated region
      $region41: #{double_conv.4} parent=35 // pred_check
        %p5896 = pneg %p151
      $region42: #{double_conv.4} parent=35 // pred_check_branch
        %5898 = sbr.rel (%p5896) target = $region44
      $region43: #{double_conv.4} parent=35 // pred_region
        _
      $region44: #{double_conv.4} parent=35 // pred_fallthru
        _
      // Predicated region
      $region45: #{double_conv.4} parent=35 // pred_check
        %p5899 = pneg %p177
      $region46: #{double_conv.4} parent=35 // pred_check_branch
        %5901 = sbr.rel (%p5899) target = $region48
      $region47: #{double_conv.4} parent=35 // pred_region
        _
      $region48: #{double_conv.4} parent=35 // pred_fallthru
        _
    $region36: #{double_conv.4} parent=5 // pred_fallthru
      _
    %p5902 = scmp.le.s32.totalorder 2, %s13
    // Predicated region
    $region49: #{double_conv.4} parent=5 // pred_check
      %p5903 = pneg %p5902
    $region50: #{double_conv.4} parent=5 // pred_check_branch
      %5905 = sbr.rel (%p5903) target = $region52
    $region51: #{double_conv.4} parent=5 // pred_region
      %s5906 = ssub.s32 %s13, 2
      // Predicated region
      $region53: #{double_conv.4} parent=51 // pred_check
        %p5907 = pneg %p131
      $region54: #{double_conv.4} parent=51 // pred_check_branch
        %5909 = sbr.rel (%p5907) target = $region56
      $region55: #{double_conv.4} parent=51 // pred_region
        %p5910 = scmp.lt.s32.totalorder %s19, 1
        %s5911 = scalar_select %p5910, %s19, 1
        %s5912 = smul.addr %s5911, 32
        %s5913 = smul.addr %s5912, 4
        %s5914 = scalar_lea.vmem %s4, %s5913
      $region56: #{double_conv.4} parent=51 // pred_fallthru
        _
      // Predicated region
      $region57: #{double_conv.4} parent=51 // pred_check
        %p5915 = pneg %p157
      $region58: #{double_conv.4} parent=51 // pred_check_branch
        %5917 = sbr.rel (%p5915) target = $region60
      $region59: #{double_conv.4} parent=51 // pred_region
        %p5918 = scmp.lt.s32.totalorder %s19, 1
        %s5919 = scalar_select %p5918, %s19, 1
        %s5920 = scalar_lea.vmem %s5, %s5919
      $region60: #{double_conv.4} parent=51 // pred_fallthru
        _
      // Predicated region
      $region61: #{double_conv.4} parent=51 // pred_check
        %p5921 = pneg %p183
      $region62: #{double_conv.4} parent=51 // pred_check_branch
        %5923 = sbr.rel (%p5921) target = $region64
      $region63: #{double_conv.4} parent=51 // pred_region
        %p5924 = scmp.lt.s32.totalorder %s19, 1
        %s5925 = scalar_select %p5924, %s19, 1
        %s5926 = scalar_lea.vmem %s6, %s5925
      $region64: #{double_conv.4} parent=51 // pred_fallthru
        _
    $region52: #{double_conv.4} parent=5 // pred_fallthru
      _
  $region6: #{double_conv.4} parent=0 // loop_footer
    %s17 = sadd.s32 1, %s13
  $region7: #{double_conv.4} parent=0 // loop_footer_branch
    %12 = sbr.rel target = $region3
  $region8: #{double_conv.4} parent=0 // loop_exit
    _

</llo_original>
